<compile_context>
chip_gen: v7x
topology: tpu7x:2x2x1
jax: 0.10.0
libtpu: 0.0.40
codegen_flags: <defaults>
</compile_context>

<pallas_src>
import functools
import math

import jax
import jax.numpy as jnp
from jax.experimental import pallas as pl
from jax.experimental.pallas import tpu as pltpu

# ------------------------------------------------------------------
# Static model structure (Python constants, never traced).
# ------------------------------------------------------------------
CONV_CFG = (            # (C_out, kernel_size, stride); padding = 0 ("valid")
    (96, 10, 2),
    (96, 5, 2),
    (96, 5, 2),
    (128, 3, 2),
)
C_PAD = 128             # conv channels / conv1-im2col features padded to 128 lanes
HIDDEN = 128
NUM_BEHS = 5
TAIL_PAD = 8            # extra zero rows at the end of a1..a3 (read by last taps)


# ------------------------------------------------------------------
# Single fused kernel: conv stack + pool + GRU + FC head
# ------------------------------------------------------------------
def _fused_forward_kernel(xp_ref,
                          cw1, cb1, cw2, cb2, cw3, cb3, cw4, cb4,
                          wih1, bih1, whh_cat, bhh_cat, wih2, bih2,
                          wfc1, bfc1, wfc2, bfc2,
                          out_ref,
                          a1, a2, a3, a4, pooled_ref, gi1_ref,
                          *, n_seq, p_lens, l4):
    H = HIDDEN
    C = C_PAD
    f32 = jnp.float32
    bf16 = jnp.bfloat16
    P1, P2, P3, P4 = p_lens

    # Zero the small tail pads of a1..a3: the last taps of the next layer read a
    # few rows past the last sequence's block (those reads only feed padded
    # output rows, but keep them finite / deterministic).
    zpad = jnp.zeros((TAIL_PAD, C), f32)
    a1[pl.ds(n_seq * P1, TAIL_PAD), :] = zpad
    a2[pl.ds(n_seq * P2, TAIL_PAD), :] = zpad
    a3[pl.ds(n_seq * P3, TAIL_PAD), :] = zpad

    # ---------------- Conv1 (im2col done in the wrapper) --------------------
    # ONE (N*P1, 128) @ (128, 128) bf16 matmul; rows j >= L1 of each sequence
    # are zero patches -> relu(bias) garbage that is never read by valid rows.
    r1 = n_seq * P1
    acc1 = jnp.dot(xp_ref[...], cw1[...], preferred_element_type=f32)
    a1[pl.ds(0, r1), :] = jnp.maximum(acc1 + cb1[...], 0.0)

    # ---------------- Conv2..Conv4: per-tap strided read, batched over N ----
    # Activations are flat (N*P_in, 128) with P_out = P_in // 2, so the strided
    # read rows k + 2*m (m < N*P_out) line up with every sequence's block:
    # within sequence n it covers local positions j = 0..P_out-1 (valid j < L_out,
    # the rest are finite garbage rows that never feed a valid output).
    conv_defs = (
        (a1, a2, cw2, cb2, P2, CONV_CFG[1][1], CONV_CFG[1][2]),
        (a2, a3, cw3, cb3, P3, CONV_CFG[2][1], CONV_CFG[2][2]),
        (a3, a4, cw4, cb4, P4, CONV_CFG[3][1], CONV_CFG[3][2]),
    )
    for (src, dst, w_ref, b_ref, p_out, K, S) in conv_defs:
        rows = n_seq * p_out
        acc = None
        for k in range(K):                                  # shift-and-matmul
            idx = pl.ds(k, rows, stride=S) if S > 1 else pl.ds(k, rows)
            xk = src[idx, :].astype(bf16)                   # (rows, 128)
            part = jnp.dot(xk, w_ref[k], preferred_element_type=f32)
            acc = part if acc is None else acc + part
        dst[pl.ds(0, rows), :] = jnp.maximum(acc + b_ref[...], 0.0)

    # ---------------- AdaptiveMaxPool1d(1): max over the valid L4 rows ------
    for n in range(n_seq):
        seg = a4[pl.ds(n * P4, l4), :]                      # (l4, 128) valid rows
        pooled_ref[pl.ds(n, 1), :] = jnp.max(seg, axis=0, keepdims=True)

    # ---------------- 2-layer GRU over the N pooled feature vectors ---------
    # PyTorch: input (seq=N, batch=1, 128), h0 = zeros, gate order [r, z, n],
    # n = tanh(gi_n + r * gh_n), h' = (1-z)*n + z*h.
    # Layer-1 input projections for ALL timesteps in one matmul -> VMEM scratch.
    gi1_ref[...] = jnp.dot(pooled_ref[...].astype(bf16), wih1[...],
                           preferred_element_type=f32) + bih1[...]

    def _sigmoid(v):                       # EUP tanh; exact, no transient inf
        return 0.5 * jnp.tanh(0.5 * v) + 0.5

    def _gru_gates(gi, gh, h):
        r = _sigmoid(gi[:, 0:H] + gh[:, 0:H])
        z = _sigmoid(gi[:, H:2 * H] + gh[:, H:2 * H])
        n = jnp.tanh(gi[:, 2 * H:3 * H] + r * gh[:, 2 * H:3 * H])
        return (1.0 - z) * n + z * h

    h1 = jnp.zeros((1, H), f32)
    h2 = jnp.zeros((1, H), f32)
    # N is small here, so the recurrence is statically unrolled; for large N
    # this would become a lax.fori_loop with (h1, h2) as carries.
    for t in range(n_seq):
        # Both state-only projections in ONE matmul against block-diag(Whh1,Whh2).
        h_cat = jnp.concatenate([h1, h2], axis=1).astype(bf16)        # (1, 2H)
        gh_cat = jnp.dot(h_cat, whh_cat[...],
                         preferred_element_type=f32) + bhh_cat[...]   # (1, 6H)
        gi1 = gi1_ref[pl.ds(t, 1), :]                                 # (1, 3H)
        h1 = _gru_gates(gi1, gh_cat[:, 0:3 * H], h1)
        gi2 = jnp.dot(h1.astype(bf16), wih2[...],
                      preferred_element_type=f32) + bih2[...]
        h2 = _gru_gates(gi2, gh_cat[:, 3 * H:6 * H], h2)

    # ---------------- FC head on the last GRU output (x[-1, :, :]) ----------
    z1 = jnp.maximum(
        jnp.dot(h2.astype(bf16), wfc1[...], preferred_element_type=f32)
        + bfc1[...], 0.0)
    out_ref[...] = (jnp.dot(z1.astype(bf16), wfc2[...],
                            preferred_element_type=f32)
                    + bfc2[...]).astype(out_ref.dtype)


# ------------------------------------------------------------------
# Wrapper: one pallas_call, everything resident in VMEM
# ------------------------------------------------------------------
def _conv_out_lens(L):
    lens = [L]
    for (_, K, S) in CONV_CFG:
        lens.append((lens[-1] - K) // S + 1)
    return tuple(lens)


def _padded_lens(lens):
    # P1 is a multiple of 8 so P2 = P1/2, P3 = P1/4, P4 = P1/8 are integers and
    # the batched per-tap strided reads line up across sequence blocks.
    P1 = ((lens[1] + 7) // 8) * 8
    P = (P1, P1 // 2, P1 // 4, P1 // 8)
    for p, l in zip(P, lens[1:]):
        assert p >= l, "padded length chain too short"
    return P


def _im2col_conv1(x, P1, L1):
    """x (N, C_in, L) -> bf16 patches (N*P1, 128); feature index = c*K + k."""
    N, C_in, _ = x.shape
    K, S = CONV_CFG[0][1], CONV_CFG[0][2]
    feat = C_in * K
    assert feat <= C_PAD, "conv1 im2col width must fit in 128 lanes"
    cols = [x[:, :, k:k + S * (L1 - 1) + 1:S] for k in range(K)]   # (N, C_in, L1)
    patches = jnp.stack(cols, axis=3)                              # (N, C_in, L1, K)
    patches = jnp.transpose(patches, (0, 2, 1, 3)).reshape(N, L1, feat)
    patches = jnp.pad(patches, ((0, 0), (0, P1 - L1), (0, C_PAD - feat)))
    return patches.reshape(N * P1, C_PAD).astype(jnp.bfloat16)


def forward(x, params):
    """x: (N, C_in, L) float32 -> (1, NUM_BEHS) float32."""
    N, C_in, L = x.shape
    lens = _conv_out_lens(L)                     # static (shape-derived)
    assert lens[-1] >= 1, "input length too short for the conv stack"
    P = _padded_lens(lens)
    P1, P2, P3, P4 = P

    xp = _im2col_conv1(x, P1, lens[1])           # (N*P1, 128) bf16 patches

    cp, gp, fp = params["convs"], params["gru"], params["fc"]
    args = (xp,
            cp[0]["w"], cp[0]["b"], cp[1]["w"], cp[1]["b"],
            cp[2]["w"], cp[2]["b"], cp[3]["w"], cp[3]["b"],
            gp["wih1"], gp["bih1"], gp["whh_cat"], gp["bhh_cat"],
            gp["wih2"], gp["bih2"],
            fp["w1"], fp["b1"], fp["w2"], fp["b2"])

    vmem = pl.BlockSpec(memory_space=pltpu.MemorySpace.VMEM)
    kernel = functools.partial(_fused_forward_kernel,
                               n_seq=N, p_lens=P, l4=lens[4])
    return pl.pallas_call(
        kernel,
        out_shape=jax.ShapeDtypeStruct((1, NUM_BEHS), jnp.float32),
        in_specs=[vmem] * len(args),
        out_specs=vmem,
        scratch_shapes=[
            pltpu.VMEM((N * P1 + TAIL_PAD, C_PAD), jnp.float32),  # conv1 out
            pltpu.VMEM((N * P2 + TAIL_PAD, C_PAD), jnp.float32),  # conv2 out
            pltpu.VMEM((N * P3 + TAIL_PAD, C_PAD), jnp.float32),  # conv3 out
            pltpu.VMEM((N * P4, C_PAD), jnp.float32),             # conv4 out
            pltpu.VMEM((N, C_PAD), jnp.float32),                  # pooled (N,128)
            pltpu.VMEM((N, 3 * HIDDEN), jnp.float32),             # gi1_all
        ],
        compiler_params=pltpu.CompilerParams(
            vmem_limit_bytes=32 * 1024 * 1024),
    )(*args)


# ------------------------------------------------------------------
# Parameter construction (deterministic, PyTorch-style uniform init),
# pre-laid-out for the kernel: bf16 matmul operands, f32 biases.
# ------------------------------------------------------------------
def _uniform(key, shape, bound):
    return jax.random.uniform(key, shape, jnp.float32, -bound, bound)


def make_params(in_channels, key):
    keys = iter(jax.random.split(key, 32))
    bf16 = jnp.bfloat16
    H = HIDDEN

    convs = []
    c_in = in_channels
    for li, (c_out, k, _) in enumerate(CONV_CFG):
        bound = 1.0 / math.sqrt(c_in * k)
        w = _uniform(next(keys), (c_out, c_in, k), bound)     # PyTorch (Cout,Cin,K)
        b = _uniform(next(keys), (c_out,), bound)
        if li == 0:
            # conv1 im2col layout: (C_in*K, C_out) zero-padded to (128, 128);
            # row index c*K + k matches the wrapper's patch feature order.
            wk = w.reshape(c_out, c_in * k).T
            wk = jnp.pad(wk, ((0, C_PAD - c_in * k), (0, C_PAD - c_out)))
        else:
            wk = jnp.transpose(w, (2, 1, 0))                   # (K, Cin, Cout)
            wk = jnp.pad(wk, ((0, 0), (0, C_PAD - c_in), (0, C_PAD - c_out)))
        bk = jnp.pad(b, (0, C_PAD - c_out)).reshape(1, C_PAD)  # zero-padded bias
        convs.append({"w": wk.astype(bf16), "b": bk})
        c_in = c_out

    gb = 1.0 / math.sqrt(H)
    wih1 = _uniform(next(keys), (H, 3 * H), gb)
    bih1 = _uniform(next(keys), (1, 3 * H), gb)
    whh1 = _uniform(next(keys), (H, 3 * H), gb)
    bhh1 = _uniform(next(keys), (1, 3 * H), gb)
    wih2 = _uniform(next(keys), (H, 3 * H), gb)
    bih2 = _uniform(next(keys), (1, 3 * H), gb)
    whh2 = _uniform(next(keys), (H, 3 * H), gb)
    bhh2 = _uniform(next(keys), (1, 3 * H), gb)
    # Block-diagonal merge of the two recurrent weight matrices: [h1|h2] @ whh_cat
    # yields [gh1 | gh2] in one MXU matmul per GRU step.
    whh_cat = jnp.zeros((2 * H, 6 * H), jnp.float32)
    whh_cat = whh_cat.at[:H, :3 * H].set(whh1).at[H:, 3 * H:].set(whh2)
    gru = {
        "wih1": wih1.astype(bf16), "bih1": bih1,
        "whh_cat": whh_cat.astype(bf16),
        "bhh_cat": jnp.concatenate([bhh1, bhh2], axis=1),
        "wih2": wih2.astype(bf16), "bih2": bih2,
    }

    fb1 = 1.0 / math.sqrt(H)
    fb2 = 1.0 / math.sqrt(H // 2)
    fc = {
        "w1": _uniform(next(keys), (H, H // 2), fb1).astype(bf16),
        "b1": _uniform(next(keys), (1, H // 2), fb1),
        "w2": _uniform(next(keys), (H // 2, NUM_BEHS), fb2).astype(bf16),
        "b2": _uniform(next(keys), (1, NUM_BEHS), fb2),
    }
    return {"convs": convs, "gru": gru, "fc": fc}


if __name__ == "__main__":
    key = jax.random.PRNGKey(0)
    k_x, k_p = jax.random.split(key)

    # N doubles as the GRU sequence length (GRU batch is 1, as in the module).
    # L=64 is the smallest "nice" length that survives the 4 valid convs.
    N, C_in, L = 8, 4, 64
    x = jax.random.normal(k_x, (N, C_in, L), dtype=jnp.float32)
    params = make_params(C_in, k_p)

    out = jax.jit(forward)(x, params)
    out = jax.block_until_ready(out)
    assert out.shape == (1, NUM_BEHS), out.shape
    assert bool(jnp.all(jnp.isfinite(out)))
    print("KERNEL_OK")
</pallas_src>

<mosaic_0001>
module attributes {stable_mosaic.version = 11 : i64} {
  func.func @_fused_forward_kernel(%arg0: memref<256x128xbf16, #tpu.memory_space<vmem>>, %arg1: memref<128x128xbf16, #tpu.memory_space<vmem>>, %arg2: memref<1x128xf32, #tpu.memory_space<vmem>>, %arg3: memref<5x128x128xbf16, #tpu.memory_space<vmem>>, %arg4: memref<1x128xf32, #tpu.memory_space<vmem>>, %arg5: memref<5x128x128xbf16, #tpu.memory_space<vmem>>, %arg6: memref<1x128xf32, #tpu.memory_space<vmem>>, %arg7: memref<3x128x128xbf16, #tpu.memory_space<vmem>>, %arg8: memref<1x128xf32, #tpu.memory_space<vmem>>, %arg9: memref<128x384xbf16, #tpu.memory_space<vmem>>, %arg10: memref<1x384xf32, #tpu.memory_space<vmem>>, %arg11: memref<256x768xbf16, #tpu.memory_space<vmem>>, %arg12: memref<1x768xf32, #tpu.memory_space<vmem>>, %arg13: memref<128x384xbf16, #tpu.memory_space<vmem>>, %arg14: memref<1x384xf32, #tpu.memory_space<vmem>>, %arg15: memref<128x64xbf16, #tpu.memory_space<vmem>>, %arg16: memref<1x64xf32, #tpu.memory_space<vmem>>, %arg17: memref<64x5xbf16, #tpu.memory_space<vmem>>, %arg18: memref<1x5xf32, #tpu.memory_space<vmem>>, %arg19: memref<1x5xf32, #tpu.memory_space<vmem>>, %arg20: memref<264x128xf32, #tpu.memory_space<vmem>>, %arg21: memref<136x128xf32, #tpu.memory_space<vmem>>, %arg22: memref<72x128xf32, #tpu.memory_space<vmem>>, %arg23: memref<32x128xf32, #tpu.memory_space<vmem>>, %arg24: memref<8x128xf32, #tpu.memory_space<vmem>>, %arg25: memref<8x384xf32, #tpu.memory_space<vmem>>) attributes {dimension_semantics = [], scalar_prefetch = 0 : i64, scratch_operands = 6 : i64, tpu.core_type = #tpu.core_type<tc>} {
    %cst = arith.constant 0.000000e+00 : f32
    %0 = vector.broadcast %cst : f32 to vector<8x128xf32>
    %c256 = arith.constant 256 : index
    %c0 = arith.constant 0 : index
    %1 = vector.load %arg20[%c256, %c0] : memref<264x128xf32, #tpu.memory_space<vmem>>, vector<8x128xf32>
    tpu.vector_store %arg20[%c256, %c0], %0 {strides = array<i32>} : memref<264x128xf32, #tpu.memory_space<vmem>>, vector<8x128xf32>,
    %c128 = arith.constant 128 : index
    %c0_0 = arith.constant 0 : index
    %2 = vector.load %arg21[%c128, %c0_0] : memref<136x128xf32, #tpu.memory_space<vmem>>, vector<8x128xf32>
    tpu.vector_store %arg21[%c128, %c0_0], %0 {strides = array<i32>} : memref<136x128xf32, #tpu.memory_space<vmem>>, vector<8x128xf32>,
    %c64 = arith.constant 64 : index
    %c0_1 = arith.constant 0 : index
    %3 = vector.load %arg22[%c64, %c0_1] : memref<72x128xf32, #tpu.memory_space<vmem>>, vector<8x128xf32>
    tpu.vector_store %arg22[%c64, %c0_1], %0 {strides = array<i32>} : memref<72x128xf32, #tpu.memory_space<vmem>>, vector<8x128xf32>,
    %c0_2 = arith.constant 0 : index
    %c0_3 = arith.constant 0 : index
    %4 = vector.load %arg0[%c0_2, %c0_3] : memref<256x128xbf16, #tpu.memory_space<vmem>>, vector<256x128xbf16>
    %c0_4 = arith.constant 0 : index
    %c0_5 = arith.constant 0 : index
    %5 = vector.load %arg1[%c0_4, %c0_5] : memref<128x128xbf16, #tpu.memory_space<vmem>>, vector<128x128xbf16>
    %cst_6 = arith.constant dense<0.000000e+00> : vector<256x128xf32>
    %6 = tpu.matmul %4, %5, %cst_6 {dimension_numbers = #tpu.dot_dimension_numbers<[1], [0], [0], [1], [0, 0, 1, 1], [], []>} : vector<256x128xbf16>, vector<128x128xbf16>, vector<256x128xf32> -> vector<256x128xf32>
    %c0_7 = arith.constant 0 : index
    %c0_8 = arith.constant 0 : index
    %7 = vector.load %arg2[%c0_7, %c0_8] : memref<1x128xf32, #tpu.memory_space<vmem>>, vector<1x128xf32>
    %8 = vector.broadcast %7 : vector<1x128xf32> to vector<256x128xf32>
    %9 = arith.addf %6, %8 : vector<256x128xf32>
    %cst_9 = arith.constant 0.000000e+00 : f32
    %10 = vector.broadcast %cst_9 : f32 to vector<256x128xf32>
    %11 = arith.maximumf %9, %10 : vector<256x128xf32>
    %c0_10 = arith.constant 0 : index
    %c0_11 = arith.constant 0 : index
    %12 = vector.load %arg20[%c0_10, %c0_11] : memref<264x128xf32, #tpu.memory_space<vmem>>, vector<256x128xf32>
    tpu.vector_store %arg20[%c0_10, %c0_11], %11 {strides = array<i32>} : memref<264x128xf32, #tpu.memory_space<vmem>>, vector<256x128xf32>,
    %c0_12 = arith.constant 0 : index
    %c0_13 = arith.constant 0 : index
    %13 = tpu.strided_load %arg20[%c0_12, %c0_13] {strides = array<i32: 2, 1>} : memref<264x128xf32, #tpu.memory_space<vmem>>, vector<128x128xf32>
    %14 = arith.truncf %13 : vector<128x128xf32> to vector<128x128xbf16>
    %c0_14 = arith.constant 0 : index
    %c0_15 = arith.constant 0 : index
    %c0_16 = arith.constant 0 : index
    %15 = vector.load %arg3[%c0_14, %c0_15, %c0_16] : memref<5x128x128xbf16, #tpu.memory_space<vmem>>, vector<1x128x128xbf16>
    %16 = vector.shape_cast %15 : vector<1x128x128xbf16> to vector<128x128xbf16>
    %cst_17 = arith.constant dense<0.000000e+00> : vector<128x128xf32>
    %17 = tpu.matmul %14, %16, %cst_17 {dimension_numbers = #tpu.dot_dimension_numbers<[1], [0], [0], [1], [0, 0, 1, 1], [], []>} : vector<128x128xbf16>, vector<128x128xbf16>, vector<128x128xf32> -> vector<128x128xf32>
    %c1 = arith.constant 1 : index
    %c0_18 = arith.constant 0 : index
    %18 = tpu.strided_load %arg20[%c1, %c0_18] {strides = array<i32: 2, 1>} : memref<264x128xf32, #tpu.memory_space<vmem>>, vector<128x128xf32>
    %19 = arith.truncf %18 : vector<128x128xf32> to vector<128x128xbf16>
    %c1_19 = arith.constant 1 : index
    %c0_20 = arith.constant 0 : index
    %c0_21 = arith.constant 0 : index
    %20 = vector.load %arg3[%c1_19, %c0_20, %c0_21] : memref<5x128x128xbf16, #tpu.memory_space<vmem>>, vector<1x128x128xbf16>
    %21 = vector.shape_cast %20 : vector<1x128x128xbf16> to vector<128x128xbf16>
    %cst_22 = arith.constant dense<0.000000e+00> : vector<128x128xf32>
    %22 = tpu.matmul %19, %21, %cst_22 {dimension_numbers = #tpu.dot_dimension_numbers<[1], [0], [0], [1], [0, 0, 1, 1], [], []>} : vector<128x128xbf16>, vector<128x128xbf16>, vector<128x128xf32> -> vector<128x128xf32>
    %23 = arith.addf %17, %22 : vector<128x128xf32>
    %c2 = arith.constant 2 : index
    %c0_23 = arith.constant 0 : index
    %24 = tpu.strided_load %arg20[%c2, %c0_23] {strides = array<i32: 2, 1>} : memref<264x128xf32, #tpu.memory_space<vmem>>, vector<128x128xf32>
    %25 = arith.truncf %24 : vector<128x128xf32> to vector<128x128xbf16>
    %c2_24 = arith.constant 2 : index
    %c0_25 = arith.constant 0 : index
    %c0_26 = arith.constant 0 : index
    %26 = vector.load %arg3[%c2_24, %c0_25, %c0_26] : memref<5x128x128xbf16, #tpu.memory_space<vmem>>, vector<1x128x128xbf16>
    %27 = vector.shape_cast %26 : vector<1x128x128xbf16> to vector<128x128xbf16>
    %cst_27 = arith.constant dense<0.000000e+00> : vector<128x128xf32>
    %28 = tpu.matmul %25, %27, %cst_27 {dimension_numbers = #tpu.dot_dimension_numbers<[1], [0], [0], [1], [0, 0, 1, 1], [], []>} : vector<128x128xbf16>, vector<128x128xbf16>, vector<128x128xf32> -> vector<128x128xf32>
    %29 = arith.addf %23, %28 : vector<128x128xf32>
    %c3 = arith.constant 3 : index
    %c0_28 = arith.constant 0 : index
    %30 = tpu.strided_load %arg20[%c3, %c0_28] {strides = array<i32: 2, 1>} : memref<264x128xf32, #tpu.memory_space<vmem>>, vector<128x128xf32>
    %31 = arith.truncf %30 : vector<128x128xf32> to vector<128x128xbf16>
    %c3_29 = arith.constant 3 : index
    %c0_30 = arith.constant 0 : index
    %c0_31 = arith.constant 0 : index
    %32 = vector.load %arg3[%c3_29, %c0_30, %c0_31] : memref<5x128x128xbf16, #tpu.memory_space<vmem>>, vector<1x128x128xbf16>
    %33 = vector.shape_cast %32 : vector<1x128x128xbf16> to vector<128x128xbf16>
    %cst_32 = arith.constant dense<0.000000e+00> : vector<128x128xf32>
    %34 = tpu.matmul %31, %33, %cst_32 {dimension_numbers = #tpu.dot_dimension_numbers<[1], [0], [0], [1], [0, 0, 1, 1], [], []>} : vector<128x128xbf16>, vector<128x128xbf16>, vector<128x128xf32> -> vector<128x128xf32>
    %35 = arith.addf %29, %34 : vector<128x128xf32>
    %c4 = arith.constant 4 : index
    %c0_33 = arith.constant 0 : index
    %36 = tpu.strided_load %arg20[%c4, %c0_33] {strides = array<i32: 2, 1>} : memref<264x128xf32, #tpu.memory_space<vmem>>, vector<128x128xf32>
    %37 = arith.truncf %36 : vector<128x128xf32> to vector<128x128xbf16>
    %c4_34 = arith.constant 4 : index
    %c0_35 = arith.constant 0 : index
    %c0_36 = arith.constant 0 : index
    %38 = vector.load %arg3[%c4_34, %c0_35, %c0_36] : memref<5x128x128xbf16, #tpu.memory_space<vmem>>, vector<1x128x128xbf16>
    %39 = vector.shape_cast %38 : vector<1x128x128xbf16> to vector<128x128xbf16>
    %cst_37 = arith.constant dense<0.000000e+00> : vector<128x128xf32>
    %40 = tpu.matmul %37, %39, %cst_37 {dimension_numbers = #tpu.dot_dimension_numbers<[1], [0], [0], [1], [0, 0, 1, 1], [], []>} : vector<128x128xbf16>, vector<128x128xbf16>, vector<128x128xf32> -> vector<128x128xf32>
    %41 = arith.addf %35, %40 : vector<128x128xf32>
    %c0_38 = arith.constant 0 : index
    %c0_39 = arith.constant 0 : index
    %42 = vector.load %arg4[%c0_38, %c0_39] : memref<1x128xf32, #tpu.memory_space<vmem>>, vector<1x128xf32>
    %43 = vector.broadcast %42 : vector<1x128xf32> to vector<128x128xf32>
    %44 = arith.addf %41, %43 : vector<128x128xf32>
    %cst_40 = arith.constant 0.000000e+00 : f32
    %45 = vector.broadcast %cst_40 : f32 to vector<128x128xf32>
    %46 = arith.maximumf %44, %45 : vector<128x128xf32>
    %c0_41 = arith.constant 0 : index
    %c0_42 = arith.constant 0 : index
    %47 = vector.load %arg21[%c0_41, %c0_42] : memref<136x128xf32, #tpu.memory_space<vmem>>, vector<128x128xf32>
    tpu.vector_store %arg21[%c0_41, %c0_42], %46 {strides = array<i32>} : memref<136x128xf32, #tpu.memory_space<vmem>>, vector<128x128xf32>,
    %c0_43 = arith.constant 0 : index
    %c0_44 = arith.constant 0 : index
    %48 = tpu.strided_load %arg21[%c0_43, %c0_44] {strides = array<i32: 2, 1>} : memref<136x128xf32, #tpu.memory_space<vmem>>, vector<64x128xf32>
    %49 = arith.truncf %48 : vector<64x128xf32> to vector<64x128xbf16>
    %c0_45 = arith.constant 0 : index
    %c0_46 = arith.constant 0 : index
    %c0_47 = arith.constant 0 : index
    %50 = vector.load %arg5[%c0_45, %c0_46, %c0_47] : memref<5x128x128xbf16, #tpu.memory_space<vmem>>, vector<1x128x128xbf16>
    %51 = vector.shape_cast %50 : vector<1x128x128xbf16> to vector<128x128xbf16>
    %cst_48 = arith.constant dense<0.000000e+00> : vector<64x128xf32>
    %52 = tpu.matmul %49, %51, %cst_48 {dimension_numbers = #tpu.dot_dimension_numbers<[1], [0], [0], [1], [0, 0, 1, 1], [], []>} : vector<64x128xbf16>, vector<128x128xbf16>, vector<64x128xf32> -> vector<64x128xf32>
    %c1_49 = arith.constant 1 : index
    %c0_50 = arith.constant 0 : index
    %53 = tpu.strided_load %arg21[%c1_49, %c0_50] {strides = array<i32: 2, 1>} : memref<136x128xf32, #tpu.memory_space<vmem>>, vector<64x128xf32>
    %54 = arith.truncf %53 : vector<64x128xf32> to vector<64x128xbf16>
    %c1_51 = arith.constant 1 : index
    %c0_52 = arith.constant 0 : index
    %c0_53 = arith.constant 0 : index
    %55 = vector.load %arg5[%c1_51, %c0_52, %c0_53] : memref<5x128x128xbf16, #tpu.memory_space<vmem>>, vector<1x128x128xbf16>
    %56 = vector.shape_cast %55 : vector<1x128x128xbf16> to vector<128x128xbf16>
    %cst_54 = arith.constant dense<0.000000e+00> : vector<64x128xf32>
    %57 = tpu.matmul %54, %56, %cst_54 {dimension_numbers = #tpu.dot_dimension_numbers<[1], [0], [0], [1], [0, 0, 1, 1], [], []>} : vector<64x128xbf16>, vector<128x128xbf16>, vector<64x128xf32> -> vector<64x128xf32>
    %58 = arith.addf %52, %57 : vector<64x128xf32>
    %c2_55 = arith.constant 2 : index
    %c0_56 = arith.constant 0 : index
    %59 = tpu.strided_load %arg21[%c2_55, %c0_56] {strides = array<i32: 2, 1>} : memref<136x128xf32, #tpu.memory_space<vmem>>, vector<64x128xf32>
    %60 = arith.truncf %59 : vector<64x128xf32> to vector<64x128xbf16>
    %c2_57 = arith.constant 2 : index
    %c0_58 = arith.constant 0 : index
    %c0_59 = arith.constant 0 : index
    %61 = vector.load %arg5[%c2_57, %c0_58, %c0_59] : memref<5x128x128xbf16, #tpu.memory_space<vmem>>, vector<1x128x128xbf16>
    %62 = vector.shape_cast %61 : vector<1x128x128xbf16> to vector<128x128xbf16>
    %cst_60 = arith.constant dense<0.000000e+00> : vector<64x128xf32>
    %63 = tpu.matmul %60, %62, %cst_60 {dimension_numbers = #tpu.dot_dimension_numbers<[1], [0], [0], [1], [0, 0, 1, 1], [], []>} : vector<64x128xbf16>, vector<128x128xbf16>, vector<64x128xf32> -> vector<64x128xf32>
    %64 = arith.addf %58, %63 : vector<64x128xf32>
    %c3_61 = arith.constant 3 : index
    %c0_62 = arith.constant 0 : index
    %65 = tpu.strided_load %arg21[%c3_61, %c0_62] {strides = array<i32: 2, 1>} : memref<136x128xf32, #tpu.memory_space<vmem>>, vector<64x128xf32>
    %66 = arith.truncf %65 : vector<64x128xf32> to vector<64x128xbf16>
    %c3_63 = arith.constant 3 : index
    %c0_64 = arith.constant 0 : index
    %c0_65 = arith.constant 0 : index
    %67 = vector.load %arg5[%c3_63, %c0_64, %c0_65] : memref<5x128x128xbf16, #tpu.memory_space<vmem>>, vector<1x128x128xbf16>
    %68 = vector.shape_cast %67 : vector<1x128x128xbf16> to vector<128x128xbf16>
    %cst_66 = arith.constant dense<0.000000e+00> : vector<64x128xf32>
    %69 = tpu.matmul %66, %68, %cst_66 {dimension_numbers = #tpu.dot_dimension_numbers<[1], [0], [0], [1], [0, 0, 1, 1], [], []>} : vector<64x128xbf16>, vector<128x128xbf16>, vector<64x128xf32> -> vector<64x128xf32>
    %70 = arith.addf %64, %69 : vector<64x128xf32>
    %c4_67 = arith.constant 4 : index
    %c0_68 = arith.constant 0 : index
    %71 = tpu.strided_load %arg21[%c4_67, %c0_68] {strides = array<i32: 2, 1>} : memref<136x128xf32, #tpu.memory_space<vmem>>, vector<64x128xf32>
    %72 = arith.truncf %71 : vector<64x128xf32> to vector<64x128xbf16>
    %c4_69 = arith.constant 4 : index
    %c0_70 = arith.constant 0 : index
    %c0_71 = arith.constant 0 : index
    %73 = vector.load %arg5[%c4_69, %c0_70, %c0_71] : memref<5x128x128xbf16, #tpu.memory_space<vmem>>, vector<1x128x128xbf16>
    %74 = vector.shape_cast %73 : vector<1x128x128xbf16> to vector<128x128xbf16>
    %cst_72 = arith.constant dense<0.000000e+00> : vector<64x128xf32>
    %75 = tpu.matmul %72, %74, %cst_72 {dimension_numbers = #tpu.dot_dimension_numbers<[1], [0], [0], [1], [0, 0, 1, 1], [], []>} : vector<64x128xbf16>, vector<128x128xbf16>, vector<64x128xf32> -> vector<64x128xf32>
    %76 = arith.addf %70, %75 : vector<64x128xf32>
    %c0_73 = arith.constant 0 : index
    %c0_74 = arith.constant 0 : index
    %77 = vector.load %arg6[%c0_73, %c0_74] : memref<1x128xf32, #tpu.memory_space<vmem>>, vector<1x128xf32>
    %78 = vector.broadcast %77 : vector<1x128xf32> to vector<64x128xf32>
    %79 = arith.addf %76, %78 : vector<64x128xf32>
    %cst_75 = arith.constant 0.000000e+00 : f32
    %80 = vector.broadcast %cst_75 : f32 to vector<64x128xf32>
    %81 = arith.maximumf %79, %80 : vector<64x128xf32>
    %c0_76 = arith.constant 0 : index
    %c0_77 = arith.constant 0 : index
    %82 = vector.load %arg22[%c0_76, %c0_77] : memref<72x128xf32, #tpu.memory_space<vmem>>, vector<64x128xf32>
    tpu.vector_store %arg22[%c0_76, %c0_77], %81 {strides = array<i32>} : memref<72x128xf32, #tpu.memory_space<vmem>>, vector<64x128xf32>,
    %c0_78 = arith.constant 0 : index
    %c0_79 = arith.constant 0 : index
    %83 = tpu.strided_load %arg22[%c0_78, %c0_79] {strides = array<i32: 2, 1>} : memref<72x128xf32, #tpu.memory_space<vmem>>, vector<32x128xf32>
    %84 = arith.truncf %83 : vector<32x128xf32> to vector<32x128xbf16>
    %c0_80 = arith.constant 0 : index
    %c0_81 = arith.constant 0 : index
    %c0_82 = arith.constant 0 : index
    %85 = vector.load %arg7[%c0_80, %c0_81, %c0_82] : memref<3x128x128xbf16, #tpu.memory_space<vmem>>, vector<1x128x128xbf16>
    %86 = vector.shape_cast %85 : vector<1x128x128xbf16> to vector<128x128xbf16>
    %cst_83 = arith.constant dense<0.000000e+00> : vector<32x128xf32>
    %87 = tpu.matmul %84, %86, %cst_83 {dimension_numbers = #tpu.dot_dimension_numbers<[1], [0], [0], [1], [0, 0, 1, 1], [], []>} : vector<32x128xbf16>, vector<128x128xbf16>, vector<32x128xf32> -> vector<32x128xf32>
    %c1_84 = arith.constant 1 : index
    %c0_85 = arith.constant 0 : index
    %88 = tpu.strided_load %arg22[%c1_84, %c0_85] {strides = array<i32: 2, 1>} : memref<72x128xf32, #tpu.memory_space<vmem>>, vector<32x128xf32>
    %89 = arith.truncf %88 : vector<32x128xf32> to vector<32x128xbf16>
    %c1_86 = arith.constant 1 : index
    %c0_87 = arith.constant 0 : index
    %c0_88 = arith.constant 0 : index
    %90 = vector.load %arg7[%c1_86, %c0_87, %c0_88] : memref<3x128x128xbf16, #tpu.memory_space<vmem>>, vector<1x128x128xbf16>
    %91 = vector.shape_cast %90 : vector<1x128x128xbf16> to vector<128x128xbf16>
    %cst_89 = arith.constant dense<0.000000e+00> : vector<32x128xf32>
    %92 = tpu.matmul %89, %91, %cst_89 {dimension_numbers = #tpu.dot_dimension_numbers<[1], [0], [0], [1], [0, 0, 1, 1], [], []>} : vector<32x128xbf16>, vector<128x128xbf16>, vector<32x128xf32> -> vector<32x128xf32>
    %93 = arith.addf %87, %92 : vector<32x128xf32>
    %c2_90 = arith.constant 2 : index
    %c0_91 = arith.constant 0 : index
    %94 = tpu.strided_load %arg22[%c2_90, %c0_91] {strides = array<i32: 2, 1>} : memref<72x128xf32, #tpu.memory_space<vmem>>, vector<32x128xf32>
    %95 = arith.truncf %94 : vector<32x128xf32> to vector<32x128xbf16>
    %c2_92 = arith.constant 2 : index
    %c0_93 = arith.constant 0 : index
    %c0_94 = arith.constant 0 : index
    %96 = vector.load %arg7[%c2_92, %c0_93, %c0_94] : memref<3x128x128xbf16, #tpu.memory_space<vmem>>, vector<1x128x128xbf16>
    %97 = vector.shape_cast %96 : vector<1x128x128xbf16> to vector<128x128xbf16>
    %cst_95 = arith.constant dense<0.000000e+00> : vector<32x128xf32>
    %98 = tpu.matmul %95, %97, %cst_95 {dimension_numbers = #tpu.dot_dimension_numbers<[1], [0], [0], [1], [0, 0, 1, 1], [], []>} : vector<32x128xbf16>, vector<128x128xbf16>, vector<32x128xf32> -> vector<32x128xf32>
    %99 = arith.addf %93, %98 : vector<32x128xf32>
    %c0_96 = arith.constant 0 : index
    %c0_97 = arith.constant 0 : index
    %100 = vector.load %arg8[%c0_96, %c0_97] : memref<1x128xf32, #tpu.memory_space<vmem>>, vector<1x128xf32>
    %101 = vector.broadcast %100 : vector<1x128xf32> to vector<32x128xf32>
    %102 = arith.addf %99, %101 : vector<32x128xf32>
    %cst_98 = arith.constant 0.000000e+00 : f32
    %103 = vector.broadcast %cst_98 : f32 to vector<32x128xf32>
    %104 = arith.maximumf %102, %103 : vector<32x128xf32>
    %c0_99 = arith.constant 0 : index
    %c0_100 = arith.constant 0 : index
    %105 = vector.load %arg23[%c0_99, %c0_100] : memref<32x128xf32, #tpu.memory_space<vmem>>, vector<32x128xf32>
    tpu.vector_store %arg23[%c0_99, %c0_100], %104 {strides = array<i32>} : memref<32x128xf32, #tpu.memory_space<vmem>>, vector<32x128xf32>,
    %c0_101 = arith.constant 0 : index
    %c0_102 = arith.constant 0 : index
    %106 = vector.load %arg23[%c0_101, %c0_102] : memref<32x128xf32, #tpu.memory_space<vmem>>, vector<1x128xf32>
    %cst_103 = arith.constant dense<0xFF800000> : vector<128xf32>
    %107 = vector.multi_reduction <maximumf>, %106, %cst_103 [0] : vector<1x128xf32> to vector<128xf32>
    %108 = vector.shape_cast %107 : vector<128xf32> to vector<1x128xf32>
    %c0_104 = arith.constant 0 : index
    %c0_105 = arith.constant 0 : index
    %109 = vector.load %arg24[%c0_104, %c0_105] : memref<8x128xf32, #tpu.memory_space<vmem>>, vector<1x128xf32>
    tpu.vector_store %arg24[%c0_104, %c0_105], %108 {strides = array<i32>} : memref<8x128xf32, #tpu.memory_space<vmem>>, vector<1x128xf32>,
    %c4_106 = arith.constant 4 : index
    %c0_107 = arith.constant 0 : index
    %110 = vector.load %arg23[%c4_106, %c0_107] : memref<32x128xf32, #tpu.memory_space<vmem>>, vector<1x128xf32>
    %cst_108 = arith.constant dense<0xFF800000> : vector<128xf32>
    %111 = vector.multi_reduction <maximumf>, %110, %cst_108 [0] : vector<1x128xf32> to vector<128xf32>
    %112 = vector.shape_cast %111 : vector<128xf32> to vector<1x128xf32>
    %c1_109 = arith.constant 1 : index
    %c0_110 = arith.constant 0 : index
    %113 = vector.load %arg24[%c1_109, %c0_110] : memref<8x128xf32, #tpu.memory_space<vmem>>, vector<1x128xf32>
    tpu.vector_store %arg24[%c1_109, %c0_110], %112 {strides = array<i32>} : memref<8x128xf32, #tpu.memory_space<vmem>>, vector<1x128xf32>,
    %c8 = arith.constant 8 : index
    %c0_111 = arith.constant 0 : index
    %114 = vector.load %arg23[%c8, %c0_111] : memref<32x128xf32, #tpu.memory_space<vmem>>, vector<1x128xf32>
    %cst_112 = arith.constant dense<0xFF800000> : vector<128xf32>
    %115 = vector.multi_reduction <maximumf>, %114, %cst_112 [0] : vector<1x128xf32> to vector<128xf32>
    %116 = vector.shape_cast %115 : vector<128xf32> to vector<1x128xf32>
    %c2_113 = arith.constant 2 : index
    %c0_114 = arith.constant 0 : index
    %117 = vector.load %arg24[%c2_113, %c0_114] : memref<8x128xf32, #tpu.memory_space<vmem>>, vector<1x128xf32>
    tpu.vector_store %arg24[%c2_113, %c0_114], %116 {strides = array<i32>} : memref<8x128xf32, #tpu.memory_space<vmem>>, vector<1x128xf32>,
    %c12 = arith.constant 12 : index
    %c0_115 = arith.constant 0 : index
    %118 = vector.load %arg23[%c12, %c0_115] : memref<32x128xf32, #tpu.memory_space<vmem>>, vector<1x128xf32>
    %cst_116 = arith.constant dense<0xFF800000> : vector<128xf32>
    %119 = vector.multi_reduction <maximumf>, %118, %cst_116 [0] : vector<1x128xf32> to vector<128xf32>
    %120 = vector.shape_cast %119 : vector<128xf32> to vector<1x128xf32>
    %c3_117 = arith.constant 3 : index
    %c0_118 = arith.constant 0 : index
    %121 = vector.load %arg24[%c3_117, %c0_118] : memref<8x128xf32, #tpu.memory_space<vmem>>, vector<1x128xf32>
    tpu.vector_store %arg24[%c3_117, %c0_118], %120 {strides = array<i32>} : memref<8x128xf32, #tpu.memory_space<vmem>>, vector<1x128xf32>,
    %c16 = arith.constant 16 : index
    %c0_119 = arith.constant 0 : index
    %122 = vector.load %arg23[%c16, %c0_119] : memref<32x128xf32, #tpu.memory_space<vmem>>, vector<1x128xf32>
    %cst_120 = arith.constant dense<0xFF800000> : vector<128xf32>
    %123 = vector.multi_reduction <maximumf>, %122, %cst_120 [0] : vector<1x128xf32> to vector<128xf32>
    %124 = vector.shape_cast %123 : vector<128xf32> to vector<1x128xf32>
    %c4_121 = arith.constant 4 : index
    %c0_122 = arith.constant 0 : index
    %125 = vector.load %arg24[%c4_121, %c0_122] : memref<8x128xf32, #tpu.memory_space<vmem>>, vector<1x128xf32>
    tpu.vector_store %arg24[%c4_121, %c0_122], %124 {strides = array<i32>} : memref<8x128xf32, #tpu.memory_space<vmem>>, vector<1x128xf32>,
    %c20 = arith.constant 20 : index
    %c0_123 = arith.constant 0 : index
    %126 = vector.load %arg23[%c20, %c0_123] : memref<32x128xf32, #tpu.memory_space<vmem>>, vector<1x128xf32>
    %cst_124 = arith.constant dense<0xFF800000> : vector<128xf32>
    %127 = vector.multi_reduction <maximumf>, %126, %cst_124 [0] : vector<1x128xf32> to vector<128xf32>
    %128 = vector.shape_cast %127 : vector<128xf32> to vector<1x128xf32>
    %c5 = arith.constant 5 : index
    %c0_125 = arith.constant 0 : index
    %129 = vector.load %arg24[%c5, %c0_125] : memref<8x128xf32, #tpu.memory_space<vmem>>, vector<1x128xf32>
    tpu.vector_store %arg24[%c5, %c0_125], %128 {strides = array<i32>} : memref<8x128xf32, #tpu.memory_space<vmem>>, vector<1x128xf32>,
    %c24 = arith.constant 24 : index
    %c0_126 = arith.constant 0 : index
    %130 = vector.load %arg23[%c24, %c0_126] : memref<32x128xf32, #tpu.memory_space<vmem>>, vector<1x128xf32>
    %cst_127 = arith.constant dense<0xFF800000> : vector<128xf32>
    %131 = vector.multi_reduction <maximumf>, %130, %cst_127 [0] : vector<1x128xf32> to vector<128xf32>
    %132 = vector.shape_cast %131 : vector<128xf32> to vector<1x128xf32>
    %c6 = arith.constant 6 : index
    %c0_128 = arith.constant 0 : index
    %133 = vector.load %arg24[%c6, %c0_128] : memref<8x128xf32, #tpu.memory_space<vmem>>, vector<1x128xf32>
    tpu.vector_store %arg24[%c6, %c0_128], %132 {strides = array<i32>} : memref<8x128xf32, #tpu.memory_space<vmem>>, vector<1x128xf32>,
    %c28 = arith.constant 28 : index
    %c0_129 = arith.constant 0 : index
    %134 = vector.load %arg23[%c28, %c0_129] : memref<32x128xf32, #tpu.memory_space<vmem>>, vector<1x128xf32>
    %cst_130 = arith.constant dense<0xFF800000> : vector<128xf32>
    %135 = vector.multi_reduction <maximumf>, %134, %cst_130 [0] : vector<1x128xf32> to vector<128xf32>
    %136 = vector.shape_cast %135 : vector<128xf32> to vector<1x128xf32>
    %c7 = arith.constant 7 : index
    %c0_131 = arith.constant 0 : index
    %137 = vector.load %arg24[%c7, %c0_131] : memref<8x128xf32, #tpu.memory_space<vmem>>, vector<1x128xf32>
    tpu.vector_store %arg24[%c7, %c0_131], %136 {strides = array<i32>} : memref<8x128xf32, #tpu.memory_space<vmem>>, vector<1x128xf32>,
    %c0_132 = arith.constant 0 : index
    %c0_133 = arith.constant 0 : index
    %138 = vector.load %arg24[%c0_132, %c0_133] : memref<8x128xf32, #tpu.memory_space<vmem>>, vector<8x128xf32>
    %139 = arith.truncf %138 : vector<8x128xf32> to vector<8x128xbf16>
    %c0_134 = arith.constant 0 : index
    %c0_135 = arith.constant 0 : index
    %140 = vector.load %arg9[%c0_134, %c0_135] : memref<128x384xbf16, #tpu.memory_space<vmem>>, vector<128x384xbf16>
    %cst_136 = arith.constant dense<0.000000e+00> : vector<8x384xf32>
    %141 = tpu.matmul %139, %140, %cst_136 {dimension_numbers = #tpu.dot_dimension_numbers<[1], [0], [0], [1], [0, 0, 1, 1], [], []>} : vector<8x128xbf16>, vector<128x384xbf16>, vector<8x384xf32> -> vector<8x384xf32>
    %c0_137 = arith.constant 0 : index
    %c0_138 = arith.constant 0 : index
    %142 = vector.load %arg10[%c0_137, %c0_138] : memref<1x384xf32, #tpu.memory_space<vmem>>, vector<1x384xf32>
    %143 = vector.broadcast %142 : vector<1x384xf32> to vector<8x384xf32>
    %144 = arith.addf %141, %143 : vector<8x384xf32>
    %c0_139 = arith.constant 0 : index
    %c0_140 = arith.constant 0 : index
    %145 = vector.load %arg25[%c0_139, %c0_140] : memref<8x384xf32, #tpu.memory_space<vmem>>, vector<8x384xf32>
    tpu.vector_store %arg25[%c0_139, %c0_140], %144 {strides = array<i32>} : memref<8x384xf32, #tpu.memory_space<vmem>>, vector<8x384xf32>,
    %cst_141 = arith.constant 0.000000e+00 : f32
    %146 = vector.broadcast %cst_141 : f32 to vector<1x128xf32>
    %cst_142 = arith.constant 0.000000e+00 : f32
    %147 = vector.broadcast %cst_142 : f32 to vector<1x128xf32>
    %148 = tpu.concatenate %146, %147 in 1 : vector<1x128xf32>, vector<1x128xf32> -> vector<1x256xf32>
    %149 = arith.truncf %148 : vector<1x256xf32> to vector<1x256xbf16>
    %c0_143 = arith.constant 0 : index
    %c0_144 = arith.constant 0 : index
    %150 = vector.load %arg11[%c0_143, %c0_144] : memref<256x768xbf16, #tpu.memory_space<vmem>>, vector<256x768xbf16>
    %cst_145 = arith.constant dense<0.000000e+00> : vector<1x768xf32>
    %151 = tpu.matmul %149, %150, %cst_145 {dimension_numbers = #tpu.dot_dimension_numbers<[1], [0], [0], [1], [0, 0, 1, 1], [], []>} : vector<1x256xbf16>, vector<256x768xbf16>, vector<1x768xf32> -> vector<1x768xf32>
    %c0_146 = arith.constant 0 : index
    %c0_147 = arith.constant 0 : index
    %152 = vector.load %arg12[%c0_146, %c0_147] : memref<1x768xf32, #tpu.memory_space<vmem>>, vector<1x768xf32>
    %153 = arith.addf %151, %152 : vector<1x768xf32>
    %c0_148 = arith.constant 0 : index
    %c0_149 = arith.constant 0 : index
    %154 = vector.load %arg25[%c0_148, %c0_149] : memref<8x384xf32, #tpu.memory_space<vmem>>, vector<1x384xf32>
    %155 = vector.extract_strided_slice %153 {offsets = [0, 0], sizes = [1, 384], strides = [1, 1]} : vector<1x768xf32> to vector<1x384xf32>
    %156 = vector.extract_strided_slice %154 {offsets = [0, 0], sizes = [1, 128], strides = [1, 1]} : vector<1x384xf32> to vector<1x128xf32>
    %157 = vector.extract_strided_slice %155 {offsets = [0, 0], sizes = [1, 128], strides = [1, 1]} : vector<1x384xf32> to vector<1x128xf32>
    %158 = arith.addf %156, %157 : vector<1x128xf32>
    %cst_150 = arith.constant 5.000000e-01 : f32
    %159 = vector.broadcast %cst_150 : f32 to vector<1x128xf32>
    %160 = arith.mulf %159, %158 : vector<1x128xf32>
    %161 = math.tanh %160 : vector<1x128xf32>
    %cst_151 = arith.constant 5.000000e-01 : f32
    %162 = vector.broadcast %cst_151 : f32 to vector<1x128xf32>
    %163 = arith.mulf %162, %161 : vector<1x128xf32>
    %cst_152 = arith.constant 5.000000e-01 : f32
    %164 = vector.broadcast %cst_152 : f32 to vector<1x128xf32>
    %165 = arith.addf %163, %164 : vector<1x128xf32>
    %166 = vector.extract_strided_slice %154 {offsets = [0, 128], sizes = [1, 128], strides = [1, 1]} : vector<1x384xf32> to vector<1x128xf32>
    %167 = vector.extract_strided_slice %155 {offsets = [0, 128], sizes = [1, 128], strides = [1, 1]} : vector<1x384xf32> to vector<1x128xf32>
    %168 = arith.addf %166, %167 : vector<1x128xf32>
    %cst_153 = arith.constant 5.000000e-01 : f32
    %169 = vector.broadcast %cst_153 : f32 to vector<1x128xf32>
    %170 = arith.mulf %169, %168 : vector<1x128xf32>
    %171 = math.tanh %170 : vector<1x128xf32>
    %cst_154 = arith.constant 5.000000e-01 : f32
    %172 = vector.broadcast %cst_154 : f32 to vector<1x128xf32>
    %173 = arith.mulf %172, %171 : vector<1x128xf32>
    %cst_155 = arith.constant 5.000000e-01 : f32
    %174 = vector.broadcast %cst_155 : f32 to vector<1x128xf32>
    %175 = arith.addf %173, %174 : vector<1x128xf32>
    %176 = vector.extract_strided_slice %154 {offsets = [0, 256], sizes = [1, 128], strides = [1, 1]} : vector<1x384xf32> to vector<1x128xf32>
    %177 = vector.extract_strided_slice %155 {offsets = [0, 256], sizes = [1, 128], strides = [1, 1]} : vector<1x384xf32> to vector<1x128xf32>
    %178 = arith.mulf %165, %177 : vector<1x128xf32>
    %179 = arith.addf %176, %178 : vector<1x128xf32>
    %180 = math.tanh %179 : vector<1x128xf32>
    %cst_156 = arith.constant 1.000000e+00 : f32
    %181 = vector.broadcast %cst_156 : f32 to vector<1x128xf32>
    %182 = arith.subf %181, %175 : vector<1x128xf32>
    %183 = arith.mulf %182, %180 : vector<1x128xf32>
    %184 = arith.mulf %175, %146 : vector<1x128xf32>
    %185 = arith.addf %183, %184 : vector<1x128xf32>
    %186 = arith.truncf %185 : vector<1x128xf32> to vector<1x128xbf16>
    %c0_157 = arith.constant 0 : index
    %c0_158 = arith.constant 0 : index
    %187 = vector.load %arg13[%c0_157, %c0_158] : memref<128x384xbf16, #tpu.memory_space<vmem>>, vector<128x384xbf16>
    %cst_159 = arith.constant dense<0.000000e+00> : vector<1x384xf32>
    %188 = tpu.matmul %186, %187, %cst_159 {dimension_numbers = #tpu.dot_dimension_numbers<[1], [0], [0], [1], [0, 0, 1, 1], [], []>} : vector<1x128xbf16>, vector<128x384xbf16>, vector<1x384xf32> -> vector<1x384xf32>
    %c0_160 = arith.constant 0 : index
    %c0_161 = arith.constant 0 : index
    %189 = vector.load %arg14[%c0_160, %c0_161] : memref<1x384xf32, #tpu.memory_space<vmem>>, vector<1x384xf32>
    %190 = arith.addf %188, %189 : vector<1x384xf32>
    %191 = vector.extract_strided_slice %153 {offsets = [0, 384], sizes = [1, 384], strides = [1, 1]} : vector<1x768xf32> to vector<1x384xf32>
    %192 = vector.extract_strided_slice %190 {offsets = [0, 0], sizes = [1, 128], strides = [1, 1]} : vector<1x384xf32> to vector<1x128xf32>
    %193 = vector.extract_strided_slice %191 {offsets = [0, 0], sizes = [1, 128], strides = [1, 1]} : vector<1x384xf32> to vector<1x128xf32>
    %194 = arith.addf %192, %193 : vector<1x128xf32>
    %cst_162 = arith.constant 5.000000e-01 : f32
    %195 = vector.broadcast %cst_162 : f32 to vector<1x128xf32>
    %196 = arith.mulf %195, %194 : vector<1x128xf32>
    %197 = math.tanh %196 : vector<1x128xf32>
    %cst_163 = arith.constant 5.000000e-01 : f32
    %198 = vector.broadcast %cst_163 : f32 to vector<1x128xf32>
    %199 = arith.mulf %198, %197 : vector<1x128xf32>
    %cst_164 = arith.constant 5.000000e-01 : f32
    %200 = vector.broadcast %cst_164 : f32 to vector<1x128xf32>
    %201 = arith.addf %199, %200 : vector<1x128xf32>
    %202 = vector.extract_strided_slice %190 {offsets = [0, 128], sizes = [1, 128], strides = [1, 1]} : vector<1x384xf32> to vector<1x128xf32>
    %203 = vector.extract_strided_slice %191 {offsets = [0, 128], sizes = [1, 128], strides = [1, 1]} : vector<1x384xf32> to vector<1x128xf32>
    %204 = arith.addf %202, %203 : vector<1x128xf32>
    %cst_165 = arith.constant 5.000000e-01 : f32
    %205 = vector.broadcast %cst_165 : f32 to vector<1x128xf32>
    %206 = arith.mulf %205, %204 : vector<1x128xf32>
    %207 = math.tanh %206 : vector<1x128xf32>
    %cst_166 = arith.constant 5.000000e-01 : f32
    %208 = vector.broadcast %cst_166 : f32 to vector<1x128xf32>
    %209 = arith.mulf %208, %207 : vector<1x128xf32>
    %cst_167 = arith.constant 5.000000e-01 : f32
    %210 = vector.broadcast %cst_167 : f32 to vector<1x128xf32>
    %211 = arith.addf %209, %210 : vector<1x128xf32>
    %212 = vector.extract_strided_slice %190 {offsets = [0, 256], sizes = [1, 128], strides = [1, 1]} : vector<1x384xf32> to vector<1x128xf32>
    %213 = vector.extract_strided_slice %191 {offsets = [0, 256], sizes = [1, 128], strides = [1, 1]} : vector<1x384xf32> to vector<1x128xf32>
    %214 = arith.mulf %201, %213 : vector<1x128xf32>
    %215 = arith.addf %212, %214 : vector<1x128xf32>
    %216 = math.tanh %215 : vector<1x128xf32>
    %cst_168 = arith.constant 1.000000e+00 : f32
    %217 = vector.broadcast %cst_168 : f32 to vector<1x128xf32>
    %218 = arith.subf %217, %211 : vector<1x128xf32>
    %219 = arith.mulf %218, %216 : vector<1x128xf32>
    %220 = arith.mulf %211, %147 : vector<1x128xf32>
    %221 = arith.addf %219, %220 : vector<1x128xf32>
    %222 = tpu.concatenate %185, %221 in 1 : vector<1x128xf32>, vector<1x128xf32> -> vector<1x256xf32>
    %223 = arith.truncf %222 : vector<1x256xf32> to vector<1x256xbf16>
    %c0_169 = arith.constant 0 : index
    %c0_170 = arith.constant 0 : index
    %224 = vector.load %arg11[%c0_169, %c0_170] : memref<256x768xbf16, #tpu.memory_space<vmem>>, vector<256x768xbf16>
    %cst_171 = arith.constant dense<0.000000e+00> : vector<1x768xf32>
    %225 = tpu.matmul %223, %224, %cst_171 {dimension_numbers = #tpu.dot_dimension_numbers<[1], [0], [0], [1], [0, 0, 1, 1], [], []>} : vector<1x256xbf16>, vector<256x768xbf16>, vector<1x768xf32> -> vector<1x768xf32>
    %c0_172 = arith.constant 0 : index
    %c0_173 = arith.constant 0 : index
    %226 = vector.load %arg12[%c0_172, %c0_173] : memref<1x768xf32, #tpu.memory_space<vmem>>, vector<1x768xf32>
    %227 = arith.addf %225, %226 : vector<1x768xf32>
    %c1_174 = arith.constant 1 : index
    %c0_175 = arith.constant 0 : index
    %228 = vector.load %arg25[%c1_174, %c0_175] : memref<8x384xf32, #tpu.memory_space<vmem>>, vector<1x384xf32>
    %229 = vector.extract_strided_slice %227 {offsets = [0, 0], sizes = [1, 384], strides = [1, 1]} : vector<1x768xf32> to vector<1x384xf32>
    %230 = vector.extract_strided_slice %228 {offsets = [0, 0], sizes = [1, 128], strides = [1, 1]} : vector<1x384xf32> to vector<1x128xf32>
    %231 = vector.extract_strided_slice %229 {offsets = [0, 0], sizes = [1, 128], strides = [1, 1]} : vector<1x384xf32> to vector<1x128xf32>
    %232 = arith.addf %230, %231 : vector<1x128xf32>
    %cst_176 = arith.constant 5.000000e-01 : f32
    %233 = vector.broadcast %cst_176 : f32 to vector<1x128xf32>
    %234 = arith.mulf %233, %232 : vector<1x128xf32>
    %235 = math.tanh %234 : vector<1x128xf32>
    %cst_177 = arith.constant 5.000000e-01 : f32
    %236 = vector.broadcast %cst_177 : f32 to vector<1x128xf32>
    %237 = arith.mulf %236, %235 : vector<1x128xf32>
    %cst_178 = arith.constant 5.000000e-01 : f32
    %238 = vector.broadcast %cst_178 : f32 to vector<1x128xf32>
    %239 = arith.addf %237, %238 : vector<1x128xf32>
    %240 = vector.extract_strided_slice %228 {offsets = [0, 128], sizes = [1, 128], strides = [1, 1]} : vector<1x384xf32> to vector<1x128xf32>
    %241 = vector.extract_strided_slice %229 {offsets = [0, 128], sizes = [1, 128], strides = [1, 1]} : vector<1x384xf32> to vector<1x128xf32>
    %242 = arith.addf %240, %241 : vector<1x128xf32>
    %cst_179 = arith.constant 5.000000e-01 : f32
    %243 = vector.broadcast %cst_179 : f32 to vector<1x128xf32>
    %244 = arith.mulf %243, %242 : vector<1x128xf32>
    %245 = math.tanh %244 : vector<1x128xf32>
    %cst_180 = arith.constant 5.000000e-01 : f32
    %246 = vector.broadcast %cst_180 : f32 to vector<1x128xf32>
    %247 = arith.mulf %246, %245 : vector<1x128xf32>
    %cst_181 = arith.constant 5.000000e-01 : f32
    %248 = vector.broadcast %cst_181 : f32 to vector<1x128xf32>
    %249 = arith.addf %247, %248 : vector<1x128xf32>
    %250 = vector.extract_strided_slice %228 {offsets = [0, 256], sizes = [1, 128], strides = [1, 1]} : vector<1x384xf32> to vector<1x128xf32>
    %251 = vector.extract_strided_slice %229 {offsets = [0, 256], sizes = [1, 128], strides = [1, 1]} : vector<1x384xf32> to vector<1x128xf32>
    %252 = arith.mulf %239, %251 : vector<1x128xf32>
    %253 = arith.addf %250, %252 : vector<1x128xf32>
    %254 = math.tanh %253 : vector<1x128xf32>
    %cst_182 = arith.constant 1.000000e+00 : f32
    %255 = vector.broadcast %cst_182 : f32 to vector<1x128xf32>
    %256 = arith.subf %255, %249 : vector<1x128xf32>
    %257 = arith.mulf %256, %254 : vector<1x128xf32>
    %258 = arith.mulf %249, %185 : vector<1x128xf32>
    %259 = arith.addf %257, %258 : vector<1x128xf32>
    %260 = arith.truncf %259 : vector<1x128xf32> to vector<1x128xbf16>
    %c0_183 = arith.constant 0 : index
    %c0_184 = arith.constant 0 : index
    %261 = vector.load %arg13[%c0_183, %c0_184] : memref<128x384xbf16, #tpu.memory_space<vmem>>, vector<128x384xbf16>
    %cst_185 = arith.constant dense<0.000000e+00> : vector<1x384xf32>
    %262 = tpu.matmul %260, %261, %cst_185 {dimension_numbers = #tpu.dot_dimension_numbers<[1], [0], [0], [1], [0, 0, 1, 1], [], []>} : vector<1x128xbf16>, vector<128x384xbf16>, vector<1x384xf32> -> vector<1x384xf32>
    %c0_186 = arith.constant 0 : index
    %c0_187 = arith.constant 0 : index
    %263 = vector.load %arg14[%c0_186, %c0_187] : memref<1x384xf32, #tpu.memory_space<vmem>>, vector<1x384xf32>
    %264 = arith.addf %262, %263 : vector<1x384xf32>
    %265 = vector.extract_strided_slice %227 {offsets = [0, 384], sizes = [1, 384], strides = [1, 1]} : vector<1x768xf32> to vector<1x384xf32>
    %266 = vector.extract_strided_slice %264 {offsets = [0, 0], sizes = [1, 128], strides = [1, 1]} : vector<1x384xf32> to vector<1x128xf32>
    %267 = vector.extract_strided_slice %265 {offsets = [0, 0], sizes = [1, 128], strides = [1, 1]} : vector<1x384xf32> to vector<1x128xf32>
    %268 = arith.addf %266, %267 : vector<1x128xf32>
    %cst_188 = arith.constant 5.000000e-01 : f32
    %269 = vector.broadcast %cst_188 : f32 to vector<1x128xf32>
    %270 = arith.mulf %269, %268 : vector<1x128xf32>
    %271 = math.tanh %270 : vector<1x128xf32>
    %cst_189 = arith.constant 5.000000e-01 : f32
    %272 = vector.broadcast %cst_189 : f32 to vector<1x128xf32>
    %273 = arith.mulf %272, %271 : vector<1x128xf32>
    %cst_190 = arith.constant 5.000000e-01 : f32
    %274 = vector.broadcast %cst_190 : f32 to vector<1x128xf32>
    %275 = arith.addf %273, %274 : vector<1x128xf32>
    %276 = vector.extract_strided_slice %264 {offsets = [0, 128], sizes = [1, 128], strides = [1, 1]} : vector<1x384xf32> to vector<1x128xf32>
    %277 = vector.extract_strided_slice %265 {offsets = [0, 128], sizes = [1, 128], strides = [1, 1]} : vector<1x384xf32> to vector<1x128xf32>
    %278 = arith.addf %276, %277 : vector<1x128xf32>
    %cst_191 = arith.constant 5.000000e-01 : f32
    %279 = vector.broadcast %cst_191 : f32 to vector<1x128xf32>
    %280 = arith.mulf %279, %278 : vector<1x128xf32>
    %281 = math.tanh %280 : vector<1x128xf32>
    %cst_192 = arith.constant 5.000000e-01 : f32
    %282 = vector.broadcast %cst_192 : f32 to vector<1x128xf32>
    %283 = arith.mulf %282, %281 : vector<1x128xf32>
    %cst_193 = arith.constant 5.000000e-01 : f32
    %284 = vector.broadcast %cst_193 : f32 to vector<1x128xf32>
    %285 = arith.addf %283, %284 : vector<1x128xf32>
    %286 = vector.extract_strided_slice %264 {offsets = [0, 256], sizes = [1, 128], strides = [1, 1]} : vector<1x384xf32> to vector<1x128xf32>
    %287 = vector.extract_strided_slice %265 {offsets = [0, 256], sizes = [1, 128], strides = [1, 1]} : vector<1x384xf32> to vector<1x128xf32>
    %288 = arith.mulf %275, %287 : vector<1x128xf32>
    %289 = arith.addf %286, %288 : vector<1x128xf32>
    %290 = math.tanh %289 : vector<1x128xf32>
    %cst_194 = arith.constant 1.000000e+00 : f32
    %291 = vector.broadcast %cst_194 : f32 to vector<1x128xf32>
    %292 = arith.subf %291, %285 : vector<1x128xf32>
    %293 = arith.mulf %292, %290 : vector<1x128xf32>
    %294 = arith.mulf %285, %221 : vector<1x128xf32>
    %295 = arith.addf %293, %294 : vector<1x128xf32>
    %296 = tpu.concatenate %259, %295 in 1 : vector<1x128xf32>, vector<1x128xf32> -> vector<1x256xf32>
    %297 = arith.truncf %296 : vector<1x256xf32> to vector<1x256xbf16>
    %c0_195 = arith.constant 0 : index
    %c0_196 = arith.constant 0 : index
    %298 = vector.load %arg11[%c0_195, %c0_196] : memref<256x768xbf16, #tpu.memory_space<vmem>>, vector<256x768xbf16>
    %cst_197 = arith.constant dense<0.000000e+00> : vector<1x768xf32>
    %299 = tpu.matmul %297, %298, %cst_197 {dimension_numbers = #tpu.dot_dimension_numbers<[1], [0], [0], [1], [0, 0, 1, 1], [], []>} : vector<1x256xbf16>, vector<256x768xbf16>, vector<1x768xf32> -> vector<1x768xf32>
    %c0_198 = arith.constant 0 : index
    %c0_199 = arith.constant 0 : index
    %300 = vector.load %arg12[%c0_198, %c0_199] : memref<1x768xf32, #tpu.memory_space<vmem>>, vector<1x768xf32>
    %301 = arith.addf %299, %300 : vector<1x768xf32>
    %c2_200 = arith.constant 2 : index
    %c0_201 = arith.constant 0 : index
    %302 = vector.load %arg25[%c2_200, %c0_201] : memref<8x384xf32, #tpu.memory_space<vmem>>, vector<1x384xf32>
    %303 = vector.extract_strided_slice %301 {offsets = [0, 0], sizes = [1, 384], strides = [1, 1]} : vector<1x768xf32> to vector<1x384xf32>
    %304 = vector.extract_strided_slice %302 {offsets = [0, 0], sizes = [1, 128], strides = [1, 1]} : vector<1x384xf32> to vector<1x128xf32>
    %305 = vector.extract_strided_slice %303 {offsets = [0, 0], sizes = [1, 128], strides = [1, 1]} : vector<1x384xf32> to vector<1x128xf32>
    %306 = arith.addf %304, %305 : vector<1x128xf32>
    %cst_202 = arith.constant 5.000000e-01 : f32
    %307 = vector.broadcast %cst_202 : f32 to vector<1x128xf32>
    %308 = arith.mulf %307, %306 : vector<1x128xf32>
    %309 = math.tanh %308 : vector<1x128xf32>
    %cst_203 = arith.constant 5.000000e-01 : f32
    %310 = vector.broadcast %cst_203 : f32 to vector<1x128xf32>
    %311 = arith.mulf %310, %309 : vector<1x128xf32>
    %cst_204 = arith.constant 5.000000e-01 : f32
    %312 = vector.broadcast %cst_204 : f32 to vector<1x128xf32>
    %313 = arith.addf %311, %312 : vector<1x128xf32>
    %314 = vector.extract_strided_slice %302 {offsets = [0, 128], sizes = [1, 128], strides = [1, 1]} : vector<1x384xf32> to vector<1x128xf32>
    %315 = vector.extract_strided_slice %303 {offsets = [0, 128], sizes = [1, 128], strides = [1, 1]} : vector<1x384xf32> to vector<1x128xf32>
    %316 = arith.addf %314, %315 : vector<1x128xf32>
    %cst_205 = arith.constant 5.000000e-01 : f32
    %317 = vector.broadcast %cst_205 : f32 to vector<1x128xf32>
    %318 = arith.mulf %317, %316 : vector<1x128xf32>
    %319 = math.tanh %318 : vector<1x128xf32>
    %cst_206 = arith.constant 5.000000e-01 : f32
    %320 = vector.broadcast %cst_206 : f32 to vector<1x128xf32>
    %321 = arith.mulf %320, %319 : vector<1x128xf32>
    %cst_207 = arith.constant 5.000000e-01 : f32
    %322 = vector.broadcast %cst_207 : f32 to vector<1x128xf32>
    %323 = arith.addf %321, %322 : vector<1x128xf32>
    %324 = vector.extract_strided_slice %302 {offsets = [0, 256], sizes = [1, 128], strides = [1, 1]} : vector<1x384xf32> to vector<1x128xf32>
    %325 = vector.extract_strided_slice %303 {offsets = [0, 256], sizes = [1, 128], strides = [1, 1]} : vector<1x384xf32> to vector<1x128xf32>
    %326 = arith.mulf %313, %325 : vector<1x128xf32>
    %327 = arith.addf %324, %326 : vector<1x128xf32>
    %328 = math.tanh %327 : vector<1x128xf32>
    %cst_208 = arith.constant 1.000000e+00 : f32
    %329 = vector.broadcast %cst_208 : f32 to vector<1x128xf32>
    %330 = arith.subf %329, %323 : vector<1x128xf32>
    %331 = arith.mulf %330, %328 : vector<1x128xf32>
    %332 = arith.mulf %323, %259 : vector<1x128xf32>
    %333 = arith.addf %331, %332 : vector<1x128xf32>
    %334 = arith.truncf %333 : vector<1x128xf32> to vector<1x128xbf16>
    %c0_209 = arith.constant 0 : index
    %c0_210 = arith.constant 0 : index
    %335 = vector.load %arg13[%c0_209, %c0_210] : memref<128x384xbf16, #tpu.memory_space<vmem>>, vector<128x384xbf16>
    %cst_211 = arith.constant dense<0.000000e+00> : vector<1x384xf32>
    %336 = tpu.matmul %334, %335, %cst_211 {dimension_numbers = #tpu.dot_dimension_numbers<[1], [0], [0], [1], [0, 0, 1, 1], [], []>} : vector<1x128xbf16>, vector<128x384xbf16>, vector<1x384xf32> -> vector<1x384xf32>
    %c0_212 = arith.constant 0 : index
    %c0_213 = arith.constant 0 : index
    %337 = vector.load %arg14[%c0_212, %c0_213] : memref<1x384xf32, #tpu.memory_space<vmem>>, vector<1x384xf32>
    %338 = arith.addf %336, %337 : vector<1x384xf32>
    %339 = vector.extract_strided_slice %301 {offsets = [0, 384], sizes = [1, 384], strides = [1, 1]} : vector<1x768xf32> to vector<1x384xf32>
    %340 = vector.extract_strided_slice %338 {offsets = [0, 0], sizes = [1, 128], strides = [1, 1]} : vector<1x384xf32> to vector<1x128xf32>
    %341 = vector.extract_strided_slice %339 {offsets = [0, 0], sizes = [1, 128], strides = [1, 1]} : vector<1x384xf32> to vector<1x128xf32>
    %342 = arith.addf %340, %341 : vector<1x128xf32>
    %cst_214 = arith.constant 5.000000e-01 : f32
    %343 = vector.broadcast %cst_214 : f32 to vector<1x128xf32>
    %344 = arith.mulf %343, %342 : vector<1x128xf32>
    %345 = math.tanh %344 : vector<1x128xf32>
    %cst_215 = arith.constant 5.000000e-01 : f32
    %346 = vector.broadcast %cst_215 : f32 to vector<1x128xf32>
    %347 = arith.mulf %346, %345 : vector<1x128xf32>
    %cst_216 = arith.constant 5.000000e-01 : f32
    %348 = vector.broadcast %cst_216 : f32 to vector<1x128xf32>
    %349 = arith.addf %347, %348 : vector<1x128xf32>
    %350 = vector.extract_strided_slice %338 {offsets = [0, 128], sizes = [1, 128], strides = [1, 1]} : vector<1x384xf32> to vector<1x128xf32>
    %351 = vector.extract_strided_slice %339 {offsets = [0, 128], sizes = [1, 128], strides = [1, 1]} : vector<1x384xf32> to vector<1x128xf32>
    %352 = arith.addf %350, %351 : vector<1x128xf32>
    %cst_217 = arith.constant 5.000000e-01 : f32
    %353 = vector.broadcast %cst_217 : f32 to vector<1x128xf32>
    %354 = arith.mulf %353, %352 : vector<1x128xf32>
    %355 = math.tanh %354 : vector<1x128xf32>
    %cst_218 = arith.constant 5.000000e-01 : f32
    %356 = vector.broadcast %cst_218 : f32 to vector<1x128xf32>
    %357 = arith.mulf %356, %355 : vector<1x128xf32>
    %cst_219 = arith.constant 5.000000e-01 : f32
    %358 = vector.broadcast %cst_219 : f32 to vector<1x128xf32>
    %359 = arith.addf %357, %358 : vector<1x128xf32>
    %360 = vector.extract_strided_slice %338 {offsets = [0, 256], sizes = [1, 128], strides = [1, 1]} : vector<1x384xf32> to vector<1x128xf32>
    %361 = vector.extract_strided_slice %339 {offsets = [0, 256], sizes = [1, 128], strides = [1, 1]} : vector<1x384xf32> to vector<1x128xf32>
    %362 = arith.mulf %349, %361 : vector<1x128xf32>
    %363 = arith.addf %360, %362 : vector<1x128xf32>
    %364 = math.tanh %363 : vector<1x128xf32>
    %cst_220 = arith.constant 1.000000e+00 : f32
    %365 = vector.broadcast %cst_220 : f32 to vector<1x128xf32>
    %366 = arith.subf %365, %359 : vector<1x128xf32>
    %367 = arith.mulf %366, %364 : vector<1x128xf32>
    %368 = arith.mulf %359, %295 : vector<1x128xf32>
    %369 = arith.addf %367, %368 : vector<1x128xf32>
    %370 = tpu.concatenate %333, %369 in 1 : vector<1x128xf32>, vector<1x128xf32> -> vector<1x256xf32>
    %371 = arith.truncf %370 : vector<1x256xf32> to vector<1x256xbf16>
    %c0_221 = arith.constant 0 : index
    %c0_222 = arith.constant 0 : index
    %372 = vector.load %arg11[%c0_221, %c0_222] : memref<256x768xbf16, #tpu.memory_space<vmem>>, vector<256x768xbf16>
    %cst_223 = arith.constant dense<0.000000e+00> : vector<1x768xf32>
    %373 = tpu.matmul %371, %372, %cst_223 {dimension_numbers = #tpu.dot_dimension_numbers<[1], [0], [0], [1], [0, 0, 1, 1], [], []>} : vector<1x256xbf16>, vector<256x768xbf16>, vector<1x768xf32> -> vector<1x768xf32>
    %c0_224 = arith.constant 0 : index
    %c0_225 = arith.constant 0 : index
    %374 = vector.load %arg12[%c0_224, %c0_225] : memref<1x768xf32, #tpu.memory_space<vmem>>, vector<1x768xf32>
    %375 = arith.addf %373, %374 : vector<1x768xf32>
    %c3_226 = arith.constant 3 : index
    %c0_227 = arith.constant 0 : index
    %376 = vector.load %arg25[%c3_226, %c0_227] : memref<8x384xf32, #tpu.memory_space<vmem>>, vector<1x384xf32>
    %377 = vector.extract_strided_slice %375 {offsets = [0, 0], sizes = [1, 384], strides = [1, 1]} : vector<1x768xf32> to vector<1x384xf32>
    %378 = vector.extract_strided_slice %376 {offsets = [0, 0], sizes = [1, 128], strides = [1, 1]} : vector<1x384xf32> to vector<1x128xf32>
    %379 = vector.extract_strided_slice %377 {offsets = [0, 0], sizes = [1, 128], strides = [1, 1]} : vector<1x384xf32> to vector<1x128xf32>
    %380 = arith.addf %378, %379 : vector<1x128xf32>
    %cst_228 = arith.constant 5.000000e-01 : f32
    %381 = vector.broadcast %cst_228 : f32 to vector<1x128xf32>
    %382 = arith.mulf %381, %380 : vector<1x128xf32>
    %383 = math.tanh %382 : vector<1x128xf32>
    %cst_229 = arith.constant 5.000000e-01 : f32
    %384 = vector.broadcast %cst_229 : f32 to vector<1x128xf32>
    %385 = arith.mulf %384, %383 : vector<1x128xf32>
    %cst_230 = arith.constant 5.000000e-01 : f32
    %386 = vector.broadcast %cst_230 : f32 to vector<1x128xf32>
    %387 = arith.addf %385, %386 : vector<1x128xf32>
    %388 = vector.extract_strided_slice %376 {offsets = [0, 128], sizes = [1, 128], strides = [1, 1]} : vector<1x384xf32> to vector<1x128xf32>
    %389 = vector.extract_strided_slice %377 {offsets = [0, 128], sizes = [1, 128], strides = [1, 1]} : vector<1x384xf32> to vector<1x128xf32>
    %390 = arith.addf %388, %389 : vector<1x128xf32>
    %cst_231 = arith.constant 5.000000e-01 : f32
    %391 = vector.broadcast %cst_231 : f32 to vector<1x128xf32>
    %392 = arith.mulf %391, %390 : vector<1x128xf32>
    %393 = math.tanh %392 : vector<1x128xf32>
    %cst_232 = arith.constant 5.000000e-01 : f32
    %394 = vector.broadcast %cst_232 : f32 to vector<1x128xf32>
    %395 = arith.mulf %394, %393 : vector<1x128xf32>
    %cst_233 = arith.constant 5.000000e-01 : f32
    %396 = vector.broadcast %cst_233 : f32 to vector<1x128xf32>
    %397 = arith.addf %395, %396 : vector<1x128xf32>
    %398 = vector.extract_strided_slice %376 {offsets = [0, 256], sizes = [1, 128], strides = [1, 1]} : vector<1x384xf32> to vector<1x128xf32>
    %399 = vector.extract_strided_slice %377 {offsets = [0, 256], sizes = [1, 128], strides = [1, 1]} : vector<1x384xf32> to vector<1x128xf32>
    %400 = arith.mulf %387, %399 : vector<1x128xf32>
    %401 = arith.addf %398, %400 : vector<1x128xf32>
    %402 = math.tanh %401 : vector<1x128xf32>
    %cst_234 = arith.constant 1.000000e+00 : f32
    %403 = vector.broadcast %cst_234 : f32 to vector<1x128xf32>
    %404 = arith.subf %403, %397 : vector<1x128xf32>
    %405 = arith.mulf %404, %402 : vector<1x128xf32>
    %406 = arith.mulf %397, %333 : vector<1x128xf32>
    %407 = arith.addf %405, %406 : vector<1x128xf32>
    %408 = arith.truncf %407 : vector<1x128xf32> to vector<1x128xbf16>
    %c0_235 = arith.constant 0 : index
    %c0_236 = arith.constant 0 : index
    %409 = vector.load %arg13[%c0_235, %c0_236] : memref<128x384xbf16, #tpu.memory_space<vmem>>, vector<128x384xbf16>
    %cst_237 = arith.constant dense<0.000000e+00> : vector<1x384xf32>
    %410 = tpu.matmul %408, %409, %cst_237 {dimension_numbers = #tpu.dot_dimension_numbers<[1], [0], [0], [1], [0, 0, 1, 1], [], []>} : vector<1x128xbf16>, vector<128x384xbf16>, vector<1x384xf32> -> vector<1x384xf32>
    %c0_238 = arith.constant 0 : index
    %c0_239 = arith.constant 0 : index
    %411 = vector.load %arg14[%c0_238, %c0_239] : memref<1x384xf32, #tpu.memory_space<vmem>>, vector<1x384xf32>
    %412 = arith.addf %410, %411 : vector<1x384xf32>
    %413 = vector.extract_strided_slice %375 {offsets = [0, 384], sizes = [1, 384], strides = [1, 1]} : vector<1x768xf32> to vector<1x384xf32>
    %414 = vector.extract_strided_slice %412 {offsets = [0, 0], sizes = [1, 128], strides = [1, 1]} : vector<1x384xf32> to vector<1x128xf32>
    %415 = vector.extract_strided_slice %413 {offsets = [0, 0], sizes = [1, 128], strides = [1, 1]} : vector<1x384xf32> to vector<1x128xf32>
    %416 = arith.addf %414, %415 : vector<1x128xf32>
    %cst_240 = arith.constant 5.000000e-01 : f32
    %417 = vector.broadcast %cst_240 : f32 to vector<1x128xf32>
    %418 = arith.mulf %417, %416 : vector<1x128xf32>
    %419 = math.tanh %418 : vector<1x128xf32>
    %cst_241 = arith.constant 5.000000e-01 : f32
    %420 = vector.broadcast %cst_241 : f32 to vector<1x128xf32>
    %421 = arith.mulf %420, %419 : vector<1x128xf32>
    %cst_242 = arith.constant 5.000000e-01 : f32
    %422 = vector.broadcast %cst_242 : f32 to vector<1x128xf32>
    %423 = arith.addf %421, %422 : vector<1x128xf32>
    %424 = vector.extract_strided_slice %412 {offsets = [0, 128], sizes = [1, 128], strides = [1, 1]} : vector<1x384xf32> to vector<1x128xf32>
    %425 = vector.extract_strided_slice %413 {offsets = [0, 128], sizes = [1, 128], strides = [1, 1]} : vector<1x384xf32> to vector<1x128xf32>
    %426 = arith.addf %424, %425 : vector<1x128xf32>
    %cst_243 = arith.constant 5.000000e-01 : f32
    %427 = vector.broadcast %cst_243 : f32 to vector<1x128xf32>
    %428 = arith.mulf %427, %426 : vector<1x128xf32>
    %429 = math.tanh %428 : vector<1x128xf32>
    %cst_244 = arith.constant 5.000000e-01 : f32
    %430 = vector.broadcast %cst_244 : f32 to vector<1x128xf32>
    %431 = arith.mulf %430, %429 : vector<1x128xf32>
    %cst_245 = arith.constant 5.000000e-01 : f32
    %432 = vector.broadcast %cst_245 : f32 to vector<1x128xf32>
    %433 = arith.addf %431, %432 : vector<1x128xf32>
    %434 = vector.extract_strided_slice %412 {offsets = [0, 256], sizes = [1, 128], strides = [1, 1]} : vector<1x384xf32> to vector<1x128xf32>
    %435 = vector.extract_strided_slice %413 {offsets = [0, 256], sizes = [1, 128], strides = [1, 1]} : vector<1x384xf32> to vector<1x128xf32>
    %436 = arith.mulf %423, %435 : vector<1x128xf32>
    %437 = arith.addf %434, %436 : vector<1x128xf32>
    %438 = math.tanh %437 : vector<1x128xf32>
    %cst_246 = arith.constant 1.000000e+00 : f32
    %439 = vector.broadcast %cst_246 : f32 to vector<1x128xf32>
    %440 = arith.subf %439, %433 : vector<1x128xf32>
    %441 = arith.mulf %440, %438 : vector<1x128xf32>
    %442 = arith.mulf %433, %369 : vector<1x128xf32>
    %443 = arith.addf %441, %442 : vector<1x128xf32>
    %444 = tpu.concatenate %407, %443 in 1 : vector<1x128xf32>, vector<1x128xf32> -> vector<1x256xf32>
    %445 = arith.truncf %444 : vector<1x256xf32> to vector<1x256xbf16>
    %c0_247 = arith.constant 0 : index
    %c0_248 = arith.constant 0 : index
    %446 = vector.load %arg11[%c0_247, %c0_248] : memref<256x768xbf16, #tpu.memory_space<vmem>>, vector<256x768xbf16>
    %cst_249 = arith.constant dense<0.000000e+00> : vector<1x768xf32>
    %447 = tpu.matmul %445, %446, %cst_249 {dimension_numbers = #tpu.dot_dimension_numbers<[1], [0], [0], [1], [0, 0, 1, 1], [], []>} : vector<1x256xbf16>, vector<256x768xbf16>, vector<1x768xf32> -> vector<1x768xf32>
    %c0_250 = arith.constant 0 : index
    %c0_251 = arith.constant 0 : index
    %448 = vector.load %arg12[%c0_250, %c0_251] : memref<1x768xf32, #tpu.memory_space<vmem>>, vector<1x768xf32>
    %449 = arith.addf %447, %448 : vector<1x768xf32>
    %c4_252 = arith.constant 4 : index
    %c0_253 = arith.constant 0 : index
    %450 = vector.load %arg25[%c4_252, %c0_253] : memref<8x384xf32, #tpu.memory_space<vmem>>, vector<1x384xf32>
    %451 = vector.extract_strided_slice %449 {offsets = [0, 0], sizes = [1, 384], strides = [1, 1]} : vector<1x768xf32> to vector<1x384xf32>
    %452 = vector.extract_strided_slice %450 {offsets = [0, 0], sizes = [1, 128], strides = [1, 1]} : vector<1x384xf32> to vector<1x128xf32>
    %453 = vector.extract_strided_slice %451 {offsets = [0, 0], sizes = [1, 128], strides = [1, 1]} : vector<1x384xf32> to vector<1x128xf32>
    %454 = arith.addf %452, %453 : vector<1x128xf32>
    %cst_254 = arith.constant 5.000000e-01 : f32
    %455 = vector.broadcast %cst_254 : f32 to vector<1x128xf32>
    %456 = arith.mulf %455, %454 : vector<1x128xf32>
    %457 = math.tanh %456 : vector<1x128xf32>
    %cst_255 = arith.constant 5.000000e-01 : f32
    %458 = vector.broadcast %cst_255 : f32 to vector<1x128xf32>
    %459 = arith.mulf %458, %457 : vector<1x128xf32>
    %cst_256 = arith.constant 5.000000e-01 : f32
    %460 = vector.broadcast %cst_256 : f32 to vector<1x128xf32>
    %461 = arith.addf %459, %460 : vector<1x128xf32>
    %462 = vector.extract_strided_slice %450 {offsets = [0, 128], sizes = [1, 128], strides = [1, 1]} : vector<1x384xf32> to vector<1x128xf32>
    %463 = vector.extract_strided_slice %451 {offsets = [0, 128], sizes = [1, 128], strides = [1, 1]} : vector<1x384xf32> to vector<1x128xf32>
    %464 = arith.addf %462, %463 : vector<1x128xf32>
    %cst_257 = arith.constant 5.000000e-01 : f32
    %465 = vector.broadcast %cst_257 : f32 to vector<1x128xf32>
    %466 = arith.mulf %465, %464 : vector<1x128xf32>
    %467 = math.tanh %466 : vector<1x128xf32>
    %cst_258 = arith.constant 5.000000e-01 : f32
    %468 = vector.broadcast %cst_258 : f32 to vector<1x128xf32>
    %469 = arith.mulf %468, %467 : vector<1x128xf32>
    %cst_259 = arith.constant 5.000000e-01 : f32
    %470 = vector.broadcast %cst_259 : f32 to vector<1x128xf32>
    %471 = arith.addf %469, %470 : vector<1x128xf32>
    %472 = vector.extract_strided_slice %450 {offsets = [0, 256], sizes = [1, 128], strides = [1, 1]} : vector<1x384xf32> to vector<1x128xf32>
    %473 = vector.extract_strided_slice %451 {offsets = [0, 256], sizes = [1, 128], strides = [1, 1]} : vector<1x384xf32> to vector<1x128xf32>
    %474 = arith.mulf %461, %473 : vector<1x128xf32>
    %475 = arith.addf %472, %474 : vector<1x128xf32>
    %476 = math.tanh %475 : vector<1x128xf32>
    %cst_260 = arith.constant 1.000000e+00 : f32
    %477 = vector.broadcast %cst_260 : f32 to vector<1x128xf32>
    %478 = arith.subf %477, %471 : vector<1x128xf32>
    %479 = arith.mulf %478, %476 : vector<1x128xf32>
    %480 = arith.mulf %471, %407 : vector<1x128xf32>
    %481 = arith.addf %479, %480 : vector<1x128xf32>
    %482 = arith.truncf %481 : vector<1x128xf32> to vector<1x128xbf16>
    %c0_261 = arith.constant 0 : index
    %c0_262 = arith.constant 0 : index
    %483 = vector.load %arg13[%c0_261, %c0_262] : memref<128x384xbf16, #tpu.memory_space<vmem>>, vector<128x384xbf16>
    %cst_263 = arith.constant dense<0.000000e+00> : vector<1x384xf32>
    %484 = tpu.matmul %482, %483, %cst_263 {dimension_numbers = #tpu.dot_dimension_numbers<[1], [0], [0], [1], [0, 0, 1, 1], [], []>} : vector<1x128xbf16>, vector<128x384xbf16>, vector<1x384xf32> -> vector<1x384xf32>
    %c0_264 = arith.constant 0 : index
    %c0_265 = arith.constant 0 : index
    %485 = vector.load %arg14[%c0_264, %c0_265] : memref<1x384xf32, #tpu.memory_space<vmem>>, vector<1x384xf32>
    %486 = arith.addf %484, %485 : vector<1x384xf32>
    %487 = vector.extract_strided_slice %449 {offsets = [0, 384], sizes = [1, 384], strides = [1, 1]} : vector<1x768xf32> to vector<1x384xf32>
    %488 = vector.extract_strided_slice %486 {offsets = [0, 0], sizes = [1, 128], strides = [1, 1]} : vector<1x384xf32> to vector<1x128xf32>
    %489 = vector.extract_strided_slice %487 {offsets = [0, 0], sizes = [1, 128], strides = [1, 1]} : vector<1x384xf32> to vector<1x128xf32>
    %490 = arith.addf %488, %489 : vector<1x128xf32>
    %cst_266 = arith.constant 5.000000e-01 : f32
    %491 = vector.broadcast %cst_266 : f32 to vector<1x128xf32>
    %492 = arith.mulf %491, %490 : vector<1x128xf32>
    %493 = math.tanh %492 : vector<1x128xf32>
    %cst_267 = arith.constant 5.000000e-01 : f32
    %494 = vector.broadcast %cst_267 : f32 to vector<1x128xf32>
    %495 = arith.mulf %494, %493 : vector<1x128xf32>
    %cst_268 = arith.constant 5.000000e-01 : f32
    %496 = vector.broadcast %cst_268 : f32 to vector<1x128xf32>
    %497 = arith.addf %495, %496 : vector<1x128xf32>
    %498 = vector.extract_strided_slice %486 {offsets = [0, 128], sizes = [1, 128], strides = [1, 1]} : vector<1x384xf32> to vector<1x128xf32>
    %499 = vector.extract_strided_slice %487 {offsets = [0, 128], sizes = [1, 128], strides = [1, 1]} : vector<1x384xf32> to vector<1x128xf32>
    %500 = arith.addf %498, %499 : vector<1x128xf32>
    %cst_269 = arith.constant 5.000000e-01 : f32
    %501 = vector.broadcast %cst_269 : f32 to vector<1x128xf32>
    %502 = arith.mulf %501, %500 : vector<1x128xf32>
    %503 = math.tanh %502 : vector<1x128xf32>
    %cst_270 = arith.constant 5.000000e-01 : f32
    %504 = vector.broadcast %cst_270 : f32 to vector<1x128xf32>
    %505 = arith.mulf %504, %503 : vector<1x128xf32>
    %cst_271 = arith.constant 5.000000e-01 : f32
    %506 = vector.broadcast %cst_271 : f32 to vector<1x128xf32>
    %507 = arith.addf %505, %506 : vector<1x128xf32>
    %508 = vector.extract_strided_slice %486 {offsets = [0, 256], sizes = [1, 128], strides = [1, 1]} : vector<1x384xf32> to vector<1x128xf32>
    %509 = vector.extract_strided_slice %487 {offsets = [0, 256], sizes = [1, 128], strides = [1, 1]} : vector<1x384xf32> to vector<1x128xf32>
    %510 = arith.mulf %497, %509 : vector<1x128xf32>
    %511 = arith.addf %508, %510 : vector<1x128xf32>
    %512 = math.tanh %511 : vector<1x128xf32>
    %cst_272 = arith.constant 1.000000e+00 : f32
    %513 = vector.broadcast %cst_272 : f32 to vector<1x128xf32>
    %514 = arith.subf %513, %507 : vector<1x128xf32>
    %515 = arith.mulf %514, %512 : vector<1x128xf32>
    %516 = arith.mulf %507, %443 : vector<1x128xf32>
    %517 = arith.addf %515, %516 : vector<1x128xf32>
    %518 = tpu.concatenate %481, %517 in 1 : vector<1x128xf32>, vector<1x128xf32> -> vector<1x256xf32>
    %519 = arith.truncf %518 : vector<1x256xf32> to vector<1x256xbf16>
    %c0_273 = arith.constant 0 : index
    %c0_274 = arith.constant 0 : index
    %520 = vector.load %arg11[%c0_273, %c0_274] : memref<256x768xbf16, #tpu.memory_space<vmem>>, vector<256x768xbf16>
    %cst_275 = arith.constant dense<0.000000e+00> : vector<1x768xf32>
    %521 = tpu.matmul %519, %520, %cst_275 {dimension_numbers = #tpu.dot_dimension_numbers<[1], [0], [0], [1], [0, 0, 1, 1], [], []>} : vector<1x256xbf16>, vector<256x768xbf16>, vector<1x768xf32> -> vector<1x768xf32>
    %c0_276 = arith.constant 0 : index
    %c0_277 = arith.constant 0 : index
    %522 = vector.load %arg12[%c0_276, %c0_277] : memref<1x768xf32, #tpu.memory_space<vmem>>, vector<1x768xf32>
    %523 = arith.addf %521, %522 : vector<1x768xf32>
    %c5_278 = arith.constant 5 : index
    %c0_279 = arith.constant 0 : index
    %524 = vector.load %arg25[%c5_278, %c0_279] : memref<8x384xf32, #tpu.memory_space<vmem>>, vector<1x384xf32>
    %525 = vector.extract_strided_slice %523 {offsets = [0, 0], sizes = [1, 384], strides = [1, 1]} : vector<1x768xf32> to vector<1x384xf32>
    %526 = vector.extract_strided_slice %524 {offsets = [0, 0], sizes = [1, 128], strides = [1, 1]} : vector<1x384xf32> to vector<1x128xf32>
    %527 = vector.extract_strided_slice %525 {offsets = [0, 0], sizes = [1, 128], strides = [1, 1]} : vector<1x384xf32> to vector<1x128xf32>
    %528 = arith.addf %526, %527 : vector<1x128xf32>
    %cst_280 = arith.constant 5.000000e-01 : f32
    %529 = vector.broadcast %cst_280 : f32 to vector<1x128xf32>
    %530 = arith.mulf %529, %528 : vector<1x128xf32>
    %531 = math.tanh %530 : vector<1x128xf32>
    %cst_281 = arith.constant 5.000000e-01 : f32
    %532 = vector.broadcast %cst_281 : f32 to vector<1x128xf32>
    %533 = arith.mulf %532, %531 : vector<1x128xf32>
    %cst_282 = arith.constant 5.000000e-01 : f32
    %534 = vector.broadcast %cst_282 : f32 to vector<1x128xf32>
    %535 = arith.addf %533, %534 : vector<1x128xf32>
    %536 = vector.extract_strided_slice %524 {offsets = [0, 128], sizes = [1, 128], strides = [1, 1]} : vector<1x384xf32> to vector<1x128xf32>
    %537 = vector.extract_strided_slice %525 {offsets = [0, 128], sizes = [1, 128], strides = [1, 1]} : vector<1x384xf32> to vector<1x128xf32>
    %538 = arith.addf %536, %537 : vector<1x128xf32>
    %cst_283 = arith.constant 5.000000e-01 : f32
    %539 = vector.broadcast %cst_283 : f32 to vector<1x128xf32>
    %540 = arith.mulf %539, %538 : vector<1x128xf32>
    %541 = math.tanh %540 : vector<1x128xf32>
    %cst_284 = arith.constant 5.000000e-01 : f32
    %542 = vector.broadcast %cst_284 : f32 to vector<1x128xf32>
    %543 = arith.mulf %542, %541 : vector<1x128xf32>
    %cst_285 = arith.constant 5.000000e-01 : f32
    %544 = vector.broadcast %cst_285 : f32 to vector<1x128xf32>
    %545 = arith.addf %543, %544 : vector<1x128xf32>
    %546 = vector.extract_strided_slice %524 {offsets = [0, 256], sizes = [1, 128], strides = [1, 1]} : vector<1x384xf32> to vector<1x128xf32>
    %547 = vector.extract_strided_slice %525 {offsets = [0, 256], sizes = [1, 128], strides = [1, 1]} : vector<1x384xf32> to vector<1x128xf32>
    %548 = arith.mulf %535, %547 : vector<1x128xf32>
    %549 = arith.addf %546, %548 : vector<1x128xf32>
    %550 = math.tanh %549 : vector<1x128xf32>
    %cst_286 = arith.constant 1.000000e+00 : f32
    %551 = vector.broadcast %cst_286 : f32 to vector<1x128xf32>
    %552 = arith.subf %551, %545 : vector<1x128xf32>
    %553 = arith.mulf %552, %550 : vector<1x128xf32>
    %554 = arith.mulf %545, %481 : vector<1x128xf32>
    %555 = arith.addf %553, %554 : vector<1x128xf32>
    %556 = arith.truncf %555 : vector<1x128xf32> to vector<1x128xbf16>
    %c0_287 = arith.constant 0 : index
    %c0_288 = arith.constant 0 : index
    %557 = vector.load %arg13[%c0_287, %c0_288] : memref<128x384xbf16, #tpu.memory_space<vmem>>, vector<128x384xbf16>
    %cst_289 = arith.constant dense<0.000000e+00> : vector<1x384xf32>
    %558 = tpu.matmul %556, %557, %cst_289 {dimension_numbers = #tpu.dot_dimension_numbers<[1], [0], [0], [1], [0, 0, 1, 1], [], []>} : vector<1x128xbf16>, vector<128x384xbf16>, vector<1x384xf32> -> vector<1x384xf32>
    %c0_290 = arith.constant 0 : index
    %c0_291 = arith.constant 0 : index
    %559 = vector.load %arg14[%c0_290, %c0_291] : memref<1x384xf32, #tpu.memory_space<vmem>>, vector<1x384xf32>
    %560 = arith.addf %558, %559 : vector<1x384xf32>
    %561 = vector.extract_strided_slice %523 {offsets = [0, 384], sizes = [1, 384], strides = [1, 1]} : vector<1x768xf32> to vector<1x384xf32>
    %562 = vector.extract_strided_slice %560 {offsets = [0, 0], sizes = [1, 128], strides = [1, 1]} : vector<1x384xf32> to vector<1x128xf32>
    %563 = vector.extract_strided_slice %561 {offsets = [0, 0], sizes = [1, 128], strides = [1, 1]} : vector<1x384xf32> to vector<1x128xf32>
    %564 = arith.addf %562, %563 : vector<1x128xf32>
    %cst_292 = arith.constant 5.000000e-01 : f32
    %565 = vector.broadcast %cst_292 : f32 to vector<1x128xf32>
    %566 = arith.mulf %565, %564 : vector<1x128xf32>
    %567 = math.tanh %566 : vector<1x128xf32>
    %cst_293 = arith.constant 5.000000e-01 : f32
    %568 = vector.broadcast %cst_293 : f32 to vector<1x128xf32>
    %569 = arith.mulf %568, %567 : vector<1x128xf32>
    %cst_294 = arith.constant 5.000000e-01 : f32
    %570 = vector.broadcast %cst_294 : f32 to vector<1x128xf32>
    %571 = arith.addf %569, %570 : vector<1x128xf32>
    %572 = vector.extract_strided_slice %560 {offsets = [0, 128], sizes = [1, 128], strides = [1, 1]} : vector<1x384xf32> to vector<1x128xf32>
    %573 = vector.extract_strided_slice %561 {offsets = [0, 128], sizes = [1, 128], strides = [1, 1]} : vector<1x384xf32> to vector<1x128xf32>
    %574 = arith.addf %572, %573 : vector<1x128xf32>
    %cst_295 = arith.constant 5.000000e-01 : f32
    %575 = vector.broadcast %cst_295 : f32 to vector<1x128xf32>
    %576 = arith.mulf %575, %574 : vector<1x128xf32>
    %577 = math.tanh %576 : vector<1x128xf32>
    %cst_296 = arith.constant 5.000000e-01 : f32
    %578 = vector.broadcast %cst_296 : f32 to vector<1x128xf32>
    %579 = arith.mulf %578, %577 : vector<1x128xf32>
    %cst_297 = arith.constant 5.000000e-01 : f32
    %580 = vector.broadcast %cst_297 : f32 to vector<1x128xf32>
    %581 = arith.addf %579, %580 : vector<1x128xf32>
    %582 = vector.extract_strided_slice %560 {offsets = [0, 256], sizes = [1, 128], strides = [1, 1]} : vector<1x384xf32> to vector<1x128xf32>
    %583 = vector.extract_strided_slice %561 {offsets = [0, 256], sizes = [1, 128], strides = [1, 1]} : vector<1x384xf32> to vector<1x128xf32>
    %584 = arith.mulf %571, %583 : vector<1x128xf32>
    %585 = arith.addf %582, %584 : vector<1x128xf32>
    %586 = math.tanh %585 : vector<1x128xf32>
    %cst_298 = arith.constant 1.000000e+00 : f32
    %587 = vector.broadcast %cst_298 : f32 to vector<1x128xf32>
    %588 = arith.subf %587, %581 : vector<1x128xf32>
    %589 = arith.mulf %588, %586 : vector<1x128xf32>
    %590 = arith.mulf %581, %517 : vector<1x128xf32>
    %591 = arith.addf %589, %590 : vector<1x128xf32>
    %592 = tpu.concatenate %555, %591 in 1 : vector<1x128xf32>, vector<1x128xf32> -> vector<1x256xf32>
    %593 = arith.truncf %592 : vector<1x256xf32> to vector<1x256xbf16>
    %c0_299 = arith.constant 0 : index
    %c0_300 = arith.constant 0 : index
    %594 = vector.load %arg11[%c0_299, %c0_300] : memref<256x768xbf16, #tpu.memory_space<vmem>>, vector<256x768xbf16>
    %cst_301 = arith.constant dense<0.000000e+00> : vector<1x768xf32>
    %595 = tpu.matmul %593, %594, %cst_301 {dimension_numbers = #tpu.dot_dimension_numbers<[1], [0], [0], [1], [0, 0, 1, 1], [], []>} : vector<1x256xbf16>, vector<256x768xbf16>, vector<1x768xf32> -> vector<1x768xf32>
    %c0_302 = arith.constant 0 : index
    %c0_303 = arith.constant 0 : index
    %596 = vector.load %arg12[%c0_302, %c0_303] : memref<1x768xf32, #tpu.memory_space<vmem>>, vector<1x768xf32>
    %597 = arith.addf %595, %596 : vector<1x768xf32>
    %c6_304 = arith.constant 6 : index
    %c0_305 = arith.constant 0 : index
    %598 = vector.load %arg25[%c6_304, %c0_305] : memref<8x384xf32, #tpu.memory_space<vmem>>, vector<1x384xf32>
    %599 = vector.extract_strided_slice %597 {offsets = [0, 0], sizes = [1, 384], strides = [1, 1]} : vector<1x768xf32> to vector<1x384xf32>
    %600 = vector.extract_strided_slice %598 {offsets = [0, 0], sizes = [1, 128], strides = [1, 1]} : vector<1x384xf32> to vector<1x128xf32>
    %601 = vector.extract_strided_slice %599 {offsets = [0, 0], sizes = [1, 128], strides = [1, 1]} : vector<1x384xf32> to vector<1x128xf32>
    %602 = arith.addf %600, %601 : vector<1x128xf32>
    %cst_306 = arith.constant 5.000000e-01 : f32
    %603 = vector.broadcast %cst_306 : f32 to vector<1x128xf32>
    %604 = arith.mulf %603, %602 : vector<1x128xf32>
    %605 = math.tanh %604 : vector<1x128xf32>
    %cst_307 = arith.constant 5.000000e-01 : f32
    %606 = vector.broadcast %cst_307 : f32 to vector<1x128xf32>
    %607 = arith.mulf %606, %605 : vector<1x128xf32>
    %cst_308 = arith.constant 5.000000e-01 : f32
    %608 = vector.broadcast %cst_308 : f32 to vector<1x128xf32>
    %609 = arith.addf %607, %608 : vector<1x128xf32>
    %610 = vector.extract_strided_slice %598 {offsets = [0, 128], sizes = [1, 128], strides = [1, 1]} : vector<1x384xf32> to vector<1x128xf32>
    %611 = vector.extract_strided_slice %599 {offsets = [0, 128], sizes = [1, 128], strides = [1, 1]} : vector<1x384xf32> to vector<1x128xf32>
    %612 = arith.addf %610, %611 : vector<1x128xf32>
    %cst_309 = arith.constant 5.000000e-01 : f32
    %613 = vector.broadcast %cst_309 : f32 to vector<1x128xf32>
    %614 = arith.mulf %613, %612 : vector<1x128xf32>
    %615 = math.tanh %614 : vector<1x128xf32>
    %cst_310 = arith.constant 5.000000e-01 : f32
    %616 = vector.broadcast %cst_310 : f32 to vector<1x128xf32>
    %617 = arith.mulf %616, %615 : vector<1x128xf32>
    %cst_311 = arith.constant 5.000000e-01 : f32
    %618 = vector.broadcast %cst_311 : f32 to vector<1x128xf32>
    %619 = arith.addf %617, %618 : vector<1x128xf32>
    %620 = vector.extract_strided_slice %598 {offsets = [0, 256], sizes = [1, 128], strides = [1, 1]} : vector<1x384xf32> to vector<1x128xf32>
    %621 = vector.extract_strided_slice %599 {offsets = [0, 256], sizes = [1, 128], strides = [1, 1]} : vector<1x384xf32> to vector<1x128xf32>
    %622 = arith.mulf %609, %621 : vector<1x128xf32>
    %623 = arith.addf %620, %622 : vector<1x128xf32>
    %624 = math.tanh %623 : vector<1x128xf32>
    %cst_312 = arith.constant 1.000000e+00 : f32
    %625 = vector.broadcast %cst_312 : f32 to vector<1x128xf32>
    %626 = arith.subf %625, %619 : vector<1x128xf32>
    %627 = arith.mulf %626, %624 : vector<1x128xf32>
    %628 = arith.mulf %619, %555 : vector<1x128xf32>
    %629 = arith.addf %627, %628 : vector<1x128xf32>
    %630 = arith.truncf %629 : vector<1x128xf32> to vector<1x128xbf16>
    %c0_313 = arith.constant 0 : index
    %c0_314 = arith.constant 0 : index
    %631 = vector.load %arg13[%c0_313, %c0_314] : memref<128x384xbf16, #tpu.memory_space<vmem>>, vector<128x384xbf16>
    %cst_315 = arith.constant dense<0.000000e+00> : vector<1x384xf32>
    %632 = tpu.matmul %630, %631, %cst_315 {dimension_numbers = #tpu.dot_dimension_numbers<[1], [0], [0], [1], [0, 0, 1, 1], [], []>} : vector<1x128xbf16>, vector<128x384xbf16>, vector<1x384xf32> -> vector<1x384xf32>
    %c0_316 = arith.constant 0 : index
    %c0_317 = arith.constant 0 : index
    %633 = vector.load %arg14[%c0_316, %c0_317] : memref<1x384xf32, #tpu.memory_space<vmem>>, vector<1x384xf32>
    %634 = arith.addf %632, %633 : vector<1x384xf32>
    %635 = vector.extract_strided_slice %597 {offsets = [0, 384], sizes = [1, 384], strides = [1, 1]} : vector<1x768xf32> to vector<1x384xf32>
    %636 = vector.extract_strided_slice %634 {offsets = [0, 0], sizes = [1, 128], strides = [1, 1]} : vector<1x384xf32> to vector<1x128xf32>
    %637 = vector.extract_strided_slice %635 {offsets = [0, 0], sizes = [1, 128], strides = [1, 1]} : vector<1x384xf32> to vector<1x128xf32>
    %638 = arith.addf %636, %637 : vector<1x128xf32>
    %cst_318 = arith.constant 5.000000e-01 : f32
    %639 = vector.broadcast %cst_318 : f32 to vector<1x128xf32>
    %640 = arith.mulf %639, %638 : vector<1x128xf32>
    %641 = math.tanh %640 : vector<1x128xf32>
    %cst_319 = arith.constant 5.000000e-01 : f32
    %642 = vector.broadcast %cst_319 : f32 to vector<1x128xf32>
    %643 = arith.mulf %642, %641 : vector<1x128xf32>
    %cst_320 = arith.constant 5.000000e-01 : f32
    %644 = vector.broadcast %cst_320 : f32 to vector<1x128xf32>
    %645 = arith.addf %643, %644 : vector<1x128xf32>
    %646 = vector.extract_strided_slice %634 {offsets = [0, 128], sizes = [1, 128], strides = [1, 1]} : vector<1x384xf32> to vector<1x128xf32>
    %647 = vector.extract_strided_slice %635 {offsets = [0, 128], sizes = [1, 128], strides = [1, 1]} : vector<1x384xf32> to vector<1x128xf32>
    %648 = arith.addf %646, %647 : vector<1x128xf32>
    %cst_321 = arith.constant 5.000000e-01 : f32
    %649 = vector.broadcast %cst_321 : f32 to vector<1x128xf32>
    %650 = arith.mulf %649, %648 : vector<1x128xf32>
    %651 = math.tanh %650 : vector<1x128xf32>
    %cst_322 = arith.constant 5.000000e-01 : f32
    %652 = vector.broadcast %cst_322 : f32 to vector<1x128xf32>
    %653 = arith.mulf %652, %651 : vector<1x128xf32>
    %cst_323 = arith.constant 5.000000e-01 : f32
    %654 = vector.broadcast %cst_323 : f32 to vector<1x128xf32>
    %655 = arith.addf %653, %654 : vector<1x128xf32>
    %656 = vector.extract_strided_slice %634 {offsets = [0, 256], sizes = [1, 128], strides = [1, 1]} : vector<1x384xf32> to vector<1x128xf32>
    %657 = vector.extract_strided_slice %635 {offsets = [0, 256], sizes = [1, 128], strides = [1, 1]} : vector<1x384xf32> to vector<1x128xf32>
    %658 = arith.mulf %645, %657 : vector<1x128xf32>
    %659 = arith.addf %656, %658 : vector<1x128xf32>
    %660 = math.tanh %659 : vector<1x128xf32>
    %cst_324 = arith.constant 1.000000e+00 : f32
    %661 = vector.broadcast %cst_324 : f32 to vector<1x128xf32>
    %662 = arith.subf %661, %655 : vector<1x128xf32>
    %663 = arith.mulf %662, %660 : vector<1x128xf32>
    %664 = arith.mulf %655, %591 : vector<1x128xf32>
    %665 = arith.addf %663, %664 : vector<1x128xf32>
    %666 = tpu.concatenate %629, %665 in 1 : vector<1x128xf32>, vector<1x128xf32> -> vector<1x256xf32>
    %667 = arith.truncf %666 : vector<1x256xf32> to vector<1x256xbf16>
    %c0_325 = arith.constant 0 : index
    %c0_326 = arith.constant 0 : index
    %668 = vector.load %arg11[%c0_325, %c0_326] : memref<256x768xbf16, #tpu.memory_space<vmem>>, vector<256x768xbf16>
    %cst_327 = arith.constant dense<0.000000e+00> : vector<1x768xf32>
    %669 = tpu.matmul %667, %668, %cst_327 {dimension_numbers = #tpu.dot_dimension_numbers<[1], [0], [0], [1], [0, 0, 1, 1], [], []>} : vector<1x256xbf16>, vector<256x768xbf16>, vector<1x768xf32> -> vector<1x768xf32>
    %c0_328 = arith.constant 0 : index
    %c0_329 = arith.constant 0 : index
    %670 = vector.load %arg12[%c0_328, %c0_329] : memref<1x768xf32, #tpu.memory_space<vmem>>, vector<1x768xf32>
    %671 = arith.addf %669, %670 : vector<1x768xf32>
    %c7_330 = arith.constant 7 : index
    %c0_331 = arith.constant 0 : index
    %672 = vector.load %arg25[%c7_330, %c0_331] : memref<8x384xf32, #tpu.memory_space<vmem>>, vector<1x384xf32>
    %673 = vector.extract_strided_slice %671 {offsets = [0, 0], sizes = [1, 384], strides = [1, 1]} : vector<1x768xf32> to vector<1x384xf32>
    %674 = vector.extract_strided_slice %672 {offsets = [0, 0], sizes = [1, 128], strides = [1, 1]} : vector<1x384xf32> to vector<1x128xf32>
    %675 = vector.extract_strided_slice %673 {offsets = [0, 0], sizes = [1, 128], strides = [1, 1]} : vector<1x384xf32> to vector<1x128xf32>
    %676 = arith.addf %674, %675 : vector<1x128xf32>
    %cst_332 = arith.constant 5.000000e-01 : f32
    %677 = vector.broadcast %cst_332 : f32 to vector<1x128xf32>
    %678 = arith.mulf %677, %676 : vector<1x128xf32>
    %679 = math.tanh %678 : vector<1x128xf32>
    %cst_333 = arith.constant 5.000000e-01 : f32
    %680 = vector.broadcast %cst_333 : f32 to vector<1x128xf32>
    %681 = arith.mulf %680, %679 : vector<1x128xf32>
    %cst_334 = arith.constant 5.000000e-01 : f32
    %682 = vector.broadcast %cst_334 : f32 to vector<1x128xf32>
    %683 = arith.addf %681, %682 : vector<1x128xf32>
    %684 = vector.extract_strided_slice %672 {offsets = [0, 128], sizes = [1, 128], strides = [1, 1]} : vector<1x384xf32> to vector<1x128xf32>
    %685 = vector.extract_strided_slice %673 {offsets = [0, 128], sizes = [1, 128], strides = [1, 1]} : vector<1x384xf32> to vector<1x128xf32>
    %686 = arith.addf %684, %685 : vector<1x128xf32>
    %cst_335 = arith.constant 5.000000e-01 : f32
    %687 = vector.broadcast %cst_335 : f32 to vector<1x128xf32>
    %688 = arith.mulf %687, %686 : vector<1x128xf32>
    %689 = math.tanh %688 : vector<1x128xf32>
    %cst_336 = arith.constant 5.000000e-01 : f32
    %690 = vector.broadcast %cst_336 : f32 to vector<1x128xf32>
    %691 = arith.mulf %690, %689 : vector<1x128xf32>
    %cst_337 = arith.constant 5.000000e-01 : f32
    %692 = vector.broadcast %cst_337 : f32 to vector<1x128xf32>
    %693 = arith.addf %691, %692 : vector<1x128xf32>
    %694 = vector.extract_strided_slice %672 {offsets = [0, 256], sizes = [1, 128], strides = [1, 1]} : vector<1x384xf32> to vector<1x128xf32>
    %695 = vector.extract_strided_slice %673 {offsets = [0, 256], sizes = [1, 128], strides = [1, 1]} : vector<1x384xf32> to vector<1x128xf32>
    %696 = arith.mulf %683, %695 : vector<1x128xf32>
    %697 = arith.addf %694, %696 : vector<1x128xf32>
    %698 = math.tanh %697 : vector<1x128xf32>
    %cst_338 = arith.constant 1.000000e+00 : f32
    %699 = vector.broadcast %cst_338 : f32 to vector<1x128xf32>
    %700 = arith.subf %699, %693 : vector<1x128xf32>
    %701 = arith.mulf %700, %698 : vector<1x128xf32>
    %702 = arith.mulf %693, %629 : vector<1x128xf32>
    %703 = arith.addf %701, %702 : vector<1x128xf32>
    %704 = arith.truncf %703 : vector<1x128xf32> to vector<1x128xbf16>
    %c0_339 = arith.constant 0 : index
    %c0_340 = arith.constant 0 : index
    %705 = vector.load %arg13[%c0_339, %c0_340] : memref<128x384xbf16, #tpu.memory_space<vmem>>, vector<128x384xbf16>
    %cst_341 = arith.constant dense<0.000000e+00> : vector<1x384xf32>
    %706 = tpu.matmul %704, %705, %cst_341 {dimension_numbers = #tpu.dot_dimension_numbers<[1], [0], [0], [1], [0, 0, 1, 1], [], []>} : vector<1x128xbf16>, vector<128x384xbf16>, vector<1x384xf32> -> vector<1x384xf32>
    %c0_342 = arith.constant 0 : index
    %c0_343 = arith.constant 0 : index
    %707 = vector.load %arg14[%c0_342, %c0_343] : memref<1x384xf32, #tpu.memory_space<vmem>>, vector<1x384xf32>
    %708 = arith.addf %706, %707 : vector<1x384xf32>
    %709 = vector.extract_strided_slice %671 {offsets = [0, 384], sizes = [1, 384], strides = [1, 1]} : vector<1x768xf32> to vector<1x384xf32>
    %710 = vector.extract_strided_slice %708 {offsets = [0, 0], sizes = [1, 128], strides = [1, 1]} : vector<1x384xf32> to vector<1x128xf32>
    %711 = vector.extract_strided_slice %709 {offsets = [0, 0], sizes = [1, 128], strides = [1, 1]} : vector<1x384xf32> to vector<1x128xf32>
    %712 = arith.addf %710, %711 : vector<1x128xf32>
    %cst_344 = arith.constant 5.000000e-01 : f32
    %713 = vector.broadcast %cst_344 : f32 to vector<1x128xf32>
    %714 = arith.mulf %713, %712 : vector<1x128xf32>
    %715 = math.tanh %714 : vector<1x128xf32>
    %cst_345 = arith.constant 5.000000e-01 : f32
    %716 = vector.broadcast %cst_345 : f32 to vector<1x128xf32>
    %717 = arith.mulf %716, %715 : vector<1x128xf32>
    %cst_346 = arith.constant 5.000000e-01 : f32
    %718 = vector.broadcast %cst_346 : f32 to vector<1x128xf32>
    %719 = arith.addf %717, %718 : vector<1x128xf32>
    %720 = vector.extract_strided_slice %708 {offsets = [0, 128], sizes = [1, 128], strides = [1, 1]} : vector<1x384xf32> to vector<1x128xf32>
    %721 = vector.extract_strided_slice %709 {offsets = [0, 128], sizes = [1, 128], strides = [1, 1]} : vector<1x384xf32> to vector<1x128xf32>
    %722 = arith.addf %720, %721 : vector<1x128xf32>
    %cst_347 = arith.constant 5.000000e-01 : f32
    %723 = vector.broadcast %cst_347 : f32 to vector<1x128xf32>
    %724 = arith.mulf %723, %722 : vector<1x128xf32>
    %725 = math.tanh %724 : vector<1x128xf32>
    %cst_348 = arith.constant 5.000000e-01 : f32
    %726 = vector.broadcast %cst_348 : f32 to vector<1x128xf32>
    %727 = arith.mulf %726, %725 : vector<1x128xf32>
    %cst_349 = arith.constant 5.000000e-01 : f32
    %728 = vector.broadcast %cst_349 : f32 to vector<1x128xf32>
    %729 = arith.addf %727, %728 : vector<1x128xf32>
    %730 = vector.extract_strided_slice %708 {offsets = [0, 256], sizes = [1, 128], strides = [1, 1]} : vector<1x384xf32> to vector<1x128xf32>
    %731 = vector.extract_strided_slice %709 {offsets = [0, 256], sizes = [1, 128], strides = [1, 1]} : vector<1x384xf32> to vector<1x128xf32>
    %732 = arith.mulf %719, %731 : vector<1x128xf32>
    %733 = arith.addf %730, %732 : vector<1x128xf32>
    %734 = math.tanh %733 : vector<1x128xf32>
    %cst_350 = arith.constant 1.000000e+00 : f32
    %735 = vector.broadcast %cst_350 : f32 to vector<1x128xf32>
    %736 = arith.subf %735, %729 : vector<1x128xf32>
    %737 = arith.mulf %736, %734 : vector<1x128xf32>
    %738 = arith.mulf %729, %665 : vector<1x128xf32>
    %739 = arith.addf %737, %738 : vector<1x128xf32>
    %740 = arith.truncf %739 : vector<1x128xf32> to vector<1x128xbf16>
    %c0_351 = arith.constant 0 : index
    %c0_352 = arith.constant 0 : index
    %741 = vector.load %arg15[%c0_351, %c0_352] : memref<128x64xbf16, #tpu.memory_space<vmem>>, vector<128x64xbf16>
    %cst_353 = arith.constant dense<0.000000e+00> : vector<1x64xf32>
    %742 = tpu.matmul %740, %741, %cst_353 {dimension_numbers = #tpu.dot_dimension_numbers<[1], [0], [0], [1], [0, 0, 1, 1], [], []>} : vector<1x128xbf16>, vector<128x64xbf16>, vector<1x64xf32> -> vector<1x64xf32>
    %c0_354 = arith.constant 0 : index
    %c0_355 = arith.constant 0 : index
    %743 = vector.load %arg16[%c0_354, %c0_355] : memref<1x64xf32, #tpu.memory_space<vmem>>, vector<1x64xf32>
    %744 = arith.addf %742, %743 : vector<1x64xf32>
    %cst_356 = arith.constant 0.000000e+00 : f32
    %745 = vector.broadcast %cst_356 : f32 to vector<1x64xf32>
    %746 = arith.maximumf %744, %745 : vector<1x64xf32>
    %747 = arith.truncf %746 : vector<1x64xf32> to vector<1x64xbf16>
    %c0_357 = arith.constant 0 : index
    %c0_358 = arith.constant 0 : index
    %748 = vector.load %arg17[%c0_357, %c0_358] : memref<64x5xbf16, #tpu.memory_space<vmem>>, vector<64x5xbf16>
    %cst_359 = arith.constant dense<0.000000e+00> : vector<1x5xf32>
    %749 = tpu.matmul %747, %748, %cst_359 {dimension_numbers = #tpu.dot_dimension_numbers<[1], [0], [0], [1], [0, 0, 1, 1], [], []>} : vector<1x64xbf16>, vector<64x5xbf16>, vector<1x5xf32> -> vector<1x5xf32>
    %c0_360 = arith.constant 0 : index
    %c0_361 = arith.constant 0 : index
    %750 = vector.load %arg18[%c0_360, %c0_361] : memref<1x5xf32, #tpu.memory_space<vmem>>, vector<1x5xf32>
    %751 = arith.addf %749, %750 : vector<1x5xf32>
    %c0_362 = arith.constant 0 : index
    %c0_363 = arith.constant 0 : index
    %752 = vector.load %arg19[%c0_362, %c0_363] : memref<1x5xf32, #tpu.memory_space<vmem>>, vector<1x5xf32>
    tpu.vector_store %arg19[%c0_362, %c0_363], %751 {strides = array<i32>} : memref<1x5xf32, #tpu.memory_space<vmem>>, vector<1x5xf32>,
    return
  }
}

</mosaic_0001>

<llo_original>
// kernel: forward.1
$region0: #{forward.1}
  #allocation0 [shape = 'u32[]', space=smem, size = 0x4, offset = 0x4, fixed_abs, tag = 'smem constant byte address 0x4 - core index']
  #allocation1 [shape = 'u32[144,128]{1,0:T(1,128)}', space=vmem, size = 0x12000, scoped, tag = 'internal scratch']
  #allocation2 [shape = 'f32[264,128]{1,0:T(8,128)}', space=vmem, size = 0x21000, scoped, tag = 'scratch operand']
  #allocation3 [shape = 'f32[136,128]{1,0:T(8,128)}', space=vmem, size = 0x11000, scoped, tag = 'scratch operand']
  #allocation4 [shape = 'f32[72,128]{1,0:T(8,128)}', space=vmem, size = 0x9000, scoped, tag = 'scratch operand']
  #allocation5 [shape = 'f32[32,128]{1,0:T(8,128)}', space=vmem, size = 0x4000, scoped, tag = 'scratch operand']
  #allocation6 [shape = 'f32[8,128]{1,0:T(8,128)}', space=vmem, size = 0x1000, scoped, tag = 'scratch operand']
  #allocation7 [shape = 'f32[8,384]{1,0:T(8,128)}', space=vmem, size = 0x3000, scoped, tag = 'scratch operand']
  %s0 = inlined_call_operand.vmem [shape: bf16[256,128], index: 0, kind: input, shape index: {}]
  %s1 = inlined_call_operand.vmem [shape: bf16[128,128], index: 1, kind: input, shape index: {}]
  %s2 = inlined_call_operand.vmem [shape: f32[1,128], index: 2, kind: input, shape index: {}]
  %s3 = inlined_call_operand.vmem [shape: bf16[5,128,128], index: 3, kind: input, shape index: {}]
  %s4 = inlined_call_operand.vmem [shape: f32[1,128], index: 4, kind: input, shape index: {}]
  %s5 = inlined_call_operand.vmem [shape: bf16[5,128,128], index: 5, kind: input, shape index: {}]
  %s6 = inlined_call_operand.vmem [shape: f32[1,128], index: 6, kind: input, shape index: {}]
  %s7 = inlined_call_operand.vmem [shape: bf16[3,128,128], index: 7, kind: input, shape index: {}]
  %s8 = inlined_call_operand.vmem [shape: f32[1,128], index: 8, kind: input, shape index: {}]
  %s9 = inlined_call_operand.hbm [shape: bf16[128,384], index: 9, kind: input, shape index: {}]
  %s10 = inlined_call_operand.hbm [shape: f32[1,384], index: 10, kind: input, shape index: {}]
  %s11 = inlined_call_operand.vmem [shape: bf16[256,768], index: 11, kind: input, shape index: {}]
  %s12 = inlined_call_operand.vmem [shape: f32[1,768], index: 12, kind: input, shape index: {}]
  %s13 = inlined_call_operand.hbm [shape: bf16[128,384], index: 13, kind: input, shape index: {}]
  %s14 = inlined_call_operand.hbm [shape: f32[1,384], index: 14, kind: input, shape index: {}]
  %s15 = inlined_call_operand.vmem [shape: bf16[128,64], index: 15, kind: input, shape index: {}]
  %s16 = inlined_call_operand.vmem [shape: f32[1,64], index: 16, kind: input, shape index: {}]
  %s17 = inlined_call_operand.vmem [shape: bf16[64,5], index: 17, kind: input, shape index: {}]
  %s18 = inlined_call_operand.vmem [shape: f32[1,5], index: 18, kind: input, shape index: {}]
  %s19 = inlined_call_operand.hbm [shape: f32[1,5], index: 19, kind: output, shape index: {}]
  %s20 = sld [smem:[#allocation0]]
  $region102: #{forward.1} parent=0
    _
  %s22 = ssub.s32 1, %s20
  %s23 = scalar_select 0, %s22, %s20
  $region1: #{forward.1} parent=0
    #allocation8 [shape = 'u8[98304]{0}', space=vmem, size = 0x18000, scoped, tag = 'input window, operand 9, single buffered']
    #allocation9 [shape = 's32[1]{0}', space=sflag, size = 0x4, scoped, tag = 'scoped memory for forward.1']
    #allocation10 [shape = 's32[1]{0}', space=sflag, size = 0x4, scoped, tag = 'scoped memory for forward.1']
    #allocation11 [shape = 'u8[1536]{0}', space=vmem, size = 0x800, scoped, tag = 'input window, operand 10, single buffered']
    #allocation12 [shape = 's32[1]{0}', space=sflag, size = 0x4, scoped, tag = 'scoped memory for forward.1']
    #allocation13 [shape = 'u8[98304]{0}', space=vmem, size = 0x18000, scoped, tag = 'input window, operand 13, single buffered']
    #allocation14 [shape = 'u8[1536]{0}', space=vmem, size = 0x800, scoped, tag = 'input window, operand 14, single buffered']
    #allocation15 [shape = 's32[1]{0}', space=sflag, size = 0x4, scoped, tag = 'scoped memory for forward.1']
    #allocation16 [shape = 'u8[512]{0}', space=vmem, size = 0x400, scoped, tag = 'output window, operand 0, single buffered']
    %24 = vsyncpa [#allocation9], 0
    %25 = vsyncpa [#allocation12], 0
    %26 = vsyncpa [#allocation15], 0
    %27 = vsyncpa [#allocation10], 0
    // Predicated region
    $region2: #{forward.1} parent=1 // pred_check
      _
    $region3: #{forward.1} parent=1 // pred_check_branch
      %29 = sbr.rel (0) target = $region5
    $region4: #{forward.1} parent=1 // pred_region
      _
    $region5: #{forward.1} parent=1 // pred_fallthru
      _
    // Predicated region
    $region6: #{forward.1} parent=1 // pred_check
      _
    $region7: #{forward.1} parent=1 // pred_check_branch
      %31 = sbr.rel (0) target = $region9
    $region8: #{forward.1} parent=1 // pred_region
      _
    $region9: #{forward.1} parent=1 // pred_fallthru
      _
    // Predicated region
    $region10: #{forward.1} parent=1 // pred_check
      _
    $region11: #{forward.1} parent=1 // pred_check_branch
      %33 = sbr.rel (0) target = $region13
    $region12: #{forward.1} parent=1 // pred_region
      _
    $region13: #{forward.1} parent=1 // pred_fallthru
      _
    // Predicated region
    $region14: #{forward.1} parent=1 // pred_check
      _
    $region15: #{forward.1} parent=1 // pred_check_branch
      %35 = sbr.rel (0) target = $region17
    $region16: #{forward.1} parent=1 // pred_region
      _
    $region17: #{forward.1} parent=1 // pred_fallthru
      _
    // Predicated region
    $region18: #{forward.1} parent=1 // pred_check
      _
    $region19: #{forward.1} parent=1 // pred_check_branch
      %37 = sbr.rel (0) target = $region21
    $region20: #{forward.1} parent=1 // pred_region
      _
    $region21: #{forward.1} parent=1 // pred_fallthru
      _
    // Predicated region
    $region22: #{forward.1} parent=1 // pred_check
      _
    $region23: #{forward.1} parent=1 // pred_check_branch
      %39 = sbr.rel (0) target = $region25
    $region24: #{forward.1} parent=1 // pred_region
      _
    $region25: #{forward.1} parent=1 // pred_fallthru
      _
    // Predicated region
    $region26: #{forward.1} parent=1 // pred_check
      _
    $region27: #{forward.1} parent=1 // pred_check_branch
      %41 = sbr.rel (0) target = $region29
    $region28: #{forward.1} parent=1 // pred_region
      _
    $region29: #{forward.1} parent=1 // pred_fallthru
      _
    // Predicated region
    $region30: #{forward.1} parent=1 // pred_check
      _
    $region31: #{forward.1} parent=1 // pred_check_branch
      %43 = sbr.rel (0) target = $region33
    $region32: #{forward.1} parent=1 // pred_region
      _
    $region33: #{forward.1} parent=1 // pred_fallthru
      _
    // Predicated region
    $region34: #{forward.1} parent=1 // pred_check
      _
    $region35: #{forward.1} parent=1 // pred_check_branch
      %45 = sbr.rel (0) target = $region37
    $region36: #{forward.1} parent=1 // pred_region
      _
    $region37: #{forward.1} parent=1 // pred_fallthru
      _
    // Predicated region
    $region38: #{forward.1} parent=1 // pred_check
      _
    $region39: #{forward.1} parent=1 // pred_check_branch
      %47 = sbr.rel (0) target = $region41
    $region40: #{forward.1} parent=1 // pred_region
      %s49 = ssub.s32 3072, 3072
      %50 = vsyncadd [#allocation9], %s49
      %s51 = sshll.u32 [#allocation8], 4
      %s52 = int_to_ptr.vmem [resolvable:$true] %s51
      %57 = dma.hbm_to_vmem [thread:$0]  %s9, 3072, %s52, [#allocation9], 192, 192, 12
    $region41: #{forward.1} parent=1 // pred_fallthru
      _
    // Predicated region
    $region42: #{forward.1} parent=1 // pred_check
      _
    $region43: #{forward.1} parent=1 // pred_check_branch
      %59 = sbr.rel (0) target = $region45
    $region44: #{forward.1} parent=1 // pred_region
      %s61 = ssub.s32 48, 48
      %62 = vsyncadd [#allocation12], %s61
      %s64 = sshll.u32 [#allocation11], 4
      %s65 = int_to_ptr.vmem [resolvable:$true] %s64
      %67 = dma.hbm_to_vmem [thread:$0]  %s10, 48, %s65, [#allocation12]
    $region45: #{forward.1} parent=1 // pred_fallthru
      _
    // Predicated region
    $region46: #{forward.1} parent=1 // pred_check
      _
    $region47: #{forward.1} parent=1 // pred_check_branch
      %69 = sbr.rel (0) target = $region49
    $region48: #{forward.1} parent=1 // pred_region
      _
    $region49: #{forward.1} parent=1 // pred_fallthru
      _
    // Predicated region
    $region50: #{forward.1} parent=1 // pred_check
      _
    $region51: #{forward.1} parent=1 // pred_check_branch
      %71 = sbr.rel (0) target = $region53
    $region52: #{forward.1} parent=1 // pred_region
      _
    $region53: #{forward.1} parent=1 // pred_fallthru
      _
    // Predicated region
    $region54: #{forward.1} parent=1 // pred_check
      _
    $region55: #{forward.1} parent=1 // pred_check_branch
      %73 = sbr.rel (0) target = $region57
    $region56: #{forward.1} parent=1 // pred_region
      %s75 = ssub.s32 3072, 3072
      %76 = vsyncadd [#allocation12], %s75
      %s77 = sshll.u32 [#allocation13], 4
      %s78 = int_to_ptr.vmem [resolvable:$true] %s77
      %83 = dma.hbm_to_vmem [thread:$0]  %s13, 3072, %s78, [#allocation12], 192, 192, 12
    $region57: #{forward.1} parent=1 // pred_fallthru
      _
    // Predicated region
    $region58: #{forward.1} parent=1 // pred_check
      _
    $region59: #{forward.1} parent=1 // pred_check_branch
      %85 = sbr.rel (0) target = $region61
    $region60: #{forward.1} parent=1 // pred_region
      %s87 = ssub.s32 48, 48
      %88 = vsyncadd [#allocation15], %s87
      %s90 = sshll.u32 [#allocation14], 4
      %s91 = int_to_ptr.vmem [resolvable:$true] %s90
      %93 = dma.hbm_to_vmem [thread:$0]  %s14, 48, %s91, [#allocation15]
    $region61: #{forward.1} parent=1 // pred_fallthru
      _
    // Predicated region
    $region62: #{forward.1} parent=1 // pred_check
      _
    $region63: #{forward.1} parent=1 // pred_check_branch
      %95 = sbr.rel (0) target = $region65
    $region64: #{forward.1} parent=1 // pred_region
      _
    $region65: #{forward.1} parent=1 // pred_fallthru
      _
    // Predicated region
    $region66: #{forward.1} parent=1 // pred_check
      _
    $region67: #{forward.1} parent=1 // pred_check_branch
      %97 = sbr.rel (0) target = $region69
    $region68: #{forward.1} parent=1 // pred_region
      _
    $region69: #{forward.1} parent=1 // pred_fallthru
      _
    // Predicated region
    $region70: #{forward.1} parent=1 // pred_check
      _
    $region71: #{forward.1} parent=1 // pred_check_branch
      %99 = sbr.rel (0) target = $region73
    $region72: #{forward.1} parent=1 // pred_region
      _
    $region73: #{forward.1} parent=1 // pred_fallthru
      _
    // Predicated region
    $region74: #{forward.1} parent=1 // pred_check
      _
    $region75: #{forward.1} parent=1 // pred_check_branch
      %101 = sbr.rel (0) target = $region77
    $region76: #{forward.1} parent=1 // pred_region
      _
    $region77: #{forward.1} parent=1 // pred_fallthru
      _
    // Predicated region
    $region78: #{forward.1} parent=1 // pred_check
      _
    $region79: #{forward.1} parent=1 // pred_check_branch
      %103 = sbr.rel (0) target = $region81
    $region80: #{forward.1} parent=1 // pred_region
      %104 = dma.done [#allocation9], 3072
    $region81: #{forward.1} parent=1 // pred_fallthru
      _
    // Predicated region
    $region82: #{forward.1} parent=1 // pred_check
      _
    $region83: #{forward.1} parent=1 // pred_check_branch
      %106 = sbr.rel (0) target = $region85
    $region84: #{forward.1} parent=1 // pred_region
      %107 = dma.done [#allocation12], 48
    $region85: #{forward.1} parent=1 // pred_fallthru
      _
    // Predicated region
    $region86: #{forward.1} parent=1 // pred_check
      _
    $region87: #{forward.1} parent=1 // pred_check_branch
      %109 = sbr.rel (0) target = $region89
    $region88: #{forward.1} parent=1 // pred_region
      %110 = dma.done [#allocation12], 3072
    $region89: #{forward.1} parent=1 // pred_fallthru
      _
    // Predicated region
    $region90: #{forward.1} parent=1 // pred_check
      _
    $region91: #{forward.1} parent=1 // pred_check_branch
      %112 = sbr.rel (0) target = $region93
    $region92: #{forward.1} parent=1 // pred_region
      %113 = dma.done [#allocation15], 48
    $region93: #{forward.1} parent=1 // pred_fallthru
      _
    %115 = vst [vmem:[#allocation2 + $0x100] sm:$0xff] 0.0
    %116 = vst [vmem:[#allocation3 + $0x80] sm:$0xff] 0.0
    %117 = vst [vmem:[#allocation4 + $0x40] sm:$0xff] 0.0
    %v118 = vld [vmem:[%s0] sm:$0xf]
    %v119 = vld [vmem:[%s0 + $0x4] sm:$0xf]
    %v120 = vld [vmem:[%s0 + $0x8] sm:$0xf]
    %v121 = vld [vmem:[%s0 + $0xc] sm:$0xf]
    %v122 = vld [vmem:[%s0 + $0x10] sm:$0xf]
    %v123 = vld [vmem:[%s0 + $0x14] sm:$0xf]
    %v124 = vld [vmem:[%s0 + $0x18] sm:$0xf]
    %v125 = vld [vmem:[%s0 + $0x1c] sm:$0xf]
    %v126 = vld [vmem:[%s0 + $0x20] sm:$0xf]
    %v127 = vld [vmem:[%s0 + $0x24] sm:$0xf]
    %v128 = vld [vmem:[%s0 + $0x28] sm:$0xf]
    %v129 = vld [vmem:[%s0 + $0x2c] sm:$0xf]
    %v130 = vld [vmem:[%s0 + $0x30] sm:$0xf]
    %v131 = vld [vmem:[%s0 + $0x34] sm:$0xf]
    %v132 = vld [vmem:[%s0 + $0x38] sm:$0xf]
    %v133 = vld [vmem:[%s0 + $0x3c] sm:$0xf]
    %v134 = vld [vmem:[%s0 + $0x40] sm:$0xf]
    %v135 = vld [vmem:[%s0 + $0x44] sm:$0xf]
    %v136 = vld [vmem:[%s0 + $0x48] sm:$0xf]
    %v137 = vld [vmem:[%s0 + $0x4c] sm:$0xf]
    %v138 = vld [vmem:[%s0 + $0x50] sm:$0xf]
    %v139 = vld [vmem:[%s0 + $0x54] sm:$0xf]
    %v140 = vld [vmem:[%s0 + $0x58] sm:$0xf]
    %v141 = vld [vmem:[%s0 + $0x5c] sm:$0xf]
    %v142 = vld [vmem:[%s0 + $0x60] sm:$0xf]
    %v143 = vld [vmem:[%s0 + $0x64] sm:$0xf]
    %v144 = vld [vmem:[%s0 + $0x68] sm:$0xf]
    %v145 = vld [vmem:[%s0 + $0x6c] sm:$0xf]
    %v146 = vld [vmem:[%s0 + $0x70] sm:$0xf]
    %v147 = vld [vmem:[%s0 + $0x74] sm:$0xf]
    %v148 = vld [vmem:[%s0 + $0x78] sm:$0xf]
    %v149 = vld [vmem:[%s0 + $0x7c] sm:$0xf]
    %v150 = vld [vmem:[%s1] sm:$0xf]
    %v151 = vld [vmem:[%s1 + $0x4] sm:$0xf]
    %v152 = vld [vmem:[%s1 + $0x8] sm:$0xf]
    %v153 = vld [vmem:[%s1 + $0xc] sm:$0xf]
    %v154 = vld [vmem:[%s1 + $0x10] sm:$0xf]
    %v155 = vld [vmem:[%s1 + $0x14] sm:$0xf]
    %v156 = vld [vmem:[%s1 + $0x18] sm:$0xf]
    %v157 = vld [vmem:[%s1 + $0x1c] sm:$0xf]
    %v158 = vld [vmem:[%s1 + $0x20] sm:$0xf]
    %v159 = vld [vmem:[%s1 + $0x24] sm:$0xf]
    %v160 = vld [vmem:[%s1 + $0x28] sm:$0xf]
    %v161 = vld [vmem:[%s1 + $0x2c] sm:$0xf]
    %v162 = vld [vmem:[%s1 + $0x30] sm:$0xf]
    %v163 = vld [vmem:[%s1 + $0x34] sm:$0xf]
    %v164 = vld [vmem:[%s1 + $0x38] sm:$0xf]
    %v165 = vld [vmem:[%s1 + $0x3c] sm:$0xf]
    %v166 = vld [vmem:[%s2] sm:$0x1]
    %v168 = vlaneseq
    %v169 = vshrl.u32 %v168, 7
    %v170 = vsub.s32 0, %v169
    %v171 = vrot.slane %v166, %v170
    %v205 = vunpack.c.l.b16 %v118
    %v206 = vunpack.c.l.b16 %v119
    %v207 = vunpack.c.l.b16 %v120
    %v208 = vunpack.c.l.b16 %v121
    %v209 = vunpack.c.l.b16 %v122
    %v210 = vunpack.c.l.b16 %v123
    %v211 = vunpack.c.l.b16 %v124
    %v212 = vunpack.c.l.b16 %v125
    %v213 = vunpack.c.l.b16 %v126
    %v214 = vunpack.c.l.b16 %v127
    %v215 = vunpack.c.l.b16 %v128
    %v216 = vunpack.c.l.b16 %v129
    %v217 = vunpack.c.l.b16 %v130
    %v218 = vunpack.c.l.b16 %v131
    %v219 = vunpack.c.l.b16 %v132
    %v220 = vunpack.c.l.b16 %v133
    %v221 = vunpack.c.l.b16 %v134
    %v222 = vunpack.c.l.b16 %v135
    %v223 = vunpack.c.l.b16 %v136
    %v224 = vunpack.c.l.b16 %v137
    %v225 = vunpack.c.l.b16 %v138
    %v226 = vunpack.c.l.b16 %v139
    %v227 = vunpack.c.l.b16 %v140
    %v228 = vunpack.c.l.b16 %v141
    %v229 = vunpack.c.l.b16 %v142
    %v230 = vunpack.c.l.b16 %v143
    %v231 = vunpack.c.l.b16 %v144
    %v232 = vunpack.c.l.b16 %v145
    %v233 = vunpack.c.l.b16 %v146
    %v234 = vunpack.c.l.b16 %v147
    %v235 = vunpack.c.l.b16 %v148
    %v236 = vunpack.c.l.b16 %v149
    %v237 = vpack.c.b16 %v206, %v205
    %v238 = vpack.c.b16 %v208, %v207
    %v239 = vpack.c.b16 %v210, %v209
    %v240 = vpack.c.b16 %v212, %v211
    %v241 = vpack.c.b16 %v214, %v213
    %v242 = vpack.c.b16 %v216, %v215
    %v243 = vpack.c.b16 %v218, %v217
    %v244 = vpack.c.b16 %v220, %v219
    %v245 = vpack.c.b16 %v222, %v221
    %v246 = vpack.c.b16 %v224, %v223
    %v247 = vpack.c.b16 %v226, %v225
    %v248 = vpack.c.b16 %v228, %v227
    %v249 = vpack.c.b16 %v230, %v229
    %v250 = vpack.c.b16 %v232, %v231
    %v251 = vpack.c.b16 %v234, %v233
    %v252 = vpack.c.b16 %v236, %v235
    %v285 = vunpack.c.l.b16 %v150
    %v286 = vunpack.c.l.b16 %v151
    %v287 = vunpack.c.l.b16 %v152
    %v288 = vunpack.c.l.b16 %v153
    %v289 = vunpack.c.l.b16 %v154
    %v290 = vunpack.c.l.b16 %v155
    %v291 = vunpack.c.l.b16 %v156
    %v292 = vunpack.c.l.b16 %v157
    %v293 = vunpack.c.l.b16 %v158
    %v294 = vunpack.c.l.b16 %v159
    %v295 = vunpack.c.l.b16 %v160
    %v296 = vunpack.c.l.b16 %v161
    %v297 = vunpack.c.l.b16 %v162
    %v298 = vunpack.c.l.b16 %v163
    %v299 = vunpack.c.l.b16 %v164
    %v300 = vunpack.c.l.b16 %v165
    %v301 = vpack.c.b16 %v286, %v285
    %v302 = vpack.c.b16 %v288, %v287
    %v303 = vpack.c.b16 %v290, %v289
    %v304 = vpack.c.b16 %v292, %v291
    %v305 = vpack.c.b16 %v294, %v293
    %v306 = vpack.c.b16 %v296, %v295
    %v307 = vpack.c.b16 %v298, %v297
    %v308 = vpack.c.b16 %v300, %v299
    %317 = vmatprep.subr.bf16.mxu0 0
    %318 = vmatpush1.bf16.msra.mxu0 %v301
    %319 = vmatprep.subr.bf16.mxu0 0
    %320 = vmatpush1.bf16.msra.mxu0 %v302
    %321 = vmatprep.subr.bf16.mxu0 0
    %322 = vmatpush1.bf16.msra.mxu0 %v303
    %323 = vmatprep.subr.bf16.mxu0 0
    %324 = vmatpush1.bf16.msra.mxu0 %v304
    %325 = vmatprep.subr.bf16.mxu0 0
    %326 = vmatpush1.bf16.msra.mxu0 %v305
    %327 = vmatprep.subr.bf16.mxu0 0
    %328 = vmatpush1.bf16.msra.mxu0 %v306
    %329 = vmatprep.subr.bf16.mxu0 0
    %330 = vmatpush1.bf16.msra.mxu0 %v307
    %331 = vmatprep.subr.bf16.mxu0 0
    %332 = vmatpush1.bf16.msra.mxu0 %v308
    %333 = vmatprep.subr.bf16.mxu0 0
    %334 = vmatpush1.bf16.msra.mxu0 0
    %335 = vmatprep.subr.bf16.mxu0 0
    %336 = vmatpush1.bf16.msra.mxu0 0
    %337 = vmatprep.subr.bf16.mxu0 0
    %338 = vmatpush1.bf16.msra.mxu0 0
    %339 = vmatprep.subr.bf16.mxu0 0
    %340 = vmatpush1.bf16.msra.mxu0 0
    %341 = vmatprep.subr.bf16.mxu0 0
    %342 = vmatpush1.bf16.msra.mxu0 0
    %343 = vmatprep.subr.bf16.mxu0 0
    %344 = vmatpush1.bf16.msra.mxu0 0
    %345 = vmatprep.subr.bf16.mxu0 0
    %346 = vmatpush1.bf16.msra.mxu0 0
    %347 = vmatprep.subr.bf16.mxu0 0
    %348 = vmatpush1.bf16.msra.mxu0 0
    %349 = vmatprep.mubr.bf16.mxu0 0
    %350 = vmatmul.mubr.bf16.gmra.mrb[0].mxu0 %v237
    %v351 = vpop.f32.mrb[0].mxu0
    %v352 = vadd.f32 %v171, %v351
    %v353 = vpop.f32.mrb[0].mxu0
    %v354 = vpop.f32.mrb[0].mxu0
    %v355 = vadd.f32 %v171, %v354
    %v356 = vpop.f32.mrb[0].mxu0
    %357 = vmatprep.mubr.bf16.mxu0 0
    %358 = vmatmul.mubr.bf16.gmra.mrb[0].mxu0 %v238
    %v359 = vpop.f32.mrb[0].mxu0
    %v360 = vadd.f32 %v171, %v359
    %v361 = vpop.f32.mrb[0].mxu0
    %v362 = vpop.f32.mrb[0].mxu0
    %v363 = vadd.f32 %v171, %v362
    %v364 = vpop.f32.mrb[0].mxu0
    %365 = vmatprep.mubr.bf16.mxu0 0
    %366 = vmatmul.mubr.bf16.gmra.mrb[0].mxu0 %v239
    %v367 = vpop.f32.mrb[0].mxu0
    %v368 = vadd.f32 %v171, %v367
    %v369 = vpop.f32.mrb[0].mxu0
    %v370 = vpop.f32.mrb[0].mxu0
    %v371 = vadd.f32 %v171, %v370
    %v372 = vpop.f32.mrb[0].mxu0
    %373 = vmatprep.mubr.bf16.mxu0 0
    %374 = vmatmul.mubr.bf16.gmra.mrb[0].mxu0 %v240
    %v375 = vpop.f32.mrb[0].mxu0
    %v376 = vadd.f32 %v171, %v375
    %v377 = vpop.f32.mrb[0].mxu0
    %v378 = vpop.f32.mrb[0].mxu0
    %v379 = vadd.f32 %v171, %v378
    %v380 = vpop.f32.mrb[0].mxu0
    %381 = vmatprep.mubr.bf16.mxu0 0
    %382 = vmatmul.mubr.bf16.gmra.mrb[0].mxu0 %v241
    %v383 = vpop.f32.mrb[0].mxu0
    %v384 = vadd.f32 %v171, %v383
    %v385 = vpop.f32.mrb[0].mxu0
    %v386 = vpop.f32.mrb[0].mxu0
    %v387 = vadd.f32 %v171, %v386
    %v388 = vpop.f32.mrb[0].mxu0
    %389 = vmatprep.mubr.bf16.mxu0 0
    %390 = vmatmul.mubr.bf16.gmra.mrb[0].mxu0 %v242
    %v391 = vpop.f32.mrb[0].mxu0
    %v392 = vadd.f32 %v171, %v391
    %v393 = vpop.f32.mrb[0].mxu0
    %v394 = vpop.f32.mrb[0].mxu0
    %v395 = vadd.f32 %v171, %v394
    %v396 = vpop.f32.mrb[0].mxu0
    %397 = vmatprep.mubr.bf16.mxu0 0
    %398 = vmatmul.mubr.bf16.gmra.mrb[0].mxu0 %v243
    %v399 = vpop.f32.mrb[0].mxu0
    %v400 = vadd.f32 %v171, %v399
    %v401 = vpop.f32.mrb[0].mxu0
    %v402 = vpop.f32.mrb[0].mxu0
    %v403 = vadd.f32 %v171, %v402
    %v404 = vpop.f32.mrb[0].mxu0
    %405 = vmatprep.mubr.bf16.mxu0 0
    %406 = vmatmul.mubr.bf16.gmra.mrb[0].mxu0 %v244
    %v407 = vpop.f32.mrb[0].mxu0
    %v408 = vadd.f32 %v171, %v407
    %v409 = vpop.f32.mrb[0].mxu0
    %v410 = vpop.f32.mrb[0].mxu0
    %v411 = vadd.f32 %v171, %v410
    %v412 = vpop.f32.mrb[0].mxu0
    %413 = vmatprep.mubr.bf16.mxu0 0
    %414 = vmatmul.mubr.bf16.gmra.mrb[0].mxu0 %v245
    %v415 = vpop.f32.mrb[0].mxu0
    %v416 = vadd.f32 %v171, %v415
    %v417 = vpop.f32.mrb[0].mxu0
    %v418 = vpop.f32.mrb[0].mxu0
    %v419 = vadd.f32 %v171, %v418
    %v420 = vpop.f32.mrb[0].mxu0
    %421 = vmatprep.mubr.bf16.mxu0 0
    %422 = vmatmul.mubr.bf16.gmra.mrb[0].mxu0 %v246
    %v423 = vpop.f32.mrb[0].mxu0
    %v424 = vadd.f32 %v171, %v423
    %v425 = vpop.f32.mrb[0].mxu0
    %v426 = vpop.f32.mrb[0].mxu0
    %v427 = vadd.f32 %v171, %v426
    %v428 = vpop.f32.mrb[0].mxu0
    %429 = vmatprep.mubr.bf16.mxu0 0
    %430 = vmatmul.mubr.bf16.gmra.mrb[0].mxu0 %v247
    %v431 = vpop.f32.mrb[0].mxu0
    %v432 = vadd.f32 %v171, %v431
    %v433 = vpop.f32.mrb[0].mxu0
    %v434 = vpop.f32.mrb[0].mxu0
    %v435 = vadd.f32 %v171, %v434
    %v436 = vpop.f32.mrb[0].mxu0
    %437 = vmatprep.mubr.bf16.mxu0 0
    %438 = vmatmul.mubr.bf16.gmra.mrb[0].mxu0 %v248
    %v439 = vpop.f32.mrb[0].mxu0
    %v440 = vadd.f32 %v171, %v439
    %v441 = vpop.f32.mrb[0].mxu0
    %v442 = vpop.f32.mrb[0].mxu0
    %v443 = vadd.f32 %v171, %v442
    %v444 = vpop.f32.mrb[0].mxu0
    %445 = vmatprep.mubr.bf16.mxu0 0
    %446 = vmatmul.mubr.bf16.gmra.mrb[0].mxu0 %v249
    %v447 = vpop.f32.mrb[0].mxu0
    %v448 = vadd.f32 %v171, %v447
    %v449 = vpop.f32.mrb[0].mxu0
    %v450 = vpop.f32.mrb[0].mxu0
    %v451 = vadd.f32 %v171, %v450
    %v452 = vpop.f32.mrb[0].mxu0
    %453 = vmatprep.mubr.bf16.mxu0 0
    %454 = vmatmul.mubr.bf16.gmra.mrb[0].mxu0 %v250
    %v455 = vpop.f32.mrb[0].mxu0
    %v456 = vadd.f32 %v171, %v455
    %v457 = vpop.f32.mrb[0].mxu0
    %v458 = vpop.f32.mrb[0].mxu0
    %v459 = vadd.f32 %v171, %v458
    %v460 = vpop.f32.mrb[0].mxu0
    %461 = vmatprep.mubr.bf16.mxu0 0
    %462 = vmatmul.mubr.bf16.gmra.mrb[0].mxu0 %v251
    %v463 = vpop.f32.mrb[0].mxu0
    %v464 = vadd.f32 %v171, %v463
    %v465 = vpop.f32.mrb[0].mxu0
    %v466 = vpop.f32.mrb[0].mxu0
    %v467 = vadd.f32 %v171, %v466
    %v468 = vpop.f32.mrb[0].mxu0
    %469 = vmatprep.mubr.bf16.mxu0 0
    %470 = vmatmul.mubr.bf16.gmra.mrb[0].mxu0 %v252
    %v471 = vpop.f32.mrb[0].mxu0
    %v472 = vadd.f32 %v171, %v471
    %v473 = vpop.f32.mrb[0].mxu0
    %v474 = vpop.f32.mrb[0].mxu0
    %v475 = vadd.f32 %v171, %v474
    %v476 = vpop.f32.mrb[0].mxu0
    %477 = vdwg.mxu0
    %v478 = vmax.f32 %v352, 0.0
    %v479 = vmax.f32 %v355, 0.0
    %v480 = vmax.f32 %v360, 0.0
    %v481 = vmax.f32 %v363, 0.0
    %v482 = vmax.f32 %v368, 0.0
    %v483 = vmax.f32 %v371, 0.0
    %v484 = vmax.f32 %v376, 0.0
    %v485 = vmax.f32 %v379, 0.0
    %v486 = vmax.f32 %v384, 0.0
    %v487 = vmax.f32 %v387, 0.0
    %v488 = vmax.f32 %v392, 0.0
    %v489 = vmax.f32 %v395, 0.0
    %v490 = vmax.f32 %v400, 0.0
    %v491 = vmax.f32 %v403, 0.0
    %v492 = vmax.f32 %v408, 0.0
    %v493 = vmax.f32 %v411, 0.0
    %v494 = vmax.f32 %v416, 0.0
    %v495 = vmax.f32 %v419, 0.0
    %v496 = vmax.f32 %v424, 0.0
    %v497 = vmax.f32 %v427, 0.0
    %v498 = vmax.f32 %v432, 0.0
    %v499 = vmax.f32 %v435, 0.0
    %v500 = vmax.f32 %v440, 0.0
    %v501 = vmax.f32 %v443, 0.0
    %v502 = vmax.f32 %v448, 0.0
    %v503 = vmax.f32 %v451, 0.0
    %v504 = vmax.f32 %v456, 0.0
    %v505 = vmax.f32 %v459, 0.0
    %v506 = vmax.f32 %v464, 0.0
    %v507 = vmax.f32 %v467, 0.0
    %v508 = vmax.f32 %v472, 0.0
    %v509 = vmax.f32 %v475, 0.0
    %510 = vst [vmem:[#allocation2] sm:$0xff] %v478
    %511 = vst [vmem:[#allocation2 + $0x8] sm:$0xff] %v479
    %512 = vst [vmem:[#allocation2 + $0x10] sm:$0xff] %v480
    %513 = vst [vmem:[#allocation2 + $0x18] sm:$0xff] %v481
    %514 = vst [vmem:[#allocation2 + $0x20] sm:$0xff] %v482
    %515 = vst [vmem:[#allocation2 + $0x28] sm:$0xff] %v483
    %516 = vst [vmem:[#allocation2 + $0x30] sm:$0xff] %v484
    %517 = vst [vmem:[#allocation2 + $0x38] sm:$0xff] %v485
    %518 = vst [vmem:[#allocation2 + $0x40] sm:$0xff] %v486
    %519 = vst [vmem:[#allocation2 + $0x48] sm:$0xff] %v487
    %520 = vst [vmem:[#allocation2 + $0x50] sm:$0xff] %v488
    %521 = vst [vmem:[#allocation2 + $0x58] sm:$0xff] %v489
    %522 = vst [vmem:[#allocation2 + $0x60] sm:$0xff] %v490
    %523 = vst [vmem:[#allocation2 + $0x68] sm:$0xff] %v491
    %524 = vst [vmem:[#allocation2 + $0x70] sm:$0xff] %v492
    %525 = vst [vmem:[#allocation2 + $0x78] sm:$0xff] %v493
    %526 = vst [vmem:[#allocation2 + $0x80] sm:$0xff] %v494
    %527 = vst [vmem:[#allocation2 + $0x88] sm:$0xff] %v495
    %528 = vst [vmem:[#allocation2 + $0x90] sm:$0xff] %v496
    %529 = vst [vmem:[#allocation2 + $0x98] sm:$0xff] %v497
    %530 = vst [vmem:[#allocation2 + $0xa0] sm:$0xff] %v498
    %531 = vst [vmem:[#allocation2 + $0xa8] sm:$0xff] %v499
    %532 = vst [vmem:[#allocation2 + $0xb0] sm:$0xff] %v500
    %533 = vst [vmem:[#allocation2 + $0xb8] sm:$0xff] %v501
    %534 = vst [vmem:[#allocation2 + $0xc0] sm:$0xff] %v502
    %535 = vst [vmem:[#allocation2 + $0xc8] sm:$0xff] %v503
    %536 = vst [vmem:[#allocation2 + $0xd0] sm:$0xff] %v504
    %537 = vst [vmem:[#allocation2 + $0xd8] sm:$0xff] %v505
    %538 = vst [vmem:[#allocation2 + $0xe0] sm:$0xff] %v506
    %539 = vst [vmem:[#allocation2 + $0xe8] sm:$0xff] %v507
    %540 = vst [vmem:[#allocation2 + $0xf0] sm:$0xff] %v508
    %541 = vst [vmem:[#allocation2 + $0xf8] sm:$0xff] %v509
    %v542 = vld [vmem:[#allocation2] ss:$2 sm:$0xff]
    %s543 = scalar_lea.vmem [#allocation2], 16
    %v544 = vld [vmem:[%s543] ss:$2 sm:$0xff]
    %s545 = scalar_lea.vmem [#allocation2], 32
    %v546 = vld [vmem:[%s545] ss:$2 sm:$0xff]
    %s547 = scalar_lea.vmem [#allocation2], 48
    %v548 = vld [vmem:[%s547] ss:$2 sm:$0xff]
    %s549 = scalar_lea.vmem [#allocation2], 64
    %v550 = vld [vmem:[%s549] ss:$2 sm:$0xff]
    %s551 = scalar_lea.vmem [#allocation2], 80
    %v552 = vld [vmem:[%s551] ss:$2 sm:$0xff]
    %s553 = scalar_lea.vmem [#allocation2], 96
    %v554 = vld [vmem:[%s553] ss:$2 sm:$0xff]
    %s555 = scalar_lea.vmem [#allocation2], 112
    %v556 = vld [vmem:[%s555] ss:$2 sm:$0xff]
    %s557 = scalar_lea.vmem [#allocation2], 128
    %v558 = vld [vmem:[%s557] ss:$2 sm:$0xff]
    %s559 = scalar_lea.vmem [#allocation2], 144
    %v560 = vld [vmem:[%s559] ss:$2 sm:$0xff]
    %s561 = scalar_lea.vmem [#allocation2], 160
    %v562 = vld [vmem:[%s561] ss:$2 sm:$0xff]
    %s563 = scalar_lea.vmem [#allocation2], 176
    %v564 = vld [vmem:[%s563] ss:$2 sm:$0xff]
    %s565 = scalar_lea.vmem [#allocation2], 192
    %v566 = vld [vmem:[%s565] ss:$2 sm:$0xff]
    %s567 = scalar_lea.vmem [#allocation2], 208
    %v568 = vld [vmem:[%s567] ss:$2 sm:$0xff]
    %s569 = scalar_lea.vmem [#allocation2], 224
    %v570 = vld [vmem:[%s569] ss:$2 sm:$0xff]
    %s571 = scalar_lea.vmem [#allocation2], 240
    %v572 = vld [vmem:[%s571] ss:$2 sm:$0xff]
    %v573 = vpack.c.bf16 %v544, %v542
    %v574 = vpack.c.bf16 %v548, %v546
    %v575 = vpack.c.bf16 %v552, %v550
    %v576 = vpack.c.bf16 %v556, %v554
    %v577 = vpack.c.bf16 %v560, %v558
    %v578 = vpack.c.bf16 %v564, %v562
    %v579 = vpack.c.bf16 %v568, %v566
    %v580 = vpack.c.bf16 %v572, %v570
    %v581 = vld [vmem:[%s3] sm:$0xf]
    %v582 = vld [vmem:[%s3 + $0x4] sm:$0xf]
    %v583 = vld [vmem:[%s3 + $0x8] sm:$0xf]
    %v584 = vld [vmem:[%s3 + $0xc] sm:$0xf]
    %v585 = vld [vmem:[%s3 + $0x10] sm:$0xf]
    %v586 = vld [vmem:[%s3 + $0x14] sm:$0xf]
    %v587 = vld [vmem:[%s3 + $0x18] sm:$0xf]
    %v588 = vld [vmem:[%s3 + $0x1c] sm:$0xf]
    %v589 = vld [vmem:[%s3 + $0x20] sm:$0xf]
    %v590 = vld [vmem:[%s3 + $0x24] sm:$0xf]
    %v591 = vld [vmem:[%s3 + $0x28] sm:$0xf]
    %v592 = vld [vmem:[%s3 + $0x2c] sm:$0xf]
    %v593 = vld [vmem:[%s3 + $0x30] sm:$0xf]
    %v594 = vld [vmem:[%s3 + $0x34] sm:$0xf]
    %v595 = vld [vmem:[%s3 + $0x38] sm:$0xf]
    %v596 = vld [vmem:[%s3 + $0x3c] sm:$0xf]
    %s597 = scalar_lea.vmem [#allocation2], 1
    %v598 = vld [vmem:[%s597] ss:$2 sm:$0xff]
    %s599 = scalar_lea.vmem [#allocation2], 17
    %v600 = vld [vmem:[%s599] ss:$2 sm:$0xff]
    %s601 = scalar_lea.vmem [#allocation2], 33
    %v602 = vld [vmem:[%s601] ss:$2 sm:$0xff]
    %s603 = scalar_lea.vmem [#allocation2], 49
    %v604 = vld [vmem:[%s603] ss:$2 sm:$0xff]
    %s605 = scalar_lea.vmem [#allocation2], 65
    %v606 = vld [vmem:[%s605] ss:$2 sm:$0xff]
    %s607 = scalar_lea.vmem [#allocation2], 81
    %v608 = vld [vmem:[%s607] ss:$2 sm:$0xff]
    %s609 = scalar_lea.vmem [#allocation2], 97
    %v610 = vld [vmem:[%s609] ss:$2 sm:$0xff]
    %s611 = scalar_lea.vmem [#allocation2], 113
    %v612 = vld [vmem:[%s611] ss:$2 sm:$0xff]
    %s613 = scalar_lea.vmem [#allocation2], 129
    %v614 = vld [vmem:[%s613] ss:$2 sm:$0xff]
    %s615 = scalar_lea.vmem [#allocation2], 145
    %v616 = vld [vmem:[%s615] ss:$2 sm:$0xff]
    %s617 = scalar_lea.vmem [#allocation2], 161
    %v618 = vld [vmem:[%s617] ss:$2 sm:$0xff]
    %s619 = scalar_lea.vmem [#allocation2], 177
    %v620 = vld [vmem:[%s619] ss:$2 sm:$0xff]
    %s621 = scalar_lea.vmem [#allocation2], 193
    %v622 = vld [vmem:[%s621] ss:$2 sm:$0xff]
    %s623 = scalar_lea.vmem [#allocation2], 209
    %v624 = vld [vmem:[%s623] ss:$2 sm:$0xff]
    %s625 = scalar_lea.vmem [#allocation2], 225
    %v626 = vld [vmem:[%s625] ss:$2 sm:$0xff]
    %s627 = scalar_lea.vmem [#allocation2], 241
    %v628 = vld [vmem:[%s627] ss:$2 sm:$0xff]
    %v629 = vpack.c.bf16 %v600, %v598
    %v630 = vpack.c.bf16 %v604, %v602
    %v631 = vpack.c.bf16 %v608, %v606
    %v632 = vpack.c.bf16 %v612, %v610
    %v633 = vpack.c.bf16 %v616, %v614
    %v634 = vpack.c.bf16 %v620, %v618
    %v635 = vpack.c.bf16 %v624, %v622
    %v636 = vpack.c.bf16 %v628, %v626
    %s637 = scalar_lea.vmem %s3, 64
    %v638 = vld [vmem:[%s637] sm:$0xf]
    %v639 = vld [vmem:[%s637 + $0x4] sm:$0xf]
    %v640 = vld [vmem:[%s637 + $0x8] sm:$0xf]
    %v641 = vld [vmem:[%s637 + $0xc] sm:$0xf]
    %v642 = vld [vmem:[%s637 + $0x10] sm:$0xf]
    %v643 = vld [vmem:[%s637 + $0x14] sm:$0xf]
    %v644 = vld [vmem:[%s637 + $0x18] sm:$0xf]
    %v645 = vld [vmem:[%s637 + $0x1c] sm:$0xf]
    %v646 = vld [vmem:[%s637 + $0x20] sm:$0xf]
    %v647 = vld [vmem:[%s637 + $0x24] sm:$0xf]
    %v648 = vld [vmem:[%s637 + $0x28] sm:$0xf]
    %v649 = vld [vmem:[%s637 + $0x2c] sm:$0xf]
    %v650 = vld [vmem:[%s637 + $0x30] sm:$0xf]
    %v651 = vld [vmem:[%s637 + $0x34] sm:$0xf]
    %v652 = vld [vmem:[%s637 + $0x38] sm:$0xf]
    %v653 = vld [vmem:[%s637 + $0x3c] sm:$0xf]
    %v670 = vunpack.c.l.b16 %v638
    %v671 = vunpack.c.l.b16 %v639
    %v672 = vunpack.c.l.b16 %v640
    %v673 = vunpack.c.l.b16 %v641
    %v674 = vunpack.c.l.b16 %v642
    %v675 = vunpack.c.l.b16 %v643
    %v676 = vunpack.c.l.b16 %v644
    %v677 = vunpack.c.l.b16 %v645
    %v678 = vunpack.c.l.b16 %v646
    %v679 = vunpack.c.l.b16 %v647
    %v680 = vunpack.c.l.b16 %v648
    %v681 = vunpack.c.l.b16 %v649
    %v682 = vunpack.c.l.b16 %v650
    %v683 = vunpack.c.l.b16 %v651
    %v684 = vunpack.c.l.b16 %v652
    %v685 = vunpack.c.l.b16 %v653
    %v686 = vpack.c.b16 %v671, %v670
    %v687 = vpack.c.b16 %v673, %v672
    %v688 = vpack.c.b16 %v675, %v674
    %v689 = vpack.c.b16 %v677, %v676
    %v690 = vpack.c.b16 %v679, %v678
    %v691 = vpack.c.b16 %v681, %v680
    %v692 = vpack.c.b16 %v683, %v682
    %v693 = vpack.c.b16 %v685, %v684
    %702 = vmatprep.subr.bf16.mxu0 0
    %703 = vmatpush1.bf16.msra.mxu0 %v686
    %704 = vmatprep.subr.bf16.mxu0 0
    %705 = vmatpush1.bf16.msra.mxu0 %v687
    %706 = vmatprep.subr.bf16.mxu0 0
    %707 = vmatpush1.bf16.msra.mxu0 %v688
    %708 = vmatprep.subr.bf16.mxu0 0
    %709 = vmatpush1.bf16.msra.mxu0 %v689
    %710 = vmatprep.subr.bf16.mxu0 0
    %711 = vmatpush1.bf16.msra.mxu0 %v690
    %712 = vmatprep.subr.bf16.mxu0 0
    %713 = vmatpush1.bf16.msra.mxu0 %v691
    %714 = vmatprep.subr.bf16.mxu0 0
    %715 = vmatpush1.bf16.msra.mxu0 %v692
    %716 = vmatprep.subr.bf16.mxu0 0
    %717 = vmatpush1.bf16.msra.mxu0 %v693
    %718 = vmatprep.subr.bf16.mxu0 0
    %719 = vmatpush1.bf16.msra.mxu0 0
    %720 = vmatprep.subr.bf16.mxu0 0
    %721 = vmatpush1.bf16.msra.mxu0 0
    %722 = vmatprep.subr.bf16.mxu0 0
    %723 = vmatpush1.bf16.msra.mxu0 0
    %724 = vmatprep.subr.bf16.mxu0 0
    %725 = vmatpush1.bf16.msra.mxu0 0
    %726 = vmatprep.subr.bf16.mxu0 0
    %727 = vmatpush1.bf16.msra.mxu0 0
    %728 = vmatprep.subr.bf16.mxu0 0
    %729 = vmatpush1.bf16.msra.mxu0 0
    %730 = vmatprep.subr.bf16.mxu0 0
    %731 = vmatpush1.bf16.msra.mxu0 0
    %732 = vmatprep.subr.bf16.mxu0 0
    %733 = vmatpush1.bf16.msra.mxu0 0
    %734 = vmatprep.mubr.bf16.mxu0 0
    %735 = vmatmul.mubr.bf16.gmra.mrb[0].mxu0 %v629
    %v736 = vpop.f32.mrb[0].mxu0
    %v737 = vadd.f32 0.0, %v736
    %v738 = vpop.f32.mrb[0].mxu0
    %v739 = vpop.f32.mrb[0].mxu0
    %v740 = vadd.f32 0.0, %v739
    %v741 = vpop.f32.mrb[0].mxu0
    %742 = vmatprep.mubr.bf16.mxu0 0
    %743 = vmatmul.mubr.bf16.gmra.mrb[0].mxu0 %v630
    %v744 = vpop.f32.mrb[0].mxu0
    %v745 = vadd.f32 0.0, %v744
    %v746 = vpop.f32.mrb[0].mxu0
    %v747 = vpop.f32.mrb[0].mxu0
    %v748 = vadd.f32 0.0, %v747
    %v749 = vpop.f32.mrb[0].mxu0
    %750 = vmatprep.mubr.bf16.mxu0 0
    %751 = vmatmul.mubr.bf16.gmra.mrb[0].mxu0 %v631
    %v752 = vpop.f32.mrb[0].mxu0
    %v753 = vadd.f32 0.0, %v752
    %v754 = vpop.f32.mrb[0].mxu0
    %v755 = vpop.f32.mrb[0].mxu0
    %v756 = vadd.f32 0.0, %v755
    %v757 = vpop.f32.mrb[0].mxu0
    %758 = vmatprep.mubr.bf16.mxu0 0
    %759 = vmatmul.mubr.bf16.gmra.mrb[0].mxu0 %v632
    %v760 = vpop.f32.mrb[0].mxu0
    %v761 = vadd.f32 0.0, %v760
    %v762 = vpop.f32.mrb[0].mxu0
    %v763 = vpop.f32.mrb[0].mxu0
    %v764 = vadd.f32 0.0, %v763
    %v765 = vpop.f32.mrb[0].mxu0
    %766 = vmatprep.mubr.bf16.mxu0 0
    %767 = vmatmul.mubr.bf16.gmra.mrb[0].mxu0 %v633
    %v768 = vpop.f32.mrb[0].mxu0
    %v769 = vadd.f32 0.0, %v768
    %v770 = vpop.f32.mrb[0].mxu0
    %v771 = vpop.f32.mrb[0].mxu0
    %v772 = vadd.f32 0.0, %v771
    %v773 = vpop.f32.mrb[0].mxu0
    %774 = vmatprep.mubr.bf16.mxu0 0
    %775 = vmatmul.mubr.bf16.gmra.mrb[0].mxu0 %v634
    %v776 = vpop.f32.mrb[0].mxu0
    %v777 = vadd.f32 0.0, %v776
    %v778 = vpop.f32.mrb[0].mxu0
    %v779 = vpop.f32.mrb[0].mxu0
    %v780 = vadd.f32 0.0, %v779
    %v781 = vpop.f32.mrb[0].mxu0
    %782 = vmatprep.mubr.bf16.mxu0 0
    %783 = vmatmul.mubr.bf16.gmra.mrb[0].mxu0 %v635
    %v784 = vpop.f32.mrb[0].mxu0
    %v785 = vadd.f32 0.0, %v784
    %v786 = vpop.f32.mrb[0].mxu0
    %v787 = vpop.f32.mrb[0].mxu0
    %v788 = vadd.f32 0.0, %v787
    %v789 = vpop.f32.mrb[0].mxu0
    %790 = vmatprep.mubr.bf16.mxu0 0
    %791 = vmatmul.mubr.bf16.gmra.mrb[0].mxu0 %v636
    %v792 = vpop.f32.mrb[0].mxu0
    %v793 = vadd.f32 0.0, %v792
    %v794 = vpop.f32.mrb[0].mxu0
    %v795 = vpop.f32.mrb[0].mxu0
    %v796 = vadd.f32 0.0, %v795
    %v797 = vpop.f32.mrb[0].mxu0
    %798 = vdwg.mxu0
    %v815 = vunpack.c.l.b16 %v581
    %v816 = vunpack.c.l.b16 %v582
    %v817 = vunpack.c.l.b16 %v583
    %v818 = vunpack.c.l.b16 %v584
    %v819 = vunpack.c.l.b16 %v585
    %v820 = vunpack.c.l.b16 %v586
    %v821 = vunpack.c.l.b16 %v587
    %v822 = vunpack.c.l.b16 %v588
    %v823 = vunpack.c.l.b16 %v589
    %v824 = vunpack.c.l.b16 %v590
    %v825 = vunpack.c.l.b16 %v591
    %v826 = vunpack.c.l.b16 %v592
    %v827 = vunpack.c.l.b16 %v593
    %v828 = vunpack.c.l.b16 %v594
    %v829 = vunpack.c.l.b16 %v595
    %v830 = vunpack.c.l.b16 %v596
    %v831 = vpack.c.b16 %v816, %v815
    %v832 = vpack.c.b16 %v818, %v817
    %v833 = vpack.c.b16 %v820, %v819
    %v834 = vpack.c.b16 %v822, %v821
    %v835 = vpack.c.b16 %v824, %v823
    %v836 = vpack.c.b16 %v826, %v825
    %v837 = vpack.c.b16 %v828, %v827
    %v838 = vpack.c.b16 %v830, %v829
    %847 = vmatprep.subr.bf16.mxu0 0
    %848 = vmatpush1.bf16.msra.mxu0 %v831
    %849 = vmatprep.subr.bf16.mxu0 0
    %850 = vmatpush1.bf16.msra.mxu0 %v832
    %851 = vmatprep.subr.bf16.mxu0 0
    %852 = vmatpush1.bf16.msra.mxu0 %v833
    %853 = vmatprep.subr.bf16.mxu0 0
    %854 = vmatpush1.bf16.msra.mxu0 %v834
    %855 = vmatprep.subr.bf16.mxu0 0
    %856 = vmatpush1.bf16.msra.mxu0 %v835
    %857 = vmatprep.subr.bf16.mxu0 0
    %858 = vmatpush1.bf16.msra.mxu0 %v836
    %859 = vmatprep.subr.bf16.mxu0 0
    %860 = vmatpush1.bf16.msra.mxu0 %v837
    %861 = vmatprep.subr.bf16.mxu0 0
    %862 = vmatpush1.bf16.msra.mxu0 %v838
    %863 = vmatprep.subr.bf16.mxu0 0
    %864 = vmatpush1.bf16.msra.mxu0 0
    %865 = vmatprep.subr.bf16.mxu0 0
    %866 = vmatpush1.bf16.msra.mxu0 0
    %867 = vmatprep.subr.bf16.mxu0 0
    %868 = vmatpush1.bf16.msra.mxu0 0
    %869 = vmatprep.subr.bf16.mxu0 0
    %870 = vmatpush1.bf16.msra.mxu0 0
    %871 = vmatprep.subr.bf16.mxu0 0
    %872 = vmatpush1.bf16.msra.mxu0 0
    %873 = vmatprep.subr.bf16.mxu0 0
    %874 = vmatpush1.bf16.msra.mxu0 0
    %875 = vmatprep.subr.bf16.mxu0 0
    %876 = vmatpush1.bf16.msra.mxu0 0
    %877 = vmatprep.subr.bf16.mxu0 0
    %878 = vmatpush1.bf16.msra.mxu0 0
    %879 = vmatprep.mubr.bf16.mxu0 0
    %880 = vmatmul.mubr.bf16.gmra.mrb[0].mxu0 %v573
    %v881 = vpop.f32.mrb[0].mxu0
    %v882 = vadd.f32 %v737, %v881
    %v883 = vpop.f32.mrb[0].mxu0
    %v884 = vpop.f32.mrb[0].mxu0
    %v885 = vadd.f32 %v740, %v884
    %v886 = vpop.f32.mrb[0].mxu0
    %887 = vmatprep.mubr.bf16.mxu0 0
    %888 = vmatmul.mubr.bf16.gmra.mrb[0].mxu0 %v574
    %v889 = vpop.f32.mrb[0].mxu0
    %v890 = vadd.f32 %v745, %v889
    %v891 = vpop.f32.mrb[0].mxu0
    %v892 = vpop.f32.mrb[0].mxu0
    %v893 = vadd.f32 %v748, %v892
    %v894 = vpop.f32.mrb[0].mxu0
    %895 = vmatprep.mubr.bf16.mxu0 0
    %896 = vmatmul.mubr.bf16.gmra.mrb[0].mxu0 %v575
    %v897 = vpop.f32.mrb[0].mxu0
    %v898 = vadd.f32 %v753, %v897
    %v899 = vpop.f32.mrb[0].mxu0
    %v900 = vpop.f32.mrb[0].mxu0
    %v901 = vadd.f32 %v756, %v900
    %v902 = vpop.f32.mrb[0].mxu0
    %903 = vmatprep.mubr.bf16.mxu0 0
    %904 = vmatmul.mubr.bf16.gmra.mrb[0].mxu0 %v576
    %v905 = vpop.f32.mrb[0].mxu0
    %v906 = vadd.f32 %v761, %v905
    %v907 = vpop.f32.mrb[0].mxu0
    %v908 = vpop.f32.mrb[0].mxu0
    %v909 = vadd.f32 %v764, %v908
    %v910 = vpop.f32.mrb[0].mxu0
    %911 = vmatprep.mubr.bf16.mxu0 0
    %912 = vmatmul.mubr.bf16.gmra.mrb[0].mxu0 %v577
    %v913 = vpop.f32.mrb[0].mxu0
    %v914 = vadd.f32 %v769, %v913
    %v915 = vpop.f32.mrb[0].mxu0
    %v916 = vpop.f32.mrb[0].mxu0
    %v917 = vadd.f32 %v772, %v916
    %v918 = vpop.f32.mrb[0].mxu0
    %919 = vmatprep.mubr.bf16.mxu0 0
    %920 = vmatmul.mubr.bf16.gmra.mrb[0].mxu0 %v578
    %v921 = vpop.f32.mrb[0].mxu0
    %v922 = vadd.f32 %v777, %v921
    %v923 = vpop.f32.mrb[0].mxu0
    %v924 = vpop.f32.mrb[0].mxu0
    %v925 = vadd.f32 %v780, %v924
    %v926 = vpop.f32.mrb[0].mxu0
    %927 = vmatprep.mubr.bf16.mxu0 0
    %928 = vmatmul.mubr.bf16.gmra.mrb[0].mxu0 %v579
    %v929 = vpop.f32.mrb[0].mxu0
    %v930 = vadd.f32 %v785, %v929
    %v931 = vpop.f32.mrb[0].mxu0
    %v932 = vpop.f32.mrb[0].mxu0
    %v933 = vadd.f32 %v788, %v932
    %v934 = vpop.f32.mrb[0].mxu0
    %935 = vmatprep.mubr.bf16.mxu0 0
    %936 = vmatmul.mubr.bf16.gmra.mrb[0].mxu0 %v580
    %v937 = vpop.f32.mrb[0].mxu0
    %v938 = vadd.f32 %v793, %v937
    %v939 = vpop.f32.mrb[0].mxu0
    %v940 = vpop.f32.mrb[0].mxu0
    %v941 = vadd.f32 %v796, %v940
    %v942 = vpop.f32.mrb[0].mxu0
    %943 = vdwg.mxu0
    %s944 = scalar_lea.vmem [#allocation2], 2
    %v945 = vld [vmem:[%s944] ss:$2 sm:$0xff]
    %s946 = scalar_lea.vmem [#allocation2], 18
    %v947 = vld [vmem:[%s946] ss:$2 sm:$0xff]
    %s948 = scalar_lea.vmem [#allocation2], 34
    %v949 = vld [vmem:[%s948] ss:$2 sm:$0xff]
    %s950 = scalar_lea.vmem [#allocation2], 50
    %v951 = vld [vmem:[%s950] ss:$2 sm:$0xff]
    %s952 = scalar_lea.vmem [#allocation2], 66
    %v953 = vld [vmem:[%s952] ss:$2 sm:$0xff]
    %s954 = scalar_lea.vmem [#allocation2], 82
    %v955 = vld [vmem:[%s954] ss:$2 sm:$0xff]
    %s956 = scalar_lea.vmem [#allocation2], 98
    %v957 = vld [vmem:[%s956] ss:$2 sm:$0xff]
    %s958 = scalar_lea.vmem [#allocation2], 114
    %v959 = vld [vmem:[%s958] ss:$2 sm:$0xff]
    %s960 = scalar_lea.vmem [#allocation2], 130
    %v961 = vld [vmem:[%s960] ss:$2 sm:$0xff]
    %s962 = scalar_lea.vmem [#allocation2], 146
    %v963 = vld [vmem:[%s962] ss:$2 sm:$0xff]
    %s964 = scalar_lea.vmem [#allocation2], 162
    %v965 = vld [vmem:[%s964] ss:$2 sm:$0xff]
    %s966 = scalar_lea.vmem [#allocation2], 178
    %v967 = vld [vmem:[%s966] ss:$2 sm:$0xff]
    %s968 = scalar_lea.vmem [#allocation2], 194
    %v969 = vld [vmem:[%s968] ss:$2 sm:$0xff]
    %s970 = scalar_lea.vmem [#allocation2], 210
    %v971 = vld [vmem:[%s970] ss:$2 sm:$0xff]
    %s972 = scalar_lea.vmem [#allocation2], 226
    %v973 = vld [vmem:[%s972] ss:$2 sm:$0xff]
    %s974 = scalar_lea.vmem [#allocation2], 242
    %v975 = vld [vmem:[%s974] ss:$2 sm:$0xff]
    %v976 = vpack.c.bf16 %v947, %v945
    %v977 = vpack.c.bf16 %v951, %v949
    %v978 = vpack.c.bf16 %v955, %v953
    %v979 = vpack.c.bf16 %v959, %v957
    %v980 = vpack.c.bf16 %v963, %v961
    %v981 = vpack.c.bf16 %v967, %v965
    %v982 = vpack.c.bf16 %v971, %v969
    %v983 = vpack.c.bf16 %v975, %v973
    %s984 = scalar_lea.vmem %s3, 128
    %v985 = vld [vmem:[%s984] sm:$0xf]
    %v986 = vld [vmem:[%s984 + $0x4] sm:$0xf]
    %v987 = vld [vmem:[%s984 + $0x8] sm:$0xf]
    %v988 = vld [vmem:[%s984 + $0xc] sm:$0xf]
    %v989 = vld [vmem:[%s984 + $0x10] sm:$0xf]
    %v990 = vld [vmem:[%s984 + $0x14] sm:$0xf]
    %v991 = vld [vmem:[%s984 + $0x18] sm:$0xf]
    %v992 = vld [vmem:[%s984 + $0x1c] sm:$0xf]
    %v993 = vld [vmem:[%s984 + $0x20] sm:$0xf]
    %v994 = vld [vmem:[%s984 + $0x24] sm:$0xf]
    %v995 = vld [vmem:[%s984 + $0x28] sm:$0xf]
    %v996 = vld [vmem:[%s984 + $0x2c] sm:$0xf]
    %v997 = vld [vmem:[%s984 + $0x30] sm:$0xf]
    %v998 = vld [vmem:[%s984 + $0x34] sm:$0xf]
    %v999 = vld [vmem:[%s984 + $0x38] sm:$0xf]
    %v1000 = vld [vmem:[%s984 + $0x3c] sm:$0xf]
    %v1017 = vunpack.c.l.b16 %v985
    %v1018 = vunpack.c.l.b16 %v986
    %v1019 = vunpack.c.l.b16 %v987
    %v1020 = vunpack.c.l.b16 %v988
    %v1021 = vunpack.c.l.b16 %v989
    %v1022 = vunpack.c.l.b16 %v990
    %v1023 = vunpack.c.l.b16 %v991
    %v1024 = vunpack.c.l.b16 %v992
    %v1025 = vunpack.c.l.b16 %v993
    %v1026 = vunpack.c.l.b16 %v994
    %v1027 = vunpack.c.l.b16 %v995
    %v1028 = vunpack.c.l.b16 %v996
    %v1029 = vunpack.c.l.b16 %v997
    %v1030 = vunpack.c.l.b16 %v998
    %v1031 = vunpack.c.l.b16 %v999
    %v1032 = vunpack.c.l.b16 %v1000
    %v1033 = vpack.c.b16 %v1018, %v1017
    %v1034 = vpack.c.b16 %v1020, %v1019
    %v1035 = vpack.c.b16 %v1022, %v1021
    %v1036 = vpack.c.b16 %v1024, %v1023
    %v1037 = vpack.c.b16 %v1026, %v1025
    %v1038 = vpack.c.b16 %v1028, %v1027
    %v1039 = vpack.c.b16 %v1030, %v1029
    %v1040 = vpack.c.b16 %v1032, %v1031
    %1049 = vmatprep.subr.bf16.mxu0 0
    %1050 = vmatpush1.bf16.msra.mxu0 %v1033
    %1051 = vmatprep.subr.bf16.mxu0 0
    %1052 = vmatpush1.bf16.msra.mxu0 %v1034
    %1053 = vmatprep.subr.bf16.mxu0 0
    %1054 = vmatpush1.bf16.msra.mxu0 %v1035
    %1055 = vmatprep.subr.bf16.mxu0 0
    %1056 = vmatpush1.bf16.msra.mxu0 %v1036
    %1057 = vmatprep.subr.bf16.mxu0 0
    %1058 = vmatpush1.bf16.msra.mxu0 %v1037
    %1059 = vmatprep.subr.bf16.mxu0 0
    %1060 = vmatpush1.bf16.msra.mxu0 %v1038
    %1061 = vmatprep.subr.bf16.mxu0 0
    %1062 = vmatpush1.bf16.msra.mxu0 %v1039
    %1063 = vmatprep.subr.bf16.mxu0 0
    %1064 = vmatpush1.bf16.msra.mxu0 %v1040
    %1065 = vmatprep.subr.bf16.mxu0 0
    %1066 = vmatpush1.bf16.msra.mxu0 0
    %1067 = vmatprep.subr.bf16.mxu0 0
    %1068 = vmatpush1.bf16.msra.mxu0 0
    %1069 = vmatprep.subr.bf16.mxu0 0
    %1070 = vmatpush1.bf16.msra.mxu0 0
    %1071 = vmatprep.subr.bf16.mxu0 0
    %1072 = vmatpush1.bf16.msra.mxu0 0
    %1073 = vmatprep.subr.bf16.mxu0 0
    %1074 = vmatpush1.bf16.msra.mxu0 0
    %1075 = vmatprep.subr.bf16.mxu0 0
    %1076 = vmatpush1.bf16.msra.mxu0 0
    %1077 = vmatprep.subr.bf16.mxu0 0
    %1078 = vmatpush1.bf16.msra.mxu0 0
    %1079 = vmatprep.subr.bf16.mxu0 0
    %1080 = vmatpush1.bf16.msra.mxu0 0
    %1081 = vmatprep.mubr.bf16.mxu0 0
    %1082 = vmatmul.mubr.bf16.gmra.mrb[0].mxu0 %v976
    %v1083 = vpop.f32.mrb[0].mxu0
    %v1084 = vadd.f32 0.0, %v1083
    %v1085 = vpop.f32.mrb[0].mxu0
    %v1086 = vpop.f32.mrb[0].mxu0
    %v1087 = vadd.f32 0.0, %v1086
    %v1088 = vpop.f32.mrb[0].mxu0
    %1089 = vmatprep.mubr.bf16.mxu0 0
    %1090 = vmatmul.mubr.bf16.gmra.mrb[0].mxu0 %v977
    %v1091 = vpop.f32.mrb[0].mxu0
    %v1092 = vadd.f32 0.0, %v1091
    %v1093 = vpop.f32.mrb[0].mxu0
    %v1094 = vpop.f32.mrb[0].mxu0
    %v1095 = vadd.f32 0.0, %v1094
    %v1096 = vpop.f32.mrb[0].mxu0
    %1097 = vmatprep.mubr.bf16.mxu0 0
    %1098 = vmatmul.mubr.bf16.gmra.mrb[0].mxu0 %v978
    %v1099 = vpop.f32.mrb[0].mxu0
    %v1100 = vadd.f32 0.0, %v1099
    %v1101 = vpop.f32.mrb[0].mxu0
    %v1102 = vpop.f32.mrb[0].mxu0
    %v1103 = vadd.f32 0.0, %v1102
    %v1104 = vpop.f32.mrb[0].mxu0
    %1105 = vmatprep.mubr.bf16.mxu0 0
    %1106 = vmatmul.mubr.bf16.gmra.mrb[0].mxu0 %v979
    %v1107 = vpop.f32.mrb[0].mxu0
    %v1108 = vadd.f32 0.0, %v1107
    %v1109 = vpop.f32.mrb[0].mxu0
    %v1110 = vpop.f32.mrb[0].mxu0
    %v1111 = vadd.f32 0.0, %v1110
    %v1112 = vpop.f32.mrb[0].mxu0
    %1113 = vmatprep.mubr.bf16.mxu0 0
    %1114 = vmatmul.mubr.bf16.gmra.mrb[0].mxu0 %v980
    %v1115 = vpop.f32.mrb[0].mxu0
    %v1116 = vadd.f32 0.0, %v1115
    %v1117 = vpop.f32.mrb[0].mxu0
    %v1118 = vpop.f32.mrb[0].mxu0
    %v1119 = vadd.f32 0.0, %v1118
    %v1120 = vpop.f32.mrb[0].mxu0
    %1121 = vmatprep.mubr.bf16.mxu0 0
    %1122 = vmatmul.mubr.bf16.gmra.mrb[0].mxu0 %v981
    %v1123 = vpop.f32.mrb[0].mxu0
    %v1124 = vadd.f32 0.0, %v1123
    %v1125 = vpop.f32.mrb[0].mxu0
    %v1126 = vpop.f32.mrb[0].mxu0
    %v1127 = vadd.f32 0.0, %v1126
    %v1128 = vpop.f32.mrb[0].mxu0
    %1129 = vmatprep.mubr.bf16.mxu0 0
    %1130 = vmatmul.mubr.bf16.gmra.mrb[0].mxu0 %v982
    %v1131 = vpop.f32.mrb[0].mxu0
    %v1132 = vadd.f32 0.0, %v1131
    %v1133 = vpop.f32.mrb[0].mxu0
    %v1134 = vpop.f32.mrb[0].mxu0
    %v1135 = vadd.f32 0.0, %v1134
    %v1136 = vpop.f32.mrb[0].mxu0
    %1137 = vmatprep.mubr.bf16.mxu0 0
    %1138 = vmatmul.mubr.bf16.gmra.mrb[0].mxu0 %v983
    %v1139 = vpop.f32.mrb[0].mxu0
    %v1140 = vadd.f32 0.0, %v1139
    %v1141 = vpop.f32.mrb[0].mxu0
    %v1142 = vpop.f32.mrb[0].mxu0
    %v1143 = vadd.f32 0.0, %v1142
    %v1144 = vpop.f32.mrb[0].mxu0
    %1145 = vdwg.mxu0
    %v1146 = vadd.f32 %v882, %v1084
    %v1147 = vadd.f32 %v885, %v1087
    %v1148 = vadd.f32 %v890, %v1092
    %v1149 = vadd.f32 %v893, %v1095
    %v1150 = vadd.f32 %v898, %v1100
    %v1151 = vadd.f32 %v901, %v1103
    %v1152 = vadd.f32 %v906, %v1108
    %v1153 = vadd.f32 %v909, %v1111
    %v1154 = vadd.f32 %v914, %v1116
    %v1155 = vadd.f32 %v917, %v1119
    %v1156 = vadd.f32 %v922, %v1124
    %v1157 = vadd.f32 %v925, %v1127
    %v1158 = vadd.f32 %v930, %v1132
    %v1159 = vadd.f32 %v933, %v1135
    %v1160 = vadd.f32 %v938, %v1140
    %v1161 = vadd.f32 %v941, %v1143
    %s1162 = scalar_lea.vmem [#allocation2], 3
    %v1163 = vld [vmem:[%s1162] ss:$2 sm:$0xff]
    %s1164 = scalar_lea.vmem [#allocation2], 19
    %v1165 = vld [vmem:[%s1164] ss:$2 sm:$0xff]
    %s1166 = scalar_lea.vmem [#allocation2], 35
    %v1167 = vld [vmem:[%s1166] ss:$2 sm:$0xff]
    %s1168 = scalar_lea.vmem [#allocation2], 51
    %v1169 = vld [vmem:[%s1168] ss:$2 sm:$0xff]
    %s1170 = scalar_lea.vmem [#allocation2], 67
    %v1171 = vld [vmem:[%s1170] ss:$2 sm:$0xff]
    %s1172 = scalar_lea.vmem [#allocation2], 83
    %v1173 = vld [vmem:[%s1172] ss:$2 sm:$0xff]
    %s1174 = scalar_lea.vmem [#allocation2], 99
    %v1175 = vld [vmem:[%s1174] ss:$2 sm:$0xff]
    %s1176 = scalar_lea.vmem [#allocation2], 115
    %v1177 = vld [vmem:[%s1176] ss:$2 sm:$0xff]
    %s1178 = scalar_lea.vmem [#allocation2], 131
    %v1179 = vld [vmem:[%s1178] ss:$2 sm:$0xff]
    %s1180 = scalar_lea.vmem [#allocation2], 147
    %v1181 = vld [vmem:[%s1180] ss:$2 sm:$0xff]
    %s1182 = scalar_lea.vmem [#allocation2], 163
    %v1183 = vld [vmem:[%s1182] ss:$2 sm:$0xff]
    %s1184 = scalar_lea.vmem [#allocation2], 179
    %v1185 = vld [vmem:[%s1184] ss:$2 sm:$0xff]
    %s1186 = scalar_lea.vmem [#allocation2], 195
    %v1187 = vld [vmem:[%s1186] ss:$2 sm:$0xff]
    %s1188 = scalar_lea.vmem [#allocation2], 211
    %v1189 = vld [vmem:[%s1188] ss:$2 sm:$0xff]
    %s1190 = scalar_lea.vmem [#allocation2], 227
    %v1191 = vld [vmem:[%s1190] ss:$2 sm:$0xff]
    %s1192 = scalar_lea.vmem [#allocation2], 243
    %v1193 = vld [vmem:[%s1192] ss:$2 sm:$0xff]
    %v1194 = vpack.c.bf16 %v1165, %v1163
    %v1195 = vpack.c.bf16 %v1169, %v1167
    %v1196 = vpack.c.bf16 %v1173, %v1171
    %v1197 = vpack.c.bf16 %v1177, %v1175
    %v1198 = vpack.c.bf16 %v1181, %v1179
    %v1199 = vpack.c.bf16 %v1185, %v1183
    %v1200 = vpack.c.bf16 %v1189, %v1187
    %v1201 = vpack.c.bf16 %v1193, %v1191
    %s1202 = scalar_lea.vmem %s3, 192
    %v1203 = vld [vmem:[%s1202] sm:$0xf]
    %v1204 = vld [vmem:[%s1202 + $0x4] sm:$0xf]
    %v1205 = vld [vmem:[%s1202 + $0x8] sm:$0xf]
    %v1206 = vld [vmem:[%s1202 + $0xc] sm:$0xf]
    %v1207 = vld [vmem:[%s1202 + $0x10] sm:$0xf]
    %v1208 = vld [vmem:[%s1202 + $0x14] sm:$0xf]
    %v1209 = vld [vmem:[%s1202 + $0x18] sm:$0xf]
    %v1210 = vld [vmem:[%s1202 + $0x1c] sm:$0xf]
    %v1211 = vld [vmem:[%s1202 + $0x20] sm:$0xf]
    %v1212 = vld [vmem:[%s1202 + $0x24] sm:$0xf]
    %v1213 = vld [vmem:[%s1202 + $0x28] sm:$0xf]
    %v1214 = vld [vmem:[%s1202 + $0x2c] sm:$0xf]
    %v1215 = vld [vmem:[%s1202 + $0x30] sm:$0xf]
    %v1216 = vld [vmem:[%s1202 + $0x34] sm:$0xf]
    %v1217 = vld [vmem:[%s1202 + $0x38] sm:$0xf]
    %v1218 = vld [vmem:[%s1202 + $0x3c] sm:$0xf]
    %v1235 = vunpack.c.l.b16 %v1203
    %v1236 = vunpack.c.l.b16 %v1204
    %v1237 = vunpack.c.l.b16 %v1205
    %v1238 = vunpack.c.l.b16 %v1206
    %v1239 = vunpack.c.l.b16 %v1207
    %v1240 = vunpack.c.l.b16 %v1208
    %v1241 = vunpack.c.l.b16 %v1209
    %v1242 = vunpack.c.l.b16 %v1210
    %v1243 = vunpack.c.l.b16 %v1211
    %v1244 = vunpack.c.l.b16 %v1212
    %v1245 = vunpack.c.l.b16 %v1213
    %v1246 = vunpack.c.l.b16 %v1214
    %v1247 = vunpack.c.l.b16 %v1215
    %v1248 = vunpack.c.l.b16 %v1216
    %v1249 = vunpack.c.l.b16 %v1217
    %v1250 = vunpack.c.l.b16 %v1218
    %v1251 = vpack.c.b16 %v1236, %v1235
    %v1252 = vpack.c.b16 %v1238, %v1237
    %v1253 = vpack.c.b16 %v1240, %v1239
    %v1254 = vpack.c.b16 %v1242, %v1241
    %v1255 = vpack.c.b16 %v1244, %v1243
    %v1256 = vpack.c.b16 %v1246, %v1245
    %v1257 = vpack.c.b16 %v1248, %v1247
    %v1258 = vpack.c.b16 %v1250, %v1249
    %1267 = vmatprep.subr.bf16.mxu0 0
    %1268 = vmatpush1.bf16.msra.mxu0 %v1251
    %1269 = vmatprep.subr.bf16.mxu0 0
    %1270 = vmatpush1.bf16.msra.mxu0 %v1252
    %1271 = vmatprep.subr.bf16.mxu0 0
    %1272 = vmatpush1.bf16.msra.mxu0 %v1253
    %1273 = vmatprep.subr.bf16.mxu0 0
    %1274 = vmatpush1.bf16.msra.mxu0 %v1254
    %1275 = vmatprep.subr.bf16.mxu0 0
    %1276 = vmatpush1.bf16.msra.mxu0 %v1255
    %1277 = vmatprep.subr.bf16.mxu0 0
    %1278 = vmatpush1.bf16.msra.mxu0 %v1256
    %1279 = vmatprep.subr.bf16.mxu0 0
    %1280 = vmatpush1.bf16.msra.mxu0 %v1257
    %1281 = vmatprep.subr.bf16.mxu0 0
    %1282 = vmatpush1.bf16.msra.mxu0 %v1258
    %1283 = vmatprep.subr.bf16.mxu0 0
    %1284 = vmatpush1.bf16.msra.mxu0 0
    %1285 = vmatprep.subr.bf16.mxu0 0
    %1286 = vmatpush1.bf16.msra.mxu0 0
    %1287 = vmatprep.subr.bf16.mxu0 0
    %1288 = vmatpush1.bf16.msra.mxu0 0
    %1289 = vmatprep.subr.bf16.mxu0 0
    %1290 = vmatpush1.bf16.msra.mxu0 0
    %1291 = vmatprep.subr.bf16.mxu0 0
    %1292 = vmatpush1.bf16.msra.mxu0 0
    %1293 = vmatprep.subr.bf16.mxu0 0
    %1294 = vmatpush1.bf16.msra.mxu0 0
    %1295 = vmatprep.subr.bf16.mxu0 0
    %1296 = vmatpush1.bf16.msra.mxu0 0
    %1297 = vmatprep.subr.bf16.mxu0 0
    %1298 = vmatpush1.bf16.msra.mxu0 0
    %1299 = vmatprep.mubr.bf16.mxu0 0
    %1300 = vmatmul.mubr.bf16.gmra.mrb[0].mxu0 %v1194
    %v1301 = vpop.f32.mrb[0].mxu0
    %v1302 = vadd.f32 0.0, %v1301
    %v1303 = vpop.f32.mrb[0].mxu0
    %v1304 = vpop.f32.mrb[0].mxu0
    %v1305 = vadd.f32 0.0, %v1304
    %v1306 = vpop.f32.mrb[0].mxu0
    %1307 = vmatprep.mubr.bf16.mxu0 0
    %1308 = vmatmul.mubr.bf16.gmra.mrb[0].mxu0 %v1195
    %v1309 = vpop.f32.mrb[0].mxu0
    %v1310 = vadd.f32 0.0, %v1309
    %v1311 = vpop.f32.mrb[0].mxu0
    %v1312 = vpop.f32.mrb[0].mxu0
    %v1313 = vadd.f32 0.0, %v1312
    %v1314 = vpop.f32.mrb[0].mxu0
    %1315 = vmatprep.mubr.bf16.mxu0 0
    %1316 = vmatmul.mubr.bf16.gmra.mrb[0].mxu0 %v1196
    %v1317 = vpop.f32.mrb[0].mxu0
    %v1318 = vadd.f32 0.0, %v1317
    %v1319 = vpop.f32.mrb[0].mxu0
    %v1320 = vpop.f32.mrb[0].mxu0
    %v1321 = vadd.f32 0.0, %v1320
    %v1322 = vpop.f32.mrb[0].mxu0
    %1323 = vmatprep.mubr.bf16.mxu0 0
    %1324 = vmatmul.mubr.bf16.gmra.mrb[0].mxu0 %v1197
    %v1325 = vpop.f32.mrb[0].mxu0
    %v1326 = vadd.f32 0.0, %v1325
    %v1327 = vpop.f32.mrb[0].mxu0
    %v1328 = vpop.f32.mrb[0].mxu0
    %v1329 = vadd.f32 0.0, %v1328
    %v1330 = vpop.f32.mrb[0].mxu0
    %1331 = vmatprep.mubr.bf16.mxu0 0
    %1332 = vmatmul.mubr.bf16.gmra.mrb[0].mxu0 %v1198
    %v1333 = vpop.f32.mrb[0].mxu0
    %v1334 = vadd.f32 0.0, %v1333
    %v1335 = vpop.f32.mrb[0].mxu0
    %v1336 = vpop.f32.mrb[0].mxu0
    %v1337 = vadd.f32 0.0, %v1336
    %v1338 = vpop.f32.mrb[0].mxu0
    %1339 = vmatprep.mubr.bf16.mxu0 0
    %1340 = vmatmul.mubr.bf16.gmra.mrb[0].mxu0 %v1199
    %v1341 = vpop.f32.mrb[0].mxu0
    %v1342 = vadd.f32 0.0, %v1341
    %v1343 = vpop.f32.mrb[0].mxu0
    %v1344 = vpop.f32.mrb[0].mxu0
    %v1345 = vadd.f32 0.0, %v1344
    %v1346 = vpop.f32.mrb[0].mxu0
    %1347 = vmatprep.mubr.bf16.mxu0 0
    %1348 = vmatmul.mubr.bf16.gmra.mrb[0].mxu0 %v1200
    %v1349 = vpop.f32.mrb[0].mxu0
    %v1350 = vadd.f32 0.0, %v1349
    %v1351 = vpop.f32.mrb[0].mxu0
    %v1352 = vpop.f32.mrb[0].mxu0
    %v1353 = vadd.f32 0.0, %v1352
    %v1354 = vpop.f32.mrb[0].mxu0
    %1355 = vmatprep.mubr.bf16.mxu0 0
    %1356 = vmatmul.mubr.bf16.gmra.mrb[0].mxu0 %v1201
    %v1357 = vpop.f32.mrb[0].mxu0
    %v1358 = vadd.f32 0.0, %v1357
    %v1359 = vpop.f32.mrb[0].mxu0
    %v1360 = vpop.f32.mrb[0].mxu0
    %v1361 = vadd.f32 0.0, %v1360
    %v1362 = vpop.f32.mrb[0].mxu0
    %1363 = vdwg.mxu0
    %v1364 = vadd.f32 %v1146, %v1302
    %v1365 = vadd.f32 %v1147, %v1305
    %v1366 = vadd.f32 %v1148, %v1310
    %v1367 = vadd.f32 %v1149, %v1313
    %v1368 = vadd.f32 %v1150, %v1318
    %v1369 = vadd.f32 %v1151, %v1321
    %v1370 = vadd.f32 %v1152, %v1326
    %v1371 = vadd.f32 %v1153, %v1329
    %v1372 = vadd.f32 %v1154, %v1334
    %v1373 = vadd.f32 %v1155, %v1337
    %v1374 = vadd.f32 %v1156, %v1342
    %v1375 = vadd.f32 %v1157, %v1345
    %v1376 = vadd.f32 %v1158, %v1350
    %v1377 = vadd.f32 %v1159, %v1353
    %v1378 = vadd.f32 %v1160, %v1358
    %v1379 = vadd.f32 %v1161, %v1361
    %s1380 = scalar_lea.vmem [#allocation2], 4
    %v1381 = vld [vmem:[%s1380] ss:$2 sm:$0xff]
    %s1382 = scalar_lea.vmem [#allocation2], 20
    %v1383 = vld [vmem:[%s1382] ss:$2 sm:$0xff]
    %s1384 = scalar_lea.vmem [#allocation2], 36
    %v1385 = vld [vmem:[%s1384] ss:$2 sm:$0xff]
    %s1386 = scalar_lea.vmem [#allocation2], 52
    %v1387 = vld [vmem:[%s1386] ss:$2 sm:$0xff]
    %s1388 = scalar_lea.vmem [#allocation2], 68
    %v1389 = vld [vmem:[%s1388] ss:$2 sm:$0xff]
    %s1390 = scalar_lea.vmem [#allocation2], 84
    %v1391 = vld [vmem:[%s1390] ss:$2 sm:$0xff]
    %s1392 = scalar_lea.vmem [#allocation2], 100
    %v1393 = vld [vmem:[%s1392] ss:$2 sm:$0xff]
    %s1394 = scalar_lea.vmem [#allocation2], 116
    %v1395 = vld [vmem:[%s1394] ss:$2 sm:$0xff]
    %s1396 = scalar_lea.vmem [#allocation2], 132
    %v1397 = vld [vmem:[%s1396] ss:$2 sm:$0xff]
    %s1398 = scalar_lea.vmem [#allocation2], 148
    %v1399 = vld [vmem:[%s1398] ss:$2 sm:$0xff]
    %s1400 = scalar_lea.vmem [#allocation2], 164
    %v1401 = vld [vmem:[%s1400] ss:$2 sm:$0xff]
    %s1402 = scalar_lea.vmem [#allocation2], 180
    %v1403 = vld [vmem:[%s1402] ss:$2 sm:$0xff]
    %s1404 = scalar_lea.vmem [#allocation2], 196
    %v1405 = vld [vmem:[%s1404] ss:$2 sm:$0xff]
    %s1406 = scalar_lea.vmem [#allocation2], 212
    %v1407 = vld [vmem:[%s1406] ss:$2 sm:$0xff]
    %s1408 = scalar_lea.vmem [#allocation2], 228
    %v1409 = vld [vmem:[%s1408] ss:$2 sm:$0xff]
    %s1410 = scalar_lea.vmem [#allocation2], 244
    %v1411 = vld [vmem:[%s1410] ss:$2 sm:$0xff]
    %v1412 = vpack.c.bf16 %v1383, %v1381
    %v1413 = vpack.c.bf16 %v1387, %v1385
    %v1414 = vpack.c.bf16 %v1391, %v1389
    %v1415 = vpack.c.bf16 %v1395, %v1393
    %v1416 = vpack.c.bf16 %v1399, %v1397
    %v1417 = vpack.c.bf16 %v1403, %v1401
    %v1418 = vpack.c.bf16 %v1407, %v1405
    %v1419 = vpack.c.bf16 %v1411, %v1409
    %s1420 = scalar_lea.vmem %s3, 256
    %v1421 = vld [vmem:[%s1420] sm:$0xf]
    %v1422 = vld [vmem:[%s1420 + $0x4] sm:$0xf]
    %v1423 = vld [vmem:[%s1420 + $0x8] sm:$0xf]
    %v1424 = vld [vmem:[%s1420 + $0xc] sm:$0xf]
    %v1425 = vld [vmem:[%s1420 + $0x10] sm:$0xf]
    %v1426 = vld [vmem:[%s1420 + $0x14] sm:$0xf]
    %v1427 = vld [vmem:[%s1420 + $0x18] sm:$0xf]
    %v1428 = vld [vmem:[%s1420 + $0x1c] sm:$0xf]
    %v1429 = vld [vmem:[%s1420 + $0x20] sm:$0xf]
    %v1430 = vld [vmem:[%s1420 + $0x24] sm:$0xf]
    %v1431 = vld [vmem:[%s1420 + $0x28] sm:$0xf]
    %v1432 = vld [vmem:[%s1420 + $0x2c] sm:$0xf]
    %v1433 = vld [vmem:[%s1420 + $0x30] sm:$0xf]
    %v1434 = vld [vmem:[%s1420 + $0x34] sm:$0xf]
    %v1435 = vld [vmem:[%s1420 + $0x38] sm:$0xf]
    %v1436 = vld [vmem:[%s1420 + $0x3c] sm:$0xf]
    %v1453 = vunpack.c.l.b16 %v1421
    %v1454 = vunpack.c.l.b16 %v1422
    %v1455 = vunpack.c.l.b16 %v1423
    %v1456 = vunpack.c.l.b16 %v1424
    %v1457 = vunpack.c.l.b16 %v1425
    %v1458 = vunpack.c.l.b16 %v1426
    %v1459 = vunpack.c.l.b16 %v1427
    %v1460 = vunpack.c.l.b16 %v1428
    %v1461 = vunpack.c.l.b16 %v1429
    %v1462 = vunpack.c.l.b16 %v1430
    %v1463 = vunpack.c.l.b16 %v1431
    %v1464 = vunpack.c.l.b16 %v1432
    %v1465 = vunpack.c.l.b16 %v1433
    %v1466 = vunpack.c.l.b16 %v1434
    %v1467 = vunpack.c.l.b16 %v1435
    %v1468 = vunpack.c.l.b16 %v1436
    %v1469 = vpack.c.b16 %v1454, %v1453
    %v1470 = vpack.c.b16 %v1456, %v1455
    %v1471 = vpack.c.b16 %v1458, %v1457
    %v1472 = vpack.c.b16 %v1460, %v1459
    %v1473 = vpack.c.b16 %v1462, %v1461
    %v1474 = vpack.c.b16 %v1464, %v1463
    %v1475 = vpack.c.b16 %v1466, %v1465
    %v1476 = vpack.c.b16 %v1468, %v1467
    %1485 = vmatprep.subr.bf16.mxu0 0
    %1486 = vmatpush1.bf16.msra.mxu0 %v1469
    %1487 = vmatprep.subr.bf16.mxu0 0
    %1488 = vmatpush1.bf16.msra.mxu0 %v1470
    %1489 = vmatprep.subr.bf16.mxu0 0
    %1490 = vmatpush1.bf16.msra.mxu0 %v1471
    %1491 = vmatprep.subr.bf16.mxu0 0
    %1492 = vmatpush1.bf16.msra.mxu0 %v1472
    %1493 = vmatprep.subr.bf16.mxu0 0
    %1494 = vmatpush1.bf16.msra.mxu0 %v1473
    %1495 = vmatprep.subr.bf16.mxu0 0
    %1496 = vmatpush1.bf16.msra.mxu0 %v1474
    %1497 = vmatprep.subr.bf16.mxu0 0
    %1498 = vmatpush1.bf16.msra.mxu0 %v1475
    %1499 = vmatprep.subr.bf16.mxu0 0
    %1500 = vmatpush1.bf16.msra.mxu0 %v1476
    %1501 = vmatprep.subr.bf16.mxu0 0
    %1502 = vmatpush1.bf16.msra.mxu0 0
    %1503 = vmatprep.subr.bf16.mxu0 0
    %1504 = vmatpush1.bf16.msra.mxu0 0
    %1505 = vmatprep.subr.bf16.mxu0 0
    %1506 = vmatpush1.bf16.msra.mxu0 0
    %1507 = vmatprep.subr.bf16.mxu0 0
    %1508 = vmatpush1.bf16.msra.mxu0 0
    %1509 = vmatprep.subr.bf16.mxu0 0
    %1510 = vmatpush1.bf16.msra.mxu0 0
    %1511 = vmatprep.subr.bf16.mxu0 0
    %1512 = vmatpush1.bf16.msra.mxu0 0
    %1513 = vmatprep.subr.bf16.mxu0 0
    %1514 = vmatpush1.bf16.msra.mxu0 0
    %1515 = vmatprep.subr.bf16.mxu0 0
    %1516 = vmatpush1.bf16.msra.mxu0 0
    %1517 = vmatprep.mubr.bf16.mxu0 0
    %1518 = vmatmul.mubr.bf16.gmra.mrb[0].mxu0 %v1412
    %v1519 = vpop.f32.mrb[0].mxu0
    %v1520 = vadd.f32 0.0, %v1519
    %v1521 = vpop.f32.mrb[0].mxu0
    %v1522 = vpop.f32.mrb[0].mxu0
    %v1523 = vadd.f32 0.0, %v1522
    %v1524 = vpop.f32.mrb[0].mxu0
    %1525 = vmatprep.mubr.bf16.mxu0 0
    %1526 = vmatmul.mubr.bf16.gmra.mrb[0].mxu0 %v1413
    %v1527 = vpop.f32.mrb[0].mxu0
    %v1528 = vadd.f32 0.0, %v1527
    %v1529 = vpop.f32.mrb[0].mxu0
    %v1530 = vpop.f32.mrb[0].mxu0
    %v1531 = vadd.f32 0.0, %v1530
    %v1532 = vpop.f32.mrb[0].mxu0
    %1533 = vmatprep.mubr.bf16.mxu0 0
    %1534 = vmatmul.mubr.bf16.gmra.mrb[0].mxu0 %v1414
    %v1535 = vpop.f32.mrb[0].mxu0
    %v1536 = vadd.f32 0.0, %v1535
    %v1537 = vpop.f32.mrb[0].mxu0
    %v1538 = vpop.f32.mrb[0].mxu0
    %v1539 = vadd.f32 0.0, %v1538
    %v1540 = vpop.f32.mrb[0].mxu0
    %1541 = vmatprep.mubr.bf16.mxu0 0
    %1542 = vmatmul.mubr.bf16.gmra.mrb[0].mxu0 %v1415
    %v1543 = vpop.f32.mrb[0].mxu0
    %v1544 = vadd.f32 0.0, %v1543
    %v1545 = vpop.f32.mrb[0].mxu0
    %v1546 = vpop.f32.mrb[0].mxu0
    %v1547 = vadd.f32 0.0, %v1546
    %v1548 = vpop.f32.mrb[0].mxu0
    %1549 = vmatprep.mubr.bf16.mxu0 0
    %1550 = vmatmul.mubr.bf16.gmra.mrb[0].mxu0 %v1416
    %v1551 = vpop.f32.mrb[0].mxu0
    %v1552 = vadd.f32 0.0, %v1551
    %v1553 = vpop.f32.mrb[0].mxu0
    %v1554 = vpop.f32.mrb[0].mxu0
    %v1555 = vadd.f32 0.0, %v1554
    %v1556 = vpop.f32.mrb[0].mxu0
    %1557 = vmatprep.mubr.bf16.mxu0 0
    %1558 = vmatmul.mubr.bf16.gmra.mrb[0].mxu0 %v1417
    %v1559 = vpop.f32.mrb[0].mxu0
    %v1560 = vadd.f32 0.0, %v1559
    %v1561 = vpop.f32.mrb[0].mxu0
    %v1562 = vpop.f32.mrb[0].mxu0
    %v1563 = vadd.f32 0.0, %v1562
    %v1564 = vpop.f32.mrb[0].mxu0
    %1565 = vmatprep.mubr.bf16.mxu0 0
    %1566 = vmatmul.mubr.bf16.gmra.mrb[0].mxu0 %v1418
    %v1567 = vpop.f32.mrb[0].mxu0
    %v1568 = vadd.f32 0.0, %v1567
    %v1569 = vpop.f32.mrb[0].mxu0
    %v1570 = vpop.f32.mrb[0].mxu0
    %v1571 = vadd.f32 0.0, %v1570
    %v1572 = vpop.f32.mrb[0].mxu0
    %1573 = vmatprep.mubr.bf16.mxu0 0
    %1574 = vmatmul.mubr.bf16.gmra.mrb[0].mxu0 %v1419
    %v1575 = vpop.f32.mrb[0].mxu0
    %v1576 = vadd.f32 0.0, %v1575
    %v1577 = vpop.f32.mrb[0].mxu0
    %v1578 = vpop.f32.mrb[0].mxu0
    %v1579 = vadd.f32 0.0, %v1578
    %v1580 = vpop.f32.mrb[0].mxu0
    %1581 = vdwg.mxu0
    %v1582 = vadd.f32 %v1364, %v1520
    %v1583 = vadd.f32 %v1365, %v1523
    %v1584 = vadd.f32 %v1366, %v1528
    %v1585 = vadd.f32 %v1367, %v1531
    %v1586 = vadd.f32 %v1368, %v1536
    %v1587 = vadd.f32 %v1369, %v1539
    %v1588 = vadd.f32 %v1370, %v1544
    %v1589 = vadd.f32 %v1371, %v1547
    %v1590 = vadd.f32 %v1372, %v1552
    %v1591 = vadd.f32 %v1373, %v1555
    %v1592 = vadd.f32 %v1374, %v1560
    %v1593 = vadd.f32 %v1375, %v1563
    %v1594 = vadd.f32 %v1376, %v1568
    %v1595 = vadd.f32 %v1377, %v1571
    %v1596 = vadd.f32 %v1378, %v1576
    %v1597 = vadd.f32 %v1379, %v1579
    %v1598 = vld [vmem:[%s4] sm:$0x1]
    %v1600 = vlaneseq
    %v1601 = vshrl.u32 %v1600, 7
    %v1602 = vsub.s32 0, %v1601
    %v1603 = vrot.slane %v1598, %v1602
    %v1605 = vadd.f32 %v1582, %v1603
    %v1606 = vadd.f32 %v1583, %v1603
    %v1607 = vadd.f32 %v1584, %v1603
    %v1608 = vadd.f32 %v1585, %v1603
    %v1609 = vadd.f32 %v1586, %v1603
    %v1610 = vadd.f32 %v1587, %v1603
    %v1611 = vadd.f32 %v1588, %v1603
    %v1612 = vadd.f32 %v1589, %v1603
    %v1613 = vadd.f32 %v1590, %v1603
    %v1614 = vadd.f32 %v1591, %v1603
    %v1615 = vadd.f32 %v1592, %v1603
    %v1616 = vadd.f32 %v1593, %v1603
    %v1617 = vadd.f32 %v1594, %v1603
    %v1618 = vadd.f32 %v1595, %v1603
    %v1619 = vadd.f32 %v1596, %v1603
    %v1620 = vadd.f32 %v1597, %v1603
    %v1621 = vmax.f32 %v1605, 0.0
    %v1622 = vmax.f32 %v1606, 0.0
    %v1623 = vmax.f32 %v1607, 0.0
    %v1624 = vmax.f32 %v1608, 0.0
    %v1625 = vmax.f32 %v1609, 0.0
    %v1626 = vmax.f32 %v1610, 0.0
    %v1627 = vmax.f32 %v1611, 0.0
    %v1628 = vmax.f32 %v1612, 0.0
    %v1629 = vmax.f32 %v1613, 0.0
    %v1630 = vmax.f32 %v1614, 0.0
    %v1631 = vmax.f32 %v1615, 0.0
    %v1632 = vmax.f32 %v1616, 0.0
    %v1633 = vmax.f32 %v1617, 0.0
    %v1634 = vmax.f32 %v1618, 0.0
    %v1635 = vmax.f32 %v1619, 0.0
    %v1636 = vmax.f32 %v1620, 0.0
    %1637 = vst [vmem:[#allocation3] sm:$0xff] %v1621
    %1638 = vst [vmem:[#allocation3 + $0x8] sm:$0xff] %v1622
    %1639 = vst [vmem:[#allocation3 + $0x10] sm:$0xff] %v1623
    %1640 = vst [vmem:[#allocation3 + $0x18] sm:$0xff] %v1624
    %1641 = vst [vmem:[#allocation3 + $0x20] sm:$0xff] %v1625
    %1642 = vst [vmem:[#allocation3 + $0x28] sm:$0xff] %v1626
    %1643 = vst [vmem:[#allocation3 + $0x30] sm:$0xff] %v1627
    %1644 = vst [vmem:[#allocation3 + $0x38] sm:$0xff] %v1628
    %1645 = vst [vmem:[#allocation3 + $0x40] sm:$0xff] %v1629
    %1646 = vst [vmem:[#allocation3 + $0x48] sm:$0xff] %v1630
    %1647 = vst [vmem:[#allocation3 + $0x50] sm:$0xff] %v1631
    %1648 = vst [vmem:[#allocation3 + $0x58] sm:$0xff] %v1632
    %1649 = vst [vmem:[#allocation3 + $0x60] sm:$0xff] %v1633
    %1650 = vst [vmem:[#allocation3 + $0x68] sm:$0xff] %v1634
    %1651 = vst [vmem:[#allocation3 + $0x70] sm:$0xff] %v1635
    %1652 = vst [vmem:[#allocation3 + $0x78] sm:$0xff] %v1636
    %v1653 = vld [vmem:[#allocation3] ss:$2 sm:$0xff]
    %s1654 = scalar_lea.vmem [#allocation3], 16
    %v1655 = vld [vmem:[%s1654] ss:$2 sm:$0xff]
    %s1656 = scalar_lea.vmem [#allocation3], 32
    %v1657 = vld [vmem:[%s1656] ss:$2 sm:$0xff]
    %s1658 = scalar_lea.vmem [#allocation3], 48
    %v1659 = vld [vmem:[%s1658] ss:$2 sm:$0xff]
    %s1660 = scalar_lea.vmem [#allocation3], 64
    %v1661 = vld [vmem:[%s1660] ss:$2 sm:$0xff]
    %s1662 = scalar_lea.vmem [#allocation3], 80
    %v1663 = vld [vmem:[%s1662] ss:$2 sm:$0xff]
    %s1664 = scalar_lea.vmem [#allocation3], 96
    %v1665 = vld [vmem:[%s1664] ss:$2 sm:$0xff]
    %s1666 = scalar_lea.vmem [#allocation3], 112
    %v1667 = vld [vmem:[%s1666] ss:$2 sm:$0xff]
    %v1668 = vpack.c.bf16 %v1655, %v1653
    %v1669 = vpack.c.bf16 %v1659, %v1657
    %v1670 = vpack.c.bf16 %v1663, %v1661
    %v1671 = vpack.c.bf16 %v1667, %v1665
    %v1672 = vld [vmem:[%s5] sm:$0xf]
    %v1673 = vld [vmem:[%s5 + $0x4] sm:$0xf]
    %v1674 = vld [vmem:[%s5 + $0x8] sm:$0xf]
    %v1675 = vld [vmem:[%s5 + $0xc] sm:$0xf]
    %v1676 = vld [vmem:[%s5 + $0x10] sm:$0xf]
    %v1677 = vld [vmem:[%s5 + $0x14] sm:$0xf]
    %v1678 = vld [vmem:[%s5 + $0x18] sm:$0xf]
    %v1679 = vld [vmem:[%s5 + $0x1c] sm:$0xf]
    %v1680 = vld [vmem:[%s5 + $0x20] sm:$0xf]
    %v1681 = vld [vmem:[%s5 + $0x24] sm:$0xf]
    %v1682 = vld [vmem:[%s5 + $0x28] sm:$0xf]
    %v1683 = vld [vmem:[%s5 + $0x2c] sm:$0xf]
    %v1684 = vld [vmem:[%s5 + $0x30] sm:$0xf]
    %v1685 = vld [vmem:[%s5 + $0x34] sm:$0xf]
    %v1686 = vld [vmem:[%s5 + $0x38] sm:$0xf]
    %v1687 = vld [vmem:[%s5 + $0x3c] sm:$0xf]
    %s1688 = scalar_lea.vmem [#allocation3], 1
    %v1689 = vld [vmem:[%s1688] ss:$2 sm:$0xff]
    %s1690 = scalar_lea.vmem [#allocation3], 17
    %v1691 = vld [vmem:[%s1690] ss:$2 sm:$0xff]
    %s1692 = scalar_lea.vmem [#allocation3], 33
    %v1693 = vld [vmem:[%s1692] ss:$2 sm:$0xff]
    %s1694 = scalar_lea.vmem [#allocation3], 49
    %v1695 = vld [vmem:[%s1694] ss:$2 sm:$0xff]
    %s1696 = scalar_lea.vmem [#allocation3], 65
    %v1697 = vld [vmem:[%s1696] ss:$2 sm:$0xff]
    %s1698 = scalar_lea.vmem [#allocation3], 81
    %v1699 = vld [vmem:[%s1698] ss:$2 sm:$0xff]
    %s1700 = scalar_lea.vmem [#allocation3], 97
    %v1701 = vld [vmem:[%s1700] ss:$2 sm:$0xff]
    %s1702 = scalar_lea.vmem [#allocation3], 113
    %v1703 = vld [vmem:[%s1702] ss:$2 sm:$0xff]
    %v1704 = vpack.c.bf16 %v1691, %v1689
    %v1705 = vpack.c.bf16 %v1695, %v1693
    %v1706 = vpack.c.bf16 %v1699, %v1697
    %v1707 = vpack.c.bf16 %v1703, %v1701
    %s1708 = scalar_lea.vmem %s5, 64
    %v1709 = vld [vmem:[%s1708] sm:$0xf]
    %v1710 = vld [vmem:[%s1708 + $0x4] sm:$0xf]
    %v1711 = vld [vmem:[%s1708 + $0x8] sm:$0xf]
    %v1712 = vld [vmem:[%s1708 + $0xc] sm:$0xf]
    %v1713 = vld [vmem:[%s1708 + $0x10] sm:$0xf]
    %v1714 = vld [vmem:[%s1708 + $0x14] sm:$0xf]
    %v1715 = vld [vmem:[%s1708 + $0x18] sm:$0xf]
    %v1716 = vld [vmem:[%s1708 + $0x1c] sm:$0xf]
    %v1717 = vld [vmem:[%s1708 + $0x20] sm:$0xf]
    %v1718 = vld [vmem:[%s1708 + $0x24] sm:$0xf]
    %v1719 = vld [vmem:[%s1708 + $0x28] sm:$0xf]
    %v1720 = vld [vmem:[%s1708 + $0x2c] sm:$0xf]
    %v1721 = vld [vmem:[%s1708 + $0x30] sm:$0xf]
    %v1722 = vld [vmem:[%s1708 + $0x34] sm:$0xf]
    %v1723 = vld [vmem:[%s1708 + $0x38] sm:$0xf]
    %v1724 = vld [vmem:[%s1708 + $0x3c] sm:$0xf]
    %v1741 = vunpack.c.l.b16 %v1709
    %v1742 = vunpack.c.l.b16 %v1710
    %v1743 = vunpack.c.l.b16 %v1711
    %v1744 = vunpack.c.l.b16 %v1712
    %v1745 = vunpack.c.l.b16 %v1713
    %v1746 = vunpack.c.l.b16 %v1714
    %v1747 = vunpack.c.l.b16 %v1715
    %v1748 = vunpack.c.l.b16 %v1716
    %v1749 = vunpack.c.l.b16 %v1717
    %v1750 = vunpack.c.l.b16 %v1718
    %v1751 = vunpack.c.l.b16 %v1719
    %v1752 = vunpack.c.l.b16 %v1720
    %v1753 = vunpack.c.l.b16 %v1721
    %v1754 = vunpack.c.l.b16 %v1722
    %v1755 = vunpack.c.l.b16 %v1723
    %v1756 = vunpack.c.l.b16 %v1724
    %v1757 = vpack.c.b16 %v1742, %v1741
    %v1758 = vpack.c.b16 %v1744, %v1743
    %v1759 = vpack.c.b16 %v1746, %v1745
    %v1760 = vpack.c.b16 %v1748, %v1747
    %v1761 = vpack.c.b16 %v1750, %v1749
    %v1762 = vpack.c.b16 %v1752, %v1751
    %v1763 = vpack.c.b16 %v1754, %v1753
    %v1764 = vpack.c.b16 %v1756, %v1755
    %1773 = vmatprep.subr.bf16.mxu0 0
    %1774 = vmatpush1.bf16.msra.mxu0 %v1757
    %1775 = vmatprep.subr.bf16.mxu0 0
    %1776 = vmatpush1.bf16.msra.mxu0 %v1758
    %1777 = vmatprep.subr.bf16.mxu0 0
    %1778 = vmatpush1.bf16.msra.mxu0 %v1759
    %1779 = vmatprep.subr.bf16.mxu0 0
    %1780 = vmatpush1.bf16.msra.mxu0 %v1760
    %1781 = vmatprep.subr.bf16.mxu0 0
    %1782 = vmatpush1.bf16.msra.mxu0 %v1761
    %1783 = vmatprep.subr.bf16.mxu0 0
    %1784 = vmatpush1.bf16.msra.mxu0 %v1762
    %1785 = vmatprep.subr.bf16.mxu0 0
    %1786 = vmatpush1.bf16.msra.mxu0 %v1763
    %1787 = vmatprep.subr.bf16.mxu0 0
    %1788 = vmatpush1.bf16.msra.mxu0 %v1764
    %1789 = vmatprep.subr.bf16.mxu0 0
    %1790 = vmatpush1.bf16.msra.mxu0 0
    %1791 = vmatprep.subr.bf16.mxu0 0
    %1792 = vmatpush1.bf16.msra.mxu0 0
    %1793 = vmatprep.subr.bf16.mxu0 0
    %1794 = vmatpush1.bf16.msra.mxu0 0
    %1795 = vmatprep.subr.bf16.mxu0 0
    %1796 = vmatpush1.bf16.msra.mxu0 0
    %1797 = vmatprep.subr.bf16.mxu0 0
    %1798 = vmatpush1.bf16.msra.mxu0 0
    %1799 = vmatprep.subr.bf16.mxu0 0
    %1800 = vmatpush1.bf16.msra.mxu0 0
    %1801 = vmatprep.subr.bf16.mxu0 0
    %1802 = vmatpush1.bf16.msra.mxu0 0
    %1803 = vmatprep.subr.bf16.mxu0 0
    %1804 = vmatpush1.bf16.msra.mxu0 0
    %1805 = vmatprep.mubr.bf16.mxu0 0
    %1806 = vmatmul.mubr.bf16.gmra.mrb[0].mxu0 %v1704
    %v1807 = vpop.f32.mrb[0].mxu0
    %v1808 = vadd.f32 0.0, %v1807
    %v1809 = vpop.f32.mrb[0].mxu0
    %v1810 = vpop.f32.mrb[0].mxu0
    %v1811 = vadd.f32 0.0, %v1810
    %v1812 = vpop.f32.mrb[0].mxu0
    %1813 = vmatprep.mubr.bf16.mxu0 0
    %1814 = vmatmul.mubr.bf16.gmra.mrb[0].mxu0 %v1705
    %v1815 = vpop.f32.mrb[0].mxu0
    %v1816 = vadd.f32 0.0, %v1815
    %v1817 = vpop.f32.mrb[0].mxu0
    %v1818 = vpop.f32.mrb[0].mxu0
    %v1819 = vadd.f32 0.0, %v1818
    %v1820 = vpop.f32.mrb[0].mxu0
    %1821 = vmatprep.mubr.bf16.mxu0 0
    %1822 = vmatmul.mubr.bf16.gmra.mrb[0].mxu0 %v1706
    %v1823 = vpop.f32.mrb[0].mxu0
    %v1824 = vadd.f32 0.0, %v1823
    %v1825 = vpop.f32.mrb[0].mxu0
    %v1826 = vpop.f32.mrb[0].mxu0
    %v1827 = vadd.f32 0.0, %v1826
    %v1828 = vpop.f32.mrb[0].mxu0
    %1829 = vmatprep.mubr.bf16.mxu0 0
    %1830 = vmatmul.mubr.bf16.gmra.mrb[0].mxu0 %v1707
    %v1831 = vpop.f32.mrb[0].mxu0
    %v1832 = vadd.f32 0.0, %v1831
    %v1833 = vpop.f32.mrb[0].mxu0
    %v1834 = vpop.f32.mrb[0].mxu0
    %v1835 = vadd.f32 0.0, %v1834
    %v1836 = vpop.f32.mrb[0].mxu0
    %1837 = vdwg.mxu0
    %v1854 = vunpack.c.l.b16 %v1672
    %v1855 = vunpack.c.l.b16 %v1673
    %v1856 = vunpack.c.l.b16 %v1674
    %v1857 = vunpack.c.l.b16 %v1675
    %v1858 = vunpack.c.l.b16 %v1676
    %v1859 = vunpack.c.l.b16 %v1677
    %v1860 = vunpack.c.l.b16 %v1678
    %v1861 = vunpack.c.l.b16 %v1679
    %v1862 = vunpack.c.l.b16 %v1680
    %v1863 = vunpack.c.l.b16 %v1681
    %v1864 = vunpack.c.l.b16 %v1682
    %v1865 = vunpack.c.l.b16 %v1683
    %v1866 = vunpack.c.l.b16 %v1684
    %v1867 = vunpack.c.l.b16 %v1685
    %v1868 = vunpack.c.l.b16 %v1686
    %v1869 = vunpack.c.l.b16 %v1687
    %v1870 = vpack.c.b16 %v1855, %v1854
    %v1871 = vpack.c.b16 %v1857, %v1856
    %v1872 = vpack.c.b16 %v1859, %v1858
    %v1873 = vpack.c.b16 %v1861, %v1860
    %v1874 = vpack.c.b16 %v1863, %v1862
    %v1875 = vpack.c.b16 %v1865, %v1864
    %v1876 = vpack.c.b16 %v1867, %v1866
    %v1877 = vpack.c.b16 %v1869, %v1868
    %1886 = vmatprep.subr.bf16.mxu0 0
    %1887 = vmatpush1.bf16.msra.mxu0 %v1870
    %1888 = vmatprep.subr.bf16.mxu0 0
    %1889 = vmatpush1.bf16.msra.mxu0 %v1871
    %1890 = vmatprep.subr.bf16.mxu0 0
    %1891 = vmatpush1.bf16.msra.mxu0 %v1872
    %1892 = vmatprep.subr.bf16.mxu0 0
    %1893 = vmatpush1.bf16.msra.mxu0 %v1873
    %1894 = vmatprep.subr.bf16.mxu0 0
    %1895 = vmatpush1.bf16.msra.mxu0 %v1874
    %1896 = vmatprep.subr.bf16.mxu0 0
    %1897 = vmatpush1.bf16.msra.mxu0 %v1875
    %1898 = vmatprep.subr.bf16.mxu0 0
    %1899 = vmatpush1.bf16.msra.mxu0 %v1876
    %1900 = vmatprep.subr.bf16.mxu0 0
    %1901 = vmatpush1.bf16.msra.mxu0 %v1877
    %1902 = vmatprep.subr.bf16.mxu0 0
    %1903 = vmatpush1.bf16.msra.mxu0 0
    %1904 = vmatprep.subr.bf16.mxu0 0
    %1905 = vmatpush1.bf16.msra.mxu0 0
    %1906 = vmatprep.subr.bf16.mxu0 0
    %1907 = vmatpush1.bf16.msra.mxu0 0
    %1908 = vmatprep.subr.bf16.mxu0 0
    %1909 = vmatpush1.bf16.msra.mxu0 0
    %1910 = vmatprep.subr.bf16.mxu0 0
    %1911 = vmatpush1.bf16.msra.mxu0 0
    %1912 = vmatprep.subr.bf16.mxu0 0
    %1913 = vmatpush1.bf16.msra.mxu0 0
    %1914 = vmatprep.subr.bf16.mxu0 0
    %1915 = vmatpush1.bf16.msra.mxu0 0
    %1916 = vmatprep.subr.bf16.mxu0 0
    %1917 = vmatpush1.bf16.msra.mxu0 0
    %1918 = vmatprep.mubr.bf16.mxu0 0
    %1919 = vmatmul.mubr.bf16.gmra.mrb[0].mxu0 %v1668
    %v1920 = vpop.f32.mrb[0].mxu0
    %v1921 = vadd.f32 %v1808, %v1920
    %v1922 = vpop.f32.mrb[0].mxu0
    %v1923 = vpop.f32.mrb[0].mxu0
    %v1924 = vadd.f32 %v1811, %v1923
    %v1925 = vpop.f32.mrb[0].mxu0
    %1926 = vmatprep.mubr.bf16.mxu0 0
    %1927 = vmatmul.mubr.bf16.gmra.mrb[0].mxu0 %v1669
    %v1928 = vpop.f32.mrb[0].mxu0
    %v1929 = vadd.f32 %v1816, %v1928
    %v1930 = vpop.f32.mrb[0].mxu0
    %v1931 = vpop.f32.mrb[0].mxu0
    %v1932 = vadd.f32 %v1819, %v1931
    %v1933 = vpop.f32.mrb[0].mxu0
    %1934 = vmatprep.mubr.bf16.mxu0 0
    %1935 = vmatmul.mubr.bf16.gmra.mrb[0].mxu0 %v1670
    %v1936 = vpop.f32.mrb[0].mxu0
    %v1937 = vadd.f32 %v1824, %v1936
    %v1938 = vpop.f32.mrb[0].mxu0
    %v1939 = vpop.f32.mrb[0].mxu0
    %v1940 = vadd.f32 %v1827, %v1939
    %v1941 = vpop.f32.mrb[0].mxu0
    %1942 = vmatprep.mubr.bf16.mxu0 0
    %1943 = vmatmul.mubr.bf16.gmra.mrb[0].mxu0 %v1671
    %v1944 = vpop.f32.mrb[0].mxu0
    %v1945 = vadd.f32 %v1832, %v1944
    %v1946 = vpop.f32.mrb[0].mxu0
    %v1947 = vpop.f32.mrb[0].mxu0
    %v1948 = vadd.f32 %v1835, %v1947
    %v1949 = vpop.f32.mrb[0].mxu0
    %1950 = vdwg.mxu0
    %s1951 = scalar_lea.vmem [#allocation3], 2
    %v1952 = vld [vmem:[%s1951] ss:$2 sm:$0xff]
    %s1953 = scalar_lea.vmem [#allocation3], 18
    %v1954 = vld [vmem:[%s1953] ss:$2 sm:$0xff]
    %s1955 = scalar_lea.vmem [#allocation3], 34
    %v1956 = vld [vmem:[%s1955] ss:$2 sm:$0xff]
    %s1957 = scalar_lea.vmem [#allocation3], 50
    %v1958 = vld [vmem:[%s1957] ss:$2 sm:$0xff]
    %s1959 = scalar_lea.vmem [#allocation3], 66
    %v1960 = vld [vmem:[%s1959] ss:$2 sm:$0xff]
    %s1961 = scalar_lea.vmem [#allocation3], 82
    %v1962 = vld [vmem:[%s1961] ss:$2 sm:$0xff]
    %s1963 = scalar_lea.vmem [#allocation3], 98
    %v1964 = vld [vmem:[%s1963] ss:$2 sm:$0xff]
    %s1965 = scalar_lea.vmem [#allocation3], 114
    %v1966 = vld [vmem:[%s1965] ss:$2 sm:$0xff]
    %v1967 = vpack.c.bf16 %v1954, %v1952
    %v1968 = vpack.c.bf16 %v1958, %v1956
    %v1969 = vpack.c.bf16 %v1962, %v1960
    %v1970 = vpack.c.bf16 %v1966, %v1964
    %s1971 = scalar_lea.vmem %s5, 128
    %v1972 = vld [vmem:[%s1971] sm:$0xf]
    %v1973 = vld [vmem:[%s1971 + $0x4] sm:$0xf]
    %v1974 = vld [vmem:[%s1971 + $0x8] sm:$0xf]
    %v1975 = vld [vmem:[%s1971 + $0xc] sm:$0xf]
    %v1976 = vld [vmem:[%s1971 + $0x10] sm:$0xf]
    %v1977 = vld [vmem:[%s1971 + $0x14] sm:$0xf]
    %v1978 = vld [vmem:[%s1971 + $0x18] sm:$0xf]
    %v1979 = vld [vmem:[%s1971 + $0x1c] sm:$0xf]
    %v1980 = vld [vmem:[%s1971 + $0x20] sm:$0xf]
    %v1981 = vld [vmem:[%s1971 + $0x24] sm:$0xf]
    %v1982 = vld [vmem:[%s1971 + $0x28] sm:$0xf]
    %v1983 = vld [vmem:[%s1971 + $0x2c] sm:$0xf]
    %v1984 = vld [vmem:[%s1971 + $0x30] sm:$0xf]
    %v1985 = vld [vmem:[%s1971 + $0x34] sm:$0xf]
    %v1986 = vld [vmem:[%s1971 + $0x38] sm:$0xf]
    %v1987 = vld [vmem:[%s1971 + $0x3c] sm:$0xf]
    %v2004 = vunpack.c.l.b16 %v1972
    %v2005 = vunpack.c.l.b16 %v1973
    %v2006 = vunpack.c.l.b16 %v1974
    %v2007 = vunpack.c.l.b16 %v1975
    %v2008 = vunpack.c.l.b16 %v1976
    %v2009 = vunpack.c.l.b16 %v1977
    %v2010 = vunpack.c.l.b16 %v1978
    %v2011 = vunpack.c.l.b16 %v1979
    %v2012 = vunpack.c.l.b16 %v1980
    %v2013 = vunpack.c.l.b16 %v1981
    %v2014 = vunpack.c.l.b16 %v1982
    %v2015 = vunpack.c.l.b16 %v1983
    %v2016 = vunpack.c.l.b16 %v1984
    %v2017 = vunpack.c.l.b16 %v1985
    %v2018 = vunpack.c.l.b16 %v1986
    %v2019 = vunpack.c.l.b16 %v1987
    %v2020 = vpack.c.b16 %v2005, %v2004
    %v2021 = vpack.c.b16 %v2007, %v2006
    %v2022 = vpack.c.b16 %v2009, %v2008
    %v2023 = vpack.c.b16 %v2011, %v2010
    %v2024 = vpack.c.b16 %v2013, %v2012
    %v2025 = vpack.c.b16 %v2015, %v2014
    %v2026 = vpack.c.b16 %v2017, %v2016
    %v2027 = vpack.c.b16 %v2019, %v2018
    %2036 = vmatprep.subr.bf16.mxu0 0
    %2037 = vmatpush1.bf16.msra.mxu0 %v2020
    %2038 = vmatprep.subr.bf16.mxu0 0
    %2039 = vmatpush1.bf16.msra.mxu0 %v2021
    %2040 = vmatprep.subr.bf16.mxu0 0
    %2041 = vmatpush1.bf16.msra.mxu0 %v2022
    %2042 = vmatprep.subr.bf16.mxu0 0
    %2043 = vmatpush1.bf16.msra.mxu0 %v2023
    %2044 = vmatprep.subr.bf16.mxu0 0
    %2045 = vmatpush1.bf16.msra.mxu0 %v2024
    %2046 = vmatprep.subr.bf16.mxu0 0
    %2047 = vmatpush1.bf16.msra.mxu0 %v2025
    %2048 = vmatprep.subr.bf16.mxu0 0
    %2049 = vmatpush1.bf16.msra.mxu0 %v2026
    %2050 = vmatprep.subr.bf16.mxu0 0
    %2051 = vmatpush1.bf16.msra.mxu0 %v2027
    %2052 = vmatprep.subr.bf16.mxu0 0
    %2053 = vmatpush1.bf16.msra.mxu0 0
    %2054 = vmatprep.subr.bf16.mxu0 0
    %2055 = vmatpush1.bf16.msra.mxu0 0
    %2056 = vmatprep.subr.bf16.mxu0 0
    %2057 = vmatpush1.bf16.msra.mxu0 0
    %2058 = vmatprep.subr.bf16.mxu0 0
    %2059 = vmatpush1.bf16.msra.mxu0 0
    %2060 = vmatprep.subr.bf16.mxu0 0
    %2061 = vmatpush1.bf16.msra.mxu0 0
    %2062 = vmatprep.subr.bf16.mxu0 0
    %2063 = vmatpush1.bf16.msra.mxu0 0
    %2064 = vmatprep.subr.bf16.mxu0 0
    %2065 = vmatpush1.bf16.msra.mxu0 0
    %2066 = vmatprep.subr.bf16.mxu0 0
    %2067 = vmatpush1.bf16.msra.mxu0 0
    %2068 = vmatprep.mubr.bf16.mxu0 0
    %2069 = vmatmul.mubr.bf16.gmra.mrb[0].mxu0 %v1967
    %v2070 = vpop.f32.mrb[0].mxu0
    %v2071 = vadd.f32 0.0, %v2070
    %v2072 = vpop.f32.mrb[0].mxu0
    %v2073 = vpop.f32.mrb[0].mxu0
    %v2074 = vadd.f32 0.0, %v2073
    %v2075 = vpop.f32.mrb[0].mxu0
    %2076 = vmatprep.mubr.bf16.mxu0 0
    %2077 = vmatmul.mubr.bf16.gmra.mrb[0].mxu0 %v1968
    %v2078 = vpop.f32.mrb[0].mxu0
    %v2079 = vadd.f32 0.0, %v2078
    %v2080 = vpop.f32.mrb[0].mxu0
    %v2081 = vpop.f32.mrb[0].mxu0
    %v2082 = vadd.f32 0.0, %v2081
    %v2083 = vpop.f32.mrb[0].mxu0
    %2084 = vmatprep.mubr.bf16.mxu0 0
    %2085 = vmatmul.mubr.bf16.gmra.mrb[0].mxu0 %v1969
    %v2086 = vpop.f32.mrb[0].mxu0
    %v2087 = vadd.f32 0.0, %v2086
    %v2088 = vpop.f32.mrb[0].mxu0
    %v2089 = vpop.f32.mrb[0].mxu0
    %v2090 = vadd.f32 0.0, %v2089
    %v2091 = vpop.f32.mrb[0].mxu0
    %2092 = vmatprep.mubr.bf16.mxu0 0
    %2093 = vmatmul.mubr.bf16.gmra.mrb[0].mxu0 %v1970
    %v2094 = vpop.f32.mrb[0].mxu0
    %v2095 = vadd.f32 0.0, %v2094
    %v2096 = vpop.f32.mrb[0].mxu0
    %v2097 = vpop.f32.mrb[0].mxu0
    %v2098 = vadd.f32 0.0, %v2097
    %v2099 = vpop.f32.mrb[0].mxu0
    %2100 = vdwg.mxu0
    %v2101 = vadd.f32 %v1921, %v2071
    %v2102 = vadd.f32 %v1924, %v2074
    %v2103 = vadd.f32 %v1929, %v2079
    %v2104 = vadd.f32 %v1932, %v2082
    %v2105 = vadd.f32 %v1937, %v2087
    %v2106 = vadd.f32 %v1940, %v2090
    %v2107 = vadd.f32 %v1945, %v2095
    %v2108 = vadd.f32 %v1948, %v2098
    %s2109 = scalar_lea.vmem [#allocation3], 3
    %v2110 = vld [vmem:[%s2109] ss:$2 sm:$0xff]
    %s2111 = scalar_lea.vmem [#allocation3], 19
    %v2112 = vld [vmem:[%s2111] ss:$2 sm:$0xff]
    %s2113 = scalar_lea.vmem [#allocation3], 35
    %v2114 = vld [vmem:[%s2113] ss:$2 sm:$0xff]
    %s2115 = scalar_lea.vmem [#allocation3], 51
    %v2116 = vld [vmem:[%s2115] ss:$2 sm:$0xff]
    %s2117 = scalar_lea.vmem [#allocation3], 67
    %v2118 = vld [vmem:[%s2117] ss:$2 sm:$0xff]
    %s2119 = scalar_lea.vmem [#allocation3], 83
    %v2120 = vld [vmem:[%s2119] ss:$2 sm:$0xff]
    %s2121 = scalar_lea.vmem [#allocation3], 99
    %v2122 = vld [vmem:[%s2121] ss:$2 sm:$0xff]
    %s2123 = scalar_lea.vmem [#allocation3], 115
    %v2124 = vld [vmem:[%s2123] ss:$2 sm:$0xff]
    %v2125 = vpack.c.bf16 %v2112, %v2110
    %v2126 = vpack.c.bf16 %v2116, %v2114
    %v2127 = vpack.c.bf16 %v2120, %v2118
    %v2128 = vpack.c.bf16 %v2124, %v2122
    %s2129 = scalar_lea.vmem %s5, 192
    %v2130 = vld [vmem:[%s2129] sm:$0xf]
    %v2131 = vld [vmem:[%s2129 + $0x4] sm:$0xf]
    %v2132 = vld [vmem:[%s2129 + $0x8] sm:$0xf]
    %v2133 = vld [vmem:[%s2129 + $0xc] sm:$0xf]
    %v2134 = vld [vmem:[%s2129 + $0x10] sm:$0xf]
    %v2135 = vld [vmem:[%s2129 + $0x14] sm:$0xf]
    %v2136 = vld [vmem:[%s2129 + $0x18] sm:$0xf]
    %v2137 = vld [vmem:[%s2129 + $0x1c] sm:$0xf]
    %v2138 = vld [vmem:[%s2129 + $0x20] sm:$0xf]
    %v2139 = vld [vmem:[%s2129 + $0x24] sm:$0xf]
    %v2140 = vld [vmem:[%s2129 + $0x28] sm:$0xf]
    %v2141 = vld [vmem:[%s2129 + $0x2c] sm:$0xf]
    %v2142 = vld [vmem:[%s2129 + $0x30] sm:$0xf]
    %v2143 = vld [vmem:[%s2129 + $0x34] sm:$0xf]
    %v2144 = vld [vmem:[%s2129 + $0x38] sm:$0xf]
    %v2145 = vld [vmem:[%s2129 + $0x3c] sm:$0xf]
    %v2162 = vunpack.c.l.b16 %v2130
    %v2163 = vunpack.c.l.b16 %v2131
    %v2164 = vunpack.c.l.b16 %v2132
    %v2165 = vunpack.c.l.b16 %v2133
    %v2166 = vunpack.c.l.b16 %v2134
    %v2167 = vunpack.c.l.b16 %v2135
    %v2168 = vunpack.c.l.b16 %v2136
    %v2169 = vunpack.c.l.b16 %v2137
    %v2170 = vunpack.c.l.b16 %v2138
    %v2171 = vunpack.c.l.b16 %v2139
    %v2172 = vunpack.c.l.b16 %v2140
    %v2173 = vunpack.c.l.b16 %v2141
    %v2174 = vunpack.c.l.b16 %v2142
    %v2175 = vunpack.c.l.b16 %v2143
    %v2176 = vunpack.c.l.b16 %v2144
    %v2177 = vunpack.c.l.b16 %v2145
    %v2178 = vpack.c.b16 %v2163, %v2162
    %v2179 = vpack.c.b16 %v2165, %v2164
    %v2180 = vpack.c.b16 %v2167, %v2166
    %v2181 = vpack.c.b16 %v2169, %v2168
    %v2182 = vpack.c.b16 %v2171, %v2170
    %v2183 = vpack.c.b16 %v2173, %v2172
    %v2184 = vpack.c.b16 %v2175, %v2174
    %v2185 = vpack.c.b16 %v2177, %v2176
    %2194 = vmatprep.subr.bf16.mxu0 0
    %2195 = vmatpush1.bf16.msra.mxu0 %v2178
    %2196 = vmatprep.subr.bf16.mxu0 0
    %2197 = vmatpush1.bf16.msra.mxu0 %v2179
    %2198 = vmatprep.subr.bf16.mxu0 0
    %2199 = vmatpush1.bf16.msra.mxu0 %v2180
    %2200 = vmatprep.subr.bf16.mxu0 0
    %2201 = vmatpush1.bf16.msra.mxu0 %v2181
    %2202 = vmatprep.subr.bf16.mxu0 0
    %2203 = vmatpush1.bf16.msra.mxu0 %v2182
    %2204 = vmatprep.subr.bf16.mxu0 0
    %2205 = vmatpush1.bf16.msra.mxu0 %v2183
    %2206 = vmatprep.subr.bf16.mxu0 0
    %2207 = vmatpush1.bf16.msra.mxu0 %v2184
    %2208 = vmatprep.subr.bf16.mxu0 0
    %2209 = vmatpush1.bf16.msra.mxu0 %v2185
    %2210 = vmatprep.subr.bf16.mxu0 0
    %2211 = vmatpush1.bf16.msra.mxu0 0
    %2212 = vmatprep.subr.bf16.mxu0 0
    %2213 = vmatpush1.bf16.msra.mxu0 0
    %2214 = vmatprep.subr.bf16.mxu0 0
    %2215 = vmatpush1.bf16.msra.mxu0 0
    %2216 = vmatprep.subr.bf16.mxu0 0
    %2217 = vmatpush1.bf16.msra.mxu0 0
    %2218 = vmatprep.subr.bf16.mxu0 0
    %2219 = vmatpush1.bf16.msra.mxu0 0
    %2220 = vmatprep.subr.bf16.mxu0 0
    %2221 = vmatpush1.bf16.msra.mxu0 0
    %2222 = vmatprep.subr.bf16.mxu0 0
    %2223 = vmatpush1.bf16.msra.mxu0 0
    %2224 = vmatprep.subr.bf16.mxu0 0
    %2225 = vmatpush1.bf16.msra.mxu0 0
    %2226 = vmatprep.mubr.bf16.mxu0 0
    %2227 = vmatmul.mubr.bf16.gmra.mrb[0].mxu0 %v2125
    %v2228 = vpop.f32.mrb[0].mxu0
    %v2229 = vadd.f32 0.0, %v2228
    %v2230 = vpop.f32.mrb[0].mxu0
    %v2231 = vpop.f32.mrb[0].mxu0
    %v2232 = vadd.f32 0.0, %v2231
    %v2233 = vpop.f32.mrb[0].mxu0
    %2234 = vmatprep.mubr.bf16.mxu0 0
    %2235 = vmatmul.mubr.bf16.gmra.mrb[0].mxu0 %v2126
    %v2236 = vpop.f32.mrb[0].mxu0
    %v2237 = vadd.f32 0.0, %v2236
    %v2238 = vpop.f32.mrb[0].mxu0
    %v2239 = vpop.f32.mrb[0].mxu0
    %v2240 = vadd.f32 0.0, %v2239
    %v2241 = vpop.f32.mrb[0].mxu0
    %2242 = vmatprep.mubr.bf16.mxu0 0
    %2243 = vmatmul.mubr.bf16.gmra.mrb[0].mxu0 %v2127
    %v2244 = vpop.f32.mrb[0].mxu0
    %v2245 = vadd.f32 0.0, %v2244
    %v2246 = vpop.f32.mrb[0].mxu0
    %v2247 = vpop.f32.mrb[0].mxu0
    %v2248 = vadd.f32 0.0, %v2247
    %v2249 = vpop.f32.mrb[0].mxu0
    %2250 = vmatprep.mubr.bf16.mxu0 0
    %2251 = vmatmul.mubr.bf16.gmra.mrb[0].mxu0 %v2128
    %v2252 = vpop.f32.mrb[0].mxu0
    %v2253 = vadd.f32 0.0, %v2252
    %v2254 = vpop.f32.mrb[0].mxu0
    %v2255 = vpop.f32.mrb[0].mxu0
    %v2256 = vadd.f32 0.0, %v2255
    %v2257 = vpop.f32.mrb[0].mxu0
    %2258 = vdwg.mxu0
    %v2259 = vadd.f32 %v2101, %v2229
    %v2260 = vadd.f32 %v2102, %v2232
    %v2261 = vadd.f32 %v2103, %v2237
    %v2262 = vadd.f32 %v2104, %v2240
    %v2263 = vadd.f32 %v2105, %v2245
    %v2264 = vadd.f32 %v2106, %v2248
    %v2265 = vadd.f32 %v2107, %v2253
    %v2266 = vadd.f32 %v2108, %v2256
    %s2267 = scalar_lea.vmem [#allocation3], 4
    %v2268 = vld [vmem:[%s2267] ss:$2 sm:$0xff]
    %s2269 = scalar_lea.vmem [#allocation3], 20
    %v2270 = vld [vmem:[%s2269] ss:$2 sm:$0xff]
    %s2271 = scalar_lea.vmem [#allocation3], 36
    %v2272 = vld [vmem:[%s2271] ss:$2 sm:$0xff]
    %s2273 = scalar_lea.vmem [#allocation3], 52
    %v2274 = vld [vmem:[%s2273] ss:$2 sm:$0xff]
    %s2275 = scalar_lea.vmem [#allocation3], 68
    %v2276 = vld [vmem:[%s2275] ss:$2 sm:$0xff]
    %s2277 = scalar_lea.vmem [#allocation3], 84
    %v2278 = vld [vmem:[%s2277] ss:$2 sm:$0xff]
    %s2279 = scalar_lea.vmem [#allocation3], 100
    %v2280 = vld [vmem:[%s2279] ss:$2 sm:$0xff]
    %s2281 = scalar_lea.vmem [#allocation3], 116
    %v2282 = vld [vmem:[%s2281] ss:$2 sm:$0xff]
    %v2283 = vpack.c.bf16 %v2270, %v2268
    %v2284 = vpack.c.bf16 %v2274, %v2272
    %v2285 = vpack.c.bf16 %v2278, %v2276
    %v2286 = vpack.c.bf16 %v2282, %v2280
    %s2287 = scalar_lea.vmem %s5, 256
    %v2288 = vld [vmem:[%s2287] sm:$0xf]
    %v2289 = vld [vmem:[%s2287 + $0x4] sm:$0xf]
    %v2290 = vld [vmem:[%s2287 + $0x8] sm:$0xf]
    %v2291 = vld [vmem:[%s2287 + $0xc] sm:$0xf]
    %v2292 = vld [vmem:[%s2287 + $0x10] sm:$0xf]
    %v2293 = vld [vmem:[%s2287 + $0x14] sm:$0xf]
    %v2294 = vld [vmem:[%s2287 + $0x18] sm:$0xf]
    %v2295 = vld [vmem:[%s2287 + $0x1c] sm:$0xf]
    %v2296 = vld [vmem:[%s2287 + $0x20] sm:$0xf]
    %v2297 = vld [vmem:[%s2287 + $0x24] sm:$0xf]
    %v2298 = vld [vmem:[%s2287 + $0x28] sm:$0xf]
    %v2299 = vld [vmem:[%s2287 + $0x2c] sm:$0xf]
    %v2300 = vld [vmem:[%s2287 + $0x30] sm:$0xf]
    %v2301 = vld [vmem:[%s2287 + $0x34] sm:$0xf]
    %v2302 = vld [vmem:[%s2287 + $0x38] sm:$0xf]
    %v2303 = vld [vmem:[%s2287 + $0x3c] sm:$0xf]
    %v2320 = vunpack.c.l.b16 %v2288
    %v2321 = vunpack.c.l.b16 %v2289
    %v2322 = vunpack.c.l.b16 %v2290
    %v2323 = vunpack.c.l.b16 %v2291
    %v2324 = vunpack.c.l.b16 %v2292
    %v2325 = vunpack.c.l.b16 %v2293
    %v2326 = vunpack.c.l.b16 %v2294
    %v2327 = vunpack.c.l.b16 %v2295
    %v2328 = vunpack.c.l.b16 %v2296
    %v2329 = vunpack.c.l.b16 %v2297
    %v2330 = vunpack.c.l.b16 %v2298
    %v2331 = vunpack.c.l.b16 %v2299
    %v2332 = vunpack.c.l.b16 %v2300
    %v2333 = vunpack.c.l.b16 %v2301
    %v2334 = vunpack.c.l.b16 %v2302
    %v2335 = vunpack.c.l.b16 %v2303
    %v2336 = vpack.c.b16 %v2321, %v2320
    %v2337 = vpack.c.b16 %v2323, %v2322
    %v2338 = vpack.c.b16 %v2325, %v2324
    %v2339 = vpack.c.b16 %v2327, %v2326
    %v2340 = vpack.c.b16 %v2329, %v2328
    %v2341 = vpack.c.b16 %v2331, %v2330
    %v2342 = vpack.c.b16 %v2333, %v2332
    %v2343 = vpack.c.b16 %v2335, %v2334
    %2352 = vmatprep.subr.bf16.mxu0 0
    %2353 = vmatpush1.bf16.msra.mxu0 %v2336
    %2354 = vmatprep.subr.bf16.mxu0 0
    %2355 = vmatpush1.bf16.msra.mxu0 %v2337
    %2356 = vmatprep.subr.bf16.mxu0 0
    %2357 = vmatpush1.bf16.msra.mxu0 %v2338
    %2358 = vmatprep.subr.bf16.mxu0 0
    %2359 = vmatpush1.bf16.msra.mxu0 %v2339
    %2360 = vmatprep.subr.bf16.mxu0 0
    %2361 = vmatpush1.bf16.msra.mxu0 %v2340
    %2362 = vmatprep.subr.bf16.mxu0 0
    %2363 = vmatpush1.bf16.msra.mxu0 %v2341
    %2364 = vmatprep.subr.bf16.mxu0 0
    %2365 = vmatpush1.bf16.msra.mxu0 %v2342
    %2366 = vmatprep.subr.bf16.mxu0 0
    %2367 = vmatpush1.bf16.msra.mxu0 %v2343
    %2368 = vmatprep.subr.bf16.mxu0 0
    %2369 = vmatpush1.bf16.msra.mxu0 0
    %2370 = vmatprep.subr.bf16.mxu0 0
    %2371 = vmatpush1.bf16.msra.mxu0 0
    %2372 = vmatprep.subr.bf16.mxu0 0
    %2373 = vmatpush1.bf16.msra.mxu0 0
    %2374 = vmatprep.subr.bf16.mxu0 0
    %2375 = vmatpush1.bf16.msra.mxu0 0
    %2376 = vmatprep.subr.bf16.mxu0 0
    %2377 = vmatpush1.bf16.msra.mxu0 0
    %2378 = vmatprep.subr.bf16.mxu0 0
    %2379 = vmatpush1.bf16.msra.mxu0 0
    %2380 = vmatprep.subr.bf16.mxu0 0
    %2381 = vmatpush1.bf16.msra.mxu0 0
    %2382 = vmatprep.subr.bf16.mxu0 0
    %2383 = vmatpush1.bf16.msra.mxu0 0
    %2384 = vmatprep.mubr.bf16.mxu0 0
    %2385 = vmatmul.mubr.bf16.gmra.mrb[0].mxu0 %v2283
    %v2386 = vpop.f32.mrb[0].mxu0
    %v2387 = vadd.f32 0.0, %v2386
    %v2388 = vpop.f32.mrb[0].mxu0
    %v2389 = vpop.f32.mrb[0].mxu0
    %v2390 = vadd.f32 0.0, %v2389
    %v2391 = vpop.f32.mrb[0].mxu0
    %2392 = vmatprep.mubr.bf16.mxu0 0
    %2393 = vmatmul.mubr.bf16.gmra.mrb[0].mxu0 %v2284
    %v2394 = vpop.f32.mrb[0].mxu0
    %v2395 = vadd.f32 0.0, %v2394
    %v2396 = vpop.f32.mrb[0].mxu0
    %v2397 = vpop.f32.mrb[0].mxu0
    %v2398 = vadd.f32 0.0, %v2397
    %v2399 = vpop.f32.mrb[0].mxu0
    %2400 = vmatprep.mubr.bf16.mxu0 0
    %2401 = vmatmul.mubr.bf16.gmra.mrb[0].mxu0 %v2285
    %v2402 = vpop.f32.mrb[0].mxu0
    %v2403 = vadd.f32 0.0, %v2402
    %v2404 = vpop.f32.mrb[0].mxu0
    %v2405 = vpop.f32.mrb[0].mxu0
    %v2406 = vadd.f32 0.0, %v2405
    %v2407 = vpop.f32.mrb[0].mxu0
    %2408 = vmatprep.mubr.bf16.mxu0 0
    %2409 = vmatmul.mubr.bf16.gmra.mrb[0].mxu0 %v2286
    %v2410 = vpop.f32.mrb[0].mxu0
    %v2411 = vadd.f32 0.0, %v2410
    %v2412 = vpop.f32.mrb[0].mxu0
    %v2413 = vpop.f32.mrb[0].mxu0
    %v2414 = vadd.f32 0.0, %v2413
    %v2415 = vpop.f32.mrb[0].mxu0
    %2416 = vdwg.mxu0
    %v2417 = vadd.f32 %v2259, %v2387
    %v2418 = vadd.f32 %v2260, %v2390
    %v2419 = vadd.f32 %v2261, %v2395
    %v2420 = vadd.f32 %v2262, %v2398
    %v2421 = vadd.f32 %v2263, %v2403
    %v2422 = vadd.f32 %v2264, %v2406
    %v2423 = vadd.f32 %v2265, %v2411
    %v2424 = vadd.f32 %v2266, %v2414
    %v2425 = vld [vmem:[%s6] sm:$0x1]
    %v2427 = vlaneseq
    %v2428 = vshrl.u32 %v2427, 7
    %v2429 = vsub.s32 0, %v2428
    %v2430 = vrot.slane %v2425, %v2429
    %v2432 = vadd.f32 %v2417, %v2430
    %v2433 = vadd.f32 %v2418, %v2430
    %v2434 = vadd.f32 %v2419, %v2430
    %v2435 = vadd.f32 %v2420, %v2430
    %v2436 = vadd.f32 %v2421, %v2430
    %v2437 = vadd.f32 %v2422, %v2430
    %v2438 = vadd.f32 %v2423, %v2430
    %v2439 = vadd.f32 %v2424, %v2430
    %v2440 = vmax.f32 %v2432, 0.0
    %v2441 = vmax.f32 %v2433, 0.0
    %v2442 = vmax.f32 %v2434, 0.0
    %v2443 = vmax.f32 %v2435, 0.0
    %v2444 = vmax.f32 %v2436, 0.0
    %v2445 = vmax.f32 %v2437, 0.0
    %v2446 = vmax.f32 %v2438, 0.0
    %v2447 = vmax.f32 %v2439, 0.0
    %2448 = vst [vmem:[#allocation4] sm:$0xff] %v2440
    %2449 = vst [vmem:[#allocation4 + $0x8] sm:$0xff] %v2441
    %2450 = vst [vmem:[#allocation4 + $0x10] sm:$0xff] %v2442
    %2451 = vst [vmem:[#allocation4 + $0x18] sm:$0xff] %v2443
    %2452 = vst [vmem:[#allocation4 + $0x20] sm:$0xff] %v2444
    %2453 = vst [vmem:[#allocation4 + $0x28] sm:$0xff] %v2445
    %2454 = vst [vmem:[#allocation4 + $0x30] sm:$0xff] %v2446
    %2455 = vst [vmem:[#allocation4 + $0x38] sm:$0xff] %v2447
    %v2456 = vld [vmem:[#allocation4] ss:$2 sm:$0xff]
    %s2457 = scalar_lea.vmem [#allocation4], 16
    %v2458 = vld [vmem:[%s2457] ss:$2 sm:$0xff]
    %s2459 = scalar_lea.vmem [#allocation4], 32
    %v2460 = vld [vmem:[%s2459] ss:$2 sm:$0xff]
    %s2461 = scalar_lea.vmem [#allocation4], 48
    %v2462 = vld [vmem:[%s2461] ss:$2 sm:$0xff]
    %v2463 = vpack.c.bf16 %v2458, %v2456
    %v2464 = vpack.c.bf16 %v2462, %v2460
    %v2465 = vld [vmem:[%s7] sm:$0xf]
    %v2466 = vld [vmem:[%s7 + $0x4] sm:$0xf]
    %v2467 = vld [vmem:[%s7 + $0x8] sm:$0xf]
    %v2468 = vld [vmem:[%s7 + $0xc] sm:$0xf]
    %v2469 = vld [vmem:[%s7 + $0x10] sm:$0xf]
    %v2470 = vld [vmem:[%s7 + $0x14] sm:$0xf]
    %v2471 = vld [vmem:[%s7 + $0x18] sm:$0xf]
    %v2472 = vld [vmem:[%s7 + $0x1c] sm:$0xf]
    %v2473 = vld [vmem:[%s7 + $0x20] sm:$0xf]
    %v2474 = vld [vmem:[%s7 + $0x24] sm:$0xf]
    %v2475 = vld [vmem:[%s7 + $0x28] sm:$0xf]
    %v2476 = vld [vmem:[%s7 + $0x2c] sm:$0xf]
    %v2477 = vld [vmem:[%s7 + $0x30] sm:$0xf]
    %v2478 = vld [vmem:[%s7 + $0x34] sm:$0xf]
    %v2479 = vld [vmem:[%s7 + $0x38] sm:$0xf]
    %v2480 = vld [vmem:[%s7 + $0x3c] sm:$0xf]
    %s2481 = scalar_lea.vmem [#allocation4], 1
    %v2482 = vld [vmem:[%s2481] ss:$2 sm:$0xff]
    %s2483 = scalar_lea.vmem [#allocation4], 17
    %v2484 = vld [vmem:[%s2483] ss:$2 sm:$0xff]
    %s2485 = scalar_lea.vmem [#allocation4], 33
    %v2486 = vld [vmem:[%s2485] ss:$2 sm:$0xff]
    %s2487 = scalar_lea.vmem [#allocation4], 49
    %v2488 = vld [vmem:[%s2487] ss:$2 sm:$0xff]
    %v2489 = vpack.c.bf16 %v2484, %v2482
    %v2490 = vpack.c.bf16 %v2488, %v2486
    %s2491 = scalar_lea.vmem %s7, 64
    %v2492 = vld [vmem:[%s2491] sm:$0xf]
    %v2493 = vld [vmem:[%s2491 + $0x4] sm:$0xf]
    %v2494 = vld [vmem:[%s2491 + $0x8] sm:$0xf]
    %v2495 = vld [vmem:[%s2491 + $0xc] sm:$0xf]
    %v2496 = vld [vmem:[%s2491 + $0x10] sm:$0xf]
    %v2497 = vld [vmem:[%s2491 + $0x14] sm:$0xf]
    %v2498 = vld [vmem:[%s2491 + $0x18] sm:$0xf]
    %v2499 = vld [vmem:[%s2491 + $0x1c] sm:$0xf]
    %v2500 = vld [vmem:[%s2491 + $0x20] sm:$0xf]
    %v2501 = vld [vmem:[%s2491 + $0x24] sm:$0xf]
    %v2502 = vld [vmem:[%s2491 + $0x28] sm:$0xf]
    %v2503 = vld [vmem:[%s2491 + $0x2c] sm:$0xf]
    %v2504 = vld [vmem:[%s2491 + $0x30] sm:$0xf]
    %v2505 = vld [vmem:[%s2491 + $0x34] sm:$0xf]
    %v2506 = vld [vmem:[%s2491 + $0x38] sm:$0xf]
    %v2507 = vld [vmem:[%s2491 + $0x3c] sm:$0xf]
    %v2524 = vunpack.c.l.b16 %v2492
    %v2525 = vunpack.c.l.b16 %v2493
    %v2526 = vunpack.c.l.b16 %v2494
    %v2527 = vunpack.c.l.b16 %v2495
    %v2528 = vunpack.c.l.b16 %v2496
    %v2529 = vunpack.c.l.b16 %v2497
    %v2530 = vunpack.c.l.b16 %v2498
    %v2531 = vunpack.c.l.b16 %v2499
    %v2532 = vunpack.c.l.b16 %v2500
    %v2533 = vunpack.c.l.b16 %v2501
    %v2534 = vunpack.c.l.b16 %v2502
    %v2535 = vunpack.c.l.b16 %v2503
    %v2536 = vunpack.c.l.b16 %v2504
    %v2537 = vunpack.c.l.b16 %v2505
    %v2538 = vunpack.c.l.b16 %v2506
    %v2539 = vunpack.c.l.b16 %v2507
    %v2540 = vpack.c.b16 %v2525, %v2524
    %v2541 = vpack.c.b16 %v2527, %v2526
    %v2542 = vpack.c.b16 %v2529, %v2528
    %v2543 = vpack.c.b16 %v2531, %v2530
    %v2544 = vpack.c.b16 %v2533, %v2532
    %v2545 = vpack.c.b16 %v2535, %v2534
    %v2546 = vpack.c.b16 %v2537, %v2536
    %v2547 = vpack.c.b16 %v2539, %v2538
    %2556 = vmatprep.subr.bf16.mxu0 0
    %2557 = vmatpush1.bf16.msra.mxu0 %v2540
    %2558 = vmatprep.subr.bf16.mxu0 0
    %2559 = vmatpush1.bf16.msra.mxu0 %v2541
    %2560 = vmatprep.subr.bf16.mxu0 0
    %2561 = vmatpush1.bf16.msra.mxu0 %v2542
    %2562 = vmatprep.subr.bf16.mxu0 0
    %2563 = vmatpush1.bf16.msra.mxu0 %v2543
    %2564 = vmatprep.subr.bf16.mxu0 0
    %2565 = vmatpush1.bf16.msra.mxu0 %v2544
    %2566 = vmatprep.subr.bf16.mxu0 0
    %2567 = vmatpush1.bf16.msra.mxu0 %v2545
    %2568 = vmatprep.subr.bf16.mxu0 0
    %2569 = vmatpush1.bf16.msra.mxu0 %v2546
    %2570 = vmatprep.subr.bf16.mxu0 0
    %2571 = vmatpush1.bf16.msra.mxu0 %v2547
    %2572 = vmatprep.subr.bf16.mxu0 0
    %2573 = vmatpush1.bf16.msra.mxu0 0
    %2574 = vmatprep.subr.bf16.mxu0 0
    %2575 = vmatpush1.bf16.msra.mxu0 0
    %2576 = vmatprep.subr.bf16.mxu0 0
    %2577 = vmatpush1.bf16.msra.mxu0 0
    %2578 = vmatprep.subr.bf16.mxu0 0
    %2579 = vmatpush1.bf16.msra.mxu0 0
    %2580 = vmatprep.subr.bf16.mxu0 0
    %2581 = vmatpush1.bf16.msra.mxu0 0
    %2582 = vmatprep.subr.bf16.mxu0 0
    %2583 = vmatpush1.bf16.msra.mxu0 0
    %2584 = vmatprep.subr.bf16.mxu0 0
    %2585 = vmatpush1.bf16.msra.mxu0 0
    %2586 = vmatprep.subr.bf16.mxu0 0
    %2587 = vmatpush1.bf16.msra.mxu0 0
    %2588 = vmatprep.mubr.bf16.mxu0 0
    %2589 = vmatmul.mubr.bf16.gmra.mrb[0].mxu0 %v2489
    %v2590 = vpop.f32.mrb[0].mxu0
    %v2591 = vadd.f32 0.0, %v2590
    %v2592 = vpop.f32.mrb[0].mxu0
    %v2593 = vpop.f32.mrb[0].mxu0
    %v2594 = vadd.f32 0.0, %v2593
    %v2595 = vpop.f32.mrb[0].mxu0
    %2596 = vmatprep.mubr.bf16.mxu0 0
    %2597 = vmatmul.mubr.bf16.gmra.mrb[0].mxu0 %v2490
    %v2598 = vpop.f32.mrb[0].mxu0
    %v2599 = vadd.f32 0.0, %v2598
    %v2600 = vpop.f32.mrb[0].mxu0
    %v2601 = vpop.f32.mrb[0].mxu0
    %v2602 = vadd.f32 0.0, %v2601
    %v2603 = vpop.f32.mrb[0].mxu0
    %2604 = vdwg.mxu0
    %v2621 = vunpack.c.l.b16 %v2465
    %v2622 = vunpack.c.l.b16 %v2466
    %v2623 = vunpack.c.l.b16 %v2467
    %v2624 = vunpack.c.l.b16 %v2468
    %v2625 = vunpack.c.l.b16 %v2469
    %v2626 = vunpack.c.l.b16 %v2470
    %v2627 = vunpack.c.l.b16 %v2471
    %v2628 = vunpack.c.l.b16 %v2472
    %v2629 = vunpack.c.l.b16 %v2473
    %v2630 = vunpack.c.l.b16 %v2474
    %v2631 = vunpack.c.l.b16 %v2475
    %v2632 = vunpack.c.l.b16 %v2476
    %v2633 = vunpack.c.l.b16 %v2477
    %v2634 = vunpack.c.l.b16 %v2478
    %v2635 = vunpack.c.l.b16 %v2479
    %v2636 = vunpack.c.l.b16 %v2480
    %v2637 = vpack.c.b16 %v2622, %v2621
    %v2638 = vpack.c.b16 %v2624, %v2623
    %v2639 = vpack.c.b16 %v2626, %v2625
    %v2640 = vpack.c.b16 %v2628, %v2627
    %v2641 = vpack.c.b16 %v2630, %v2629
    %v2642 = vpack.c.b16 %v2632, %v2631
    %v2643 = vpack.c.b16 %v2634, %v2633
    %v2644 = vpack.c.b16 %v2636, %v2635
    %2653 = vmatprep.subr.bf16.mxu0 0
    %2654 = vmatpush1.bf16.msra.mxu0 %v2637
    %2655 = vmatprep.subr.bf16.mxu0 0
    %2656 = vmatpush1.bf16.msra.mxu0 %v2638
    %2657 = vmatprep.subr.bf16.mxu0 0
    %2658 = vmatpush1.bf16.msra.mxu0 %v2639
    %2659 = vmatprep.subr.bf16.mxu0 0
    %2660 = vmatpush1.bf16.msra.mxu0 %v2640
    %2661 = vmatprep.subr.bf16.mxu0 0
    %2662 = vmatpush1.bf16.msra.mxu0 %v2641
    %2663 = vmatprep.subr.bf16.mxu0 0
    %2664 = vmatpush1.bf16.msra.mxu0 %v2642
    %2665 = vmatprep.subr.bf16.mxu0 0
    %2666 = vmatpush1.bf16.msra.mxu0 %v2643
    %2667 = vmatprep.subr.bf16.mxu0 0
    %2668 = vmatpush1.bf16.msra.mxu0 %v2644
    %2669 = vmatprep.subr.bf16.mxu0 0
    %2670 = vmatpush1.bf16.msra.mxu0 0
    %2671 = vmatprep.subr.bf16.mxu0 0
    %2672 = vmatpush1.bf16.msra.mxu0 0
    %2673 = vmatprep.subr.bf16.mxu0 0
    %2674 = vmatpush1.bf16.msra.mxu0 0
    %2675 = vmatprep.subr.bf16.mxu0 0
    %2676 = vmatpush1.bf16.msra.mxu0 0
    %2677 = vmatprep.subr.bf16.mxu0 0
    %2678 = vmatpush1.bf16.msra.mxu0 0
    %2679 = vmatprep.subr.bf16.mxu0 0
    %2680 = vmatpush1.bf16.msra.mxu0 0
    %2681 = vmatprep.subr.bf16.mxu0 0
    %2682 = vmatpush1.bf16.msra.mxu0 0
    %2683 = vmatprep.subr.bf16.mxu0 0
    %2684 = vmatpush1.bf16.msra.mxu0 0
    %2685 = vmatprep.mubr.bf16.mxu0 0
    %2686 = vmatmul.mubr.bf16.gmra.mrb[0].mxu0 %v2463
    %v2687 = vpop.f32.mrb[0].mxu0
    %v2688 = vadd.f32 %v2591, %v2687
    %v2689 = vpop.f32.mrb[0].mxu0
    %v2690 = vpop.f32.mrb[0].mxu0
    %v2691 = vadd.f32 %v2594, %v2690
    %v2692 = vpop.f32.mrb[0].mxu0
    %2693 = vmatprep.mubr.bf16.mxu0 0
    %2694 = vmatmul.mubr.bf16.gmra.mrb[0].mxu0 %v2464
    %v2695 = vpop.f32.mrb[0].mxu0
    %v2696 = vadd.f32 %v2599, %v2695
    %v2697 = vpop.f32.mrb[0].mxu0
    %v2698 = vpop.f32.mrb[0].mxu0
    %v2699 = vadd.f32 %v2602, %v2698
    %v2700 = vpop.f32.mrb[0].mxu0
    %2701 = vdwg.mxu0
    %s2702 = scalar_lea.vmem [#allocation4], 2
    %v2703 = vld [vmem:[%s2702] ss:$2 sm:$0xff]
    %s2704 = scalar_lea.vmem [#allocation4], 18
    %v2705 = vld [vmem:[%s2704] ss:$2 sm:$0xff]
    %s2706 = scalar_lea.vmem [#allocation4], 34
    %v2707 = vld [vmem:[%s2706] ss:$2 sm:$0xff]
    %s2708 = scalar_lea.vmem [#allocation4], 50
    %v2709 = vld [vmem:[%s2708] ss:$2 sm:$0xff]
    %v2710 = vpack.c.bf16 %v2705, %v2703
    %v2711 = vpack.c.bf16 %v2709, %v2707
    %s2712 = scalar_lea.vmem %s7, 128
    %v2713 = vld [vmem:[%s2712] sm:$0xf]
    %v2714 = vld [vmem:[%s2712 + $0x4] sm:$0xf]
    %v2715 = vld [vmem:[%s2712 + $0x8] sm:$0xf]
    %v2716 = vld [vmem:[%s2712 + $0xc] sm:$0xf]
    %v2717 = vld [vmem:[%s2712 + $0x10] sm:$0xf]
    %v2718 = vld [vmem:[%s2712 + $0x14] sm:$0xf]
    %v2719 = vld [vmem:[%s2712 + $0x18] sm:$0xf]
    %v2720 = vld [vmem:[%s2712 + $0x1c] sm:$0xf]
    %v2721 = vld [vmem:[%s2712 + $0x20] sm:$0xf]
    %v2722 = vld [vmem:[%s2712 + $0x24] sm:$0xf]
    %v2723 = vld [vmem:[%s2712 + $0x28] sm:$0xf]
    %v2724 = vld [vmem:[%s2712 + $0x2c] sm:$0xf]
    %v2725 = vld [vmem:[%s2712 + $0x30] sm:$0xf]
    %v2726 = vld [vmem:[%s2712 + $0x34] sm:$0xf]
    %v2727 = vld [vmem:[%s2712 + $0x38] sm:$0xf]
    %v2728 = vld [vmem:[%s2712 + $0x3c] sm:$0xf]
    %v2745 = vunpack.c.l.b16 %v2713
    %v2746 = vunpack.c.l.b16 %v2714
    %v2747 = vunpack.c.l.b16 %v2715
    %v2748 = vunpack.c.l.b16 %v2716
    %v2749 = vunpack.c.l.b16 %v2717
    %v2750 = vunpack.c.l.b16 %v2718
    %v2751 = vunpack.c.l.b16 %v2719
    %v2752 = vunpack.c.l.b16 %v2720
    %v2753 = vunpack.c.l.b16 %v2721
    %v2754 = vunpack.c.l.b16 %v2722
    %v2755 = vunpack.c.l.b16 %v2723
    %v2756 = vunpack.c.l.b16 %v2724
    %v2757 = vunpack.c.l.b16 %v2725
    %v2758 = vunpack.c.l.b16 %v2726
    %v2759 = vunpack.c.l.b16 %v2727
    %v2760 = vunpack.c.l.b16 %v2728
    %v2761 = vpack.c.b16 %v2746, %v2745
    %v2762 = vpack.c.b16 %v2748, %v2747
    %v2763 = vpack.c.b16 %v2750, %v2749
    %v2764 = vpack.c.b16 %v2752, %v2751
    %v2765 = vpack.c.b16 %v2754, %v2753
    %v2766 = vpack.c.b16 %v2756, %v2755
    %v2767 = vpack.c.b16 %v2758, %v2757
    %v2768 = vpack.c.b16 %v2760, %v2759
    %2777 = vmatprep.subr.bf16.mxu0 0
    %2778 = vmatpush1.bf16.msra.mxu0 %v2761
    %2779 = vmatprep.subr.bf16.mxu0 0
    %2780 = vmatpush1.bf16.msra.mxu0 %v2762
    %2781 = vmatprep.subr.bf16.mxu0 0
    %2782 = vmatpush1.bf16.msra.mxu0 %v2763
    %2783 = vmatprep.subr.bf16.mxu0 0
    %2784 = vmatpush1.bf16.msra.mxu0 %v2764
    %2785 = vmatprep.subr.bf16.mxu0 0
    %2786 = vmatpush1.bf16.msra.mxu0 %v2765
    %2787 = vmatprep.subr.bf16.mxu0 0
    %2788 = vmatpush1.bf16.msra.mxu0 %v2766
    %2789 = vmatprep.subr.bf16.mxu0 0
    %2790 = vmatpush1.bf16.msra.mxu0 %v2767
    %2791 = vmatprep.subr.bf16.mxu0 0
    %2792 = vmatpush1.bf16.msra.mxu0 %v2768
    %2793 = vmatprep.subr.bf16.mxu0 0
    %2794 = vmatpush1.bf16.msra.mxu0 0
    %2795 = vmatprep.subr.bf16.mxu0 0
    %2796 = vmatpush1.bf16.msra.mxu0 0
    %2797 = vmatprep.subr.bf16.mxu0 0
    %2798 = vmatpush1.bf16.msra.mxu0 0
    %2799 = vmatprep.subr.bf16.mxu0 0
    %2800 = vmatpush1.bf16.msra.mxu0 0
    %2801 = vmatprep.subr.bf16.mxu0 0
    %2802 = vmatpush1.bf16.msra.mxu0 0
    %2803 = vmatprep.subr.bf16.mxu0 0
    %2804 = vmatpush1.bf16.msra.mxu0 0
    %2805 = vmatprep.subr.bf16.mxu0 0
    %2806 = vmatpush1.bf16.msra.mxu0 0
    %2807 = vmatprep.subr.bf16.mxu0 0
    %2808 = vmatpush1.bf16.msra.mxu0 0
    %2809 = vmatprep.mubr.bf16.mxu0 0
    %2810 = vmatmul.mubr.bf16.gmra.mrb[0].mxu0 %v2710
    %v2811 = vpop.f32.mrb[0].mxu0
    %v2812 = vadd.f32 0.0, %v2811
    %v2813 = vpop.f32.mrb[0].mxu0
    %v2814 = vpop.f32.mrb[0].mxu0
    %v2815 = vadd.f32 0.0, %v2814
    %v2816 = vpop.f32.mrb[0].mxu0
    %2817 = vmatprep.mubr.bf16.mxu0 0
    %2818 = vmatmul.mubr.bf16.gmra.mrb[0].mxu0 %v2711
    %v2819 = vpop.f32.mrb[0].mxu0
    %v2820 = vadd.f32 0.0, %v2819
    %v2821 = vpop.f32.mrb[0].mxu0
    %v2822 = vpop.f32.mrb[0].mxu0
    %v2823 = vadd.f32 0.0, %v2822
    %v2824 = vpop.f32.mrb[0].mxu0
    %2825 = vdwg.mxu0
    %v2826 = vadd.f32 %v2688, %v2812
    %v2827 = vadd.f32 %v2691, %v2815
    %v2828 = vadd.f32 %v2696, %v2820
    %v2829 = vadd.f32 %v2699, %v2823
    %v2830 = vld [vmem:[%s8] sm:$0x1]
    %v2832 = vlaneseq
    %v2833 = vshrl.u32 %v2832, 7
    %v2834 = vsub.s32 0, %v2833
    %v2835 = vrot.slane %v2830, %v2834
    %v2837 = vadd.f32 %v2826, %v2835
    %v2838 = vadd.f32 %v2827, %v2835
    %v2839 = vadd.f32 %v2828, %v2835
    %v2840 = vadd.f32 %v2829, %v2835
    %v2841 = vmax.f32 %v2837, 0.0
    %v2842 = vmax.f32 %v2838, 0.0
    %v2843 = vmax.f32 %v2839, 0.0
    %v2844 = vmax.f32 %v2840, 0.0
    %2845 = vst [vmem:[#allocation5] sm:$0xff] %v2841
    %2846 = vst [vmem:[#allocation5 + $0x8] sm:$0xff] %v2842
    %2847 = vst [vmem:[#allocation5 + $0x10] sm:$0xff] %v2843
    %2848 = vst [vmem:[#allocation5 + $0x18] sm:$0xff] %v2844
    %v2849 = vld [vmem:[#allocation5] sm:$0x1]
    %2850 = vst [vmem:[#allocation6] sm:$0x1] %v2849
    %v2851 = vld [vmem:[#allocation5 + $0x4] sm:$0x1]
    %2852 = vst [vmem:[#allocation6 + $0x1] sm:$0x1] %v2851
    %v2853 = vld [vmem:[#allocation5 + $0x8] sm:$0x1]
    %2854 = vst [vmem:[#allocation6 + $0x2] sm:$0x1] %v2853
    %v2855 = vld [vmem:[#allocation5 + $0xc] sm:$0x1]
    %2856 = vst [vmem:[#allocation6 + $0x3] sm:$0x1] %v2855
    %v2857 = vld [vmem:[#allocation5 + $0x10] sm:$0x1]
    %2858 = vst [vmem:[#allocation6 + $0x4] sm:$0x1] %v2857
    %v2859 = vld [vmem:[#allocation5 + $0x14] sm:$0x1]
    %2860 = vst [vmem:[#allocation6 + $0x5] sm:$0x1] %v2859
    %v2861 = vld [vmem:[#allocation5 + $0x18] sm:$0x1]
    %2862 = vst [vmem:[#allocation6 + $0x6] sm:$0x1] %v2861
    %v2863 = vld [vmem:[#allocation5 + $0x1c] sm:$0x1]
    %2864 = vst [vmem:[#allocation6 + $0x7] sm:$0x1] %v2863
    %v2865 = vld [vmem:[#allocation6] sm:$0xff]
    %v2866 = vpack.c.bf16 %v2865, %v2865
    %v2867 = vld [vmem:[#allocation8] sm:$0xff]
    %v2868 = vld [vmem:[#allocation8 + $0x8] sm:$0xf]
    %v2869 = vld [vmem:[#allocation8 + $0xc] sm:$0xff]
    %v2870 = vld [vmem:[#allocation8 + $0x14] sm:$0xf]
    %v2871 = vld [vmem:[#allocation8 + $0x18] sm:$0xff]
    %v2872 = vld [vmem:[#allocation8 + $0x20] sm:$0xf]
    %v2873 = vld [vmem:[#allocation8 + $0x24] sm:$0xff]
    %v2874 = vld [vmem:[#allocation8 + $0x2c] sm:$0xf]
    %v2875 = vld [vmem:[#allocation8 + $0x30] sm:$0xff]
    %v2876 = vld [vmem:[#allocation8 + $0x38] sm:$0xf]
    %v2877 = vld [vmem:[#allocation8 + $0x3c] sm:$0xff]
    %v2878 = vld [vmem:[#allocation8 + $0x44] sm:$0xf]
    %v2879 = vld [vmem:[#allocation8 + $0x48] sm:$0xff]
    %v2880 = vld [vmem:[#allocation8 + $0x50] sm:$0xf]
    %v2881 = vld [vmem:[#allocation8 + $0x54] sm:$0xff]
    %v2882 = vld [vmem:[#allocation8 + $0x5c] sm:$0xf]
    %v2883 = vld [vmem:[#allocation8 + $0x60] sm:$0xff]
    %v2884 = vld [vmem:[#allocation8 + $0x68] sm:$0xf]
    %v2885 = vld [vmem:[#allocation8 + $0x6c] sm:$0xff]
    %v2886 = vld [vmem:[#allocation8 + $0x74] sm:$0xf]
    %v2887 = vld [vmem:[#allocation8 + $0x78] sm:$0xff]
    %v2888 = vld [vmem:[#allocation8 + $0x80] sm:$0xf]
    %v2889 = vld [vmem:[#allocation8 + $0x84] sm:$0xff]
    %v2890 = vld [vmem:[#allocation8 + $0x8c] sm:$0xf]
    %v2891 = vld [vmem:[#allocation8 + $0x90] sm:$0xff]
    %v2892 = vld [vmem:[#allocation8 + $0x98] sm:$0xf]
    %v2893 = vld [vmem:[#allocation8 + $0x9c] sm:$0xff]
    %v2894 = vld [vmem:[#allocation8 + $0xa4] sm:$0xf]
    %v2895 = vld [vmem:[#allocation8 + $0xa8] sm:$0xff]
    %v2896 = vld [vmem:[#allocation8 + $0xb0] sm:$0xf]
    %v2897 = vld [vmem:[#allocation8 + $0xb4] sm:$0xff]
    %v2898 = vld [vmem:[#allocation8 + $0xbc] sm:$0xf]
    %v2899 = vld [vmem:[#allocation11] sm:$0x7]
    %v2901 = vlaneseq
    %v2902 = vshrl.u32 %v2901, 7
    %v2903 = vsub.s32 0, %v2902
    %v2904 = vrot.slane %v2899, %v2903
    %v2905 = vlaneseq
    %v2906 = vshrl.u32 %v2905, 7
    %v2907 = vsub.s32 1, %v2906
    %v2908 = vrot.slane %v2899, %v2907
    %v2909 = vlaneseq
    %v2910 = vshrl.u32 %v2909, 7
    %v2911 = vsub.s32 2, %v2910
    %v2912 = vrot.slane %v2899, %v2911
    %v2948 = vunpack.c.l.b16 %v2867
    %v2949 = vunpack.c.h.b16 %v2867
    %v2950 = vunpack.c.l.b16 %v2868
    %v2951 = vunpack.c.l.b16 %v2869
    %v2952 = vunpack.c.h.b16 %v2869
    %v2953 = vunpack.c.l.b16 %v2870
    %v2954 = vunpack.c.l.b16 %v2871
    %v2955 = vunpack.c.h.b16 %v2871
    %v2956 = vunpack.c.l.b16 %v2872
    %v2957 = vunpack.c.l.b16 %v2873
    %v2958 = vunpack.c.h.b16 %v2873
    %v2959 = vunpack.c.l.b16 %v2874
    %v2960 = vunpack.c.l.b16 %v2875
    %v2961 = vunpack.c.h.b16 %v2875
    %v2962 = vunpack.c.l.b16 %v2876
    %v2963 = vunpack.c.l.b16 %v2877
    %v2964 = vunpack.c.h.b16 %v2877
    %v2965 = vunpack.c.l.b16 %v2878
    %v2966 = vunpack.c.l.b16 %v2879
    %v2967 = vunpack.c.h.b16 %v2879
    %v2968 = vunpack.c.l.b16 %v2880
    %v2969 = vunpack.c.l.b16 %v2881
    %v2970 = vunpack.c.h.b16 %v2881
    %v2971 = vunpack.c.l.b16 %v2882
    %v2972 = vunpack.c.l.b16 %v2883
    %v2973 = vunpack.c.h.b16 %v2883
    %v2974 = vunpack.c.l.b16 %v2884
    %v2975 = vunpack.c.l.b16 %v2885
    %v2976 = vunpack.c.h.b16 %v2885
    %v2977 = vunpack.c.l.b16 %v2886
    %v2978 = vunpack.c.l.b16 %v2887
    %v2979 = vunpack.c.h.b16 %v2887
    %v2980 = vunpack.c.l.b16 %v2888
    %v2981 = vunpack.c.l.b16 %v2889
    %v2982 = vunpack.c.h.b16 %v2889
    %v2983 = vunpack.c.l.b16 %v2890
    %v2984 = vunpack.c.l.b16 %v2891
    %v2985 = vunpack.c.h.b16 %v2891
    %v2986 = vunpack.c.l.b16 %v2892
    %v2987 = vunpack.c.l.b16 %v2893
    %v2988 = vunpack.c.h.b16 %v2893
    %v2989 = vunpack.c.l.b16 %v2894
    %v2990 = vunpack.c.l.b16 %v2895
    %v2991 = vunpack.c.h.b16 %v2895
    %v2992 = vunpack.c.l.b16 %v2896
    %v2993 = vunpack.c.l.b16 %v2897
    %v2994 = vunpack.c.h.b16 %v2897
    %v2995 = vunpack.c.l.b16 %v2898
    %v2996 = vpack.c.b16 %v2951, %v2948
    %v2997 = vpack.c.b16 %v2952, %v2949
    %v2998 = vpack.c.b16 %v2953, %v2950
    %v2999 = vpack.c.b16 %v2957, %v2954
    %v3000 = vpack.c.b16 %v2958, %v2955
    %v3001 = vpack.c.b16 %v2959, %v2956
    %v3002 = vpack.c.b16 %v2963, %v2960
    %v3003 = vpack.c.b16 %v2964, %v2961
    %v3004 = vpack.c.b16 %v2965, %v2962
    %v3005 = vpack.c.b16 %v2969, %v2966
    %v3006 = vpack.c.b16 %v2970, %v2967
    %v3007 = vpack.c.b16 %v2971, %v2968
    %v3008 = vpack.c.b16 %v2975, %v2972
    %v3009 = vpack.c.b16 %v2976, %v2973
    %v3010 = vpack.c.b16 %v2977, %v2974
    %v3011 = vpack.c.b16 %v2981, %v2978
    %v3012 = vpack.c.b16 %v2982, %v2979
    %v3013 = vpack.c.b16 %v2983, %v2980
    %v3014 = vpack.c.b16 %v2987, %v2984
    %v3015 = vpack.c.b16 %v2988, %v2985
    %v3016 = vpack.c.b16 %v2989, %v2986
    %v3017 = vpack.c.b16 %v2993, %v2990
    %v3018 = vpack.c.b16 %v2994, %v2991
    %v3019 = vpack.c.b16 %v2995, %v2992
    %3044 = vmatprep.subr.bf16.mxu0 %v2997
    %3045 = vmatpush1.bf16.msra.mxu0 %v2996
    %3046 = vmatprep.subr.bf16.mxu0 %v3000
    %3047 = vmatpush1.bf16.msra.mxu0 %v2999
    %3048 = vmatprep.subr.bf16.mxu0 %v3003
    %3049 = vmatpush1.bf16.msra.mxu0 %v3002
    %3050 = vmatprep.subr.bf16.mxu0 %v3006
    %3051 = vmatpush1.bf16.msra.mxu0 %v3005
    %3052 = vmatprep.subr.bf16.mxu0 %v3009
    %3053 = vmatpush1.bf16.msra.mxu0 %v3008
    %3054 = vmatprep.subr.bf16.mxu0 %v3012
    %3055 = vmatpush1.bf16.msra.mxu0 %v3011
    %3056 = vmatprep.subr.bf16.mxu0 %v3015
    %3057 = vmatpush1.bf16.msra.mxu0 %v3014
    %3058 = vmatprep.subr.bf16.mxu0 %v3018
    %3059 = vmatpush1.bf16.msra.mxu0 %v3017
    %3060 = vmatprep.subr.bf16.mxu0 0
    %3061 = vmatpush1.bf16.msra.mxu0 0
    %3062 = vmatprep.subr.bf16.mxu0 0
    %3063 = vmatpush1.bf16.msra.mxu0 0
    %3064 = vmatprep.subr.bf16.mxu0 0
    %3065 = vmatpush1.bf16.msra.mxu0 0
    %3066 = vmatprep.subr.bf16.mxu0 0
    %3067 = vmatpush1.bf16.msra.mxu0 0
    %3068 = vmatprep.subr.bf16.mxu0 0
    %3069 = vmatpush1.bf16.msra.mxu0 0
    %3070 = vmatprep.subr.bf16.mxu0 0
    %3071 = vmatpush1.bf16.msra.mxu0 0
    %3072 = vmatprep.subr.bf16.mxu0 0
    %3073 = vmatpush1.bf16.msra.mxu0 0
    %3074 = vmatprep.subr.bf16.mxu0 0
    %3075 = vmatpush1.bf16.msra.mxu0 0
    %3076 = vmatprep.mubr.bf16.mxu0 0
    %3077 = vmatmul.mubr.bf16.gmra.mrb[0].mxu0 %v2866
    %v3078 = vpop.f32.mrb[0].mxu0
    %v3079 = vadd.f32 %v2904, %v3078
    %v3080 = vpop.f32.mrb[0].mxu0
    %v3081 = vadd.f32 %v2908, %v3080
    %v3082 = vpop.f32.mrb[0].mxu0
    %v3083 = vpop.f32.mrb[0].mxu0
    %3084 = vdwg.mxu0
    %3085 = vmatprep.subr.bf16.mxu0 0
    %3086 = vmatpush1.bf16.msra.mxu0 %v2998
    %3087 = vmatprep.subr.bf16.mxu0 0
    %3088 = vmatpush1.bf16.msra.mxu0 %v3001
    %3089 = vmatprep.subr.bf16.mxu0 0
    %3090 = vmatpush1.bf16.msra.mxu0 %v3004
    %3091 = vmatprep.subr.bf16.mxu0 0
    %3092 = vmatpush1.bf16.msra.mxu0 %v3007
    %3093 = vmatprep.subr.bf16.mxu0 0
    %3094 = vmatpush1.bf16.msra.mxu0 %v3010
    %3095 = vmatprep.subr.bf16.mxu0 0
    %3096 = vmatpush1.bf16.msra.mxu0 %v3013
    %3097 = vmatprep.subr.bf16.mxu0 0
    %3098 = vmatpush1.bf16.msra.mxu0 %v3016
    %3099 = vmatprep.subr.bf16.mxu0 0
    %3100 = vmatpush1.bf16.msra.mxu0 %v3019
    %3101 = vmatprep.subr.bf16.mxu0 0
    %3102 = vmatpush1.bf16.msra.mxu0 0
    %3103 = vmatprep.subr.bf16.mxu0 0
    %3104 = vmatpush1.bf16.msra.mxu0 0
    %3105 = vmatprep.subr.bf16.mxu0 0
    %3106 = vmatpush1.bf16.msra.mxu0 0
    %3107 = vmatprep.subr.bf16.mxu0 0
    %3108 = vmatpush1.bf16.msra.mxu0 0
    %3109 = vmatprep.subr.bf16.mxu0 0
    %3110 = vmatpush1.bf16.msra.mxu0 0
    %3111 = vmatprep.subr.bf16.mxu0 0
    %3112 = vmatpush1.bf16.msra.mxu0 0
    %3113 = vmatprep.subr.bf16.mxu0 0
    %3114 = vmatpush1.bf16.msra.mxu0 0
    %3115 = vmatprep.subr.bf16.mxu0 0
    %3116 = vmatpush1.bf16.msra.mxu0 0
    %3117 = vmatprep.mubr.bf16.mxu0 0
    %3118 = vmatmul.mubr.bf16.gmra.mrb[0].mxu0 %v2866
    %v3119 = vpop.f32.mrb[0].mxu0
    %v3120 = vadd.f32 %v2912, %v3119
    %v3121 = vpop.f32.mrb[0].mxu0
    %v3122 = vpop.f32.mrb[0].mxu0
    %v3123 = vpop.f32.mrb[0].mxu0
    %3124 = vdwg.mxu0
    %3125 = vst [vmem:[#allocation7] sm:$0xff] %v3079
    %3126 = vst [vmem:[#allocation7 + $0x8] sm:$0xff] %v3081
    %3127 = vst [vmem:[#allocation7 + $0x10] sm:$0xff] %v3120
    %v3128 = vpack.c.bf16 0.0, 0.0
    %v3129 = vld [vmem:[%s11] sm:$0xff]
    %v3130 = vld [vmem:[%s11 + $0x8] sm:$0xff]
    %v3131 = vld [vmem:[%s11 + $0x10] sm:$0xff]
    %v3132 = vld [vmem:[%s11 + $0x18] sm:$0xff]
    %v3133 = vld [vmem:[%s11 + $0x20] sm:$0xff]
    %v3134 = vld [vmem:[%s11 + $0x28] sm:$0xff]
    %v3135 = vld [vmem:[%s11 + $0x30] sm:$0xff]
    %v3136 = vld [vmem:[%s11 + $0x38] sm:$0xff]
    %v3137 = vld [vmem:[%s11 + $0x40] sm:$0xff]
    %v3138 = vld [vmem:[%s11 + $0x48] sm:$0xff]
    %v3139 = vld [vmem:[%s11 + $0x50] sm:$0xff]
    %v3140 = vld [vmem:[%s11 + $0x58] sm:$0xff]
    %v3141 = vld [vmem:[%s11 + $0x60] sm:$0xff]
    %v3142 = vld [vmem:[%s11 + $0x68] sm:$0xff]
    %v3143 = vld [vmem:[%s11 + $0x70] sm:$0xff]
    %v3144 = vld [vmem:[%s11 + $0x78] sm:$0xff]
    %v3145 = vld [vmem:[%s11 + $0x80] sm:$0xff]
    %v3146 = vld [vmem:[%s11 + $0x88] sm:$0xff]
    %v3147 = vld [vmem:[%s11 + $0x90] sm:$0xff]
    %v3148 = vld [vmem:[%s11 + $0x98] sm:$0xff]
    %v3149 = vld [vmem:[%s11 + $0xa0] sm:$0xff]
    %v3150 = vld [vmem:[%s11 + $0xa8] sm:$0xff]
    %v3151 = vld [vmem:[%s11 + $0xb0] sm:$0xff]
    %v3152 = vld [vmem:[%s11 + $0xb8] sm:$0xff]
    %v3153 = vld [vmem:[%s11 + $0xc0] sm:$0xff]
    %v3154 = vld [vmem:[%s11 + $0xc8] sm:$0xff]
    %v3155 = vld [vmem:[%s11 + $0xd0] sm:$0xff]
    %v3156 = vld [vmem:[%s11 + $0xd8] sm:$0xff]
    %v3157 = vld [vmem:[%s11 + $0xe0] sm:$0xff]
    %v3158 = vld [vmem:[%s11 + $0xe8] sm:$0xff]
    %v3159 = vld [vmem:[%s11 + $0xf0] sm:$0xff]
    %v3160 = vld [vmem:[%s11 + $0xf8] sm:$0xff]
    %v3161 = vld [vmem:[%s11 + $0x100] sm:$0xff]
    %v3162 = vld [vmem:[%s11 + $0x108] sm:$0xff]
    %v3163 = vld [vmem:[%s11 + $0x110] sm:$0xff]
    %v3164 = vld [vmem:[%s11 + $0x118] sm:$0xff]
    %v3165 = vld [vmem:[%s11 + $0x120] sm:$0xff]
    %v3166 = vld [vmem:[%s11 + $0x128] sm:$0xff]
    %v3167 = vld [vmem:[%s11 + $0x130] sm:$0xff]
    %v3168 = vld [vmem:[%s11 + $0x138] sm:$0xff]
    %v3169 = vld [vmem:[%s11 + $0x140] sm:$0xff]
    %v3170 = vld [vmem:[%s11 + $0x148] sm:$0xff]
    %v3171 = vld [vmem:[%s11 + $0x150] sm:$0xff]
    %v3172 = vld [vmem:[%s11 + $0x158] sm:$0xff]
    %v3173 = vld [vmem:[%s11 + $0x160] sm:$0xff]
    %v3174 = vld [vmem:[%s11 + $0x168] sm:$0xff]
    %v3175 = vld [vmem:[%s11 + $0x170] sm:$0xff]
    %v3176 = vld [vmem:[%s11 + $0x178] sm:$0xff]
    %v3177 = vld [vmem:[%s11 + $0x180] sm:$0xff]
    %v3178 = vld [vmem:[%s11 + $0x188] sm:$0xff]
    %v3179 = vld [vmem:[%s11 + $0x190] sm:$0xff]
    %v3180 = vld [vmem:[%s11 + $0x198] sm:$0xff]
    %v3181 = vld [vmem:[%s11 + $0x1a0] sm:$0xff]
    %v3182 = vld [vmem:[%s11 + $0x1a8] sm:$0xff]
    %v3183 = vld [vmem:[%s11 + $0x1b0] sm:$0xff]
    %v3184 = vld [vmem:[%s11 + $0x1b8] sm:$0xff]
    %v3185 = vld [vmem:[%s11 + $0x1c0] sm:$0xff]
    %v3186 = vld [vmem:[%s11 + $0x1c8] sm:$0xff]
    %v3187 = vld [vmem:[%s11 + $0x1d0] sm:$0xff]
    %v3188 = vld [vmem:[%s11 + $0x1d8] sm:$0xff]
    %v3189 = vld [vmem:[%s11 + $0x1e0] sm:$0xff]
    %v3190 = vld [vmem:[%s11 + $0x1e8] sm:$0xff]
    %v3191 = vld [vmem:[%s11 + $0x1f0] sm:$0xff]
    %v3192 = vld [vmem:[%s11 + $0x1f8] sm:$0xff]
    %v3193 = vld [vmem:[%s11 + $0x200] sm:$0xff]
    %v3194 = vld [vmem:[%s11 + $0x208] sm:$0xff]
    %v3195 = vld [vmem:[%s11 + $0x210] sm:$0xff]
    %v3196 = vld [vmem:[%s11 + $0x218] sm:$0xff]
    %v3197 = vld [vmem:[%s11 + $0x220] sm:$0xff]
    %v3198 = vld [vmem:[%s11 + $0x228] sm:$0xff]
    %v3199 = vld [vmem:[%s11 + $0x230] sm:$0xff]
    %v3200 = vld [vmem:[%s11 + $0x238] sm:$0xff]
    %v3201 = vld [vmem:[%s11 + $0x240] sm:$0xff]
    %v3202 = vld [vmem:[%s11 + $0x248] sm:$0xff]
    %v3203 = vld [vmem:[%s11 + $0x250] sm:$0xff]
    %v3204 = vld [vmem:[%s11 + $0x258] sm:$0xff]
    %v3205 = vld [vmem:[%s11 + $0x260] sm:$0xff]
    %v3206 = vld [vmem:[%s11 + $0x268] sm:$0xff]
    %v3207 = vld [vmem:[%s11 + $0x270] sm:$0xff]
    %v3208 = vld [vmem:[%s11 + $0x278] sm:$0xff]
    %v3209 = vld [vmem:[%s11 + $0x280] sm:$0xff]
    %v3210 = vld [vmem:[%s11 + $0x288] sm:$0xff]
    %v3211 = vld [vmem:[%s11 + $0x290] sm:$0xff]
    %v3212 = vld [vmem:[%s11 + $0x298] sm:$0xff]
    %v3213 = vld [vmem:[%s11 + $0x2a0] sm:$0xff]
    %v3214 = vld [vmem:[%s11 + $0x2a8] sm:$0xff]
    %v3215 = vld [vmem:[%s11 + $0x2b0] sm:$0xff]
    %v3216 = vld [vmem:[%s11 + $0x2b8] sm:$0xff]
    %v3217 = vld [vmem:[%s11 + $0x2c0] sm:$0xff]
    %v3218 = vld [vmem:[%s11 + $0x2c8] sm:$0xff]
    %v3219 = vld [vmem:[%s11 + $0x2d0] sm:$0xff]
    %v3220 = vld [vmem:[%s11 + $0x2d8] sm:$0xff]
    %v3221 = vld [vmem:[%s11 + $0x2e0] sm:$0xff]
    %v3222 = vld [vmem:[%s11 + $0x2e8] sm:$0xff]
    %v3223 = vld [vmem:[%s11 + $0x2f0] sm:$0xff]
    %v3224 = vld [vmem:[%s11 + $0x2f8] sm:$0xff]
    %v3225 = vld [vmem:[%s12] sm:$0x3f]
    %v3322 = vunpack.c.l.b16 %v3129
    %v3323 = vunpack.c.h.b16 %v3129
    %v3324 = vunpack.c.l.b16 %v3130
    %v3325 = vunpack.c.h.b16 %v3130
    %v3326 = vunpack.c.l.b16 %v3131
    %v3327 = vunpack.c.h.b16 %v3131
    %v3328 = vunpack.c.l.b16 %v3132
    %v3329 = vunpack.c.h.b16 %v3132
    %v3330 = vunpack.c.l.b16 %v3133
    %v3331 = vunpack.c.h.b16 %v3133
    %v3332 = vunpack.c.l.b16 %v3134
    %v3333 = vunpack.c.h.b16 %v3134
    %v3334 = vunpack.c.l.b16 %v3135
    %v3335 = vunpack.c.h.b16 %v3135
    %v3336 = vunpack.c.l.b16 %v3136
    %v3337 = vunpack.c.h.b16 %v3136
    %v3338 = vunpack.c.l.b16 %v3137
    %v3339 = vunpack.c.h.b16 %v3137
    %v3340 = vunpack.c.l.b16 %v3138
    %v3341 = vunpack.c.h.b16 %v3138
    %v3342 = vunpack.c.l.b16 %v3139
    %v3343 = vunpack.c.h.b16 %v3139
    %v3344 = vunpack.c.l.b16 %v3140
    %v3345 = vunpack.c.h.b16 %v3140
    %v3346 = vunpack.c.l.b16 %v3141
    %v3347 = vunpack.c.h.b16 %v3141
    %v3348 = vunpack.c.l.b16 %v3142
    %v3349 = vunpack.c.h.b16 %v3142
    %v3350 = vunpack.c.l.b16 %v3143
    %v3351 = vunpack.c.h.b16 %v3143
    %v3352 = vunpack.c.l.b16 %v3144
    %v3353 = vunpack.c.h.b16 %v3144
    %v3354 = vunpack.c.l.b16 %v3145
    %v3355 = vunpack.c.h.b16 %v3145
    %v3356 = vunpack.c.l.b16 %v3146
    %v3357 = vunpack.c.h.b16 %v3146
    %v3358 = vunpack.c.l.b16 %v3147
    %v3359 = vunpack.c.h.b16 %v3147
    %v3360 = vunpack.c.l.b16 %v3148
    %v3361 = vunpack.c.h.b16 %v3148
    %v3362 = vunpack.c.l.b16 %v3149
    %v3363 = vunpack.c.h.b16 %v3149
    %v3364 = vunpack.c.l.b16 %v3150
    %v3365 = vunpack.c.h.b16 %v3150
    %v3366 = vunpack.c.l.b16 %v3151
    %v3367 = vunpack.c.h.b16 %v3151
    %v3368 = vunpack.c.l.b16 %v3152
    %v3369 = vunpack.c.h.b16 %v3152
    %v3370 = vunpack.c.l.b16 %v3153
    %v3371 = vunpack.c.h.b16 %v3153
    %v3372 = vunpack.c.l.b16 %v3154
    %v3373 = vunpack.c.h.b16 %v3154
    %v3374 = vunpack.c.l.b16 %v3155
    %v3375 = vunpack.c.h.b16 %v3155
    %v3376 = vunpack.c.l.b16 %v3156
    %v3377 = vunpack.c.h.b16 %v3156
    %v3378 = vunpack.c.l.b16 %v3157
    %v3379 = vunpack.c.h.b16 %v3157
    %v3380 = vunpack.c.l.b16 %v3158
    %v3381 = vunpack.c.h.b16 %v3158
    %v3382 = vunpack.c.l.b16 %v3159
    %v3383 = vunpack.c.h.b16 %v3159
    %v3384 = vunpack.c.l.b16 %v3160
    %v3385 = vunpack.c.h.b16 %v3160
    %v3386 = vunpack.c.l.b16 %v3161
    %v3387 = vunpack.c.h.b16 %v3161
    %v3388 = vunpack.c.l.b16 %v3162
    %v3389 = vunpack.c.h.b16 %v3162
    %v3390 = vunpack.c.l.b16 %v3163
    %v3391 = vunpack.c.h.b16 %v3163
    %v3392 = vunpack.c.l.b16 %v3164
    %v3393 = vunpack.c.h.b16 %v3164
    %v3394 = vunpack.c.l.b16 %v3165
    %v3395 = vunpack.c.h.b16 %v3165
    %v3396 = vunpack.c.l.b16 %v3166
    %v3397 = vunpack.c.h.b16 %v3166
    %v3398 = vunpack.c.l.b16 %v3167
    %v3399 = vunpack.c.h.b16 %v3167
    %v3400 = vunpack.c.l.b16 %v3168
    %v3401 = vunpack.c.h.b16 %v3168
    %v3402 = vunpack.c.l.b16 %v3169
    %v3403 = vunpack.c.h.b16 %v3169
    %v3404 = vunpack.c.l.b16 %v3170
    %v3405 = vunpack.c.h.b16 %v3170
    %v3406 = vunpack.c.l.b16 %v3171
    %v3407 = vunpack.c.h.b16 %v3171
    %v3408 = vunpack.c.l.b16 %v3172
    %v3409 = vunpack.c.h.b16 %v3172
    %v3410 = vunpack.c.l.b16 %v3173
    %v3411 = vunpack.c.h.b16 %v3173
    %v3412 = vunpack.c.l.b16 %v3174
    %v3413 = vunpack.c.h.b16 %v3174
    %v3414 = vunpack.c.l.b16 %v3175
    %v3415 = vunpack.c.h.b16 %v3175
    %v3416 = vunpack.c.l.b16 %v3176
    %v3417 = vunpack.c.h.b16 %v3176
    %v3418 = vunpack.c.l.b16 %v3177
    %v3419 = vunpack.c.h.b16 %v3177
    %v3420 = vunpack.c.l.b16 %v3178
    %v3421 = vunpack.c.h.b16 %v3178
    %v3422 = vunpack.c.l.b16 %v3179
    %v3423 = vunpack.c.h.b16 %v3179
    %v3424 = vunpack.c.l.b16 %v3180
    %v3425 = vunpack.c.h.b16 %v3180
    %v3426 = vunpack.c.l.b16 %v3181
    %v3427 = vunpack.c.h.b16 %v3181
    %v3428 = vunpack.c.l.b16 %v3182
    %v3429 = vunpack.c.h.b16 %v3182
    %v3430 = vunpack.c.l.b16 %v3183
    %v3431 = vunpack.c.h.b16 %v3183
    %v3432 = vunpack.c.l.b16 %v3184
    %v3433 = vunpack.c.h.b16 %v3184
    %v3434 = vunpack.c.l.b16 %v3185
    %v3435 = vunpack.c.h.b16 %v3185
    %v3436 = vunpack.c.l.b16 %v3186
    %v3437 = vunpack.c.h.b16 %v3186
    %v3438 = vunpack.c.l.b16 %v3187
    %v3439 = vunpack.c.h.b16 %v3187
    %v3440 = vunpack.c.l.b16 %v3188
    %v3441 = vunpack.c.h.b16 %v3188
    %v3442 = vunpack.c.l.b16 %v3189
    %v3443 = vunpack.c.h.b16 %v3189
    %v3444 = vunpack.c.l.b16 %v3190
    %v3445 = vunpack.c.h.b16 %v3190
    %v3446 = vunpack.c.l.b16 %v3191
    %v3447 = vunpack.c.h.b16 %v3191
    %v3448 = vunpack.c.l.b16 %v3192
    %v3449 = vunpack.c.h.b16 %v3192
    %v3450 = vunpack.c.l.b16 %v3193
    %v3451 = vunpack.c.h.b16 %v3193
    %v3452 = vunpack.c.l.b16 %v3194
    %v3453 = vunpack.c.h.b16 %v3194
    %v3454 = vunpack.c.l.b16 %v3195
    %v3455 = vunpack.c.h.b16 %v3195
    %v3456 = vunpack.c.l.b16 %v3196
    %v3457 = vunpack.c.h.b16 %v3196
    %v3458 = vunpack.c.l.b16 %v3197
    %v3459 = vunpack.c.h.b16 %v3197
    %v3460 = vunpack.c.l.b16 %v3198
    %v3461 = vunpack.c.h.b16 %v3198
    %v3462 = vunpack.c.l.b16 %v3199
    %v3463 = vunpack.c.h.b16 %v3199
    %v3464 = vunpack.c.l.b16 %v3200
    %v3465 = vunpack.c.h.b16 %v3200
    %v3466 = vunpack.c.l.b16 %v3201
    %v3467 = vunpack.c.h.b16 %v3201
    %v3468 = vunpack.c.l.b16 %v3202
    %v3469 = vunpack.c.h.b16 %v3202
    %v3470 = vunpack.c.l.b16 %v3203
    %v3471 = vunpack.c.h.b16 %v3203
    %v3472 = vunpack.c.l.b16 %v3204
    %v3473 = vunpack.c.h.b16 %v3204
    %v3474 = vunpack.c.l.b16 %v3205
    %v3475 = vunpack.c.h.b16 %v3205
    %v3476 = vunpack.c.l.b16 %v3206
    %v3477 = vunpack.c.h.b16 %v3206
    %v3478 = vunpack.c.l.b16 %v3207
    %v3479 = vunpack.c.h.b16 %v3207
    %v3480 = vunpack.c.l.b16 %v3208
    %v3481 = vunpack.c.h.b16 %v3208
    %v3482 = vunpack.c.l.b16 %v3209
    %v3483 = vunpack.c.h.b16 %v3209
    %v3484 = vunpack.c.l.b16 %v3210
    %v3485 = vunpack.c.h.b16 %v3210
    %v3486 = vunpack.c.l.b16 %v3211
    %v3487 = vunpack.c.h.b16 %v3211
    %v3488 = vunpack.c.l.b16 %v3212
    %v3489 = vunpack.c.h.b16 %v3212
    %v3490 = vunpack.c.l.b16 %v3213
    %v3491 = vunpack.c.h.b16 %v3213
    %v3492 = vunpack.c.l.b16 %v3214
    %v3493 = vunpack.c.h.b16 %v3214
    %v3494 = vunpack.c.l.b16 %v3215
    %v3495 = vunpack.c.h.b16 %v3215
    %v3496 = vunpack.c.l.b16 %v3216
    %v3497 = vunpack.c.h.b16 %v3216
    %v3498 = vunpack.c.l.b16 %v3217
    %v3499 = vunpack.c.h.b16 %v3217
    %v3500 = vunpack.c.l.b16 %v3218
    %v3501 = vunpack.c.h.b16 %v3218
    %v3502 = vunpack.c.l.b16 %v3219
    %v3503 = vunpack.c.h.b16 %v3219
    %v3504 = vunpack.c.l.b16 %v3220
    %v3505 = vunpack.c.h.b16 %v3220
    %v3506 = vunpack.c.l.b16 %v3221
    %v3507 = vunpack.c.h.b16 %v3221
    %v3508 = vunpack.c.l.b16 %v3222
    %v3509 = vunpack.c.h.b16 %v3222
    %v3510 = vunpack.c.l.b16 %v3223
    %v3511 = vunpack.c.h.b16 %v3223
    %v3512 = vunpack.c.l.b16 %v3224
    %v3513 = vunpack.c.h.b16 %v3224
    %v3514 = vpack.c.b16 %v3328, %v3322
    %v3515 = vpack.c.b16 %v3329, %v3323
    %v3516 = vpack.c.b16 %v3330, %v3324
    %v3517 = vpack.c.b16 %v3331, %v3325
    %v3518 = vpack.c.b16 %v3332, %v3326
    %v3519 = vpack.c.b16 %v3333, %v3327
    %v3520 = vpack.c.b16 %v3340, %v3334
    %v3521 = vpack.c.b16 %v3341, %v3335
    %v3522 = vpack.c.b16 %v3342, %v3336
    %v3523 = vpack.c.b16 %v3343, %v3337
    %v3524 = vpack.c.b16 %v3344, %v3338
    %v3525 = vpack.c.b16 %v3345, %v3339
    %v3526 = vpack.c.b16 %v3352, %v3346
    %v3527 = vpack.c.b16 %v3353, %v3347
    %v3528 = vpack.c.b16 %v3354, %v3348
    %v3529 = vpack.c.b16 %v3355, %v3349
    %v3530 = vpack.c.b16 %v3356, %v3350
    %v3531 = vpack.c.b16 %v3357, %v3351
    %v3532 = vpack.c.b16 %v3364, %v3358
    %v3533 = vpack.c.b16 %v3365, %v3359
    %v3534 = vpack.c.b16 %v3366, %v3360
    %v3535 = vpack.c.b16 %v3367, %v3361
    %v3536 = vpack.c.b16 %v3368, %v3362
    %v3537 = vpack.c.b16 %v3369, %v3363
    %v3538 = vpack.c.b16 %v3376, %v3370
    %v3539 = vpack.c.b16 %v3377, %v3371
    %v3540 = vpack.c.b16 %v3378, %v3372
    %v3541 = vpack.c.b16 %v3379, %v3373
    %v3542 = vpack.c.b16 %v3380, %v3374
    %v3543 = vpack.c.b16 %v3381, %v3375
    %v3544 = vpack.c.b16 %v3388, %v3382
    %v3545 = vpack.c.b16 %v3389, %v3383
    %v3546 = vpack.c.b16 %v3390, %v3384
    %v3547 = vpack.c.b16 %v3391, %v3385
    %v3548 = vpack.c.b16 %v3392, %v3386
    %v3549 = vpack.c.b16 %v3393, %v3387
    %v3550 = vpack.c.b16 %v3400, %v3394
    %v3551 = vpack.c.b16 %v3401, %v3395
    %v3552 = vpack.c.b16 %v3402, %v3396
    %v3553 = vpack.c.b16 %v3403, %v3397
    %v3554 = vpack.c.b16 %v3404, %v3398
    %v3555 = vpack.c.b16 %v3405, %v3399
    %v3556 = vpack.c.b16 %v3412, %v3406
    %v3557 = vpack.c.b16 %v3413, %v3407
    %v3558 = vpack.c.b16 %v3414, %v3408
    %v3559 = vpack.c.b16 %v3415, %v3409
    %v3560 = vpack.c.b16 %v3416, %v3410
    %v3561 = vpack.c.b16 %v3417, %v3411
    %v3562 = vpack.c.b16 %v3424, %v3418
    %v3563 = vpack.c.b16 %v3425, %v3419
    %v3564 = vpack.c.b16 %v3426, %v3420
    %v3565 = vpack.c.b16 %v3427, %v3421
    %v3566 = vpack.c.b16 %v3428, %v3422
    %v3567 = vpack.c.b16 %v3429, %v3423
    %v3568 = vpack.c.b16 %v3436, %v3430
    %v3569 = vpack.c.b16 %v3437, %v3431
    %v3570 = vpack.c.b16 %v3438, %v3432
    %v3571 = vpack.c.b16 %v3439, %v3433
    %v3572 = vpack.c.b16 %v3440, %v3434
    %v3573 = vpack.c.b16 %v3441, %v3435
    %v3574 = vpack.c.b16 %v3448, %v3442
    %v3575 = vpack.c.b16 %v3449, %v3443
    %v3576 = vpack.c.b16 %v3450, %v3444
    %v3577 = vpack.c.b16 %v3451, %v3445
    %v3578 = vpack.c.b16 %v3452, %v3446
    %v3579 = vpack.c.b16 %v3453, %v3447
    %v3580 = vpack.c.b16 %v3460, %v3454
    %v3581 = vpack.c.b16 %v3461, %v3455
    %v3582 = vpack.c.b16 %v3462, %v3456
    %v3583 = vpack.c.b16 %v3463, %v3457
    %v3584 = vpack.c.b16 %v3464, %v3458
    %v3585 = vpack.c.b16 %v3465, %v3459
    %v3586 = vpack.c.b16 %v3472, %v3466
    %v3587 = vpack.c.b16 %v3473, %v3467
    %v3588 = vpack.c.b16 %v3474, %v3468
    %v3589 = vpack.c.b16 %v3475, %v3469
    %v3590 = vpack.c.b16 %v3476, %v3470
    %v3591 = vpack.c.b16 %v3477, %v3471
    %v3592 = vpack.c.b16 %v3484, %v3478
    %v3593 = vpack.c.b16 %v3485, %v3479
    %v3594 = vpack.c.b16 %v3486, %v3480
    %v3595 = vpack.c.b16 %v3487, %v3481
    %v3596 = vpack.c.b16 %v3488, %v3482
    %v3597 = vpack.c.b16 %v3489, %v3483
    %v3598 = vpack.c.b16 %v3496, %v3490
    %v3599 = vpack.c.b16 %v3497, %v3491
    %v3600 = vpack.c.b16 %v3498, %v3492
    %v3601 = vpack.c.b16 %v3499, %v3493
    %v3602 = vpack.c.b16 %v3500, %v3494
    %v3603 = vpack.c.b16 %v3501, %v3495
    %v3604 = vpack.c.b16 %v3508, %v3502
    %v3605 = vpack.c.b16 %v3509, %v3503
    %v3606 = vpack.c.b16 %v3510, %v3504
    %v3607 = vpack.c.b16 %v3511, %v3505
    %v3608 = vpack.c.b16 %v3512, %v3506
    %v3609 = vpack.c.b16 %v3513, %v3507
    %v3707 = vlaneseq
    %v3708 = vshrl.u32 %v3707, 7
    %v3709 = vsub.s32 0, %v3708
    %v3710 = vrot.slane %v3225, %v3709
    %v3711 = vlaneseq
    %v3712 = vshrl.u32 %v3711, 7
    %v3713 = vsub.s32 1, %v3712
    %v3714 = vrot.slane %v3225, %v3713
    %v3715 = vlaneseq
    %v3716 = vshrl.u32 %v3715, 7
    %v3717 = vsub.s32 2, %v3716
    %v3718 = vrot.slane %v3225, %v3717
    %v3719 = vlaneseq
    %v3720 = vshrl.u32 %v3719, 7
    %v3721 = vsub.s32 3, %v3720
    %v3722 = vrot.slane %v3225, %v3721
    %v3723 = vlaneseq
    %v3724 = vshrl.u32 %v3723, 7
    %v3725 = vsub.s32 4, %v3724
    %v3726 = vrot.slane %v3225, %v3725
    %v3727 = vlaneseq
    %v3728 = vshrl.u32 %v3727, 7
    %v3729 = vsub.s32 5, %v3728
    %v3730 = vrot.slane %v3225, %v3729
    %3737 = vmatprep.subr.bf16.mxu0 %v3515
    %3738 = vmatpush1.bf16.msra.mxu0 %v3514
    %3739 = vmatprep.subr.bf16.mxu0 %v3521
    %3740 = vmatpush1.bf16.msra.mxu0 %v3520
    %3741 = vmatprep.subr.bf16.mxu0 %v3527
    %3742 = vmatpush1.bf16.msra.mxu0 %v3526
    %3743 = vmatprep.subr.bf16.mxu0 %v3533
    %3744 = vmatpush1.bf16.msra.mxu0 %v3532
    %3745 = vmatprep.subr.bf16.mxu0 %v3539
    %3746 = vmatpush1.bf16.msra.mxu0 %v3538
    %3747 = vmatprep.subr.bf16.mxu0 %v3545
    %3748 = vmatpush1.bf16.msra.mxu0 %v3544
    %3749 = vmatprep.subr.bf16.mxu0 %v3551
    %3750 = vmatpush1.bf16.msra.mxu0 %v3550
    %3751 = vmatprep.subr.bf16.mxu0 %v3557
    %3752 = vmatpush1.bf16.msra.mxu0 %v3556
    %3753 = vmatprep.subr.bf16.mxu0 %v3563
    %3754 = vmatpush1.bf16.msra.mxu0 %v3562
    %3755 = vmatprep.subr.bf16.mxu0 %v3569
    %3756 = vmatpush1.bf16.msra.mxu0 %v3568
    %3757 = vmatprep.subr.bf16.mxu0 %v3575
    %3758 = vmatpush1.bf16.msra.mxu0 %v3574
    %3759 = vmatprep.subr.bf16.mxu0 %v3581
    %3760 = vmatpush1.bf16.msra.mxu0 %v3580
    %3761 = vmatprep.subr.bf16.mxu0 %v3587
    %3762 = vmatpush1.bf16.msra.mxu0 %v3586
    %3763 = vmatprep.subr.bf16.mxu0 %v3593
    %3764 = vmatpush1.bf16.msra.mxu0 %v3592
    %3765 = vmatprep.subr.bf16.mxu0 %v3599
    %3766 = vmatpush1.bf16.msra.mxu0 %v3598
    %3767 = vmatprep.subr.bf16.mxu0 %v3605
    %3768 = vmatpush1.bf16.msra.mxu0 %v3604
    %3769 = vmatprep.mubr.bf16.mxu0 %v3128
    %3770 = vmatmul.mubr.bf16.gmra.mrb[0].mxu0 %v3128
    %v3771 = vpop.f32.mrb[0].mxu0
    %v3772 = vadd.f32 %v3710, %v3771
    %v3773 = vpop.f32.mrb[0].mxu0
    %v3774 = vadd.f32 %v3714, %v3773
    %v3775 = vpop.f32.mrb[0].mxu0
    %v3776 = vpop.f32.mrb[0].mxu0
    %3777 = vdwg.mxu0
    %3778 = vmatprep.subr.bf16.mxu0 %v3517
    %3779 = vmatpush1.bf16.msra.mxu0 %v3516
    %3780 = vmatprep.subr.bf16.mxu0 %v3523
    %3781 = vmatpush1.bf16.msra.mxu0 %v3522
    %3782 = vmatprep.subr.bf16.mxu0 %v3529
    %3783 = vmatpush1.bf16.msra.mxu0 %v3528
    %3784 = vmatprep.subr.bf16.mxu0 %v3535
    %3785 = vmatpush1.bf16.msra.mxu0 %v3534
    %3786 = vmatprep.subr.bf16.mxu0 %v3541
    %3787 = vmatpush1.bf16.msra.mxu0 %v3540
    %3788 = vmatprep.subr.bf16.mxu0 %v3547
    %3789 = vmatpush1.bf16.msra.mxu0 %v3546
    %3790 = vmatprep.subr.bf16.mxu0 %v3553
    %3791 = vmatpush1.bf16.msra.mxu0 %v3552
    %3792 = vmatprep.subr.bf16.mxu0 %v3559
    %3793 = vmatpush1.bf16.msra.mxu0 %v3558
    %3794 = vmatprep.subr.bf16.mxu0 %v3565
    %3795 = vmatpush1.bf16.msra.mxu0 %v3564
    %3796 = vmatprep.subr.bf16.mxu0 %v3571
    %3797 = vmatpush1.bf16.msra.mxu0 %v3570
    %3798 = vmatprep.subr.bf16.mxu0 %v3577
    %3799 = vmatpush1.bf16.msra.mxu0 %v3576
    %3800 = vmatprep.subr.bf16.mxu0 %v3583
    %3801 = vmatpush1.bf16.msra.mxu0 %v3582
    %3802 = vmatprep.subr.bf16.mxu0 %v3589
    %3803 = vmatpush1.bf16.msra.mxu0 %v3588
    %3804 = vmatprep.subr.bf16.mxu0 %v3595
    %3805 = vmatpush1.bf16.msra.mxu0 %v3594
    %3806 = vmatprep.subr.bf16.mxu0 %v3601
    %3807 = vmatpush1.bf16.msra.mxu0 %v3600
    %3808 = vmatprep.subr.bf16.mxu0 %v3607
    %3809 = vmatpush1.bf16.msra.mxu0 %v3606
    %3810 = vmatprep.mubr.bf16.mxu0 %v3128
    %3811 = vmatmul.mubr.bf16.gmra.mrb[0].mxu0 %v3128
    %v3812 = vpop.f32.mrb[0].mxu0
    %v3813 = vadd.f32 %v3718, %v3812
    %v3814 = vpop.f32.mrb[0].mxu0
    %v3815 = vadd.f32 %v3722, %v3814
    %v3816 = vpop.f32.mrb[0].mxu0
    %v3817 = vpop.f32.mrb[0].mxu0
    %3818 = vdwg.mxu0
    %3819 = vmatprep.subr.bf16.mxu0 %v3519
    %3820 = vmatpush1.bf16.msra.mxu0 %v3518
    %3821 = vmatprep.subr.bf16.mxu0 %v3525
    %3822 = vmatpush1.bf16.msra.mxu0 %v3524
    %3823 = vmatprep.subr.bf16.mxu0 %v3531
    %3824 = vmatpush1.bf16.msra.mxu0 %v3530
    %3825 = vmatprep.subr.bf16.mxu0 %v3537
    %3826 = vmatpush1.bf16.msra.mxu0 %v3536
    %3827 = vmatprep.subr.bf16.mxu0 %v3543
    %3828 = vmatpush1.bf16.msra.mxu0 %v3542
    %3829 = vmatprep.subr.bf16.mxu0 %v3549
    %3830 = vmatpush1.bf16.msra.mxu0 %v3548
    %3831 = vmatprep.subr.bf16.mxu0 %v3555
    %3832 = vmatpush1.bf16.msra.mxu0 %v3554
    %3833 = vmatprep.subr.bf16.mxu0 %v3561
    %3834 = vmatpush1.bf16.msra.mxu0 %v3560
    %3835 = vmatprep.subr.bf16.mxu0 %v3567
    %3836 = vmatpush1.bf16.msra.mxu0 %v3566
    %3837 = vmatprep.subr.bf16.mxu0 %v3573
    %3838 = vmatpush1.bf16.msra.mxu0 %v3572
    %3839 = vmatprep.subr.bf16.mxu0 %v3579
    %3840 = vmatpush1.bf16.msra.mxu0 %v3578
    %3841 = vmatprep.subr.bf16.mxu0 %v3585
    %3842 = vmatpush1.bf16.msra.mxu0 %v3584
    %3843 = vmatprep.subr.bf16.mxu0 %v3591
    %3844 = vmatpush1.bf16.msra.mxu0 %v3590
    %3845 = vmatprep.subr.bf16.mxu0 %v3597
    %3846 = vmatpush1.bf16.msra.mxu0 %v3596
    %3847 = vmatprep.subr.bf16.mxu0 %v3603
    %3848 = vmatpush1.bf16.msra.mxu0 %v3602
    %3849 = vmatprep.subr.bf16.mxu0 %v3609
    %3850 = vmatpush1.bf16.msra.mxu0 %v3608
    %3851 = vmatprep.mubr.bf16.mxu0 %v3128
    %3852 = vmatmul.mubr.bf16.gmra.mrb[0].mxu0 %v3128
    %v3853 = vpop.f32.mrb[0].mxu0
    %v3854 = vadd.f32 %v3726, %v3853
    %v3855 = vpop.f32.mrb[0].mxu0
    %v3856 = vadd.f32 %v3730, %v3855
    %v3857 = vpop.f32.mrb[0].mxu0
    %v3858 = vpop.f32.mrb[0].mxu0
    %3859 = vdwg.mxu0
    %v3860 = vld [vmem:[#allocation7] ss:$8 sm:$0x7]
    %v3861 = vadd.f32 %v3860, %v3772
    %v3862 = vmul.f32 %v3861, 0.5
    %v3863 = vtanh.pop %v3862
    %v3864 = vmul.f32 %v3863, 0.5
    %v3865 = vadd.f32 %v3864, 0.5
    %v3867 = vrot.slane %v3860, 1
    %v3869 = vadd.f32 %v3867, %v3774
    %v3870 = vmul.f32 %v3869, 0.5
    %v3871 = vtanh.pop %v3870
    %v3872 = vmul.f32 %v3871, 0.5
    %v3873 = vadd.f32 %v3872, 0.5
    %v3874 = vmul.f32 %v3865, %v3813
    %v3875 = vrot.slane %v3860, 2
    %v3877 = vadd.f32 %v3875, %v3874
    %v3878 = vtanh.pop %v3877
    %v3879 = vsub.f32 1.0, %v3873
    %v3880 = vmul.f32 %v3879, %v3878
    %v3881 = vmul.f32 %v3873, 0.0
    %v3882 = vadd.f32 %v3880, %v3881
    %v3883 = vpack.c.bf16 %v3882, %v3882
    %v3884 = vld [vmem:[#allocation13] sm:$0xff]
    %v3885 = vld [vmem:[#allocation13 + $0x8] sm:$0xf]
    %v3886 = vld [vmem:[#allocation13 + $0xc] sm:$0xff]
    %v3887 = vld [vmem:[#allocation13 + $0x14] sm:$0xf]
    %v3888 = vld [vmem:[#allocation13 + $0x18] sm:$0xff]
    %v3889 = vld [vmem:[#allocation13 + $0x20] sm:$0xf]
    %v3890 = vld [vmem:[#allocation13 + $0x24] sm:$0xff]
    %v3891 = vld [vmem:[#allocation13 + $0x2c] sm:$0xf]
    %v3892 = vld [vmem:[#allocation13 + $0x30] sm:$0xff]
    %v3893 = vld [vmem:[#allocation13 + $0x38] sm:$0xf]
    %v3894 = vld [vmem:[#allocation13 + $0x3c] sm:$0xff]
    %v3895 = vld [vmem:[#allocation13 + $0x44] sm:$0xf]
    %v3896 = vld [vmem:[#allocation13 + $0x48] sm:$0xff]
    %v3897 = vld [vmem:[#allocation13 + $0x50] sm:$0xf]
    %v3898 = vld [vmem:[#allocation13 + $0x54] sm:$0xff]
    %v3899 = vld [vmem:[#allocation13 + $0x5c] sm:$0xf]
    %v3900 = vld [vmem:[#allocation13 + $0x60] sm:$0xff]
    %v3901 = vld [vmem:[#allocation13 + $0x68] sm:$0xf]
    %v3902 = vld [vmem:[#allocation13 + $0x6c] sm:$0xff]
    %v3903 = vld [vmem:[#allocation13 + $0x74] sm:$0xf]
    %v3904 = vld [vmem:[#allocation13 + $0x78] sm:$0xff]
    %v3905 = vld [vmem:[#allocation13 + $0x80] sm:$0xf]
    %v3906 = vld [vmem:[#allocation13 + $0x84] sm:$0xff]
    %v3907 = vld [vmem:[#allocation13 + $0x8c] sm:$0xf]
    %v3908 = vld [vmem:[#allocation13 + $0x90] sm:$0xff]
    %v3909 = vld [vmem:[#allocation13 + $0x98] sm:$0xf]
    %v3910 = vld [vmem:[#allocation13 + $0x9c] sm:$0xff]
    %v3911 = vld [vmem:[#allocation13 + $0xa4] sm:$0xf]
    %v3912 = vld [vmem:[#allocation13 + $0xa8] sm:$0xff]
    %v3913 = vld [vmem:[#allocation13 + $0xb0] sm:$0xf]
    %v3914 = vld [vmem:[#allocation13 + $0xb4] sm:$0xff]
    %v3915 = vld [vmem:[#allocation13 + $0xbc] sm:$0xf]
    %v3916 = vld [vmem:[#allocation14] sm:$0x7]
    %v3949 = vunpack.c.l.b16 %v3884
    %v3950 = vunpack.c.h.b16 %v3884
    %v3951 = vunpack.c.l.b16 %v3885
    %v3952 = vunpack.c.l.b16 %v3886
    %v3953 = vunpack.c.h.b16 %v3886
    %v3954 = vunpack.c.l.b16 %v3887
    %v3955 = vunpack.c.l.b16 %v3888
    %v3956 = vunpack.c.h.b16 %v3888
    %v3957 = vunpack.c.l.b16 %v3889
    %v3958 = vunpack.c.l.b16 %v3890
    %v3959 = vunpack.c.h.b16 %v3890
    %v3960 = vunpack.c.l.b16 %v3891
    %v3961 = vunpack.c.l.b16 %v3892
    %v3962 = vunpack.c.h.b16 %v3892
    %v3963 = vunpack.c.l.b16 %v3893
    %v3964 = vunpack.c.l.b16 %v3894
    %v3965 = vunpack.c.h.b16 %v3894
    %v3966 = vunpack.c.l.b16 %v3895
    %v3967 = vunpack.c.l.b16 %v3896
    %v3968 = vunpack.c.h.b16 %v3896
    %v3969 = vunpack.c.l.b16 %v3897
    %v3970 = vunpack.c.l.b16 %v3898
    %v3971 = vunpack.c.h.b16 %v3898
    %v3972 = vunpack.c.l.b16 %v3899
    %v3973 = vunpack.c.l.b16 %v3900
    %v3974 = vunpack.c.h.b16 %v3900
    %v3975 = vunpack.c.l.b16 %v3901
    %v3976 = vunpack.c.l.b16 %v3902
    %v3977 = vunpack.c.h.b16 %v3902
    %v3978 = vunpack.c.l.b16 %v3903
    %v3979 = vunpack.c.l.b16 %v3904
    %v3980 = vunpack.c.h.b16 %v3904
    %v3981 = vunpack.c.l.b16 %v3905
    %v3982 = vunpack.c.l.b16 %v3906
    %v3983 = vunpack.c.h.b16 %v3906
    %v3984 = vunpack.c.l.b16 %v3907
    %v3985 = vunpack.c.l.b16 %v3908
    %v3986 = vunpack.c.h.b16 %v3908
    %v3987 = vunpack.c.l.b16 %v3909
    %v3988 = vunpack.c.l.b16 %v3910
    %v3989 = vunpack.c.h.b16 %v3910
    %v3990 = vunpack.c.l.b16 %v3911
    %v3991 = vunpack.c.l.b16 %v3912
    %v3992 = vunpack.c.h.b16 %v3912
    %v3993 = vunpack.c.l.b16 %v3913
    %v3994 = vunpack.c.l.b16 %v3914
    %v3995 = vunpack.c.h.b16 %v3914
    %v3996 = vunpack.c.l.b16 %v3915
    %v3997 = vpack.c.b16 %v3952, %v3949
    %v3998 = vpack.c.b16 %v3953, %v3950
    %v3999 = vpack.c.b16 %v3954, %v3951
    %v4000 = vpack.c.b16 %v3958, %v3955
    %v4001 = vpack.c.b16 %v3959, %v3956
    %v4002 = vpack.c.b16 %v3960, %v3957
    %v4003 = vpack.c.b16 %v3964, %v3961
    %v4004 = vpack.c.b16 %v3965, %v3962
    %v4005 = vpack.c.b16 %v3966, %v3963
    %v4006 = vpack.c.b16 %v3970, %v3967
    %v4007 = vpack.c.b16 %v3971, %v3968
    %v4008 = vpack.c.b16 %v3972, %v3969
    %v4009 = vpack.c.b16 %v3976, %v3973
    %v4010 = vpack.c.b16 %v3977, %v3974
    %v4011 = vpack.c.b16 %v3978, %v3975
    %v4012 = vpack.c.b16 %v3982, %v3979
    %v4013 = vpack.c.b16 %v3983, %v3980
    %v4014 = vpack.c.b16 %v3984, %v3981
    %v4015 = vpack.c.b16 %v3988, %v3985
    %v4016 = vpack.c.b16 %v3989, %v3986
    %v4017 = vpack.c.b16 %v3990, %v3987
    %v4018 = vpack.c.b16 %v3994, %v3991
    %v4019 = vpack.c.b16 %v3995, %v3992
    %v4020 = vpack.c.b16 %v3996, %v3993
    %v4046 = vlaneseq
    %v4047 = vshrl.u32 %v4046, 7
    %v4048 = vsub.s32 0, %v4047
    %v4049 = vrot.slane %v3916, %v4048
    %v4050 = vlaneseq
    %v4051 = vshrl.u32 %v4050, 7
    %v4052 = vsub.s32 1, %v4051
    %v4053 = vrot.slane %v3916, %v4052
    %v4054 = vlaneseq
    %v4055 = vshrl.u32 %v4054, 7
    %v4056 = vsub.s32 2, %v4055
    %v4057 = vrot.slane %v3916, %v4056
    %4061 = vmatprep.subr.bf16.mxu0 %v3998
    %4062 = vmatpush1.bf16.msra.mxu0 %v3997
    %4063 = vmatprep.subr.bf16.mxu0 %v4001
    %4064 = vmatpush1.bf16.msra.mxu0 %v4000
    %4065 = vmatprep.subr.bf16.mxu0 %v4004
    %4066 = vmatpush1.bf16.msra.mxu0 %v4003
    %4067 = vmatprep.subr.bf16.mxu0 %v4007
    %4068 = vmatpush1.bf16.msra.mxu0 %v4006
    %4069 = vmatprep.subr.bf16.mxu0 %v4010
    %4070 = vmatpush1.bf16.msra.mxu0 %v4009
    %4071 = vmatprep.subr.bf16.mxu0 %v4013
    %4072 = vmatpush1.bf16.msra.mxu0 %v4012
    %4073 = vmatprep.subr.bf16.mxu0 %v4016
    %4074 = vmatpush1.bf16.msra.mxu0 %v4015
    %4075 = vmatprep.subr.bf16.mxu0 %v4019
    %4076 = vmatpush1.bf16.msra.mxu0 %v4018
    %4077 = vmatprep.subr.bf16.mxu0 0
    %4078 = vmatpush1.bf16.msra.mxu0 0
    %4079 = vmatprep.subr.bf16.mxu0 0
    %4080 = vmatpush1.bf16.msra.mxu0 0
    %4081 = vmatprep.subr.bf16.mxu0 0
    %4082 = vmatpush1.bf16.msra.mxu0 0
    %4083 = vmatprep.subr.bf16.mxu0 0
    %4084 = vmatpush1.bf16.msra.mxu0 0
    %4085 = vmatprep.subr.bf16.mxu0 0
    %4086 = vmatpush1.bf16.msra.mxu0 0
    %4087 = vmatprep.subr.bf16.mxu0 0
    %4088 = vmatpush1.bf16.msra.mxu0 0
    %4089 = vmatprep.subr.bf16.mxu0 0
    %4090 = vmatpush1.bf16.msra.mxu0 0
    %4091 = vmatprep.subr.bf16.mxu0 0
    %4092 = vmatpush1.bf16.msra.mxu0 0
    %4093 = vmatprep.mubr.bf16.mxu0 0
    %4094 = vmatmul.mubr.bf16.gmra.mrb[0].mxu0 %v3883
    %v4095 = vpop.f32.mrb[0].mxu0
    %v4096 = vadd.f32 %v4049, %v4095
    %v4097 = vpop.f32.mrb[0].mxu0
    %v4098 = vadd.f32 %v4053, %v4097
    %v4099 = vpop.f32.mrb[0].mxu0
    %v4100 = vpop.f32.mrb[0].mxu0
    %4101 = vdwg.mxu0
    %4102 = vmatprep.subr.bf16.mxu0 0
    %4103 = vmatpush1.bf16.msra.mxu0 %v3999
    %4104 = vmatprep.subr.bf16.mxu0 0
    %4105 = vmatpush1.bf16.msra.mxu0 %v4002
    %4106 = vmatprep.subr.bf16.mxu0 0
    %4107 = vmatpush1.bf16.msra.mxu0 %v4005
    %4108 = vmatprep.subr.bf16.mxu0 0
    %4109 = vmatpush1.bf16.msra.mxu0 %v4008
    %4110 = vmatprep.subr.bf16.mxu0 0
    %4111 = vmatpush1.bf16.msra.mxu0 %v4011
    %4112 = vmatprep.subr.bf16.mxu0 0
    %4113 = vmatpush1.bf16.msra.mxu0 %v4014
    %4114 = vmatprep.subr.bf16.mxu0 0
    %4115 = vmatpush1.bf16.msra.mxu0 %v4017
    %4116 = vmatprep.subr.bf16.mxu0 0
    %4117 = vmatpush1.bf16.msra.mxu0 %v4020
    %4118 = vmatprep.subr.bf16.mxu0 0
    %4119 = vmatpush1.bf16.msra.mxu0 0
    %4120 = vmatprep.subr.bf16.mxu0 0
    %4121 = vmatpush1.bf16.msra.mxu0 0
    %4122 = vmatprep.subr.bf16.mxu0 0
    %4123 = vmatpush1.bf16.msra.mxu0 0
    %4124 = vmatprep.subr.bf16.mxu0 0
    %4125 = vmatpush1.bf16.msra.mxu0 0
    %4126 = vmatprep.subr.bf16.mxu0 0
    %4127 = vmatpush1.bf16.msra.mxu0 0
    %4128 = vmatprep.subr.bf16.mxu0 0
    %4129 = vmatpush1.bf16.msra.mxu0 0
    %4130 = vmatprep.subr.bf16.mxu0 0
    %4131 = vmatpush1.bf16.msra.mxu0 0
    %4132 = vmatprep.subr.bf16.mxu0 0
    %4133 = vmatpush1.bf16.msra.mxu0 0
    %4134 = vmatprep.mubr.bf16.mxu0 0
    %4135 = vmatmul.mubr.bf16.gmra.mrb[0].mxu0 %v3883
    %v4136 = vpop.f32.mrb[0].mxu0
    %v4137 = vadd.f32 %v4057, %v4136
    %v4138 = vpop.f32.mrb[0].mxu0
    %v4139 = vpop.f32.mrb[0].mxu0
    %v4140 = vpop.f32.mrb[0].mxu0
    %4141 = vdwg.mxu0
    %v4142 = vadd.f32 %v4096, %v3815
    %v4143 = vmul.f32 %v4142, 0.5
    %v4144 = vtanh.pop %v4143
    %v4145 = vmul.f32 %v4144, 0.5
    %v4146 = vadd.f32 %v4145, 0.5
    %v4147 = vadd.f32 %v4098, %v3854
    %v4148 = vmul.f32 %v4147, 0.5
    %v4149 = vtanh.pop %v4148
    %v4150 = vmul.f32 %v4149, 0.5
    %v4151 = vadd.f32 %v4150, 0.5
    %v4152 = vmul.f32 %v4146, %v3856
    %v4153 = vadd.f32 %v4137, %v4152
    %v4154 = vtanh.pop %v4153
    %v4155 = vsub.f32 1.0, %v4151
    %v4156 = vmul.f32 %v4155, %v4154
    %v4157 = vmul.f32 %v4151, 0.0
    %v4158 = vadd.f32 %v4156, %v4157
    %v4159 = vpack.c.bf16 %v4158, %v4158
    %4160 = vmatprep.subr.bf16.mxu0 %v3515
    %4161 = vmatpush1.bf16.msra.mxu0 %v3514
    %4162 = vmatprep.subr.bf16.mxu0 %v3521
    %4163 = vmatpush1.bf16.msra.mxu0 %v3520
    %4164 = vmatprep.subr.bf16.mxu0 %v3527
    %4165 = vmatpush1.bf16.msra.mxu0 %v3526
    %4166 = vmatprep.subr.bf16.mxu0 %v3533
    %4167 = vmatpush1.bf16.msra.mxu0 %v3532
    %4168 = vmatprep.subr.bf16.mxu0 %v3539
    %4169 = vmatpush1.bf16.msra.mxu0 %v3538
    %4170 = vmatprep.subr.bf16.mxu0 %v3545
    %4171 = vmatpush1.bf16.msra.mxu0 %v3544
    %4172 = vmatprep.subr.bf16.mxu0 %v3551
    %4173 = vmatpush1.bf16.msra.mxu0 %v3550
    %4174 = vmatprep.subr.bf16.mxu0 %v3557
    %4175 = vmatpush1.bf16.msra.mxu0 %v3556
    %4176 = vmatprep.subr.bf16.mxu0 %v3563
    %4177 = vmatpush1.bf16.msra.mxu0 %v3562
    %4178 = vmatprep.subr.bf16.mxu0 %v3569
    %4179 = vmatpush1.bf16.msra.mxu0 %v3568
    %4180 = vmatprep.subr.bf16.mxu0 %v3575
    %4181 = vmatpush1.bf16.msra.mxu0 %v3574
    %4182 = vmatprep.subr.bf16.mxu0 %v3581
    %4183 = vmatpush1.bf16.msra.mxu0 %v3580
    %4184 = vmatprep.subr.bf16.mxu0 %v3587
    %4185 = vmatpush1.bf16.msra.mxu0 %v3586
    %4186 = vmatprep.subr.bf16.mxu0 %v3593
    %4187 = vmatpush1.bf16.msra.mxu0 %v3592
    %4188 = vmatprep.subr.bf16.mxu0 %v3599
    %4189 = vmatpush1.bf16.msra.mxu0 %v3598
    %4190 = vmatprep.subr.bf16.mxu0 %v3605
    %4191 = vmatpush1.bf16.msra.mxu0 %v3604
    %4192 = vmatprep.mubr.bf16.mxu0 %v4159
    %4193 = vmatmul.mubr.bf16.gmra.mrb[0].mxu0 %v3883
    %v4194 = vpop.f32.mrb[0].mxu0
    %v4195 = vadd.f32 %v3710, %v4194
    %v4196 = vpop.f32.mrb[0].mxu0
    %v4197 = vadd.f32 %v3714, %v4196
    %v4198 = vpop.f32.mrb[0].mxu0
    %v4199 = vpop.f32.mrb[0].mxu0
    %4200 = vdwg.mxu0
    %4201 = vmatprep.subr.bf16.mxu0 %v3517
    %4202 = vmatpush1.bf16.msra.mxu0 %v3516
    %4203 = vmatprep.subr.bf16.mxu0 %v3523
    %4204 = vmatpush1.bf16.msra.mxu0 %v3522
    %4205 = vmatprep.subr.bf16.mxu0 %v3529
    %4206 = vmatpush1.bf16.msra.mxu0 %v3528
    %4207 = vmatprep.subr.bf16.mxu0 %v3535
    %4208 = vmatpush1.bf16.msra.mxu0 %v3534
    %4209 = vmatprep.subr.bf16.mxu0 %v3541
    %4210 = vmatpush1.bf16.msra.mxu0 %v3540
    %4211 = vmatprep.subr.bf16.mxu0 %v3547
    %4212 = vmatpush1.bf16.msra.mxu0 %v3546
    %4213 = vmatprep.subr.bf16.mxu0 %v3553
    %4214 = vmatpush1.bf16.msra.mxu0 %v3552
    %4215 = vmatprep.subr.bf16.mxu0 %v3559
    %4216 = vmatpush1.bf16.msra.mxu0 %v3558
    %4217 = vmatprep.subr.bf16.mxu0 %v3565
    %4218 = vmatpush1.bf16.msra.mxu0 %v3564
    %4219 = vmatprep.subr.bf16.mxu0 %v3571
    %4220 = vmatpush1.bf16.msra.mxu0 %v3570
    %4221 = vmatprep.subr.bf16.mxu0 %v3577
    %4222 = vmatpush1.bf16.msra.mxu0 %v3576
    %4223 = vmatprep.subr.bf16.mxu0 %v3583
    %4224 = vmatpush1.bf16.msra.mxu0 %v3582
    %4225 = vmatprep.subr.bf16.mxu0 %v3589
    %4226 = vmatpush1.bf16.msra.mxu0 %v3588
    %4227 = vmatprep.subr.bf16.mxu0 %v3595
    %4228 = vmatpush1.bf16.msra.mxu0 %v3594
    %4229 = vmatprep.subr.bf16.mxu0 %v3601
    %4230 = vmatpush1.bf16.msra.mxu0 %v3600
    %4231 = vmatprep.subr.bf16.mxu0 %v3607
    %4232 = vmatpush1.bf16.msra.mxu0 %v3606
    %4233 = vmatprep.mubr.bf16.mxu0 %v4159
    %4234 = vmatmul.mubr.bf16.gmra.mrb[0].mxu0 %v3883
    %v4235 = vpop.f32.mrb[0].mxu0
    %v4236 = vadd.f32 %v3718, %v4235
    %v4237 = vpop.f32.mrb[0].mxu0
    %v4238 = vadd.f32 %v3722, %v4237
    %v4239 = vpop.f32.mrb[0].mxu0
    %v4240 = vpop.f32.mrb[0].mxu0
    %4241 = vdwg.mxu0
    %4242 = vmatprep.subr.bf16.mxu0 %v3519
    %4243 = vmatpush1.bf16.msra.mxu0 %v3518
    %4244 = vmatprep.subr.bf16.mxu0 %v3525
    %4245 = vmatpush1.bf16.msra.mxu0 %v3524
    %4246 = vmatprep.subr.bf16.mxu0 %v3531
    %4247 = vmatpush1.bf16.msra.mxu0 %v3530
    %4248 = vmatprep.subr.bf16.mxu0 %v3537
    %4249 = vmatpush1.bf16.msra.mxu0 %v3536
    %4250 = vmatprep.subr.bf16.mxu0 %v3543
    %4251 = vmatpush1.bf16.msra.mxu0 %v3542
    %4252 = vmatprep.subr.bf16.mxu0 %v3549
    %4253 = vmatpush1.bf16.msra.mxu0 %v3548
    %4254 = vmatprep.subr.bf16.mxu0 %v3555
    %4255 = vmatpush1.bf16.msra.mxu0 %v3554
    %4256 = vmatprep.subr.bf16.mxu0 %v3561
    %4257 = vmatpush1.bf16.msra.mxu0 %v3560
    %4258 = vmatprep.subr.bf16.mxu0 %v3567
    %4259 = vmatpush1.bf16.msra.mxu0 %v3566
    %4260 = vmatprep.subr.bf16.mxu0 %v3573
    %4261 = vmatpush1.bf16.msra.mxu0 %v3572
    %4262 = vmatprep.subr.bf16.mxu0 %v3579
    %4263 = vmatpush1.bf16.msra.mxu0 %v3578
    %4264 = vmatprep.subr.bf16.mxu0 %v3585
    %4265 = vmatpush1.bf16.msra.mxu0 %v3584
    %4266 = vmatprep.subr.bf16.mxu0 %v3591
    %4267 = vmatpush1.bf16.msra.mxu0 %v3590
    %4268 = vmatprep.subr.bf16.mxu0 %v3597
    %4269 = vmatpush1.bf16.msra.mxu0 %v3596
    %4270 = vmatprep.subr.bf16.mxu0 %v3603
    %4271 = vmatpush1.bf16.msra.mxu0 %v3602
    %4272 = vmatprep.subr.bf16.mxu0 %v3609
    %4273 = vmatpush1.bf16.msra.mxu0 %v3608
    %4274 = vmatprep.mubr.bf16.mxu0 %v4159
    %4275 = vmatmul.mubr.bf16.gmra.mrb[0].mxu0 %v3883
    %v4276 = vpop.f32.mrb[0].mxu0
    %v4277 = vadd.f32 %v3726, %v4276
    %v4278 = vpop.f32.mrb[0].mxu0
    %v4279 = vadd.f32 %v3730, %v4278
    %v4280 = vpop.f32.mrb[0].mxu0
    %v4281 = vpop.f32.mrb[0].mxu0
    %4282 = vdwg.mxu0
    %s4283 = scalar_lea.vmem [#allocation7], 1
    %v4284 = vld [vmem:[%s4283] ss:$8 sm:$0x7]
    %v4285 = vadd.f32 %v4284, %v4195
    %v4286 = vmul.f32 %v4285, 0.5
    %v4287 = vtanh.pop %v4286
    %v4288 = vmul.f32 %v4287, 0.5
    %v4289 = vadd.f32 %v4288, 0.5
    %v4291 = vrot.slane %v4284, 1
    %v4293 = vadd.f32 %v4291, %v4197
    %v4294 = vmul.f32 %v4293, 0.5
    %v4295 = vtanh.pop %v4294
    %v4296 = vmul.f32 %v4295, 0.5
    %v4297 = vadd.f32 %v4296, 0.5
    %v4298 = vmul.f32 %v4289, %v4236
    %v4299 = vrot.slane %v4284, 2
    %v4301 = vadd.f32 %v4299, %v4298
    %v4302 = vtanh.pop %v4301
    %v4303 = vsub.f32 1.0, %v4297
    %v4304 = vmul.f32 %v4303, %v4302
    %v4305 = vmul.f32 %v4297, %v3882
    %v4306 = vadd.f32 %v4304, %v4305
    %v4307 = vpack.c.bf16 %v4306, %v4306
    %4308 = vmatprep.subr.bf16.mxu0 %v3998
    %4309 = vmatpush1.bf16.msra.mxu0 %v3997
    %4310 = vmatprep.subr.bf16.mxu0 %v4001
    %4311 = vmatpush1.bf16.msra.mxu0 %v4000
    %4312 = vmatprep.subr.bf16.mxu0 %v4004
    %4313 = vmatpush1.bf16.msra.mxu0 %v4003
    %4314 = vmatprep.subr.bf16.mxu0 %v4007
    %4315 = vmatpush1.bf16.msra.mxu0 %v4006
    %4316 = vmatprep.subr.bf16.mxu0 %v4010
    %4317 = vmatpush1.bf16.msra.mxu0 %v4009
    %4318 = vmatprep.subr.bf16.mxu0 %v4013
    %4319 = vmatpush1.bf16.msra.mxu0 %v4012
    %4320 = vmatprep.subr.bf16.mxu0 %v4016
    %4321 = vmatpush1.bf16.msra.mxu0 %v4015
    %4322 = vmatprep.subr.bf16.mxu0 %v4019
    %4323 = vmatpush1.bf16.msra.mxu0 %v4018
    %4324 = vmatprep.subr.bf16.mxu0 0
    %4325 = vmatpush1.bf16.msra.mxu0 0
    %4326 = vmatprep.subr.bf16.mxu0 0
    %4327 = vmatpush1.bf16.msra.mxu0 0
    %4328 = vmatprep.subr.bf16.mxu0 0
    %4329 = vmatpush1.bf16.msra.mxu0 0
    %4330 = vmatprep.subr.bf16.mxu0 0
    %4331 = vmatpush1.bf16.msra.mxu0 0
    %4332 = vmatprep.subr.bf16.mxu0 0
    %4333 = vmatpush1.bf16.msra.mxu0 0
    %4334 = vmatprep.subr.bf16.mxu0 0
    %4335 = vmatpush1.bf16.msra.mxu0 0
    %4336 = vmatprep.subr.bf16.mxu0 0
    %4337 = vmatpush1.bf16.msra.mxu0 0
    %4338 = vmatprep.subr.bf16.mxu0 0
    %4339 = vmatpush1.bf16.msra.mxu0 0
    %4340 = vmatprep.mubr.bf16.mxu0 0
    %4341 = vmatmul.mubr.bf16.gmra.mrb[0].mxu0 %v4307
    %v4342 = vpop.f32.mrb[0].mxu0
    %v4343 = vadd.f32 %v4049, %v4342
    %v4344 = vpop.f32.mrb[0].mxu0
    %v4345 = vadd.f32 %v4053, %v4344
    %v4346 = vpop.f32.mrb[0].mxu0
    %v4347 = vpop.f32.mrb[0].mxu0
    %4348 = vdwg.mxu0
    %4349 = vmatprep.subr.bf16.mxu0 0
    %4350 = vmatpush1.bf16.msra.mxu0 %v3999
    %4351 = vmatprep.subr.bf16.mxu0 0
    %4352 = vmatpush1.bf16.msra.mxu0 %v4002
    %4353 = vmatprep.subr.bf16.mxu0 0
    %4354 = vmatpush1.bf16.msra.mxu0 %v4005
    %4355 = vmatprep.subr.bf16.mxu0 0
    %4356 = vmatpush1.bf16.msra.mxu0 %v4008
    %4357 = vmatprep.subr.bf16.mxu0 0
    %4358 = vmatpush1.bf16.msra.mxu0 %v4011
    %4359 = vmatprep.subr.bf16.mxu0 0
    %4360 = vmatpush1.bf16.msra.mxu0 %v4014
    %4361 = vmatprep.subr.bf16.mxu0 0
    %4362 = vmatpush1.bf16.msra.mxu0 %v4017
    %4363 = vmatprep.subr.bf16.mxu0 0
    %4364 = vmatpush1.bf16.msra.mxu0 %v4020
    %4365 = vmatprep.subr.bf16.mxu0 0
    %4366 = vmatpush1.bf16.msra.mxu0 0
    %4367 = vmatprep.subr.bf16.mxu0 0
    %4368 = vmatpush1.bf16.msra.mxu0 0
    %4369 = vmatprep.subr.bf16.mxu0 0
    %4370 = vmatpush1.bf16.msra.mxu0 0
    %4371 = vmatprep.subr.bf16.mxu0 0
    %4372 = vmatpush1.bf16.msra.mxu0 0
    %4373 = vmatprep.subr.bf16.mxu0 0
    %4374 = vmatpush1.bf16.msra.mxu0 0
    %4375 = vmatprep.subr.bf16.mxu0 0
    %4376 = vmatpush1.bf16.msra.mxu0 0
    %4377 = vmatprep.subr.bf16.mxu0 0
    %4378 = vmatpush1.bf16.msra.mxu0 0
    %4379 = vmatprep.subr.bf16.mxu0 0
    %4380 = vmatpush1.bf16.msra.mxu0 0
    %4381 = vmatprep.mubr.bf16.mxu0 0
    %4382 = vmatmul.mubr.bf16.gmra.mrb[0].mxu0 %v4307
    %v4383 = vpop.f32.mrb[0].mxu0
    %v4384 = vadd.f32 %v4057, %v4383
    %v4385 = vpop.f32.mrb[0].mxu0
    %v4386 = vpop.f32.mrb[0].mxu0
    %v4387 = vpop.f32.mrb[0].mxu0
    %4388 = vdwg.mxu0
    %v4389 = vadd.f32 %v4343, %v4238
    %v4390 = vmul.f32 %v4389, 0.5
    %v4391 = vtanh.pop %v4390
    %v4392 = vmul.f32 %v4391, 0.5
    %v4393 = vadd.f32 %v4392, 0.5
    %v4394 = vadd.f32 %v4345, %v4277
    %v4395 = vmul.f32 %v4394, 0.5
    %v4396 = vtanh.pop %v4395
    %v4397 = vmul.f32 %v4396, 0.5
    %v4398 = vadd.f32 %v4397, 0.5
    %v4399 = vmul.f32 %v4393, %v4279
    %v4400 = vadd.f32 %v4384, %v4399
    %v4401 = vtanh.pop %v4400
    %v4402 = vsub.f32 1.0, %v4398
    %v4403 = vmul.f32 %v4402, %v4401
    %v4404 = vmul.f32 %v4398, %v4158
    %v4405 = vadd.f32 %v4403, %v4404
    %v4406 = vpack.c.bf16 %v4405, %v4405
    %4407 = vmatprep.subr.bf16.mxu0 %v3515
    %4408 = vmatpush1.bf16.msra.mxu0 %v3514
    %4409 = vmatprep.subr.bf16.mxu0 %v3521
    %4410 = vmatpush1.bf16.msra.mxu0 %v3520
    %4411 = vmatprep.subr.bf16.mxu0 %v3527
    %4412 = vmatpush1.bf16.msra.mxu0 %v3526
    %4413 = vmatprep.subr.bf16.mxu0 %v3533
    %4414 = vmatpush1.bf16.msra.mxu0 %v3532
    %4415 = vmatprep.subr.bf16.mxu0 %v3539
    %4416 = vmatpush1.bf16.msra.mxu0 %v3538
    %4417 = vmatprep.subr.bf16.mxu0 %v3545
    %4418 = vmatpush1.bf16.msra.mxu0 %v3544
    %4419 = vmatprep.subr.bf16.mxu0 %v3551
    %4420 = vmatpush1.bf16.msra.mxu0 %v3550
    %4421 = vmatprep.subr.bf16.mxu0 %v3557
    %4422 = vmatpush1.bf16.msra.mxu0 %v3556
    %4423 = vmatprep.subr.bf16.mxu0 %v3563
    %4424 = vmatpush1.bf16.msra.mxu0 %v3562
    %4425 = vmatprep.subr.bf16.mxu0 %v3569
    %4426 = vmatpush1.bf16.msra.mxu0 %v3568
    %4427 = vmatprep.subr.bf16.mxu0 %v3575
    %4428 = vmatpush1.bf16.msra.mxu0 %v3574
    %4429 = vmatprep.subr.bf16.mxu0 %v3581
    %4430 = vmatpush1.bf16.msra.mxu0 %v3580
    %4431 = vmatprep.subr.bf16.mxu0 %v3587
    %4432 = vmatpush1.bf16.msra.mxu0 %v3586
    %4433 = vmatprep.subr.bf16.mxu0 %v3593
    %4434 = vmatpush1.bf16.msra.mxu0 %v3592
    %4435 = vmatprep.subr.bf16.mxu0 %v3599
    %4436 = vmatpush1.bf16.msra.mxu0 %v3598
    %4437 = vmatprep.subr.bf16.mxu0 %v3605
    %4438 = vmatpush1.bf16.msra.mxu0 %v3604
    %4439 = vmatprep.mubr.bf16.mxu0 %v4406
    %4440 = vmatmul.mubr.bf16.gmra.mrb[0].mxu0 %v4307
    %v4441 = vpop.f32.mrb[0].mxu0
    %v4442 = vadd.f32 %v3710, %v4441
    %v4443 = vpop.f32.mrb[0].mxu0
    %v4444 = vadd.f32 %v3714, %v4443
    %v4445 = vpop.f32.mrb[0].mxu0
    %v4446 = vpop.f32.mrb[0].mxu0
    %4447 = vdwg.mxu0
    %4448 = vmatprep.subr.bf16.mxu0 %v3517
    %4449 = vmatpush1.bf16.msra.mxu0 %v3516
    %4450 = vmatprep.subr.bf16.mxu0 %v3523
    %4451 = vmatpush1.bf16.msra.mxu0 %v3522
    %4452 = vmatprep.subr.bf16.mxu0 %v3529
    %4453 = vmatpush1.bf16.msra.mxu0 %v3528
    %4454 = vmatprep.subr.bf16.mxu0 %v3535
    %4455 = vmatpush1.bf16.msra.mxu0 %v3534
    %4456 = vmatprep.subr.bf16.mxu0 %v3541
    %4457 = vmatpush1.bf16.msra.mxu0 %v3540
    %4458 = vmatprep.subr.bf16.mxu0 %v3547
    %4459 = vmatpush1.bf16.msra.mxu0 %v3546
    %4460 = vmatprep.subr.bf16.mxu0 %v3553
    %4461 = vmatpush1.bf16.msra.mxu0 %v3552
    %4462 = vmatprep.subr.bf16.mxu0 %v3559
    %4463 = vmatpush1.bf16.msra.mxu0 %v3558
    %4464 = vmatprep.subr.bf16.mxu0 %v3565
    %4465 = vmatpush1.bf16.msra.mxu0 %v3564
    %4466 = vmatprep.subr.bf16.mxu0 %v3571
    %4467 = vmatpush1.bf16.msra.mxu0 %v3570
    %4468 = vmatprep.subr.bf16.mxu0 %v3577
    %4469 = vmatpush1.bf16.msra.mxu0 %v3576
    %4470 = vmatprep.subr.bf16.mxu0 %v3583
    %4471 = vmatpush1.bf16.msra.mxu0 %v3582
    %4472 = vmatprep.subr.bf16.mxu0 %v3589
    %4473 = vmatpush1.bf16.msra.mxu0 %v3588
    %4474 = vmatprep.subr.bf16.mxu0 %v3595
    %4475 = vmatpush1.bf16.msra.mxu0 %v3594
    %4476 = vmatprep.subr.bf16.mxu0 %v3601
    %4477 = vmatpush1.bf16.msra.mxu0 %v3600
    %4478 = vmatprep.subr.bf16.mxu0 %v3607
    %4479 = vmatpush1.bf16.msra.mxu0 %v3606
    %4480 = vmatprep.mubr.bf16.mxu0 %v4406
    %4481 = vmatmul.mubr.bf16.gmra.mrb[0].mxu0 %v4307
    %v4482 = vpop.f32.mrb[0].mxu0
    %v4483 = vadd.f32 %v3718, %v4482
    %v4484 = vpop.f32.mrb[0].mxu0
    %v4485 = vadd.f32 %v3722, %v4484
    %v4486 = vpop.f32.mrb[0].mxu0
    %v4487 = vpop.f32.mrb[0].mxu0
    %4488 = vdwg.mxu0
    %4489 = vmatprep.subr.bf16.mxu0 %v3519
    %4490 = vmatpush1.bf16.msra.mxu0 %v3518
    %4491 = vmatprep.subr.bf16.mxu0 %v3525
    %4492 = vmatpush1.bf16.msra.mxu0 %v3524
    %4493 = vmatprep.subr.bf16.mxu0 %v3531
    %4494 = vmatpush1.bf16.msra.mxu0 %v3530
    %4495 = vmatprep.subr.bf16.mxu0 %v3537
    %4496 = vmatpush1.bf16.msra.mxu0 %v3536
    %4497 = vmatprep.subr.bf16.mxu0 %v3543
    %4498 = vmatpush1.bf16.msra.mxu0 %v3542
    %4499 = vmatprep.subr.bf16.mxu0 %v3549
    %4500 = vmatpush1.bf16.msra.mxu0 %v3548
    %4501 = vmatprep.subr.bf16.mxu0 %v3555
    %4502 = vmatpush1.bf16.msra.mxu0 %v3554
    %4503 = vmatprep.subr.bf16.mxu0 %v3561
    %4504 = vmatpush1.bf16.msra.mxu0 %v3560
    %4505 = vmatprep.subr.bf16.mxu0 %v3567
    %4506 = vmatpush1.bf16.msra.mxu0 %v3566
    %4507 = vmatprep.subr.bf16.mxu0 %v3573
    %4508 = vmatpush1.bf16.msra.mxu0 %v3572
    %4509 = vmatprep.subr.bf16.mxu0 %v3579
    %4510 = vmatpush1.bf16.msra.mxu0 %v3578
    %4511 = vmatprep.subr.bf16.mxu0 %v3585
    %4512 = vmatpush1.bf16.msra.mxu0 %v3584
    %4513 = vmatprep.subr.bf16.mxu0 %v3591
    %4514 = vmatpush1.bf16.msra.mxu0 %v3590
    %4515 = vmatprep.subr.bf16.mxu0 %v3597
    %4516 = vmatpush1.bf16.msra.mxu0 %v3596
    %4517 = vmatprep.subr.bf16.mxu0 %v3603
    %4518 = vmatpush1.bf16.msra.mxu0 %v3602
    %4519 = vmatprep.subr.bf16.mxu0 %v3609
    %4520 = vmatpush1.bf16.msra.mxu0 %v3608
    %4521 = vmatprep.mubr.bf16.mxu0 %v4406
    %4522 = vmatmul.mubr.bf16.gmra.mrb[0].mxu0 %v4307
    %v4523 = vpop.f32.mrb[0].mxu0
    %v4524 = vadd.f32 %v3726, %v4523
    %v4525 = vpop.f32.mrb[0].mxu0
    %v4526 = vadd.f32 %v3730, %v4525
    %v4527 = vpop.f32.mrb[0].mxu0
    %v4528 = vpop.f32.mrb[0].mxu0
    %4529 = vdwg.mxu0
    %s4530 = scalar_lea.vmem [#allocation7], 2
    %v4531 = vld [vmem:[%s4530] ss:$8 sm:$0x7]
    %v4532 = vadd.f32 %v4531, %v4442
    %v4533 = vmul.f32 %v4532, 0.5
    %v4534 = vtanh.pop %v4533
    %v4535 = vmul.f32 %v4534, 0.5
    %v4536 = vadd.f32 %v4535, 0.5
    %v4538 = vrot.slane %v4531, 1
    %v4540 = vadd.f32 %v4538, %v4444
    %v4541 = vmul.f32 %v4540, 0.5
    %v4542 = vtanh.pop %v4541
    %v4543 = vmul.f32 %v4542, 0.5
    %v4544 = vadd.f32 %v4543, 0.5
    %v4545 = vmul.f32 %v4536, %v4483
    %v4546 = vrot.slane %v4531, 2
    %v4548 = vadd.f32 %v4546, %v4545
    %v4549 = vtanh.pop %v4548
    %v4550 = vsub.f32 1.0, %v4544
    %v4551 = vmul.f32 %v4550, %v4549
    %v4552 = vmul.f32 %v4544, %v4306
    %v4553 = vadd.f32 %v4551, %v4552
    %v4554 = vpack.c.bf16 %v4553, %v4553
    %4555 = vmatprep.subr.bf16.mxu0 %v3998
    %4556 = vmatpush1.bf16.msra.mxu0 %v3997
    %4557 = vmatprep.subr.bf16.mxu0 %v4001
    %4558 = vmatpush1.bf16.msra.mxu0 %v4000
    %4559 = vmatprep.subr.bf16.mxu0 %v4004
    %4560 = vmatpush1.bf16.msra.mxu0 %v4003
    %4561 = vmatprep.subr.bf16.mxu0 %v4007
    %4562 = vmatpush1.bf16.msra.mxu0 %v4006
    %4563 = vmatprep.subr.bf16.mxu0 %v4010
    %4564 = vmatpush1.bf16.msra.mxu0 %v4009
    %4565 = vmatprep.subr.bf16.mxu0 %v4013
    %4566 = vmatpush1.bf16.msra.mxu0 %v4012
    %4567 = vmatprep.subr.bf16.mxu0 %v4016
    %4568 = vmatpush1.bf16.msra.mxu0 %v4015
    %4569 = vmatprep.subr.bf16.mxu0 %v4019
    %4570 = vmatpush1.bf16.msra.mxu0 %v4018
    %4571 = vmatprep.subr.bf16.mxu0 0
    %4572 = vmatpush1.bf16.msra.mxu0 0
    %4573 = vmatprep.subr.bf16.mxu0 0
    %4574 = vmatpush1.bf16.msra.mxu0 0
    %4575 = vmatprep.subr.bf16.mxu0 0
    %4576 = vmatpush1.bf16.msra.mxu0 0
    %4577 = vmatprep.subr.bf16.mxu0 0
    %4578 = vmatpush1.bf16.msra.mxu0 0
    %4579 = vmatprep.subr.bf16.mxu0 0
    %4580 = vmatpush1.bf16.msra.mxu0 0
    %4581 = vmatprep.subr.bf16.mxu0 0
    %4582 = vmatpush1.bf16.msra.mxu0 0
    %4583 = vmatprep.subr.bf16.mxu0 0
    %4584 = vmatpush1.bf16.msra.mxu0 0
    %4585 = vmatprep.subr.bf16.mxu0 0
    %4586 = vmatpush1.bf16.msra.mxu0 0
    %4587 = vmatprep.mubr.bf16.mxu0 0
    %4588 = vmatmul.mubr.bf16.gmra.mrb[0].mxu0 %v4554
    %v4589 = vpop.f32.mrb[0].mxu0
    %v4590 = vadd.f32 %v4049, %v4589
    %v4591 = vpop.f32.mrb[0].mxu0
    %v4592 = vadd.f32 %v4053, %v4591
    %v4593 = vpop.f32.mrb[0].mxu0
    %v4594 = vpop.f32.mrb[0].mxu0
    %4595 = vdwg.mxu0
    %4596 = vmatprep.subr.bf16.mxu0 0
    %4597 = vmatpush1.bf16.msra.mxu0 %v3999
    %4598 = vmatprep.subr.bf16.mxu0 0
    %4599 = vmatpush1.bf16.msra.mxu0 %v4002
    %4600 = vmatprep.subr.bf16.mxu0 0
    %4601 = vmatpush1.bf16.msra.mxu0 %v4005
    %4602 = vmatprep.subr.bf16.mxu0 0
    %4603 = vmatpush1.bf16.msra.mxu0 %v4008
    %4604 = vmatprep.subr.bf16.mxu0 0
    %4605 = vmatpush1.bf16.msra.mxu0 %v4011
    %4606 = vmatprep.subr.bf16.mxu0 0
    %4607 = vmatpush1.bf16.msra.mxu0 %v4014
    %4608 = vmatprep.subr.bf16.mxu0 0
    %4609 = vmatpush1.bf16.msra.mxu0 %v4017
    %4610 = vmatprep.subr.bf16.mxu0 0
    %4611 = vmatpush1.bf16.msra.mxu0 %v4020
    %4612 = vmatprep.subr.bf16.mxu0 0
    %4613 = vmatpush1.bf16.msra.mxu0 0
    %4614 = vmatprep.subr.bf16.mxu0 0
    %4615 = vmatpush1.bf16.msra.mxu0 0
    %4616 = vmatprep.subr.bf16.mxu0 0
    %4617 = vmatpush1.bf16.msra.mxu0 0
    %4618 = vmatprep.subr.bf16.mxu0 0
    %4619 = vmatpush1.bf16.msra.mxu0 0
    %4620 = vmatprep.subr.bf16.mxu0 0
    %4621 = vmatpush1.bf16.msra.mxu0 0
    %4622 = vmatprep.subr.bf16.mxu0 0
    %4623 = vmatpush1.bf16.msra.mxu0 0
    %4624 = vmatprep.subr.bf16.mxu0 0
    %4625 = vmatpush1.bf16.msra.mxu0 0
    %4626 = vmatprep.subr.bf16.mxu0 0
    %4627 = vmatpush1.bf16.msra.mxu0 0
    %4628 = vmatprep.mubr.bf16.mxu0 0
    %4629 = vmatmul.mubr.bf16.gmra.mrb[0].mxu0 %v4554
    %v4630 = vpop.f32.mrb[0].mxu0
    %v4631 = vadd.f32 %v4057, %v4630
    %v4632 = vpop.f32.mrb[0].mxu0
    %v4633 = vpop.f32.mrb[0].mxu0
    %v4634 = vpop.f32.mrb[0].mxu0
    %4635 = vdwg.mxu0
    %v4636 = vadd.f32 %v4590, %v4485
    %v4637 = vmul.f32 %v4636, 0.5
    %v4638 = vtanh.pop %v4637
    %v4639 = vmul.f32 %v4638, 0.5
    %v4640 = vadd.f32 %v4639, 0.5
    %v4641 = vadd.f32 %v4592, %v4524
    %v4642 = vmul.f32 %v4641, 0.5
    %v4643 = vtanh.pop %v4642
    %v4644 = vmul.f32 %v4643, 0.5
    %v4645 = vadd.f32 %v4644, 0.5
    %v4646 = vmul.f32 %v4640, %v4526
    %v4647 = vadd.f32 %v4631, %v4646
    %v4648 = vtanh.pop %v4647
    %v4649 = vsub.f32 1.0, %v4645
    %v4650 = vmul.f32 %v4649, %v4648
    %v4651 = vmul.f32 %v4645, %v4405
    %v4652 = vadd.f32 %v4650, %v4651
    %v4653 = vpack.c.bf16 %v4652, %v4652
    %4654 = vmatprep.subr.bf16.mxu0 %v3515
    %4655 = vmatpush1.bf16.msra.mxu0 %v3514
    %4656 = vmatprep.subr.bf16.mxu0 %v3521
    %4657 = vmatpush1.bf16.msra.mxu0 %v3520
    %4658 = vmatprep.subr.bf16.mxu0 %v3527
    %4659 = vmatpush1.bf16.msra.mxu0 %v3526
    %4660 = vmatprep.subr.bf16.mxu0 %v3533
    %4661 = vmatpush1.bf16.msra.mxu0 %v3532
    %4662 = vmatprep.subr.bf16.mxu0 %v3539
    %4663 = vmatpush1.bf16.msra.mxu0 %v3538
    %4664 = vmatprep.subr.bf16.mxu0 %v3545
    %4665 = vmatpush1.bf16.msra.mxu0 %v3544
    %4666 = vmatprep.subr.bf16.mxu0 %v3551
    %4667 = vmatpush1.bf16.msra.mxu0 %v3550
    %4668 = vmatprep.subr.bf16.mxu0 %v3557
    %4669 = vmatpush1.bf16.msra.mxu0 %v3556
    %4670 = vmatprep.subr.bf16.mxu0 %v3563
    %4671 = vmatpush1.bf16.msra.mxu0 %v3562
    %4672 = vmatprep.subr.bf16.mxu0 %v3569
    %4673 = vmatpush1.bf16.msra.mxu0 %v3568
    %4674 = vmatprep.subr.bf16.mxu0 %v3575
    %4675 = vmatpush1.bf16.msra.mxu0 %v3574
    %4676 = vmatprep.subr.bf16.mxu0 %v3581
    %4677 = vmatpush1.bf16.msra.mxu0 %v3580
    %4678 = vmatprep.subr.bf16.mxu0 %v3587
    %4679 = vmatpush1.bf16.msra.mxu0 %v3586
    %4680 = vmatprep.subr.bf16.mxu0 %v3593
    %4681 = vmatpush1.bf16.msra.mxu0 %v3592
    %4682 = vmatprep.subr.bf16.mxu0 %v3599
    %4683 = vmatpush1.bf16.msra.mxu0 %v3598
    %4684 = vmatprep.subr.bf16.mxu0 %v3605
    %4685 = vmatpush1.bf16.msra.mxu0 %v3604
    %4686 = vmatprep.mubr.bf16.mxu0 %v4653
    %4687 = vmatmul.mubr.bf16.gmra.mrb[0].mxu0 %v4554
    %v4688 = vpop.f32.mrb[0].mxu0
    %v4689 = vadd.f32 %v3710, %v4688
    %v4690 = vpop.f32.mrb[0].mxu0
    %v4691 = vadd.f32 %v3714, %v4690
    %v4692 = vpop.f32.mrb[0].mxu0
    %v4693 = vpop.f32.mrb[0].mxu0
    %4694 = vdwg.mxu0
    %4695 = vmatprep.subr.bf16.mxu0 %v3517
    %4696 = vmatpush1.bf16.msra.mxu0 %v3516
    %4697 = vmatprep.subr.bf16.mxu0 %v3523
    %4698 = vmatpush1.bf16.msra.mxu0 %v3522
    %4699 = vmatprep.subr.bf16.mxu0 %v3529
    %4700 = vmatpush1.bf16.msra.mxu0 %v3528
    %4701 = vmatprep.subr.bf16.mxu0 %v3535
    %4702 = vmatpush1.bf16.msra.mxu0 %v3534
    %4703 = vmatprep.subr.bf16.mxu0 %v3541
    %4704 = vmatpush1.bf16.msra.mxu0 %v3540
    %4705 = vmatprep.subr.bf16.mxu0 %v3547
    %4706 = vmatpush1.bf16.msra.mxu0 %v3546
    %4707 = vmatprep.subr.bf16.mxu0 %v3553
    %4708 = vmatpush1.bf16.msra.mxu0 %v3552
    %4709 = vmatprep.subr.bf16.mxu0 %v3559
    %4710 = vmatpush1.bf16.msra.mxu0 %v3558
    %4711 = vmatprep.subr.bf16.mxu0 %v3565
    %4712 = vmatpush1.bf16.msra.mxu0 %v3564
    %4713 = vmatprep.subr.bf16.mxu0 %v3571
    %4714 = vmatpush1.bf16.msra.mxu0 %v3570
    %4715 = vmatprep.subr.bf16.mxu0 %v3577
    %4716 = vmatpush1.bf16.msra.mxu0 %v3576
    %4717 = vmatprep.subr.bf16.mxu0 %v3583
    %4718 = vmatpush1.bf16.msra.mxu0 %v3582
    %4719 = vmatprep.subr.bf16.mxu0 %v3589
    %4720 = vmatpush1.bf16.msra.mxu0 %v3588
    %4721 = vmatprep.subr.bf16.mxu0 %v3595
    %4722 = vmatpush1.bf16.msra.mxu0 %v3594
    %4723 = vmatprep.subr.bf16.mxu0 %v3601
    %4724 = vmatpush1.bf16.msra.mxu0 %v3600
    %4725 = vmatprep.subr.bf16.mxu0 %v3607
    %4726 = vmatpush1.bf16.msra.mxu0 %v3606
    %4727 = vmatprep.mubr.bf16.mxu0 %v4653
    %4728 = vmatmul.mubr.bf16.gmra.mrb[0].mxu0 %v4554
    %v4729 = vpop.f32.mrb[0].mxu0
    %v4730 = vadd.f32 %v3718, %v4729
    %v4731 = vpop.f32.mrb[0].mxu0
    %v4732 = vadd.f32 %v3722, %v4731
    %v4733 = vpop.f32.mrb[0].mxu0
    %v4734 = vpop.f32.mrb[0].mxu0
    %4735 = vdwg.mxu0
    %4736 = vmatprep.subr.bf16.mxu0 %v3519
    %4737 = vmatpush1.bf16.msra.mxu0 %v3518
    %4738 = vmatprep.subr.bf16.mxu0 %v3525
    %4739 = vmatpush1.bf16.msra.mxu0 %v3524
    %4740 = vmatprep.subr.bf16.mxu0 %v3531
    %4741 = vmatpush1.bf16.msra.mxu0 %v3530
    %4742 = vmatprep.subr.bf16.mxu0 %v3537
    %4743 = vmatpush1.bf16.msra.mxu0 %v3536
    %4744 = vmatprep.subr.bf16.mxu0 %v3543
    %4745 = vmatpush1.bf16.msra.mxu0 %v3542
    %4746 = vmatprep.subr.bf16.mxu0 %v3549
    %4747 = vmatpush1.bf16.msra.mxu0 %v3548
    %4748 = vmatprep.subr.bf16.mxu0 %v3555
    %4749 = vmatpush1.bf16.msra.mxu0 %v3554
    %4750 = vmatprep.subr.bf16.mxu0 %v3561
    %4751 = vmatpush1.bf16.msra.mxu0 %v3560
    %4752 = vmatprep.subr.bf16.mxu0 %v3567
    %4753 = vmatpush1.bf16.msra.mxu0 %v3566
    %4754 = vmatprep.subr.bf16.mxu0 %v3573
    %4755 = vmatpush1.bf16.msra.mxu0 %v3572
    %4756 = vmatprep.subr.bf16.mxu0 %v3579
    %4757 = vmatpush1.bf16.msra.mxu0 %v3578
    %4758 = vmatprep.subr.bf16.mxu0 %v3585
    %4759 = vmatpush1.bf16.msra.mxu0 %v3584
    %4760 = vmatprep.subr.bf16.mxu0 %v3591
    %4761 = vmatpush1.bf16.msra.mxu0 %v3590
    %4762 = vmatprep.subr.bf16.mxu0 %v3597
    %4763 = vmatpush1.bf16.msra.mxu0 %v3596
    %4764 = vmatprep.subr.bf16.mxu0 %v3603
    %4765 = vmatpush1.bf16.msra.mxu0 %v3602
    %4766 = vmatprep.subr.bf16.mxu0 %v3609
    %4767 = vmatpush1.bf16.msra.mxu0 %v3608
    %4768 = vmatprep.mubr.bf16.mxu0 %v4653
    %4769 = vmatmul.mubr.bf16.gmra.mrb[0].mxu0 %v4554
    %v4770 = vpop.f32.mrb[0].mxu0
    %v4771 = vadd.f32 %v3726, %v4770
    %v4772 = vpop.f32.mrb[0].mxu0
    %v4773 = vadd.f32 %v3730, %v4772
    %v4774 = vpop.f32.mrb[0].mxu0
    %v4775 = vpop.f32.mrb[0].mxu0
    %4776 = vdwg.mxu0
    %s4777 = scalar_lea.vmem [#allocation7], 3
    %v4778 = vld [vmem:[%s4777] ss:$8 sm:$0x7]
    %v4779 = vadd.f32 %v4778, %v4689
    %v4780 = vmul.f32 %v4779, 0.5
    %v4781 = vtanh.pop %v4780
    %v4782 = vmul.f32 %v4781, 0.5
    %v4783 = vadd.f32 %v4782, 0.5
    %v4785 = vrot.slane %v4778, 1
    %v4787 = vadd.f32 %v4785, %v4691
    %v4788 = vmul.f32 %v4787, 0.5
    %v4789 = vtanh.pop %v4788
    %v4790 = vmul.f32 %v4789, 0.5
    %v4791 = vadd.f32 %v4790, 0.5
    %v4792 = vmul.f32 %v4783, %v4730
    %v4793 = vrot.slane %v4778, 2
    %v4795 = vadd.f32 %v4793, %v4792
    %v4796 = vtanh.pop %v4795
    %v4797 = vsub.f32 1.0, %v4791
    %v4798 = vmul.f32 %v4797, %v4796
    %v4799 = vmul.f32 %v4791, %v4553
    %v4800 = vadd.f32 %v4798, %v4799
    %v4801 = vpack.c.bf16 %v4800, %v4800
    %4802 = vmatprep.subr.bf16.mxu0 %v3998
    %4803 = vmatpush1.bf16.msra.mxu0 %v3997
    %4804 = vmatprep.subr.bf16.mxu0 %v4001
    %4805 = vmatpush1.bf16.msra.mxu0 %v4000
    %4806 = vmatprep.subr.bf16.mxu0 %v4004
    %4807 = vmatpush1.bf16.msra.mxu0 %v4003
    %4808 = vmatprep.subr.bf16.mxu0 %v4007
    %4809 = vmatpush1.bf16.msra.mxu0 %v4006
    %4810 = vmatprep.subr.bf16.mxu0 %v4010
    %4811 = vmatpush1.bf16.msra.mxu0 %v4009
    %4812 = vmatprep.subr.bf16.mxu0 %v4013
    %4813 = vmatpush1.bf16.msra.mxu0 %v4012
    %4814 = vmatprep.subr.bf16.mxu0 %v4016
    %4815 = vmatpush1.bf16.msra.mxu0 %v4015
    %4816 = vmatprep.subr.bf16.mxu0 %v4019
    %4817 = vmatpush1.bf16.msra.mxu0 %v4018
    %4818 = vmatprep.subr.bf16.mxu0 0
    %4819 = vmatpush1.bf16.msra.mxu0 0
    %4820 = vmatprep.subr.bf16.mxu0 0
    %4821 = vmatpush1.bf16.msra.mxu0 0
    %4822 = vmatprep.subr.bf16.mxu0 0
    %4823 = vmatpush1.bf16.msra.mxu0 0
    %4824 = vmatprep.subr.bf16.mxu0 0
    %4825 = vmatpush1.bf16.msra.mxu0 0
    %4826 = vmatprep.subr.bf16.mxu0 0
    %4827 = vmatpush1.bf16.msra.mxu0 0
    %4828 = vmatprep.subr.bf16.mxu0 0
    %4829 = vmatpush1.bf16.msra.mxu0 0
    %4830 = vmatprep.subr.bf16.mxu0 0
    %4831 = vmatpush1.bf16.msra.mxu0 0
    %4832 = vmatprep.subr.bf16.mxu0 0
    %4833 = vmatpush1.bf16.msra.mxu0 0
    %4834 = vmatprep.mubr.bf16.mxu0 0
    %4835 = vmatmul.mubr.bf16.gmra.mrb[0].mxu0 %v4801
    %v4836 = vpop.f32.mrb[0].mxu0
    %v4837 = vadd.f32 %v4049, %v4836
    %v4838 = vpop.f32.mrb[0].mxu0
    %v4839 = vadd.f32 %v4053, %v4838
    %v4840 = vpop.f32.mrb[0].mxu0
    %v4841 = vpop.f32.mrb[0].mxu0
    %4842 = vdwg.mxu0
    %4843 = vmatprep.subr.bf16.mxu0 0
    %4844 = vmatpush1.bf16.msra.mxu0 %v3999
    %4845 = vmatprep.subr.bf16.mxu0 0
    %4846 = vmatpush1.bf16.msra.mxu0 %v4002
    %4847 = vmatprep.subr.bf16.mxu0 0
    %4848 = vmatpush1.bf16.msra.mxu0 %v4005
    %4849 = vmatprep.subr.bf16.mxu0 0
    %4850 = vmatpush1.bf16.msra.mxu0 %v4008
    %4851 = vmatprep.subr.bf16.mxu0 0
    %4852 = vmatpush1.bf16.msra.mxu0 %v4011
    %4853 = vmatprep.subr.bf16.mxu0 0
    %4854 = vmatpush1.bf16.msra.mxu0 %v4014
    %4855 = vmatprep.subr.bf16.mxu0 0
    %4856 = vmatpush1.bf16.msra.mxu0 %v4017
    %4857 = vmatprep.subr.bf16.mxu0 0
    %4858 = vmatpush1.bf16.msra.mxu0 %v4020
    %4859 = vmatprep.subr.bf16.mxu0 0
    %4860 = vmatpush1.bf16.msra.mxu0 0
    %4861 = vmatprep.subr.bf16.mxu0 0
    %4862 = vmatpush1.bf16.msra.mxu0 0
    %4863 = vmatprep.subr.bf16.mxu0 0
    %4864 = vmatpush1.bf16.msra.mxu0 0
    %4865 = vmatprep.subr.bf16.mxu0 0
    %4866 = vmatpush1.bf16.msra.mxu0 0
    %4867 = vmatprep.subr.bf16.mxu0 0
    %4868 = vmatpush1.bf16.msra.mxu0 0
    %4869 = vmatprep.subr.bf16.mxu0 0
    %4870 = vmatpush1.bf16.msra.mxu0 0
    %4871 = vmatprep.subr.bf16.mxu0 0
    %4872 = vmatpush1.bf16.msra.mxu0 0
    %4873 = vmatprep.subr.bf16.mxu0 0
    %4874 = vmatpush1.bf16.msra.mxu0 0
    %4875 = vmatprep.mubr.bf16.mxu0 0
    %4876 = vmatmul.mubr.bf16.gmra.mrb[0].mxu0 %v4801
    %v4877 = vpop.f32.mrb[0].mxu0
    %v4878 = vadd.f32 %v4057, %v4877
    %v4879 = vpop.f32.mrb[0].mxu0
    %v4880 = vpop.f32.mrb[0].mxu0
    %v4881 = vpop.f32.mrb[0].mxu0
    %4882 = vdwg.mxu0
    %v4883 = vadd.f32 %v4837, %v4732
    %v4884 = vmul.f32 %v4883, 0.5
    %v4885 = vtanh.pop %v4884
    %v4886 = vmul.f32 %v4885, 0.5
    %v4887 = vadd.f32 %v4886, 0.5
    %v4888 = vadd.f32 %v4839, %v4771
    %v4889 = vmul.f32 %v4888, 0.5
    %v4890 = vtanh.pop %v4889
    %v4891 = vmul.f32 %v4890, 0.5
    %v4892 = vadd.f32 %v4891, 0.5
    %v4893 = vmul.f32 %v4887, %v4773
    %v4894 = vadd.f32 %v4878, %v4893
    %v4895 = vtanh.pop %v4894
    %v4896 = vsub.f32 1.0, %v4892
    %v4897 = vmul.f32 %v4896, %v4895
    %v4898 = vmul.f32 %v4892, %v4652
    %v4899 = vadd.f32 %v4897, %v4898
    %v4900 = vpack.c.bf16 %v4899, %v4899
    %4901 = vmatprep.subr.bf16.mxu0 %v3515
    %4902 = vmatpush1.bf16.msra.mxu0 %v3514
    %4903 = vmatprep.subr.bf16.mxu0 %v3521
    %4904 = vmatpush1.bf16.msra.mxu0 %v3520
    %4905 = vmatprep.subr.bf16.mxu0 %v3527
    %4906 = vmatpush1.bf16.msra.mxu0 %v3526
    %4907 = vmatprep.subr.bf16.mxu0 %v3533
    %4908 = vmatpush1.bf16.msra.mxu0 %v3532
    %4909 = vmatprep.subr.bf16.mxu0 %v3539
    %4910 = vmatpush1.bf16.msra.mxu0 %v3538
    %4911 = vmatprep.subr.bf16.mxu0 %v3545
    %4912 = vmatpush1.bf16.msra.mxu0 %v3544
    %4913 = vmatprep.subr.bf16.mxu0 %v3551
    %4914 = vmatpush1.bf16.msra.mxu0 %v3550
    %4915 = vmatprep.subr.bf16.mxu0 %v3557
    %4916 = vmatpush1.bf16.msra.mxu0 %v3556
    %4917 = vmatprep.subr.bf16.mxu0 %v3563
    %4918 = vmatpush1.bf16.msra.mxu0 %v3562
    %4919 = vmatprep.subr.bf16.mxu0 %v3569
    %4920 = vmatpush1.bf16.msra.mxu0 %v3568
    %4921 = vmatprep.subr.bf16.mxu0 %v3575
    %4922 = vmatpush1.bf16.msra.mxu0 %v3574
    %4923 = vmatprep.subr.bf16.mxu0 %v3581
    %4924 = vmatpush1.bf16.msra.mxu0 %v3580
    %4925 = vmatprep.subr.bf16.mxu0 %v3587
    %4926 = vmatpush1.bf16.msra.mxu0 %v3586
    %4927 = vmatprep.subr.bf16.mxu0 %v3593
    %4928 = vmatpush1.bf16.msra.mxu0 %v3592
    %4929 = vmatprep.subr.bf16.mxu0 %v3599
    %4930 = vmatpush1.bf16.msra.mxu0 %v3598
    %4931 = vmatprep.subr.bf16.mxu0 %v3605
    %4932 = vmatpush1.bf16.msra.mxu0 %v3604
    %4933 = vmatprep.mubr.bf16.mxu0 %v4900
    %4934 = vmatmul.mubr.bf16.gmra.mrb[0].mxu0 %v4801
    %v4935 = vpop.f32.mrb[0].mxu0
    %v4936 = vadd.f32 %v3710, %v4935
    %v4937 = vpop.f32.mrb[0].mxu0
    %v4938 = vadd.f32 %v3714, %v4937
    %v4939 = vpop.f32.mrb[0].mxu0
    %v4940 = vpop.f32.mrb[0].mxu0
    %4941 = vdwg.mxu0
    %4942 = vmatprep.subr.bf16.mxu0 %v3517
    %4943 = vmatpush1.bf16.msra.mxu0 %v3516
    %4944 = vmatprep.subr.bf16.mxu0 %v3523
    %4945 = vmatpush1.bf16.msra.mxu0 %v3522
    %4946 = vmatprep.subr.bf16.mxu0 %v3529
    %4947 = vmatpush1.bf16.msra.mxu0 %v3528
    %4948 = vmatprep.subr.bf16.mxu0 %v3535
    %4949 = vmatpush1.bf16.msra.mxu0 %v3534
    %4950 = vmatprep.subr.bf16.mxu0 %v3541
    %4951 = vmatpush1.bf16.msra.mxu0 %v3540
    %4952 = vmatprep.subr.bf16.mxu0 %v3547
    %4953 = vmatpush1.bf16.msra.mxu0 %v3546
    %4954 = vmatprep.subr.bf16.mxu0 %v3553
    %4955 = vmatpush1.bf16.msra.mxu0 %v3552
    %4956 = vmatprep.subr.bf16.mxu0 %v3559
    %4957 = vmatpush1.bf16.msra.mxu0 %v3558
    %4958 = vmatprep.subr.bf16.mxu0 %v3565
    %4959 = vmatpush1.bf16.msra.mxu0 %v3564
    %4960 = vmatprep.subr.bf16.mxu0 %v3571
    %4961 = vmatpush1.bf16.msra.mxu0 %v3570
    %4962 = vmatprep.subr.bf16.mxu0 %v3577
    %4963 = vmatpush1.bf16.msra.mxu0 %v3576
    %4964 = vmatprep.subr.bf16.mxu0 %v3583
    %4965 = vmatpush1.bf16.msra.mxu0 %v3582
    %4966 = vmatprep.subr.bf16.mxu0 %v3589
    %4967 = vmatpush1.bf16.msra.mxu0 %v3588
    %4968 = vmatprep.subr.bf16.mxu0 %v3595
    %4969 = vmatpush1.bf16.msra.mxu0 %v3594
    %4970 = vmatprep.subr.bf16.mxu0 %v3601
    %4971 = vmatpush1.bf16.msra.mxu0 %v3600
    %4972 = vmatprep.subr.bf16.mxu0 %v3607
    %4973 = vmatpush1.bf16.msra.mxu0 %v3606
    %4974 = vmatprep.mubr.bf16.mxu0 %v4900
    %4975 = vmatmul.mubr.bf16.gmra.mrb[0].mxu0 %v4801
    %v4976 = vpop.f32.mrb[0].mxu0
    %v4977 = vadd.f32 %v3718, %v4976
    %v4978 = vpop.f32.mrb[0].mxu0
    %v4979 = vadd.f32 %v3722, %v4978
    %v4980 = vpop.f32.mrb[0].mxu0
    %v4981 = vpop.f32.mrb[0].mxu0
    %4982 = vdwg.mxu0
    %4983 = vmatprep.subr.bf16.mxu0 %v3519
    %4984 = vmatpush1.bf16.msra.mxu0 %v3518
    %4985 = vmatprep.subr.bf16.mxu0 %v3525
    %4986 = vmatpush1.bf16.msra.mxu0 %v3524
    %4987 = vmatprep.subr.bf16.mxu0 %v3531
    %4988 = vmatpush1.bf16.msra.mxu0 %v3530
    %4989 = vmatprep.subr.bf16.mxu0 %v3537
    %4990 = vmatpush1.bf16.msra.mxu0 %v3536
    %4991 = vmatprep.subr.bf16.mxu0 %v3543
    %4992 = vmatpush1.bf16.msra.mxu0 %v3542
    %4993 = vmatprep.subr.bf16.mxu0 %v3549
    %4994 = vmatpush1.bf16.msra.mxu0 %v3548
    %4995 = vmatprep.subr.bf16.mxu0 %v3555
    %4996 = vmatpush1.bf16.msra.mxu0 %v3554
    %4997 = vmatprep.subr.bf16.mxu0 %v3561
    %4998 = vmatpush1.bf16.msra.mxu0 %v3560
    %4999 = vmatprep.subr.bf16.mxu0 %v3567
    %5000 = vmatpush1.bf16.msra.mxu0 %v3566
    %5001 = vmatprep.subr.bf16.mxu0 %v3573
    %5002 = vmatpush1.bf16.msra.mxu0 %v3572
    %5003 = vmatprep.subr.bf16.mxu0 %v3579
    %5004 = vmatpush1.bf16.msra.mxu0 %v3578
    %5005 = vmatprep.subr.bf16.mxu0 %v3585
    %5006 = vmatpush1.bf16.msra.mxu0 %v3584
    %5007 = vmatprep.subr.bf16.mxu0 %v3591
    %5008 = vmatpush1.bf16.msra.mxu0 %v3590
    %5009 = vmatprep.subr.bf16.mxu0 %v3597
    %5010 = vmatpush1.bf16.msra.mxu0 %v3596
    %5011 = vmatprep.subr.bf16.mxu0 %v3603
    %5012 = vmatpush1.bf16.msra.mxu0 %v3602
    %5013 = vmatprep.subr.bf16.mxu0 %v3609
    %5014 = vmatpush1.bf16.msra.mxu0 %v3608
    %5015 = vmatprep.mubr.bf16.mxu0 %v4900
    %5016 = vmatmul.mubr.bf16.gmra.mrb[0].mxu0 %v4801
    %v5017 = vpop.f32.mrb[0].mxu0
    %v5018 = vadd.f32 %v3726, %v5017
    %v5019 = vpop.f32.mrb[0].mxu0
    %v5020 = vadd.f32 %v3730, %v5019
    %v5021 = vpop.f32.mrb[0].mxu0
    %v5022 = vpop.f32.mrb[0].mxu0
    %5023 = vdwg.mxu0
    %s5024 = scalar_lea.vmem [#allocation7], 4
    %v5025 = vld [vmem:[%s5024] ss:$8 sm:$0x7]
    %v5026 = vadd.f32 %v5025, %v4936
    %v5027 = vmul.f32 %v5026, 0.5
    %v5028 = vtanh.pop %v5027
    %v5029 = vmul.f32 %v5028, 0.5
    %v5030 = vadd.f32 %v5029, 0.5
    %v5032 = vrot.slane %v5025, 1
    %v5034 = vadd.f32 %v5032, %v4938
    %v5035 = vmul.f32 %v5034, 0.5
    %v5036 = vtanh.pop %v5035
    %v5037 = vmul.f32 %v5036, 0.5
    %v5038 = vadd.f32 %v5037, 0.5
    %v5039 = vmul.f32 %v5030, %v4977
    %v5040 = vrot.slane %v5025, 2
    %v5042 = vadd.f32 %v5040, %v5039
    %v5043 = vtanh.pop %v5042
    %v5044 = vsub.f32 1.0, %v5038
    %v5045 = vmul.f32 %v5044, %v5043
    %v5046 = vmul.f32 %v5038, %v4800
    %v5047 = vadd.f32 %v5045, %v5046
    %v5048 = vpack.c.bf16 %v5047, %v5047
    %5049 = vmatprep.subr.bf16.mxu0 %v3998
    %5050 = vmatpush1.bf16.msra.mxu0 %v3997
    %5051 = vmatprep.subr.bf16.mxu0 %v4001
    %5052 = vmatpush1.bf16.msra.mxu0 %v4000
    %5053 = vmatprep.subr.bf16.mxu0 %v4004
    %5054 = vmatpush1.bf16.msra.mxu0 %v4003
    %5055 = vmatprep.subr.bf16.mxu0 %v4007
    %5056 = vmatpush1.bf16.msra.mxu0 %v4006
    %5057 = vmatprep.subr.bf16.mxu0 %v4010
    %5058 = vmatpush1.bf16.msra.mxu0 %v4009
    %5059 = vmatprep.subr.bf16.mxu0 %v4013
    %5060 = vmatpush1.bf16.msra.mxu0 %v4012
    %5061 = vmatprep.subr.bf16.mxu0 %v4016
    %5062 = vmatpush1.bf16.msra.mxu0 %v4015
    %5063 = vmatprep.subr.bf16.mxu0 %v4019
    %5064 = vmatpush1.bf16.msra.mxu0 %v4018
    %5065 = vmatprep.subr.bf16.mxu0 0
    %5066 = vmatpush1.bf16.msra.mxu0 0
    %5067 = vmatprep.subr.bf16.mxu0 0
    %5068 = vmatpush1.bf16.msra.mxu0 0
    %5069 = vmatprep.subr.bf16.mxu0 0
    %5070 = vmatpush1.bf16.msra.mxu0 0
    %5071 = vmatprep.subr.bf16.mxu0 0
    %5072 = vmatpush1.bf16.msra.mxu0 0
    %5073 = vmatprep.subr.bf16.mxu0 0
    %5074 = vmatpush1.bf16.msra.mxu0 0
    %5075 = vmatprep.subr.bf16.mxu0 0
    %5076 = vmatpush1.bf16.msra.mxu0 0
    %5077 = vmatprep.subr.bf16.mxu0 0
    %5078 = vmatpush1.bf16.msra.mxu0 0
    %5079 = vmatprep.subr.bf16.mxu0 0
    %5080 = vmatpush1.bf16.msra.mxu0 0
    %5081 = vmatprep.mubr.bf16.mxu0 0
    %5082 = vmatmul.mubr.bf16.gmra.mrb[0].mxu0 %v5048
    %v5083 = vpop.f32.mrb[0].mxu0
    %v5084 = vadd.f32 %v4049, %v5083
    %v5085 = vpop.f32.mrb[0].mxu0
    %v5086 = vadd.f32 %v4053, %v5085
    %v5087 = vpop.f32.mrb[0].mxu0
    %v5088 = vpop.f32.mrb[0].mxu0
    %5089 = vdwg.mxu0
    %5090 = vmatprep.subr.bf16.mxu0 0
    %5091 = vmatpush1.bf16.msra.mxu0 %v3999
    %5092 = vmatprep.subr.bf16.mxu0 0
    %5093 = vmatpush1.bf16.msra.mxu0 %v4002
    %5094 = vmatprep.subr.bf16.mxu0 0
    %5095 = vmatpush1.bf16.msra.mxu0 %v4005
    %5096 = vmatprep.subr.bf16.mxu0 0
    %5097 = vmatpush1.bf16.msra.mxu0 %v4008
    %5098 = vmatprep.subr.bf16.mxu0 0
    %5099 = vmatpush1.bf16.msra.mxu0 %v4011
    %5100 = vmatprep.subr.bf16.mxu0 0
    %5101 = vmatpush1.bf16.msra.mxu0 %v4014
    %5102 = vmatprep.subr.bf16.mxu0 0
    %5103 = vmatpush1.bf16.msra.mxu0 %v4017
    %5104 = vmatprep.subr.bf16.mxu0 0
    %5105 = vmatpush1.bf16.msra.mxu0 %v4020
    %5106 = vmatprep.subr.bf16.mxu0 0
    %5107 = vmatpush1.bf16.msra.mxu0 0
    %5108 = vmatprep.subr.bf16.mxu0 0
    %5109 = vmatpush1.bf16.msra.mxu0 0
    %5110 = vmatprep.subr.bf16.mxu0 0
    %5111 = vmatpush1.bf16.msra.mxu0 0
    %5112 = vmatprep.subr.bf16.mxu0 0
    %5113 = vmatpush1.bf16.msra.mxu0 0
    %5114 = vmatprep.subr.bf16.mxu0 0
    %5115 = vmatpush1.bf16.msra.mxu0 0
    %5116 = vmatprep.subr.bf16.mxu0 0
    %5117 = vmatpush1.bf16.msra.mxu0 0
    %5118 = vmatprep.subr.bf16.mxu0 0
    %5119 = vmatpush1.bf16.msra.mxu0 0
    %5120 = vmatprep.subr.bf16.mxu0 0
    %5121 = vmatpush1.bf16.msra.mxu0 0
    %5122 = vmatprep.mubr.bf16.mxu0 0
    %5123 = vmatmul.mubr.bf16.gmra.mrb[0].mxu0 %v5048
    %v5124 = vpop.f32.mrb[0].mxu0
    %v5125 = vadd.f32 %v4057, %v5124
    %v5126 = vpop.f32.mrb[0].mxu0
    %v5127 = vpop.f32.mrb[0].mxu0
    %v5128 = vpop.f32.mrb[0].mxu0
    %5129 = vdwg.mxu0
    %v5130 = vadd.f32 %v5084, %v4979
    %v5131 = vmul.f32 %v5130, 0.5
    %v5132 = vtanh.pop %v5131
    %v5133 = vmul.f32 %v5132, 0.5
    %v5134 = vadd.f32 %v5133, 0.5
    %v5135 = vadd.f32 %v5086, %v5018
    %v5136 = vmul.f32 %v5135, 0.5
    %v5137 = vtanh.pop %v5136
    %v5138 = vmul.f32 %v5137, 0.5
    %v5139 = vadd.f32 %v5138, 0.5
    %v5140 = vmul.f32 %v5134, %v5020
    %v5141 = vadd.f32 %v5125, %v5140
    %v5142 = vtanh.pop %v5141
    %v5143 = vsub.f32 1.0, %v5139
    %v5144 = vmul.f32 %v5143, %v5142
    %v5145 = vmul.f32 %v5139, %v4899
    %v5146 = vadd.f32 %v5144, %v5145
    %v5147 = vpack.c.bf16 %v5146, %v5146
    %5148 = vmatprep.subr.bf16.mxu0 %v3515
    %5149 = vmatpush1.bf16.msra.mxu0 %v3514
    %5150 = vmatprep.subr.bf16.mxu0 %v3521
    %5151 = vmatpush1.bf16.msra.mxu0 %v3520
    %5152 = vmatprep.subr.bf16.mxu0 %v3527
    %5153 = vmatpush1.bf16.msra.mxu0 %v3526
    %5154 = vmatprep.subr.bf16.mxu0 %v3533
    %5155 = vmatpush1.bf16.msra.mxu0 %v3532
    %5156 = vmatprep.subr.bf16.mxu0 %v3539
    %5157 = vmatpush1.bf16.msra.mxu0 %v3538
    %5158 = vmatprep.subr.bf16.mxu0 %v3545
    %5159 = vmatpush1.bf16.msra.mxu0 %v3544
    %5160 = vmatprep.subr.bf16.mxu0 %v3551
    %5161 = vmatpush1.bf16.msra.mxu0 %v3550
    %5162 = vmatprep.subr.bf16.mxu0 %v3557
    %5163 = vmatpush1.bf16.msra.mxu0 %v3556
    %5164 = vmatprep.subr.bf16.mxu0 %v3563
    %5165 = vmatpush1.bf16.msra.mxu0 %v3562
    %5166 = vmatprep.subr.bf16.mxu0 %v3569
    %5167 = vmatpush1.bf16.msra.mxu0 %v3568
    %5168 = vmatprep.subr.bf16.mxu0 %v3575
    %5169 = vmatpush1.bf16.msra.mxu0 %v3574
    %5170 = vmatprep.subr.bf16.mxu0 %v3581
    %5171 = vmatpush1.bf16.msra.mxu0 %v3580
    %5172 = vmatprep.subr.bf16.mxu0 %v3587
    %5173 = vmatpush1.bf16.msra.mxu0 %v3586
    %5174 = vmatprep.subr.bf16.mxu0 %v3593
    %5175 = vmatpush1.bf16.msra.mxu0 %v3592
    %5176 = vmatprep.subr.bf16.mxu0 %v3599
    %5177 = vmatpush1.bf16.msra.mxu0 %v3598
    %5178 = vmatprep.subr.bf16.mxu0 %v3605
    %5179 = vmatpush1.bf16.msra.mxu0 %v3604
    %5180 = vmatprep.mubr.bf16.mxu0 %v5147
    %5181 = vmatmul.mubr.bf16.gmra.mrb[0].mxu0 %v5048
    %v5182 = vpop.f32.mrb[0].mxu0
    %v5183 = vadd.f32 %v3710, %v5182
    %v5184 = vpop.f32.mrb[0].mxu0
    %v5185 = vadd.f32 %v3714, %v5184
    %v5186 = vpop.f32.mrb[0].mxu0
    %v5187 = vpop.f32.mrb[0].mxu0
    %5188 = vdwg.mxu0
    %5189 = vmatprep.subr.bf16.mxu0 %v3517
    %5190 = vmatpush1.bf16.msra.mxu0 %v3516
    %5191 = vmatprep.subr.bf16.mxu0 %v3523
    %5192 = vmatpush1.bf16.msra.mxu0 %v3522
    %5193 = vmatprep.subr.bf16.mxu0 %v3529
    %5194 = vmatpush1.bf16.msra.mxu0 %v3528
    %5195 = vmatprep.subr.bf16.mxu0 %v3535
    %5196 = vmatpush1.bf16.msra.mxu0 %v3534
    %5197 = vmatprep.subr.bf16.mxu0 %v3541
    %5198 = vmatpush1.bf16.msra.mxu0 %v3540
    %5199 = vmatprep.subr.bf16.mxu0 %v3547
    %5200 = vmatpush1.bf16.msra.mxu0 %v3546
    %5201 = vmatprep.subr.bf16.mxu0 %v3553
    %5202 = vmatpush1.bf16.msra.mxu0 %v3552
    %5203 = vmatprep.subr.bf16.mxu0 %v3559
    %5204 = vmatpush1.bf16.msra.mxu0 %v3558
    %5205 = vmatprep.subr.bf16.mxu0 %v3565
    %5206 = vmatpush1.bf16.msra.mxu0 %v3564
    %5207 = vmatprep.subr.bf16.mxu0 %v3571
    %5208 = vmatpush1.bf16.msra.mxu0 %v3570
    %5209 = vmatprep.subr.bf16.mxu0 %v3577
    %5210 = vmatpush1.bf16.msra.mxu0 %v3576
    %5211 = vmatprep.subr.bf16.mxu0 %v3583
    %5212 = vmatpush1.bf16.msra.mxu0 %v3582
    %5213 = vmatprep.subr.bf16.mxu0 %v3589
    %5214 = vmatpush1.bf16.msra.mxu0 %v3588
    %5215 = vmatprep.subr.bf16.mxu0 %v3595
    %5216 = vmatpush1.bf16.msra.mxu0 %v3594
    %5217 = vmatprep.subr.bf16.mxu0 %v3601
    %5218 = vmatpush1.bf16.msra.mxu0 %v3600
    %5219 = vmatprep.subr.bf16.mxu0 %v3607
    %5220 = vmatpush1.bf16.msra.mxu0 %v3606
    %5221 = vmatprep.mubr.bf16.mxu0 %v5147
    %5222 = vmatmul.mubr.bf16.gmra.mrb[0].mxu0 %v5048
    %v5223 = vpop.f32.mrb[0].mxu0
    %v5224 = vadd.f32 %v3718, %v5223
    %v5225 = vpop.f32.mrb[0].mxu0
    %v5226 = vadd.f32 %v3722, %v5225
    %v5227 = vpop.f32.mrb[0].mxu0
    %v5228 = vpop.f32.mrb[0].mxu0
    %5229 = vdwg.mxu0
    %5230 = vmatprep.subr.bf16.mxu0 %v3519
    %5231 = vmatpush1.bf16.msra.mxu0 %v3518
    %5232 = vmatprep.subr.bf16.mxu0 %v3525
    %5233 = vmatpush1.bf16.msra.mxu0 %v3524
    %5234 = vmatprep.subr.bf16.mxu0 %v3531
    %5235 = vmatpush1.bf16.msra.mxu0 %v3530
    %5236 = vmatprep.subr.bf16.mxu0 %v3537
    %5237 = vmatpush1.bf16.msra.mxu0 %v3536
    %5238 = vmatprep.subr.bf16.mxu0 %v3543
    %5239 = vmatpush1.bf16.msra.mxu0 %v3542
    %5240 = vmatprep.subr.bf16.mxu0 %v3549
    %5241 = vmatpush1.bf16.msra.mxu0 %v3548
    %5242 = vmatprep.subr.bf16.mxu0 %v3555
    %5243 = vmatpush1.bf16.msra.mxu0 %v3554
    %5244 = vmatprep.subr.bf16.mxu0 %v3561
    %5245 = vmatpush1.bf16.msra.mxu0 %v3560
    %5246 = vmatprep.subr.bf16.mxu0 %v3567
    %5247 = vmatpush1.bf16.msra.mxu0 %v3566
    %5248 = vmatprep.subr.bf16.mxu0 %v3573
    %5249 = vmatpush1.bf16.msra.mxu0 %v3572
    %5250 = vmatprep.subr.bf16.mxu0 %v3579
    %5251 = vmatpush1.bf16.msra.mxu0 %v3578
    %5252 = vmatprep.subr.bf16.mxu0 %v3585
    %5253 = vmatpush1.bf16.msra.mxu0 %v3584
    %5254 = vmatprep.subr.bf16.mxu0 %v3591
    %5255 = vmatpush1.bf16.msra.mxu0 %v3590
    %5256 = vmatprep.subr.bf16.mxu0 %v3597
    %5257 = vmatpush1.bf16.msra.mxu0 %v3596
    %5258 = vmatprep.subr.bf16.mxu0 %v3603
    %5259 = vmatpush1.bf16.msra.mxu0 %v3602
    %5260 = vmatprep.subr.bf16.mxu0 %v3609
    %5261 = vmatpush1.bf16.msra.mxu0 %v3608
    %5262 = vmatprep.mubr.bf16.mxu0 %v5147
    %5263 = vmatmul.mubr.bf16.gmra.mrb[0].mxu0 %v5048
    %v5264 = vpop.f32.mrb[0].mxu0
    %v5265 = vadd.f32 %v3726, %v5264
    %v5266 = vpop.f32.mrb[0].mxu0
    %v5267 = vadd.f32 %v3730, %v5266
    %v5268 = vpop.f32.mrb[0].mxu0
    %v5269 = vpop.f32.mrb[0].mxu0
    %5270 = vdwg.mxu0
    %s5271 = scalar_lea.vmem [#allocation7], 5
    %v5272 = vld [vmem:[%s5271] ss:$8 sm:$0x7]
    %v5273 = vadd.f32 %v5272, %v5183
    %v5274 = vmul.f32 %v5273, 0.5
    %v5275 = vtanh.pop %v5274
    %v5276 = vmul.f32 %v5275, 0.5
    %v5277 = vadd.f32 %v5276, 0.5
    %v5279 = vrot.slane %v5272, 1
    %v5281 = vadd.f32 %v5279, %v5185
    %v5282 = vmul.f32 %v5281, 0.5
    %v5283 = vtanh.pop %v5282
    %v5284 = vmul.f32 %v5283, 0.5
    %v5285 = vadd.f32 %v5284, 0.5
    %v5286 = vmul.f32 %v5277, %v5224
    %v5287 = vrot.slane %v5272, 2
    %v5289 = vadd.f32 %v5287, %v5286
    %v5290 = vtanh.pop %v5289
    %v5291 = vsub.f32 1.0, %v5285
    %v5292 = vmul.f32 %v5291, %v5290
    %v5293 = vmul.f32 %v5285, %v5047
    %v5294 = vadd.f32 %v5292, %v5293
    %v5295 = vpack.c.bf16 %v5294, %v5294
    %5296 = vmatprep.subr.bf16.mxu0 %v3998
    %5297 = vmatpush1.bf16.msra.mxu0 %v3997
    %5298 = vmatprep.subr.bf16.mxu0 %v4001
    %5299 = vmatpush1.bf16.msra.mxu0 %v4000
    %5300 = vmatprep.subr.bf16.mxu0 %v4004
    %5301 = vmatpush1.bf16.msra.mxu0 %v4003
    %5302 = vmatprep.subr.bf16.mxu0 %v4007
    %5303 = vmatpush1.bf16.msra.mxu0 %v4006
    %5304 = vmatprep.subr.bf16.mxu0 %v4010
    %5305 = vmatpush1.bf16.msra.mxu0 %v4009
    %5306 = vmatprep.subr.bf16.mxu0 %v4013
    %5307 = vmatpush1.bf16.msra.mxu0 %v4012
    %5308 = vmatprep.subr.bf16.mxu0 %v4016
    %5309 = vmatpush1.bf16.msra.mxu0 %v4015
    %5310 = vmatprep.subr.bf16.mxu0 %v4019
    %5311 = vmatpush1.bf16.msra.mxu0 %v4018
    %5312 = vmatprep.subr.bf16.mxu0 0
    %5313 = vmatpush1.bf16.msra.mxu0 0
    %5314 = vmatprep.subr.bf16.mxu0 0
    %5315 = vmatpush1.bf16.msra.mxu0 0
    %5316 = vmatprep.subr.bf16.mxu0 0
    %5317 = vmatpush1.bf16.msra.mxu0 0
    %5318 = vmatprep.subr.bf16.mxu0 0
    %5319 = vmatpush1.bf16.msra.mxu0 0
    %5320 = vmatprep.subr.bf16.mxu0 0
    %5321 = vmatpush1.bf16.msra.mxu0 0
    %5322 = vmatprep.subr.bf16.mxu0 0
    %5323 = vmatpush1.bf16.msra.mxu0 0
    %5324 = vmatprep.subr.bf16.mxu0 0
    %5325 = vmatpush1.bf16.msra.mxu0 0
    %5326 = vmatprep.subr.bf16.mxu0 0
    %5327 = vmatpush1.bf16.msra.mxu0 0
    %5328 = vmatprep.mubr.bf16.mxu0 0
    %5329 = vmatmul.mubr.bf16.gmra.mrb[0].mxu0 %v5295
    %v5330 = vpop.f32.mrb[0].mxu0
    %v5331 = vadd.f32 %v4049, %v5330
    %v5332 = vpop.f32.mrb[0].mxu0
    %v5333 = vadd.f32 %v4053, %v5332
    %v5334 = vpop.f32.mrb[0].mxu0
    %v5335 = vpop.f32.mrb[0].mxu0
    %5336 = vdwg.mxu0
    %5337 = vmatprep.subr.bf16.mxu0 0
    %5338 = vmatpush1.bf16.msra.mxu0 %v3999
    %5339 = vmatprep.subr.bf16.mxu0 0
    %5340 = vmatpush1.bf16.msra.mxu0 %v4002
    %5341 = vmatprep.subr.bf16.mxu0 0
    %5342 = vmatpush1.bf16.msra.mxu0 %v4005
    %5343 = vmatprep.subr.bf16.mxu0 0
    %5344 = vmatpush1.bf16.msra.mxu0 %v4008
    %5345 = vmatprep.subr.bf16.mxu0 0
    %5346 = vmatpush1.bf16.msra.mxu0 %v4011
    %5347 = vmatprep.subr.bf16.mxu0 0
    %5348 = vmatpush1.bf16.msra.mxu0 %v4014
    %5349 = vmatprep.subr.bf16.mxu0 0
    %5350 = vmatpush1.bf16.msra.mxu0 %v4017
    %5351 = vmatprep.subr.bf16.mxu0 0
    %5352 = vmatpush1.bf16.msra.mxu0 %v4020
    %5353 = vmatprep.subr.bf16.mxu0 0
    %5354 = vmatpush1.bf16.msra.mxu0 0
    %5355 = vmatprep.subr.bf16.mxu0 0
    %5356 = vmatpush1.bf16.msra.mxu0 0
    %5357 = vmatprep.subr.bf16.mxu0 0
    %5358 = vmatpush1.bf16.msra.mxu0 0
    %5359 = vmatprep.subr.bf16.mxu0 0
    %5360 = vmatpush1.bf16.msra.mxu0 0
    %5361 = vmatprep.subr.bf16.mxu0 0
    %5362 = vmatpush1.bf16.msra.mxu0 0
    %5363 = vmatprep.subr.bf16.mxu0 0
    %5364 = vmatpush1.bf16.msra.mxu0 0
    %5365 = vmatprep.subr.bf16.mxu0 0
    %5366 = vmatpush1.bf16.msra.mxu0 0
    %5367 = vmatprep.subr.bf16.mxu0 0
    %5368 = vmatpush1.bf16.msra.mxu0 0
    %5369 = vmatprep.mubr.bf16.mxu0 0
    %5370 = vmatmul.mubr.bf16.gmra.mrb[0].mxu0 %v5295
    %v5371 = vpop.f32.mrb[0].mxu0
    %v5372 = vadd.f32 %v4057, %v5371
    %v5373 = vpop.f32.mrb[0].mxu0
    %v5374 = vpop.f32.mrb[0].mxu0
    %v5375 = vpop.f32.mrb[0].mxu0
    %5376 = vdwg.mxu0
    %v5377 = vadd.f32 %v5331, %v5226
    %v5378 = vmul.f32 %v5377, 0.5
    %v5379 = vtanh.pop %v5378
    %v5380 = vmul.f32 %v5379, 0.5
    %v5381 = vadd.f32 %v5380, 0.5
    %v5382 = vadd.f32 %v5333, %v5265
    %v5383 = vmul.f32 %v5382, 0.5
    %v5384 = vtanh.pop %v5383
    %v5385 = vmul.f32 %v5384, 0.5
    %v5386 = vadd.f32 %v5385, 0.5
    %v5387 = vmul.f32 %v5381, %v5267
    %v5388 = vadd.f32 %v5372, %v5387
    %v5389 = vtanh.pop %v5388
    %v5390 = vsub.f32 1.0, %v5386
    %v5391 = vmul.f32 %v5390, %v5389
    %v5392 = vmul.f32 %v5386, %v5146
    %v5393 = vadd.f32 %v5391, %v5392
    %v5394 = vpack.c.bf16 %v5393, %v5393
    %5395 = vmatprep.subr.bf16.mxu0 %v3515
    %5396 = vmatpush1.bf16.msra.mxu0 %v3514
    %5397 = vmatprep.subr.bf16.mxu0 %v3521
    %5398 = vmatpush1.bf16.msra.mxu0 %v3520
    %5399 = vmatprep.subr.bf16.mxu0 %v3527
    %5400 = vmatpush1.bf16.msra.mxu0 %v3526
    %5401 = vmatprep.subr.bf16.mxu0 %v3533
    %5402 = vmatpush1.bf16.msra.mxu0 %v3532
    %5403 = vmatprep.subr.bf16.mxu0 %v3539
    %5404 = vmatpush1.bf16.msra.mxu0 %v3538
    %5405 = vmatprep.subr.bf16.mxu0 %v3545
    %5406 = vmatpush1.bf16.msra.mxu0 %v3544
    %5407 = vmatprep.subr.bf16.mxu0 %v3551
    %5408 = vmatpush1.bf16.msra.mxu0 %v3550
    %5409 = vmatprep.subr.bf16.mxu0 %v3557
    %5410 = vmatpush1.bf16.msra.mxu0 %v3556
    %5411 = vmatprep.subr.bf16.mxu0 %v3563
    %5412 = vmatpush1.bf16.msra.mxu0 %v3562
    %5413 = vmatprep.subr.bf16.mxu0 %v3569
    %5414 = vmatpush1.bf16.msra.mxu0 %v3568
    %5415 = vmatprep.subr.bf16.mxu0 %v3575
    %5416 = vmatpush1.bf16.msra.mxu0 %v3574
    %5417 = vmatprep.subr.bf16.mxu0 %v3581
    %5418 = vmatpush1.bf16.msra.mxu0 %v3580
    %5419 = vmatprep.subr.bf16.mxu0 %v3587
    %5420 = vmatpush1.bf16.msra.mxu0 %v3586
    %5421 = vmatprep.subr.bf16.mxu0 %v3593
    %5422 = vmatpush1.bf16.msra.mxu0 %v3592
    %5423 = vmatprep.subr.bf16.mxu0 %v3599
    %5424 = vmatpush1.bf16.msra.mxu0 %v3598
    %5425 = vmatprep.subr.bf16.mxu0 %v3605
    %5426 = vmatpush1.bf16.msra.mxu0 %v3604
    %5427 = vmatprep.mubr.bf16.mxu0 %v5394
    %5428 = vmatmul.mubr.bf16.gmra.mrb[0].mxu0 %v5295
    %v5429 = vpop.f32.mrb[0].mxu0
    %v5430 = vadd.f32 %v3710, %v5429
    %v5431 = vpop.f32.mrb[0].mxu0
    %v5432 = vadd.f32 %v3714, %v5431
    %v5433 = vpop.f32.mrb[0].mxu0
    %v5434 = vpop.f32.mrb[0].mxu0
    %5435 = vdwg.mxu0
    %5436 = vmatprep.subr.bf16.mxu0 %v3517
    %5437 = vmatpush1.bf16.msra.mxu0 %v3516
    %5438 = vmatprep.subr.bf16.mxu0 %v3523
    %5439 = vmatpush1.bf16.msra.mxu0 %v3522
    %5440 = vmatprep.subr.bf16.mxu0 %v3529
    %5441 = vmatpush1.bf16.msra.mxu0 %v3528
    %5442 = vmatprep.subr.bf16.mxu0 %v3535
    %5443 = vmatpush1.bf16.msra.mxu0 %v3534
    %5444 = vmatprep.subr.bf16.mxu0 %v3541
    %5445 = vmatpush1.bf16.msra.mxu0 %v3540
    %5446 = vmatprep.subr.bf16.mxu0 %v3547
    %5447 = vmatpush1.bf16.msra.mxu0 %v3546
    %5448 = vmatprep.subr.bf16.mxu0 %v3553
    %5449 = vmatpush1.bf16.msra.mxu0 %v3552
    %5450 = vmatprep.subr.bf16.mxu0 %v3559
    %5451 = vmatpush1.bf16.msra.mxu0 %v3558
    %5452 = vmatprep.subr.bf16.mxu0 %v3565
    %5453 = vmatpush1.bf16.msra.mxu0 %v3564
    %5454 = vmatprep.subr.bf16.mxu0 %v3571
    %5455 = vmatpush1.bf16.msra.mxu0 %v3570
    %5456 = vmatprep.subr.bf16.mxu0 %v3577
    %5457 = vmatpush1.bf16.msra.mxu0 %v3576
    %5458 = vmatprep.subr.bf16.mxu0 %v3583
    %5459 = vmatpush1.bf16.msra.mxu0 %v3582
    %5460 = vmatprep.subr.bf16.mxu0 %v3589
    %5461 = vmatpush1.bf16.msra.mxu0 %v3588
    %5462 = vmatprep.subr.bf16.mxu0 %v3595
    %5463 = vmatpush1.bf16.msra.mxu0 %v3594
    %5464 = vmatprep.subr.bf16.mxu0 %v3601
    %5465 = vmatpush1.bf16.msra.mxu0 %v3600
    %5466 = vmatprep.subr.bf16.mxu0 %v3607
    %5467 = vmatpush1.bf16.msra.mxu0 %v3606
    %5468 = vmatprep.mubr.bf16.mxu0 %v5394
    %5469 = vmatmul.mubr.bf16.gmra.mrb[0].mxu0 %v5295
    %v5470 = vpop.f32.mrb[0].mxu0
    %v5471 = vadd.f32 %v3718, %v5470
    %v5472 = vpop.f32.mrb[0].mxu0
    %v5473 = vadd.f32 %v3722, %v5472
    %v5474 = vpop.f32.mrb[0].mxu0
    %v5475 = vpop.f32.mrb[0].mxu0
    %5476 = vdwg.mxu0
    %5477 = vmatprep.subr.bf16.mxu0 %v3519
    %5478 = vmatpush1.bf16.msra.mxu0 %v3518
    %5479 = vmatprep.subr.bf16.mxu0 %v3525
    %5480 = vmatpush1.bf16.msra.mxu0 %v3524
    %5481 = vmatprep.subr.bf16.mxu0 %v3531
    %5482 = vmatpush1.bf16.msra.mxu0 %v3530
    %5483 = vmatprep.subr.bf16.mxu0 %v3537
    %5484 = vmatpush1.bf16.msra.mxu0 %v3536
    %5485 = vmatprep.subr.bf16.mxu0 %v3543
    %5486 = vmatpush1.bf16.msra.mxu0 %v3542
    %5487 = vmatprep.subr.bf16.mxu0 %v3549
    %5488 = vmatpush1.bf16.msra.mxu0 %v3548
    %5489 = vmatprep.subr.bf16.mxu0 %v3555
    %5490 = vmatpush1.bf16.msra.mxu0 %v3554
    %5491 = vmatprep.subr.bf16.mxu0 %v3561
    %5492 = vmatpush1.bf16.msra.mxu0 %v3560
    %5493 = vmatprep.subr.bf16.mxu0 %v3567
    %5494 = vmatpush1.bf16.msra.mxu0 %v3566
    %5495 = vmatprep.subr.bf16.mxu0 %v3573
    %5496 = vmatpush1.bf16.msra.mxu0 %v3572
    %5497 = vmatprep.subr.bf16.mxu0 %v3579
    %5498 = vmatpush1.bf16.msra.mxu0 %v3578
    %5499 = vmatprep.subr.bf16.mxu0 %v3585
    %5500 = vmatpush1.bf16.msra.mxu0 %v3584
    %5501 = vmatprep.subr.bf16.mxu0 %v3591
    %5502 = vmatpush1.bf16.msra.mxu0 %v3590
    %5503 = vmatprep.subr.bf16.mxu0 %v3597
    %5504 = vmatpush1.bf16.msra.mxu0 %v3596
    %5505 = vmatprep.subr.bf16.mxu0 %v3603
    %5506 = vmatpush1.bf16.msra.mxu0 %v3602
    %5507 = vmatprep.subr.bf16.mxu0 %v3609
    %5508 = vmatpush1.bf16.msra.mxu0 %v3608
    %5509 = vmatprep.mubr.bf16.mxu0 %v5394
    %5510 = vmatmul.mubr.bf16.gmra.mrb[0].mxu0 %v5295
    %v5511 = vpop.f32.mrb[0].mxu0
    %v5512 = vadd.f32 %v3726, %v5511
    %v5513 = vpop.f32.mrb[0].mxu0
    %v5514 = vadd.f32 %v3730, %v5513
    %v5515 = vpop.f32.mrb[0].mxu0
    %v5516 = vpop.f32.mrb[0].mxu0
    %5517 = vdwg.mxu0
    %s5518 = scalar_lea.vmem [#allocation7], 6
    %v5519 = vld [vmem:[%s5518] ss:$8 sm:$0x7]
    %v5520 = vadd.f32 %v5519, %v5430
    %v5521 = vmul.f32 %v5520, 0.5
    %v5522 = vtanh.pop %v5521
    %v5523 = vmul.f32 %v5522, 0.5
    %v5524 = vadd.f32 %v5523, 0.5
    %v5526 = vrot.slane %v5519, 1
    %v5528 = vadd.f32 %v5526, %v5432
    %v5529 = vmul.f32 %v5528, 0.5
    %v5530 = vtanh.pop %v5529
    %v5531 = vmul.f32 %v5530, 0.5
    %v5532 = vadd.f32 %v5531, 0.5
    %v5533 = vmul.f32 %v5524, %v5471
    %v5534 = vrot.slane %v5519, 2
    %v5536 = vadd.f32 %v5534, %v5533
    %v5537 = vtanh.pop %v5536
    %v5538 = vsub.f32 1.0, %v5532
    %v5539 = vmul.f32 %v5538, %v5537
    %v5540 = vmul.f32 %v5532, %v5294
    %v5541 = vadd.f32 %v5539, %v5540
    %v5542 = vpack.c.bf16 %v5541, %v5541
    %5543 = vmatprep.subr.bf16.mxu0 %v3998
    %5544 = vmatpush1.bf16.msra.mxu0 %v3997
    %5545 = vmatprep.subr.bf16.mxu0 %v4001
    %5546 = vmatpush1.bf16.msra.mxu0 %v4000
    %5547 = vmatprep.subr.bf16.mxu0 %v4004
    %5548 = vmatpush1.bf16.msra.mxu0 %v4003
    %5549 = vmatprep.subr.bf16.mxu0 %v4007
    %5550 = vmatpush1.bf16.msra.mxu0 %v4006
    %5551 = vmatprep.subr.bf16.mxu0 %v4010
    %5552 = vmatpush1.bf16.msra.mxu0 %v4009
    %5553 = vmatprep.subr.bf16.mxu0 %v4013
    %5554 = vmatpush1.bf16.msra.mxu0 %v4012
    %5555 = vmatprep.subr.bf16.mxu0 %v4016
    %5556 = vmatpush1.bf16.msra.mxu0 %v4015
    %5557 = vmatprep.subr.bf16.mxu0 %v4019
    %5558 = vmatpush1.bf16.msra.mxu0 %v4018
    %5559 = vmatprep.subr.bf16.mxu0 0
    %5560 = vmatpush1.bf16.msra.mxu0 0
    %5561 = vmatprep.subr.bf16.mxu0 0
    %5562 = vmatpush1.bf16.msra.mxu0 0
    %5563 = vmatprep.subr.bf16.mxu0 0
    %5564 = vmatpush1.bf16.msra.mxu0 0
    %5565 = vmatprep.subr.bf16.mxu0 0
    %5566 = vmatpush1.bf16.msra.mxu0 0
    %5567 = vmatprep.subr.bf16.mxu0 0
    %5568 = vmatpush1.bf16.msra.mxu0 0
    %5569 = vmatprep.subr.bf16.mxu0 0
    %5570 = vmatpush1.bf16.msra.mxu0 0
    %5571 = vmatprep.subr.bf16.mxu0 0
    %5572 = vmatpush1.bf16.msra.mxu0 0
    %5573 = vmatprep.subr.bf16.mxu0 0
    %5574 = vmatpush1.bf16.msra.mxu0 0
    %5575 = vmatprep.mubr.bf16.mxu0 0
    %5576 = vmatmul.mubr.bf16.gmra.mrb[0].mxu0 %v5542
    %v5577 = vpop.f32.mrb[0].mxu0
    %v5578 = vadd.f32 %v4049, %v5577
    %v5579 = vpop.f32.mrb[0].mxu0
    %v5580 = vadd.f32 %v4053, %v5579
    %v5581 = vpop.f32.mrb[0].mxu0
    %v5582 = vpop.f32.mrb[0].mxu0
    %5583 = vdwg.mxu0
    %5584 = vmatprep.subr.bf16.mxu0 0
    %5585 = vmatpush1.bf16.msra.mxu0 %v3999
    %5586 = vmatprep.subr.bf16.mxu0 0
    %5587 = vmatpush1.bf16.msra.mxu0 %v4002
    %5588 = vmatprep.subr.bf16.mxu0 0
    %5589 = vmatpush1.bf16.msra.mxu0 %v4005
    %5590 = vmatprep.subr.bf16.mxu0 0
    %5591 = vmatpush1.bf16.msra.mxu0 %v4008
    %5592 = vmatprep.subr.bf16.mxu0 0
    %5593 = vmatpush1.bf16.msra.mxu0 %v4011
    %5594 = vmatprep.subr.bf16.mxu0 0
    %5595 = vmatpush1.bf16.msra.mxu0 %v4014
    %5596 = vmatprep.subr.bf16.mxu0 0
    %5597 = vmatpush1.bf16.msra.mxu0 %v4017
    %5598 = vmatprep.subr.bf16.mxu0 0
    %5599 = vmatpush1.bf16.msra.mxu0 %v4020
    %5600 = vmatprep.subr.bf16.mxu0 0
    %5601 = vmatpush1.bf16.msra.mxu0 0
    %5602 = vmatprep.subr.bf16.mxu0 0
    %5603 = vmatpush1.bf16.msra.mxu0 0
    %5604 = vmatprep.subr.bf16.mxu0 0
    %5605 = vmatpush1.bf16.msra.mxu0 0
    %5606 = vmatprep.subr.bf16.mxu0 0
    %5607 = vmatpush1.bf16.msra.mxu0 0
    %5608 = vmatprep.subr.bf16.mxu0 0
    %5609 = vmatpush1.bf16.msra.mxu0 0
    %5610 = vmatprep.subr.bf16.mxu0 0
    %5611 = vmatpush1.bf16.msra.mxu0 0
    %5612 = vmatprep.subr.bf16.mxu0 0
    %5613 = vmatpush1.bf16.msra.mxu0 0
    %5614 = vmatprep.subr.bf16.mxu0 0
    %5615 = vmatpush1.bf16.msra.mxu0 0
    %5616 = vmatprep.mubr.bf16.mxu0 0
    %5617 = vmatmul.mubr.bf16.gmra.mrb[0].mxu0 %v5542
    %v5618 = vpop.f32.mrb[0].mxu0
    %v5619 = vadd.f32 %v4057, %v5618
    %v5620 = vpop.f32.mrb[0].mxu0
    %v5621 = vpop.f32.mrb[0].mxu0
    %v5622 = vpop.f32.mrb[0].mxu0
    %5623 = vdwg.mxu0
    %v5624 = vadd.f32 %v5578, %v5473
    %v5625 = vmul.f32 %v5624, 0.5
    %v5626 = vtanh.pop %v5625
    %v5627 = vmul.f32 %v5626, 0.5
    %v5628 = vadd.f32 %v5627, 0.5
    %v5629 = vadd.f32 %v5580, %v5512
    %v5630 = vmul.f32 %v5629, 0.5
    %v5631 = vtanh.pop %v5630
    %v5632 = vmul.f32 %v5631, 0.5
    %v5633 = vadd.f32 %v5632, 0.5
    %v5634 = vmul.f32 %v5628, %v5514
    %v5635 = vadd.f32 %v5619, %v5634
    %v5636 = vtanh.pop %v5635
    %v5637 = vsub.f32 1.0, %v5633
    %v5638 = vmul.f32 %v5637, %v5636
    %v5639 = vmul.f32 %v5633, %v5393
    %v5640 = vadd.f32 %v5638, %v5639
    %v5641 = vpack.c.bf16 %v5640, %v5640
    %5642 = vmatprep.subr.bf16.mxu0 %v3515
    %5643 = vmatpush1.bf16.msra.mxu0 %v3514
    %5644 = vmatprep.subr.bf16.mxu0 %v3521
    %5645 = vmatpush1.bf16.msra.mxu0 %v3520
    %5646 = vmatprep.subr.bf16.mxu0 %v3527
    %5647 = vmatpush1.bf16.msra.mxu0 %v3526
    %5648 = vmatprep.subr.bf16.mxu0 %v3533
    %5649 = vmatpush1.bf16.msra.mxu0 %v3532
    %5650 = vmatprep.subr.bf16.mxu0 %v3539
    %5651 = vmatpush1.bf16.msra.mxu0 %v3538
    %5652 = vmatprep.subr.bf16.mxu0 %v3545
    %5653 = vmatpush1.bf16.msra.mxu0 %v3544
    %5654 = vmatprep.subr.bf16.mxu0 %v3551
    %5655 = vmatpush1.bf16.msra.mxu0 %v3550
    %5656 = vmatprep.subr.bf16.mxu0 %v3557
    %5657 = vmatpush1.bf16.msra.mxu0 %v3556
    %5658 = vmatprep.subr.bf16.mxu0 %v3563
    %5659 = vmatpush1.bf16.msra.mxu0 %v3562
    %5660 = vmatprep.subr.bf16.mxu0 %v3569
    %5661 = vmatpush1.bf16.msra.mxu0 %v3568
    %5662 = vmatprep.subr.bf16.mxu0 %v3575
    %5663 = vmatpush1.bf16.msra.mxu0 %v3574
    %5664 = vmatprep.subr.bf16.mxu0 %v3581
    %5665 = vmatpush1.bf16.msra.mxu0 %v3580
    %5666 = vmatprep.subr.bf16.mxu0 %v3587
    %5667 = vmatpush1.bf16.msra.mxu0 %v3586
    %5668 = vmatprep.subr.bf16.mxu0 %v3593
    %5669 = vmatpush1.bf16.msra.mxu0 %v3592
    %5670 = vmatprep.subr.bf16.mxu0 %v3599
    %5671 = vmatpush1.bf16.msra.mxu0 %v3598
    %5672 = vmatprep.subr.bf16.mxu0 %v3605
    %5673 = vmatpush1.bf16.msra.mxu0 %v3604
    %5674 = vmatprep.mubr.bf16.mxu0 %v5641
    %5675 = vmatmul.mubr.bf16.gmra.mrb[0].mxu0 %v5542
    %v5676 = vpop.f32.mrb[0].mxu0
    %v5677 = vadd.f32 %v3710, %v5676
    %v5678 = vpop.f32.mrb[0].mxu0
    %v5679 = vadd.f32 %v3714, %v5678
    %v5680 = vpop.f32.mrb[0].mxu0
    %v5681 = vpop.f32.mrb[0].mxu0
    %5682 = vdwg.mxu0
    %5683 = vmatprep.subr.bf16.mxu0 %v3517
    %5684 = vmatpush1.bf16.msra.mxu0 %v3516
    %5685 = vmatprep.subr.bf16.mxu0 %v3523
    %5686 = vmatpush1.bf16.msra.mxu0 %v3522
    %5687 = vmatprep.subr.bf16.mxu0 %v3529
    %5688 = vmatpush1.bf16.msra.mxu0 %v3528
    %5689 = vmatprep.subr.bf16.mxu0 %v3535
    %5690 = vmatpush1.bf16.msra.mxu0 %v3534
    %5691 = vmatprep.subr.bf16.mxu0 %v3541
    %5692 = vmatpush1.bf16.msra.mxu0 %v3540
    %5693 = vmatprep.subr.bf16.mxu0 %v3547
    %5694 = vmatpush1.bf16.msra.mxu0 %v3546
    %5695 = vmatprep.subr.bf16.mxu0 %v3553
    %5696 = vmatpush1.bf16.msra.mxu0 %v3552
    %5697 = vmatprep.subr.bf16.mxu0 %v3559
    %5698 = vmatpush1.bf16.msra.mxu0 %v3558
    %5699 = vmatprep.subr.bf16.mxu0 %v3565
    %5700 = vmatpush1.bf16.msra.mxu0 %v3564
    %5701 = vmatprep.subr.bf16.mxu0 %v3571
    %5702 = vmatpush1.bf16.msra.mxu0 %v3570
    %5703 = vmatprep.subr.bf16.mxu0 %v3577
    %5704 = vmatpush1.bf16.msra.mxu0 %v3576
    %5705 = vmatprep.subr.bf16.mxu0 %v3583
    %5706 = vmatpush1.bf16.msra.mxu0 %v3582
    %5707 = vmatprep.subr.bf16.mxu0 %v3589
    %5708 = vmatpush1.bf16.msra.mxu0 %v3588
    %5709 = vmatprep.subr.bf16.mxu0 %v3595
    %5710 = vmatpush1.bf16.msra.mxu0 %v3594
    %5711 = vmatprep.subr.bf16.mxu0 %v3601
    %5712 = vmatpush1.bf16.msra.mxu0 %v3600
    %5713 = vmatprep.subr.bf16.mxu0 %v3607
    %5714 = vmatpush1.bf16.msra.mxu0 %v3606
    %5715 = vmatprep.mubr.bf16.mxu0 %v5641
    %5716 = vmatmul.mubr.bf16.gmra.mrb[0].mxu0 %v5542
    %v5717 = vpop.f32.mrb[0].mxu0
    %v5718 = vadd.f32 %v3718, %v5717
    %v5719 = vpop.f32.mrb[0].mxu0
    %v5720 = vadd.f32 %v3722, %v5719
    %v5721 = vpop.f32.mrb[0].mxu0
    %v5722 = vpop.f32.mrb[0].mxu0
    %5723 = vdwg.mxu0
    %5724 = vmatprep.subr.bf16.mxu0 %v3519
    %5725 = vmatpush1.bf16.msra.mxu0 %v3518
    %5726 = vmatprep.subr.bf16.mxu0 %v3525
    %5727 = vmatpush1.bf16.msra.mxu0 %v3524
    %5728 = vmatprep.subr.bf16.mxu0 %v3531
    %5729 = vmatpush1.bf16.msra.mxu0 %v3530
    %5730 = vmatprep.subr.bf16.mxu0 %v3537
    %5731 = vmatpush1.bf16.msra.mxu0 %v3536
    %5732 = vmatprep.subr.bf16.mxu0 %v3543
    %5733 = vmatpush1.bf16.msra.mxu0 %v3542
    %5734 = vmatprep.subr.bf16.mxu0 %v3549
    %5735 = vmatpush1.bf16.msra.mxu0 %v3548
    %5736 = vmatprep.subr.bf16.mxu0 %v3555
    %5737 = vmatpush1.bf16.msra.mxu0 %v3554
    %5738 = vmatprep.subr.bf16.mxu0 %v3561
    %5739 = vmatpush1.bf16.msra.mxu0 %v3560
    %5740 = vmatprep.subr.bf16.mxu0 %v3567
    %5741 = vmatpush1.bf16.msra.mxu0 %v3566
    %5742 = vmatprep.subr.bf16.mxu0 %v3573
    %5743 = vmatpush1.bf16.msra.mxu0 %v3572
    %5744 = vmatprep.subr.bf16.mxu0 %v3579
    %5745 = vmatpush1.bf16.msra.mxu0 %v3578
    %5746 = vmatprep.subr.bf16.mxu0 %v3585
    %5747 = vmatpush1.bf16.msra.mxu0 %v3584
    %5748 = vmatprep.subr.bf16.mxu0 %v3591
    %5749 = vmatpush1.bf16.msra.mxu0 %v3590
    %5750 = vmatprep.subr.bf16.mxu0 %v3597
    %5751 = vmatpush1.bf16.msra.mxu0 %v3596
    %5752 = vmatprep.subr.bf16.mxu0 %v3603
    %5753 = vmatpush1.bf16.msra.mxu0 %v3602
    %5754 = vmatprep.subr.bf16.mxu0 %v3609
    %5755 = vmatpush1.bf16.msra.mxu0 %v3608
    %5756 = vmatprep.mubr.bf16.mxu0 %v5641
    %5757 = vmatmul.mubr.bf16.gmra.mrb[0].mxu0 %v5542
    %v5758 = vpop.f32.mrb[0].mxu0
    %v5759 = vadd.f32 %v3726, %v5758
    %v5760 = vpop.f32.mrb[0].mxu0
    %v5761 = vadd.f32 %v3730, %v5760
    %v5762 = vpop.f32.mrb[0].mxu0
    %v5763 = vpop.f32.mrb[0].mxu0
    %5764 = vdwg.mxu0
    %s5765 = scalar_lea.vmem [#allocation7], 7
    %v5766 = vld [vmem:[%s5765] ss:$8 sm:$0x7]
    %v5767 = vadd.f32 %v5766, %v5677
    %v5768 = vmul.f32 %v5767, 0.5
    %v5769 = vtanh.pop %v5768
    %v5770 = vmul.f32 %v5769, 0.5
    %v5771 = vadd.f32 %v5770, 0.5
    %v5773 = vrot.slane %v5766, 1
    %v5775 = vadd.f32 %v5773, %v5679
    %v5776 = vmul.f32 %v5775, 0.5
    %v5777 = vtanh.pop %v5776
    %v5778 = vmul.f32 %v5777, 0.5
    %v5779 = vadd.f32 %v5778, 0.5
    %v5780 = vmul.f32 %v5771, %v5718
    %v5781 = vrot.slane %v5766, 2
    %v5783 = vadd.f32 %v5781, %v5780
    %v5784 = vtanh.pop %v5783
    %v5785 = vsub.f32 1.0, %v5779
    %v5786 = vmul.f32 %v5785, %v5784
    %v5787 = vmul.f32 %v5779, %v5541
    %v5788 = vadd.f32 %v5786, %v5787
    %v5789 = vpack.c.bf16 %v5788, %v5788
    %5790 = vmatprep.subr.bf16.mxu0 %v3998
    %5791 = vmatpush1.bf16.msra.mxu0 %v3997
    %5792 = vmatprep.subr.bf16.mxu0 %v4001
    %5793 = vmatpush1.bf16.msra.mxu0 %v4000
    %5794 = vmatprep.subr.bf16.mxu0 %v4004
    %5795 = vmatpush1.bf16.msra.mxu0 %v4003
    %5796 = vmatprep.subr.bf16.mxu0 %v4007
    %5797 = vmatpush1.bf16.msra.mxu0 %v4006
    %5798 = vmatprep.subr.bf16.mxu0 %v4010
    %5799 = vmatpush1.bf16.msra.mxu0 %v4009
    %5800 = vmatprep.subr.bf16.mxu0 %v4013
    %5801 = vmatpush1.bf16.msra.mxu0 %v4012
    %5802 = vmatprep.subr.bf16.mxu0 %v4016
    %5803 = vmatpush1.bf16.msra.mxu0 %v4015
    %5804 = vmatprep.subr.bf16.mxu0 %v4019
    %5805 = vmatpush1.bf16.msra.mxu0 %v4018
    %5806 = vmatprep.subr.bf16.mxu0 0
    %5807 = vmatpush1.bf16.msra.mxu0 0
    %5808 = vmatprep.subr.bf16.mxu0 0
    %5809 = vmatpush1.bf16.msra.mxu0 0
    %5810 = vmatprep.subr.bf16.mxu0 0
    %5811 = vmatpush1.bf16.msra.mxu0 0
    %5812 = vmatprep.subr.bf16.mxu0 0
    %5813 = vmatpush1.bf16.msra.mxu0 0
    %5814 = vmatprep.subr.bf16.mxu0 0
    %5815 = vmatpush1.bf16.msra.mxu0 0
    %5816 = vmatprep.subr.bf16.mxu0 0
    %5817 = vmatpush1.bf16.msra.mxu0 0
    %5818 = vmatprep.subr.bf16.mxu0 0
    %5819 = vmatpush1.bf16.msra.mxu0 0
    %5820 = vmatprep.subr.bf16.mxu0 0
    %5821 = vmatpush1.bf16.msra.mxu0 0
    %5822 = vmatprep.mubr.bf16.mxu0 0
    %5823 = vmatmul.mubr.bf16.gmra.mrb[0].mxu0 %v5789
    %v5824 = vpop.f32.mrb[0].mxu0
    %v5825 = vadd.f32 %v4049, %v5824
    %v5826 = vpop.f32.mrb[0].mxu0
    %v5827 = vadd.f32 %v4053, %v5826
    %v5828 = vpop.f32.mrb[0].mxu0
    %v5829 = vpop.f32.mrb[0].mxu0
    %5830 = vdwg.mxu0
    %5831 = vmatprep.subr.bf16.mxu0 0
    %5832 = vmatpush1.bf16.msra.mxu0 %v3999
    %5833 = vmatprep.subr.bf16.mxu0 0
    %5834 = vmatpush1.bf16.msra.mxu0 %v4002
    %5835 = vmatprep.subr.bf16.mxu0 0
    %5836 = vmatpush1.bf16.msra.mxu0 %v4005
    %5837 = vmatprep.subr.bf16.mxu0 0
    %5838 = vmatpush1.bf16.msra.mxu0 %v4008
    %5839 = vmatprep.subr.bf16.mxu0 0
    %5840 = vmatpush1.bf16.msra.mxu0 %v4011
    %5841 = vmatprep.subr.bf16.mxu0 0
    %5842 = vmatpush1.bf16.msra.mxu0 %v4014
    %5843 = vmatprep.subr.bf16.mxu0 0
    %5844 = vmatpush1.bf16.msra.mxu0 %v4017
    %5845 = vmatprep.subr.bf16.mxu0 0
    %5846 = vmatpush1.bf16.msra.mxu0 %v4020
    %5847 = vmatprep.subr.bf16.mxu0 0
    %5848 = vmatpush1.bf16.msra.mxu0 0
    %5849 = vmatprep.subr.bf16.mxu0 0
    %5850 = vmatpush1.bf16.msra.mxu0 0
    %5851 = vmatprep.subr.bf16.mxu0 0
    %5852 = vmatpush1.bf16.msra.mxu0 0
    %5853 = vmatprep.subr.bf16.mxu0 0
    %5854 = vmatpush1.bf16.msra.mxu0 0
    %5855 = vmatprep.subr.bf16.mxu0 0
    %5856 = vmatpush1.bf16.msra.mxu0 0
    %5857 = vmatprep.subr.bf16.mxu0 0
    %5858 = vmatpush1.bf16.msra.mxu0 0
    %5859 = vmatprep.subr.bf16.mxu0 0
    %5860 = vmatpush1.bf16.msra.mxu0 0
    %5861 = vmatprep.subr.bf16.mxu0 0
    %5862 = vmatpush1.bf16.msra.mxu0 0
    %5863 = vmatprep.mubr.bf16.mxu0 0
    %5864 = vmatmul.mubr.bf16.gmra.mrb[0].mxu0 %v5789
    %v5865 = vpop.f32.mrb[0].mxu0
    %v5866 = vadd.f32 %v4057, %v5865
    %v5867 = vpop.f32.mrb[0].mxu0
    %v5868 = vpop.f32.mrb[0].mxu0
    %v5869 = vpop.f32.mrb[0].mxu0
    %5870 = vdwg.mxu0
    %v5871 = vadd.f32 %v5825, %v5720
    %v5872 = vmul.f32 %v5871, 0.5
    %v5873 = vtanh.pop %v5872
    %v5874 = vmul.f32 %v5873, 0.5
    %v5875 = vadd.f32 %v5874, 0.5
    %v5876 = vadd.f32 %v5827, %v5759
    %v5877 = vmul.f32 %v5876, 0.5
    %v5878 = vtanh.pop %v5877
    %v5879 = vmul.f32 %v5878, 0.5
    %v5880 = vadd.f32 %v5879, 0.5
    %v5881 = vmul.f32 %v5875, %v5761
    %v5882 = vadd.f32 %v5866, %v5881
    %v5883 = vtanh.pop %v5882
    %v5884 = vsub.f32 1.0, %v5880
    %v5885 = vmul.f32 %v5884, %v5883
    %v5886 = vmul.f32 %v5880, %v5640
    %v5887 = vadd.f32 %v5885, %v5886
    %v5888 = vpack.c.bf16 %v5887, %v5887
    %v5889 = vld [vmem:[%s15] sm:$0xf]
    %v5890 = vld [vmem:[%s15 + $0x4] sm:$0xf]
    %v5891 = vld [vmem:[%s15 + $0x8] sm:$0xf]
    %v5892 = vld [vmem:[%s15 + $0xc] sm:$0xf]
    %v5893 = vld [vmem:[%s15 + $0x10] sm:$0xf]
    %v5894 = vld [vmem:[%s15 + $0x14] sm:$0xf]
    %v5895 = vld [vmem:[%s15 + $0x18] sm:$0xf]
    %v5896 = vld [vmem:[%s15 + $0x1c] sm:$0xf]
    %v5897 = vld [vmem:[%s15 + $0x20] sm:$0xf]
    %v5898 = vld [vmem:[%s15 + $0x24] sm:$0xf]
    %v5899 = vld [vmem:[%s15 + $0x28] sm:$0xf]
    %v5900 = vld [vmem:[%s15 + $0x2c] sm:$0xf]
    %v5901 = vld [vmem:[%s15 + $0x30] sm:$0xf]
    %v5902 = vld [vmem:[%s15 + $0x34] sm:$0xf]
    %v5903 = vld [vmem:[%s15 + $0x38] sm:$0xf]
    %v5904 = vld [vmem:[%s15 + $0x3c] sm:$0xf]
    %v5905 = vld [vmem:[%s16] sm:$0x1]
    %v5922 = vunpack.c.l.b16 %v5889
    %v5923 = vunpack.c.l.b16 %v5890
    %v5924 = vunpack.c.l.b16 %v5891
    %v5925 = vunpack.c.l.b16 %v5892
    %v5926 = vunpack.c.l.b16 %v5893
    %v5927 = vunpack.c.l.b16 %v5894
    %v5928 = vunpack.c.l.b16 %v5895
    %v5929 = vunpack.c.l.b16 %v5896
    %v5930 = vunpack.c.l.b16 %v5897
    %v5931 = vunpack.c.l.b16 %v5898
    %v5932 = vunpack.c.l.b16 %v5899
    %v5933 = vunpack.c.l.b16 %v5900
    %v5934 = vunpack.c.l.b16 %v5901
    %v5935 = vunpack.c.l.b16 %v5902
    %v5936 = vunpack.c.l.b16 %v5903
    %v5937 = vunpack.c.l.b16 %v5904
    %v5938 = vpack.c.b16 %v5923, %v5922
    %v5939 = vpack.c.b16 %v5925, %v5924
    %v5940 = vpack.c.b16 %v5927, %v5926
    %v5941 = vpack.c.b16 %v5929, %v5928
    %v5942 = vpack.c.b16 %v5931, %v5930
    %v5943 = vpack.c.b16 %v5933, %v5932
    %v5944 = vpack.c.b16 %v5935, %v5934
    %v5945 = vpack.c.b16 %v5937, %v5936
    %5954 = vmatprep.subr.bf16.mxu0 0
    %5955 = vmatpush1.bf16.msra.mxu0 %v5938
    %5956 = vmatprep.subr.bf16.mxu0 0
    %5957 = vmatpush1.bf16.msra.mxu0 %v5939
    %5958 = vmatprep.subr.bf16.mxu0 0
    %5959 = vmatpush1.bf16.msra.mxu0 %v5940
    %5960 = vmatprep.subr.bf16.mxu0 0
    %5961 = vmatpush1.bf16.msra.mxu0 %v5941
    %5962 = vmatprep.subr.bf16.mxu0 0
    %5963 = vmatpush1.bf16.msra.mxu0 %v5942
    %5964 = vmatprep.subr.bf16.mxu0 0
    %5965 = vmatpush1.bf16.msra.mxu0 %v5943
    %5966 = vmatprep.subr.bf16.mxu0 0
    %5967 = vmatpush1.bf16.msra.mxu0 %v5944
    %5968 = vmatprep.subr.bf16.mxu0 0
    %5969 = vmatpush1.bf16.msra.mxu0 %v5945
    %5970 = vmatprep.subr.bf16.mxu0 0
    %5971 = vmatpush1.bf16.msra.mxu0 0
    %5972 = vmatprep.subr.bf16.mxu0 0
    %5973 = vmatpush1.bf16.msra.mxu0 0
    %5974 = vmatprep.subr.bf16.mxu0 0
    %5975 = vmatpush1.bf16.msra.mxu0 0
    %5976 = vmatprep.subr.bf16.mxu0 0
    %5977 = vmatpush1.bf16.msra.mxu0 0
    %5978 = vmatprep.subr.bf16.mxu0 0
    %5979 = vmatpush1.bf16.msra.mxu0 0
    %5980 = vmatprep.subr.bf16.mxu0 0
    %5981 = vmatpush1.bf16.msra.mxu0 0
    %5982 = vmatprep.subr.bf16.mxu0 0
    %5983 = vmatpush1.bf16.msra.mxu0 0
    %5984 = vmatprep.subr.bf16.mxu0 0
    %5985 = vmatpush1.bf16.msra.mxu0 0
    %5986 = vmatprep.mubr.bf16.mxu0 0
    %5987 = vmatmul.mubr.bf16.gmra.mrb[0].mxu0 %v5888
    %v5988 = vpop.f32.mrb[0].mxu0
    %v5989 = vadd.f32 %v5905, %v5988
    %v5990 = vpop.f32.mrb[0].mxu0
    %v5991 = vpop.f32.mrb[0].mxu0
    %v5992 = vpop.f32.mrb[0].mxu0
    %5993 = vdwg.mxu0
    %v5994 = vmax.f32 %v5989, 0.0
    %v5995 = vpack.c.bf16 %v5994, %v5994
    %v5996 = vld [vmem:[%s17] sm:$0xf]
    %v5997 = vld [vmem:[%s17 + $0x4] sm:$0xf]
    %v5998 = vld [vmem:[%s17 + $0x8] sm:$0xf]
    %v5999 = vld [vmem:[%s17 + $0xc] sm:$0xf]
    %v6000 = vld [vmem:[%s17 + $0x10] sm:$0xf]
    %v6001 = vld [vmem:[%s17 + $0x14] sm:$0xf]
    %v6002 = vld [vmem:[%s17 + $0x18] sm:$0xf]
    %v6003 = vld [vmem:[%s17 + $0x1c] sm:$0xf]
    %v6004 = vld [vmem:[%s18] sm:$0x1]
    %v6013 = vunpack.c.l.b16 %v5996
    %v6014 = vunpack.c.l.b16 %v5997
    %v6015 = vunpack.c.l.b16 %v5998
    %v6016 = vunpack.c.l.b16 %v5999
    %v6017 = vunpack.c.l.b16 %v6000
    %v6018 = vunpack.c.l.b16 %v6001
    %v6019 = vunpack.c.l.b16 %v6002
    %v6020 = vunpack.c.l.b16 %v6003
    %v6021 = vpack.c.b16 %v6014, %v6013
    %v6022 = vpack.c.b16 %v6016, %v6015
    %v6023 = vpack.c.b16 %v6018, %v6017
    %v6024 = vpack.c.b16 %v6020, %v6019
    %vm6029 = vcmask 523264
    %v6031 = vsel %vm6029, %v5995, 0
    %6033 = vmatprep.subr.bf16.mxu0 0
    %6034 = vmatpush1.bf16.msra.mxu0 %v6021
    %6035 = vmatprep.subr.bf16.mxu0 0
    %6036 = vmatpush1.bf16.msra.mxu0 %v6022
    %6037 = vmatprep.subr.bf16.mxu0 0
    %6038 = vmatpush1.bf16.msra.mxu0 %v6023
    %6039 = vmatprep.subr.bf16.mxu0 0
    %6040 = vmatpush1.bf16.msra.mxu0 %v6024
    %6041 = vmatprep.subr.bf16.mxu0 0
    %6042 = vmatpush1.bf16.msra.mxu0 0
    %6043 = vmatprep.subr.bf16.mxu0 0
    %6044 = vmatpush1.bf16.msra.mxu0 0
    %6045 = vmatprep.subr.bf16.mxu0 0
    %6046 = vmatpush1.bf16.msra.mxu0 0
    %6047 = vmatprep.subr.bf16.mxu0 0
    %6048 = vmatpush1.bf16.msra.mxu0 0
    %6049 = vmatprep.subr.bf16.mxu0 0
    %6050 = vmatpush1.bf16.msra.mxu0 0
    %6051 = vmatprep.subr.bf16.mxu0 0
    %6052 = vmatpush1.bf16.msra.mxu0 0
    %6053 = vmatprep.subr.bf16.mxu0 0
    %6054 = vmatpush1.bf16.msra.mxu0 0
    %6055 = vmatprep.subr.bf16.mxu0 0
    %6056 = vmatpush1.bf16.msra.mxu0 0
    %6057 = vmatprep.subr.bf16.mxu0 0
    %6058 = vmatpush1.bf16.msra.mxu0 0
    %6059 = vmatprep.subr.bf16.mxu0 0
    %6060 = vmatpush1.bf16.msra.mxu0 0
    %6061 = vmatprep.subr.bf16.mxu0 0
    %6062 = vmatpush1.bf16.msra.mxu0 0
    %6063 = vmatprep.subr.bf16.mxu0 0
    %6064 = vmatpush1.bf16.msra.mxu0 0
    %6065 = vmatprep.mubr.bf16.mxu0 0
    %6066 = vmatmul.mubr.bf16.gmra.mrb[0].mxu0 %v6031
    %v6067 = vpop.f32.mrb[0].mxu0
    %v6068 = vadd.f32 %v6004, %v6067
    %v6069 = vpop.f32.mrb[0].mxu0
    %v6070 = vpop.f32.mrb[0].mxu0
    %v6071 = vpop.f32.mrb[0].mxu0
    %6072 = vdwg.mxu0
    %vm6073 = vcmask 32768
    %6074 = vst.msk [vmem:[#allocation16] sm:$0x1] %vm6073, %v6068
    // Predicated region
    $region94: #{forward.1} parent=1 // pred_check
      _
    $region95: #{forward.1} parent=1 // pred_check_branch
      %6076 = sbr.rel (0) target = $region97
    $region96: #{forward.1} parent=1 // pred_region
      %s6078 = ssub.s32 16, 16
      %6079 = vsyncadd [#allocation10], %s6078
      %s6081 = sshll.u32 [#allocation16], 4
      %s6082 = int_to_ptr.vmem [resolvable:$true] %s6081
      %6084 = dma.vmem_to_hbm [thread:$0]  %s6082, 16, %s19, [#allocation10]
    $region97: #{forward.1} parent=1 // pred_fallthru
      _
    // Predicated region
    $region98: #{forward.1} parent=1 // pred_check
      _
    $region99: #{forward.1} parent=1 // pred_check_branch
      %6086 = sbr.rel (0) target = $region101
    $region100: #{forward.1} parent=1 // pred_region
      %6087 = dma.done [#allocation10], 16
    $region101: #{forward.1} parent=1 // pred_fallthru
      _
    %6088 = vsyncpa [#allocation9], 1
    %6089 = vsyncpa [#allocation12], 1
    %6090 = vsyncpa [#allocation15], 1
    %6091 = vsyncpa [#allocation10], 1

</llo_original>
